<compile_context>
chip_gen: v5e
topology: v5e:2x2
jax: 0.10.0
libtpu: 0.0.40
codegen_flags: <defaults>
</compile_context>

<pallas_src>
import functools
import math

import jax
import jax.numpy as jnp
from jax import lax
from jax.experimental import pallas as pl
from jax.experimental.pallas import tpu as pltpu

_INV_SQRT2 = 1.0 / math.sqrt(2.0)
_PAR1 = pltpu.CompilerParams(dimension_semantics=("parallel",))
_H0 = 8          # sublane-aligned start row of the interior inside the padded scratch
_EPS_LN = 1e-5
_EPS_BN = 1e-5


def _gelu(x):
    return 0.5 * x * (1.0 + lax.erf(x * _INV_SQRT2))


def _cspec(shape):
    # Constant-index (weight / projection / stats) operand spec.
    return pl.BlockSpec(shape, lambda i: (0,) * len(shape))


def _write_stats(st_ref, v):
    s = jnp.sum(v, axis=0, keepdims=True)
    sq = jnp.sum(v * v, axis=0, keepdims=True)
    st_ref[...] = jnp.concatenate([s, sq], axis=0)


def _bn_rows(stats, gsum, gamma_t, beta_t, count):
    # stats: (B, 2, W*A) per-grid-step (sum, sum_sq) rows from the producer.
    # Sum over B, fold the W groups with a kron(ones(W,W), I_A) matmul (keeps
    # the per-channel sums lane-tiled), derive training-mode BN scale/shift.
    st = jnp.sum(stats, axis=0)                                   # (2, W*A)
    gs = jnp.dot(st, gsum, preferred_element_type=jnp.float32)    # (2, W*A) tiled
    mean = gs[0:1] / count
    var = jnp.maximum(gs[1:2] / count - mean * mean, 0.0)         # biased (training BN)
    scale = gamma_t * lax.rsqrt(var + _EPS_BN)
    shift = beta_t - mean * scale
    return scale, shift


def _pack_and_conv(x, pad_ref, stage_ref, band_ref, bias_ref, T, H, WA):
    # x: (T*H, W*A) f32.  Zero only the halo cells the tap windows read
    # (t = 0 / T+1 frames and h-halo rows _H0-1 / _H0+H); the interior is fully
    # overwritten every step (no persistence assumption -> megacore safe).
    zfrm = jnp.zeros((1, _H0 + H + 1, WA), jnp.float32)
    zrow = jnp.zeros((T, 1, WA), jnp.float32)
    pad_ref[0:1, :, :] = zfrm
    pad_ref[T + 1:T + 2, :, :] = zfrm
    pad_ref[1:T + 1, _H0 - 1:_H0, :] = zrow
    pad_ref[1:T + 1, _H0 + H:_H0 + H + 1, :] = zrow
    pad_ref[1:T + 1, _H0:_H0 + H, :] = x.reshape(T, H, WA)
    # Pack the 9 (dt,dh) tap windows side by side (lane offsets are multiples of
    # 128; cast to bf16 on the way) and run ONE K=9*W*A MXU matmul against the
    # pre-concatenated bf16 band matrix.
    for dt in range(3):
        for dh in range(3):
            tap = dt * 3 + dh
            slab = pad_ref[dt:dt + T, _H0 - 1 + dh:_H0 - 1 + dh + H, :]
            stage_ref[:, tap * WA:(tap + 1) * WA] = (
                slab.reshape(T * H, WA).astype(stage_ref.dtype))
    out = jnp.dot(stage_ref[...], band_ref[...],
                  preferred_element_type=jnp.float32)
    return out + bias_ref[...]


# ---------------------------------------------------------------------------
# K1: LayerNorm(C) + down_proj + temporal positional embedding (per-batch block)
# ---------------------------------------------------------------------------
def _ln_down_pos_kernel(x_ref, pc_ref, g_ref, b_ref, wd_ref, bd_ref, pos_ref,
                        o_ref):
    x = x_ref[...].astype(jnp.float32)                        # (T*H, W*C)
    pc = pc_ref[...]                                          # grouped-mean matrix
    m = jnp.dot(x, pc, preferred_element_type=jnp.float32)    # per-token mean
    xc = x - m
    v = jnp.dot(xc * xc, pc, preferred_element_type=jnp.float32)
    xn = xc * lax.rsqrt(v + _EPS_LN)
    xn = xn * g_ref[...] + b_ref[...]
    y = jnp.dot(xn.astype(jnp.bfloat16), wd_ref[...],
                preferred_element_type=jnp.float32)
    o_ref[...] = (y + bd_ref[...] + pos_ref[...]).astype(o_ref.dtype)


def ln_down_pos(x_rows, pc, g_t, b_t, wd_blk, bd_t, pos_slab):
    B, TH, WC = x_rows.shape
    WA = wd_blk.shape[1]
    act_in = pl.BlockSpec((None, TH, WC), lambda i: (i, 0, 0))
    act_out = pl.BlockSpec((None, TH, WA), lambda i: (i, 0, 0))
    return pl.pallas_call(
        _ln_down_pos_kernel,
        out_shape=jax.ShapeDtypeStruct((B, TH, WA), x_rows.dtype),
        grid=(B,),
        in_specs=[act_in,
                  _cspec((WC, WC)),
                  _cspec((1, WC)), _cspec((1, WC)),
                  _cspec((WC, WA)),
                  _cspec((1, WA)),
                  _cspec((TH, WA))],
        out_specs=act_out,
        compiler_params=_PAR1,
    )(x_rows, pc, g_t, b_t, wd_blk, bd_t, pos_slab)


# ---------------------------------------------------------------------------
# K2: fused conv1x1 + conv3x3_1 (reads y once) + BN1/BN2 batch sums
# ---------------------------------------------------------------------------
def _dual_conv_kernel(y_ref, w1_ref, b1_ref, band_ref, b2_ref,
                      s1_ref, s2_ref, st1_ref, st2_ref,
                      pad_ref, stage_ref, *, T, H, WA):
    y = y_ref[...].astype(jnp.float32)                        # (T*H, W*A)
    s1 = jnp.dot(y.astype(jnp.bfloat16), w1_ref[...],
                 preferred_element_type=jnp.float32) + b1_ref[...]
    s1_ref[...] = s1.astype(s1_ref.dtype)
    _write_stats(st1_ref, s1)
    s2 = _pack_and_conv(y, pad_ref, stage_ref, band_ref, b2_ref, T, H, WA)
    s2_ref[...] = s2.astype(s2_ref.dtype)
    _write_stats(st2_ref, s2)


def dual_conv(y, w1_blk, b1_t, band_cat, b2_t, *, T, H):
    B, TH, WA = y.shape
    kern = functools.partial(_dual_conv_kernel, T=T, H=H, WA=WA)
    act = pl.BlockSpec((None, TH, WA), lambda i: (i, 0, 0))
    stat = pl.BlockSpec((None, 2, WA), lambda i: (i, 0, 0))
    return pl.pallas_call(
        kern,
        out_shape=(jax.ShapeDtypeStruct((B, TH, WA), y.dtype),
                   jax.ShapeDtypeStruct((B, TH, WA), y.dtype),
                   jax.ShapeDtypeStruct((B, 2, WA), jnp.float32),
                   jax.ShapeDtypeStruct((B, 2, WA), jnp.float32)),
        grid=(B,),
        in_specs=[act,
                  _cspec((WA, WA)),
                  _cspec((1, WA)),
                  _cspec((9 * WA, WA)),
                  _cspec((1, WA))],
        out_specs=(act, act, stat, stat),
        scratch_shapes=[pltpu.VMEM((T + 2, _H0 + H + 1, WA), jnp.float32),
                        pltpu.VMEM((TH, 9 * WA), jnp.bfloat16)],
        compiler_params=_PAR1,
    )(y, w1_blk, b1_t, band_cat, b2_t)


# ---------------------------------------------------------------------------
# K3 / K5: in-kernel BN(scale/shift from stats) + GELU prologue -> conv3x3
#          -> next-BN batch sums
# ---------------------------------------------------------------------------
def _bn_gelu_conv_kernel(x_ref, st_in_ref, g_ref, b_ref, gsum_ref,
                         band_ref, bias_ref,
                         o_ref, st_out_ref, pad_ref, stage_ref,
                         *, T, H, WA, count):
    sc, sh = _bn_rows(st_in_ref[...], gsum_ref[...], g_ref[...], b_ref[...], count)
    x = _gelu(x_ref[...].astype(jnp.float32) * sc + sh)
    out = _pack_and_conv(x, pad_ref, stage_ref, band_ref, bias_ref, T, H, WA)
    o_ref[...] = out.astype(o_ref.dtype)
    _write_stats(st_out_ref, out)


def bn_gelu_conv(x, st_in, g_t, b_t, gsum, band_cat, bias_t, *, T, H, count):
    B, TH, WA = x.shape
    kern = functools.partial(_bn_gelu_conv_kernel, T=T, H=H, WA=WA,
                             count=float(count))
    act = pl.BlockSpec((None, TH, WA), lambda i: (i, 0, 0))
    stat = pl.BlockSpec((None, 2, WA), lambda i: (i, 0, 0))
    return pl.pallas_call(
        kern,
        out_shape=(jax.ShapeDtypeStruct((B, TH, WA), x.dtype),
                   jax.ShapeDtypeStruct((B, 2, WA), jnp.float32)),
        grid=(B,),
        in_specs=[act,
                  _cspec(st_in.shape),
                  _cspec((1, WA)), _cspec((1, WA)),
                  _cspec((WA, WA)),
                  _cspec((9 * WA, WA)),
                  _cspec((1, WA))],
        out_specs=(act, stat),
        scratch_shapes=[pltpu.VMEM((T + 2, _H0 + H + 1, WA), jnp.float32),
                        pltpu.VMEM((TH, 9 * WA), jnp.bfloat16)],
        compiler_params=_PAR1,
    )(x, st_in, g_t, b_t, gsum, band_cat, bias_t)


# ---------------------------------------------------------------------------
# K4: x = BN1(stream1) + BN3(stream2)  (also emitted as residual) -> conv3x3
# ---------------------------------------------------------------------------
def _merge_conv_kernel(a_ref, b_ref, sta_ref, ga_ref, ba_ref,
                       stb_ref, gb_ref, bb_ref, gsum_ref,
                       band_ref, bias_ref,
                       xres_ref, o_ref, st_out_ref, pad_ref, stage_ref,
                       *, T, H, WA, count):
    gsum = gsum_ref[...]
    sca, sha = _bn_rows(sta_ref[...], gsum, ga_ref[...], ba_ref[...], count)
    scb, shb = _bn_rows(stb_ref[...], gsum, gb_ref[...], bb_ref[...], count)
    x = (a_ref[...].astype(jnp.float32) * sca + sha
         + b_ref[...].astype(jnp.float32) * scb + shb)
    xres_ref[...] = x.astype(xres_ref.dtype)      # residual for the tail kernel
    out = _pack_and_conv(x, pad_ref, stage_ref, band_ref, bias_ref, T, H, WA)
    o_ref[...] = out.astype(o_ref.dtype)
    _write_stats(st_out_ref, out)


def merge_conv(a, b, st_a, ga_t, ba_t, st_b, gb_t, bb_t, gsum,
               band_cat, bias_t, *, T, H, count):
    B, TH, WA = a.shape
    kern = functools.partial(_merge_conv_kernel, T=T, H=H, WA=WA,
                             count=float(count))
    act = pl.BlockSpec((None, TH, WA), lambda i: (i, 0, 0))
    stat = pl.BlockSpec((None, 2, WA), lambda i: (i, 0, 0))
    return pl.pallas_call(
        kern,
        out_shape=(jax.ShapeDtypeStruct((B, TH, WA), a.dtype),
                   jax.ShapeDtypeStruct((B, TH, WA), a.dtype),
                   jax.ShapeDtypeStruct((B, 2, WA), jnp.float32)),
        grid=(B,),
        in_specs=[act, act,
                  _cspec(st_a.shape),
                  _cspec((1, WA)), _cspec((1, WA)),
                  _cspec(st_b.shape),
                  _cspec((1, WA)), _cspec((1, WA)),
                  _cspec((WA, WA)),
                  _cspec((9 * WA, WA)),
                  _cspec((1, WA))],
        out_specs=(act, act, stat),
        scratch_shapes=[pltpu.VMEM((T + 2, _H0 + H + 1, WA), jnp.float32),
                        pltpu.VMEM((TH, 9 * WA), jnp.bfloat16)],
        compiler_params=_PAR1,
    )(a, b, st_a, ga_t, ba_t, st_b, gb_t, bb_t, gsum, band_cat, bias_t)


# ---------------------------------------------------------------------------
# K6: BN apply + residual + GELU + LayerNorm(A) + up_proj + input skip
# ---------------------------------------------------------------------------
def _final_kernel(z_ref, res_ref, xid_ref, st_ref, g_ref, b_ref, gsum_ref,
                  pa_ref, lg_ref, lb_ref, wu_ref, bu_ref, o_ref, *, count):
    sc, sh = _bn_rows(st_ref[...], gsum_ref[...], g_ref[...], b_ref[...], count)
    z = z_ref[...].astype(jnp.float32) * sc + sh
    z = _gelu(z + res_ref[...].astype(jnp.float32))
    pa = pa_ref[...]
    m = jnp.dot(z, pa, preferred_element_type=jnp.float32)
    zc = z - m
    v = jnp.dot(zc * zc, pa, preferred_element_type=jnp.float32)
    zn = zc * lax.rsqrt(v + _EPS_LN)
    zn = zn * lg_ref[...] + lb_ref[...]
    up = jnp.dot(zn.astype(jnp.bfloat16), wu_ref[...],
                 preferred_element_type=jnp.float32) + bu_ref[...]
    o_ref[...] = (xid_ref[...].astype(jnp.float32) + up).astype(o_ref.dtype)


def bn_res_gelu_ln_up(z, res, xid, st5, g5_t, b5_t, gsum, pa, lg_t, lb_t,
                      wu_blk, bu_t, *, count):
    B, TH, WA = z.shape
    WC = xid.shape[-1]
    kern = functools.partial(_final_kernel, count=float(count))
    act_a = pl.BlockSpec((None, TH, WA), lambda i: (i, 0, 0))
    act_c = pl.BlockSpec((None, TH, WC), lambda i: (i, 0, 0))
    return pl.pallas_call(
        kern,
        out_shape=jax.ShapeDtypeStruct((B, TH, WC), xid.dtype),
        grid=(B,),
        in_specs=[act_a, act_a, act_c,
                  _cspec(st5.shape),
                  _cspec((1, WA)), _cspec((1, WA)),
                  _cspec((WA, WA)),
                  _cspec((WA, WA)),
                  _cspec((1, WA)), _cspec((1, WA)),
                  _cspec((WA, WC)),
                  _cspec((1, WC))],
        out_specs=act_c,
        compiler_params=_PAR1,
    )(z, res, xid, st5, g5_t, b5_t, gsum, pa, lg_t, lb_t, wu_blk, bu_t)


# ---------------------------------------------------------------------------
# Wrapper-side (tiny, weight-sized) parameter packing and the full forward.
# ---------------------------------------------------------------------------
def _tile_row(v, reps):
    return jnp.tile(jnp.reshape(v, (1, -1)), (1, reps))


def _band_cat(wt, W):
    # wt: (3,3,3,Cin,Cout) (dt,dh,dw,ci,co) -> (9*W*Cin, W*Cout) concatenated
    # band matrices, tap order dt*3+dh.  Each (dt,dh) band folds the three dw
    # taps and the w-direction zero padding into one K=W*Cin block.
    bands = []
    for dt in range(3):
        for dh in range(3):
            m = jnp.zeros((W * wt.shape[3], W * wt.shape[4]), wt.dtype)
            for dw in range(3):
                shift = jnp.eye(W, k=-(dw - 1), dtype=wt.dtype)
                m = m + jnp.kron(shift, wt[dt, dh, dw])
            bands.append(m)
    return jnp.concatenate(bands, axis=0)


def temporal_adapter_pe_forward(x, T, params):
    BT, H, W, C = x.shape
    B = BT // T
    A = params["down_w"].shape[1]
    WA, WC, TH = W * A, W * C, T * H
    count = B * T * H * W
    f32, bf16 = jnp.float32, jnp.bfloat16

    eye_w = jnp.eye(W, dtype=f32)
    pc = jnp.kron(eye_w, jnp.ones((C, C), f32) / C)        # grouped-mean (LN1)
    pa = jnp.kron(eye_w, jnp.ones((A, A), f32) / A)        # grouped-mean (LN2)
    gsum = jnp.kron(jnp.ones((W, W), f32), jnp.eye(A, dtype=f32))  # BN group sum
    wd_blk = jnp.kron(eye_w, params["down_w"]).astype(bf16)        # (W*C, W*A)
    wu_blk = jnp.kron(eye_w, params["up_w"]).astype(bf16)          # (W*A, W*C)
    w1_blk = jnp.kron(eye_w, params["c1x1_w"]).astype(bf16)        # (W*A, W*A)

    g1_t, b1_t = _tile_row(params["ln1_g"], W), _tile_row(params["ln1_b"], W)
    bd_t = _tile_row(params["down_b"], W)
    pos_slab = jnp.repeat(jnp.tile(params["pos_emb"][:T], (1, W)), H, axis=0)
    c1b_t = _tile_row(params["c1x1_b"], W)
    band_b1c1 = _band_cat(params["b1c1_w"], W).astype(bf16)
    b1c1b_t = _tile_row(params["b1c1_b"], W)
    band_b1c2 = _band_cat(params["b1c2_w"], W).astype(bf16)
    b1c2b_t = _tile_row(params["b1c2_b"], W)
    band_b2c1 = _band_cat(params["b2c1_w"], W).astype(bf16)
    b2c1b_t = _tile_row(params["b2c1_b"], W)
    band_b2c2 = _band_cat(params["b2c2_w"], W).astype(bf16)
    b2c2b_t = _tile_row(params["b2c2_b"], W)
    bn1_g_t, bn1_b_t = _tile_row(params["bn1_g"], W), _tile_row(params["bn1_b"], W)
    bn2_g_t, bn2_b_t = _tile_row(params["bn2_g"], W), _tile_row(params["bn2_b"], W)
    bn3_g_t, bn3_b_t = _tile_row(params["bn3_g"], W), _tile_row(params["bn3_b"], W)
    b2bn1_g_t, b2bn1_b_t = (_tile_row(params["b2bn1_g"], W),
                            _tile_row(params["b2bn1_b"], W))
    b2bn2_g_t, b2bn2_b_t = (_tile_row(params["b2bn2_g"], W),
                            _tile_row(params["b2bn2_b"], W))
    g2_t, b2_t = _tile_row(params["ln2_g"], W), _tile_row(params["ln2_b"], W)
    bu_t = _tile_row(params["up_b"], W)

    x_rows = x.reshape(B, TH, WC)                          # free: same HBM bytes

    # K1: norm1 + down_proj + temporal pos emb -> y, lane-dense (B, T*H, W*A)
    y = ln_down_pos(x_rows, pc, g1_t, b1_t, wd_blk, bd_t, pos_slab)

    # K2: fused conv1x1 + conv3x3_1 (+ BN1/BN2 batch sums)
    s1, s2, st1, st2 = dual_conv(y, w1_blk, c1b_t, band_b1c1, b1c1b_t, T=T, H=H)

    # K3: BN2 + GELU prologue -> conv3x3_2 (+ BN3 batch sums)
    s2c2, st3 = bn_gelu_conv(s2, st2, bn2_g_t, bn2_b_t, gsum,
                             band_b1c2, b1c2b_t, T=T, H=H, count=count)

    # K4: x = BN1(stream1) + BN3(stream2) (also the residual) -> block2 conv1
    xres, b2c1, st4 = merge_conv(s1, s2c2, st1, bn1_g_t, bn1_b_t,
                                 st3, bn3_g_t, bn3_b_t, gsum,
                                 band_b2c1, b2c1b_t, T=T, H=H, count=count)

    # K5: block2 BN1 + GELU prologue -> block2 conv2 (+ block2 BN2 batch sums)
    b2c2, st5 = bn_gelu_conv(b2c1, st4, b2bn1_g_t, b2bn1_b_t, gsum,
                             band_b2c2, b2c2b_t, T=T, H=H, count=count)

    # K6: block2 BN2 + residual + GELU + norm2 + up_proj + input skip
    out = bn_res_gelu_ln_up(b2c2, xres, x_rows, st5, b2bn2_g_t, b2bn2_b_t,
                            gsum, pa, g2_t, b2_t, wu_blk, bu_t, count=count)
    return out.reshape(BT, H, W, C)


# ---------------------------------------------------------------------------
if __name__ == "__main__":
    B, T, H, W = 2, 4, 8, 8
    C, A, MAXF = 32, 16, 8          # in_channels, adapter_channels, max_frames

    key = jax.random.PRNGKey(0)
    keys = jax.random.split(key, 32)

    def rnd(i, shape, scale=0.1):
        return scale * jax.random.normal(keys[i], shape, dtype=jnp.float32)

    params = dict(
        ln1_g=1.0 + rnd(0, (C,)), ln1_b=rnd(1, (C,)),
        down_w=rnd(2, (C, A), math.sqrt(2.0 / (C + A))),
        down_b=jnp.zeros((A,), jnp.float32),
        pos_emb=rnd(3, (MAXF, A)),
        c1x1_w=rnd(4, (A, A), math.sqrt(2.0 / A)), c1x1_b=rnd(5, (A,)),
        bn1_g=1.0 + rnd(6, (A,)), bn1_b=rnd(7, (A,)),
        b1c1_w=rnd(8, (3, 3, 3, A, A), math.sqrt(2.0 / (27 * A))),
        b1c1_b=rnd(9, (A,)),
        bn2_g=1.0 + rnd(10, (A,)), bn2_b=rnd(11, (A,)),
        b1c2_w=rnd(12, (3, 3, 3, A, A), math.sqrt(2.0 / (27 * A))),
        b1c2_b=rnd(13, (A,)),
        bn3_g=1.0 + rnd(14, (A,)), bn3_b=rnd(15, (A,)),
        b2c1_w=rnd(16, (3, 3, 3, A, A), math.sqrt(2.0 / (27 * A))),
        b2c1_b=rnd(17, (A,)),
        b2bn1_g=1.0 + rnd(18, (A,)), b2bn1_b=rnd(19, (A,)),
        b2c2_w=rnd(20, (3, 3, 3, A, A), math.sqrt(2.0 / (27 * A))),
        b2c2_b=rnd(21, (A,)),
        b2bn2_g=1.0 + rnd(22, (A,)), b2bn2_b=rnd(23, (A,)),
        ln2_g=1.0 + rnd(24, (A,)), ln2_b=rnd(25, (A,)),
        up_w=rnd(26, (A, C), math.sqrt(2.0 / (C + A))),
        up_b=jnp.zeros((C,), jnp.float32),
    )

    x = jax.random.normal(keys[31], (B * T, H, W, C), dtype=jnp.float32)

    fwd = jax.jit(lambda xx, pp: temporal_adapter_pe_forward(xx, T, pp))
    out = jax.block_until_ready(fwd(x, params))

    assert out.shape == (B * T, H, W, C), out.shape
    assert out.dtype == jnp.float32
    assert bool(jnp.all(jnp.isfinite(out)))
    print("KERNEL_OK")
</pallas_src>

<mosaic_0001>
module attributes {stable_mosaic.version = 11 : i64} {
  func.func @_ln_down_pos_kernel(%arg0: i32, %arg1: memref<1x32x256xf32, #tpu.memory_space<vmem>>, %arg2: memref<256x256xf32, #tpu.memory_space<vmem>>, %arg3: memref<1x256xf32, #tpu.memory_space<vmem>>, %arg4: memref<1x256xf32, #tpu.memory_space<vmem>>, %arg5: memref<256x128xbf16, #tpu.memory_space<vmem>>, %arg6: memref<1x128xf32, #tpu.memory_space<vmem>>, %arg7: memref<32x128xf32, #tpu.memory_space<vmem>>, %arg8: memref<1x32x128xf32, #tpu.memory_space<vmem>>) attributes {dimension_semantics = [#tpu.dimension_semantics<parallel>], iteration_bounds = array<i64: 2>, scalar_prefetch = 0 : i64, scratch_operands = 0 : i64, tpu.core_type = #tpu.core_type<tc>, window_params = [{transform_indices = @transform_0, window_bounds = array<i64: 1, 32, 256>}, {pipeline_mode = #tpu.pipeline_mode<synchronous>, transform_indices = @transform_1, window_bounds = array<i64: 256, 256>}, {pipeline_mode = #tpu.pipeline_mode<synchronous>, transform_indices = @transform_2, window_bounds = array<i64: 1, 256>}, {pipeline_mode = #tpu.pipeline_mode<synchronous>, transform_indices = @transform_3, window_bounds = array<i64: 1, 256>}, {pipeline_mode = #tpu.pipeline_mode<synchronous>, transform_indices = @transform_4, window_bounds = array<i64: 256, 128>}, {pipeline_mode = #tpu.pipeline_mode<synchronous>, transform_indices = @transform_5, window_bounds = array<i64: 1, 128>}, {pipeline_mode = #tpu.pipeline_mode<synchronous>, transform_indices = @transform_6, window_bounds = array<i64: 32, 128>}, {transform_indices = @transform_7, window_bounds = array<i64: 1, 32, 128>}]} {
    %c0 = arith.constant 0 : index
    %c0_0 = arith.constant 0 : index
    %c0_1 = arith.constant 0 : index
    %0 = vector.load %arg1[%c0, %c0_0, %c0_1] : memref<1x32x256xf32, #tpu.memory_space<vmem>>, vector<1x32x256xf32>
    %1 = vector.shape_cast %0 : vector<1x32x256xf32> to vector<32x256xf32>
    %c0_2 = arith.constant 0 : index
    %c0_3 = arith.constant 0 : index
    %2 = vector.load %arg2[%c0_2, %c0_3] : memref<256x256xf32, #tpu.memory_space<vmem>>, vector<256x256xf32>
    %cst = arith.constant dense<0.000000e+00> : vector<32x256xf32>
    %3 = tpu.matmul %1, %2, %cst {dimension_numbers = #tpu.dot_dimension_numbers<[1], [0], [0], [1], [0, 0, 1, 1], [], []>} : vector<32x256xf32>, vector<256x256xf32>, vector<32x256xf32> -> vector<32x256xf32>
    %4 = arith.subf %1, %3 : vector<32x256xf32>
    %5 = arith.mulf %4, %4 : vector<32x256xf32>
    %cst_4 = arith.constant dense<0.000000e+00> : vector<32x256xf32>
    %6 = tpu.matmul %5, %2, %cst_4 {dimension_numbers = #tpu.dot_dimension_numbers<[1], [0], [0], [1], [0, 0, 1, 1], [], []>} : vector<32x256xf32>, vector<256x256xf32>, vector<32x256xf32> -> vector<32x256xf32>
    %cst_5 = arith.constant 9.99999974E-6 : f32
    %7 = vector.broadcast %cst_5 : f32 to vector<32x256xf32>
    %8 = arith.addf %6, %7 : vector<32x256xf32>
    %9 = math.rsqrt %8 : vector<32x256xf32>
    %10 = arith.mulf %4, %9 : vector<32x256xf32>
    %c0_6 = arith.constant 0 : index
    %c0_7 = arith.constant 0 : index
    %11 = vector.load %arg3[%c0_6, %c0_7] : memref<1x256xf32, #tpu.memory_space<vmem>>, vector<1x256xf32>
    %12 = vector.broadcast %11 : vector<1x256xf32> to vector<32x256xf32>
    %13 = arith.mulf %10, %12 : vector<32x256xf32>
    %c0_8 = arith.constant 0 : index
    %c0_9 = arith.constant 0 : index
    %14 = vector.load %arg4[%c0_8, %c0_9] : memref<1x256xf32, #tpu.memory_space<vmem>>, vector<1x256xf32>
    %15 = vector.broadcast %14 : vector<1x256xf32> to vector<32x256xf32>
    %16 = arith.addf %13, %15 : vector<32x256xf32>
    %17 = arith.truncf %16 : vector<32x256xf32> to vector<32x256xbf16>
    %c0_10 = arith.constant 0 : index
    %c0_11 = arith.constant 0 : index
    %18 = vector.load %arg5[%c0_10, %c0_11] : memref<256x128xbf16, #tpu.memory_space<vmem>>, vector<256x128xbf16>
    %cst_12 = arith.constant dense<0.000000e+00> : vector<32x128xf32>
    %19 = tpu.matmul %17, %18, %cst_12 {dimension_numbers = #tpu.dot_dimension_numbers<[1], [0], [0], [1], [0, 0, 1, 1], [], []>} : vector<32x256xbf16>, vector<256x128xbf16>, vector<32x128xf32> -> vector<32x128xf32>
    %c0_13 = arith.constant 0 : index
    %c0_14 = arith.constant 0 : index
    %20 = vector.load %arg6[%c0_13, %c0_14] : memref<1x128xf32, #tpu.memory_space<vmem>>, vector<1x128xf32>
    %21 = vector.broadcast %20 : vector<1x128xf32> to vector<32x128xf32>
    %22 = arith.addf %19, %21 : vector<32x128xf32>
    %c0_15 = arith.constant 0 : index
    %c0_16 = arith.constant 0 : index
    %23 = vector.load %arg7[%c0_15, %c0_16] : memref<32x128xf32, #tpu.memory_space<vmem>>, vector<32x128xf32>
    %24 = arith.addf %22, %23 : vector<32x128xf32>
    %c0_17 = arith.constant 0 : index
    %c0_18 = arith.constant 0 : index
    %c0_19 = arith.constant 0 : index
    %25 = vector.load %arg8[%c0_17, %c0_18, %c0_19] : memref<1x32x128xf32, #tpu.memory_space<vmem>>, vector<1x32x128xf32>
    %26 = vector.shape_cast %25 : vector<1x32x128xf32> to vector<32x128xf32>
    %27 = vector.shape_cast %24 : vector<32x128xf32> to vector<1x32x128xf32>
    tpu.vector_store %arg8[%c0_17, %c0_18, %c0_19], %27 {strides = array<i32>} : memref<1x32x128xf32, #tpu.memory_space<vmem>>, vector<1x32x128xf32>,
    return
  }
  func.func @transform_0(%arg0: i32) -> (i32, i32, i32) {
    %c0_i32 = arith.constant 0 : i32
    %c0_i32_0 = arith.constant 0 : i32
    %c0_i32_1 = arith.constant 0 : i32
    return %arg0, %c0_i32, %c0_i32_0 : i32, i32, i32
  }
  func.func @transform_1(%arg0: i32) -> (i32, i32) {
    %c0_i32 = arith.constant 0 : i32
    %c0_i32_0 = arith.constant 0 : i32
    %c0_i32_1 = arith.constant 0 : i32
    return %c0_i32, %c0_i32_0 : i32, i32
  }
  func.func @transform_2(%arg0: i32) -> (i32, i32) {
    %c0_i32 = arith.constant 0 : i32
    %c0_i32_0 = arith.constant 0 : i32
    %c0_i32_1 = arith.constant 0 : i32
    return %c0_i32, %c0_i32_0 : i32, i32
  }
  func.func @transform_3(%arg0: i32) -> (i32, i32) {
    %c0_i32 = arith.constant 0 : i32
    %c0_i32_0 = arith.constant 0 : i32
    %c0_i32_1 = arith.constant 0 : i32
    return %c0_i32, %c0_i32_0 : i32, i32
  }
  func.func @transform_4(%arg0: i32) -> (i32, i32) {
    %c0_i32 = arith.constant 0 : i32
    %c0_i32_0 = arith.constant 0 : i32
    %c0_i32_1 = arith.constant 0 : i32
    return %c0_i32, %c0_i32_0 : i32, i32
  }
  func.func @transform_5(%arg0: i32) -> (i32, i32) {
    %c0_i32 = arith.constant 0 : i32
    %c0_i32_0 = arith.constant 0 : i32
    %c0_i32_1 = arith.constant 0 : i32
    return %c0_i32, %c0_i32_0 : i32, i32
  }
  func.func @transform_6(%arg0: i32) -> (i32, i32) {
    %c0_i32 = arith.constant 0 : i32
    %c0_i32_0 = arith.constant 0 : i32
    %c0_i32_1 = arith.constant 0 : i32
    return %c0_i32, %c0_i32_0 : i32, i32
  }
  func.func @transform_7(%arg0: i32) -> (i32, i32, i32) {
    %c0_i32 = arith.constant 0 : i32
    %c0_i32_0 = arith.constant 0 : i32
    %c0_i32_1 = arith.constant 0 : i32
    return %arg0, %c0_i32, %c0_i32_0 : i32, i32, i32
  }
}

module attributes {stable_mosaic.version = 11 : i64} {
  func.func @_bn_gelu_conv_kernel(%arg0: i32, %arg1: memref<1x32x128xf32, #tpu.memory_space<vmem>>, %arg2: memref<2x2x128xf32, #tpu.memory_space<vmem>>, %arg3: memref<1x128xf32, #tpu.memory_space<vmem>>, %arg4: memref<1x128xf32, #tpu.memory_space<vmem>>, %arg5: memref<128x128xf32, #tpu.memory_space<vmem>>, %arg6: memref<1152x128xbf16, #tpu.memory_space<vmem>>, %arg7: memref<1x128xf32, #tpu.memory_space<vmem>>, %arg8: memref<1x32x128xf32, #tpu.memory_space<vmem>>, %arg9: memref<1x2x128xf32, #tpu.memory_space<vmem>>, %arg10: memref<6x17x128xf32, #tpu.memory_space<vmem>>, %arg11: memref<32x1152xbf16, #tpu.memory_space<vmem>>) attributes {dimension_semantics = [#tpu.dimension_semantics<parallel>], iteration_bounds = array<i64: 2>, scalar_prefetch = 0 : i64, scratch_operands = 2 : i64, tpu.core_type = #tpu.core_type<tc>, window_params = [{transform_indices = @transform_0, window_bounds = array<i64: 1, 32, 128>}, {pipeline_mode = #tpu.pipeline_mode<synchronous>, transform_indices = @transform_1, window_bounds = array<i64: 2, 2, 128>}, {pipeline_mode = #tpu.pipeline_mode<synchronous>, transform_indices = @transform_2, window_bounds = array<i64: 1, 128>}, {pipeline_mode = #tpu.pipeline_mode<synchronous>, transform_indices = @transform_3, window_bounds = array<i64: 1, 128>}, {pipeline_mode = #tpu.pipeline_mode<synchronous>, transform_indices = @transform_4, window_bounds = array<i64: 128, 128>}, {pipeline_mode = #tpu.pipeline_mode<synchronous>, transform_indices = @transform_5, window_bounds = array<i64: 1152, 128>}, {pipeline_mode = #tpu.pipeline_mode<synchronous>, transform_indices = @transform_6, window_bounds = array<i64: 1, 128>}, {transform_indices = @transform_7, window_bounds = array<i64: 1, 32, 128>}, {transform_indices = @transform_8, window_bounds = array<i64: 1, 2, 128>}]} {
    %c0 = arith.constant 0 : index
    %c0_0 = arith.constant 0 : index
    %c0_1 = arith.constant 0 : index
    %0 = vector.load %arg2[%c0, %c0_0, %c0_1] : memref<2x2x128xf32, #tpu.memory_space<vmem>>, vector<2x2x128xf32>
    %c0_2 = arith.constant 0 : index
    %c0_3 = arith.constant 0 : index
    %1 = vector.load %arg5[%c0_2, %c0_3] : memref<128x128xf32, #tpu.memory_space<vmem>>, vector<128x128xf32>
    %c0_4 = arith.constant 0 : index
    %c0_5 = arith.constant 0 : index
    %2 = vector.load %arg3[%c0_4, %c0_5] : memref<1x128xf32, #tpu.memory_space<vmem>>, vector<1x128xf32>
    %c0_6 = arith.constant 0 : index
    %c0_7 = arith.constant 0 : index
    %3 = vector.load %arg4[%c0_6, %c0_7] : memref<1x128xf32, #tpu.memory_space<vmem>>, vector<1x128xf32>
    %cst = arith.constant dense<0.000000e+00> : vector<2x128xf32>
    %4 = vector.multi_reduction <add>, %0, %cst [0] : vector<2x2x128xf32> to vector<2x128xf32>
    %cst_8 = arith.constant dense<0.000000e+00> : vector<2x128xf32>
    %5 = tpu.matmul %4, %1, %cst_8 {dimension_numbers = #tpu.dot_dimension_numbers<[1], [0], [0], [1], [0, 0, 1, 1], [], []>} : vector<2x128xf32>, vector<128x128xf32>, vector<2x128xf32> -> vector<2x128xf32>
    %6 = vector.extract_strided_slice %5 {offsets = [0, 0], sizes = [1, 128], strides = [1, 1]} : vector<2x128xf32> to vector<1x128xf32>
    %cst_9 = arith.constant 5.120000e+02 : f32
    %7 = vector.broadcast %cst_9 : f32 to vector<1x128xf32>
    %8 = arith.divf %6, %7 : vector<1x128xf32>
    %9 = vector.extract_strided_slice %5 {offsets = [1, 0], sizes = [1, 128], strides = [1, 1]} : vector<2x128xf32> to vector<1x128xf32>
    %cst_10 = arith.constant 5.120000e+02 : f32
    %10 = vector.broadcast %cst_10 : f32 to vector<1x128xf32>
    %11 = arith.divf %9, %10 : vector<1x128xf32>
    %12 = arith.mulf %8, %8 : vector<1x128xf32>
    %13 = arith.subf %11, %12 : vector<1x128xf32>
    %cst_11 = arith.constant 0.000000e+00 : f32
    %14 = vector.broadcast %cst_11 : f32 to vector<1x128xf32>
    %15 = arith.maximumf %13, %14 : vector<1x128xf32>
    %cst_12 = arith.constant 9.99999974E-6 : f32
    %16 = vector.broadcast %cst_12 : f32 to vector<1x128xf32>
    %17 = arith.addf %15, %16 : vector<1x128xf32>
    %18 = math.rsqrt %17 : vector<1x128xf32>
    %19 = arith.mulf %2, %18 : vector<1x128xf32>
    %20 = arith.mulf %8, %19 : vector<1x128xf32>
    %21 = arith.subf %3, %20 : vector<1x128xf32>
    %c0_13 = arith.constant 0 : index
    %c0_14 = arith.constant 0 : index
    %c0_15 = arith.constant 0 : index
    %22 = vector.load %arg1[%c0_13, %c0_14, %c0_15] : memref<1x32x128xf32, #tpu.memory_space<vmem>>, vector<1x32x128xf32>
    %23 = vector.shape_cast %22 : vector<1x32x128xf32> to vector<32x128xf32>
    %24 = vector.broadcast %19 : vector<1x128xf32> to vector<32x128xf32>
    %25 = arith.mulf %23, %24 : vector<32x128xf32>
    %26 = vector.broadcast %21 : vector<1x128xf32> to vector<32x128xf32>
    %27 = arith.addf %25, %26 : vector<32x128xf32>
    %cst_16 = arith.constant 5.000000e-01 : f32
    %28 = vector.broadcast %cst_16 : f32 to vector<32x128xf32>
    %29 = arith.mulf %28, %27 : vector<32x128xf32>
    %cst_17 = arith.constant 0.707106769 : f32
    %30 = vector.broadcast %cst_17 : f32 to vector<32x128xf32>
    %31 = arith.mulf %27, %30 : vector<32x128xf32>
    %32 = math.erf %31 : vector<32x128xf32>
    %cst_18 = arith.constant 1.000000e+00 : f32
    %33 = vector.broadcast %cst_18 : f32 to vector<32x128xf32>
    %34 = arith.addf %33, %32 : vector<32x128xf32>
    %35 = arith.mulf %29, %34 : vector<32x128xf32>
    %cst_19 = arith.constant 0.000000e+00 : f32
    %36 = vector.broadcast %cst_19 : f32 to vector<1x17x128xf32>
    %cst_20 = arith.constant 0.000000e+00 : f32
    %37 = vector.broadcast %cst_20 : f32 to vector<4x1x128xf32>
    %c0_21 = arith.constant 0 : index
    %c0_22 = arith.constant 0 : index
    %c0_23 = arith.constant 0 : index
    %38 = vector.load %arg10[%c0_21, %c0_22, %c0_23] : memref<6x17x128xf32, #tpu.memory_space<vmem>>, vector<1x17x128xf32>
    tpu.vector_store %arg10[%c0_21, %c0_22, %c0_23], %36 {strides = array<i32>} : memref<6x17x128xf32, #tpu.memory_space<vmem>>, vector<1x17x128xf32>,
    %c5 = arith.constant 5 : index
    %c0_24 = arith.constant 0 : index
    %c0_25 = arith.constant 0 : index
    %39 = vector.load %arg10[%c5, %c0_24, %c0_25] : memref<6x17x128xf32, #tpu.memory_space<vmem>>, vector<1x17x128xf32>
    tpu.vector_store %arg10[%c5, %c0_24, %c0_25], %36 {strides = array<i32>} : memref<6x17x128xf32, #tpu.memory_space<vmem>>, vector<1x17x128xf32>,
    %c1 = arith.constant 1 : index
    %c7 = arith.constant 7 : index
    %c0_26 = arith.constant 0 : index
    %40 = vector.load %arg10[%c1, %c7, %c0_26] : memref<6x17x128xf32, #tpu.memory_space<vmem>>, vector<4x1x128xf32>
    tpu.vector_store %arg10[%c1, %c7, %c0_26], %37 {strides = array<i32>} : memref<6x17x128xf32, #tpu.memory_space<vmem>>, vector<4x1x128xf32>,
    %c1_27 = arith.constant 1 : index
    %c16 = arith.constant 16 : index
    %c0_28 = arith.constant 0 : index
    %41 = vector.load %arg10[%c1_27, %c16, %c0_28] : memref<6x17x128xf32, #tpu.memory_space<vmem>>, vector<4x1x128xf32>
    tpu.vector_store %arg10[%c1_27, %c16, %c0_28], %37 {strides = array<i32>} : memref<6x17x128xf32, #tpu.memory_space<vmem>>, vector<4x1x128xf32>,
    %42 = vector.shape_cast %35 : vector<32x128xf32> to vector<4x8x128xf32>
    %c1_29 = arith.constant 1 : index
    %c8 = arith.constant 8 : index
    %c0_30 = arith.constant 0 : index
    %43 = vector.load %arg10[%c1_29, %c8, %c0_30] : memref<6x17x128xf32, #tpu.memory_space<vmem>>, vector<4x8x128xf32>
    tpu.vector_store %arg10[%c1_29, %c8, %c0_30], %42 {strides = array<i32>} : memref<6x17x128xf32, #tpu.memory_space<vmem>>, vector<4x8x128xf32>,
    %c0_31 = arith.constant 0 : index
    %c7_32 = arith.constant 7 : index
    %c0_33 = arith.constant 0 : index
    %44 = vector.load %arg10[%c0_31, %c7_32, %c0_33] : memref<6x17x128xf32, #tpu.memory_space<vmem>>, vector<4x8x128xf32>
    %45 = vector.shape_cast %44 : vector<4x8x128xf32> to vector<32x128xf32>
    %46 = arith.truncf %45 : vector<32x128xf32> to vector<32x128xbf16>
    %c0_34 = arith.constant 0 : index
    %c0_35 = arith.constant 0 : index
    %47 = vector.load %arg11[%c0_34, %c0_35] : memref<32x1152xbf16, #tpu.memory_space<vmem>>, vector<32x128xbf16>
    tpu.vector_store %arg11[%c0_34, %c0_35], %46 {strides = array<i32>} : memref<32x1152xbf16, #tpu.memory_space<vmem>>, vector<32x128xbf16>,
    %c0_36 = arith.constant 0 : index
    %c8_37 = arith.constant 8 : index
    %c0_38 = arith.constant 0 : index
    %48 = vector.load %arg10[%c0_36, %c8_37, %c0_38] : memref<6x17x128xf32, #tpu.memory_space<vmem>>, vector<4x8x128xf32>
    %49 = vector.shape_cast %48 : vector<4x8x128xf32> to vector<32x128xf32>
    %50 = arith.truncf %49 : vector<32x128xf32> to vector<32x128xbf16>
    %c0_39 = arith.constant 0 : index
    %c128 = arith.constant 128 : index
    %51 = vector.load %arg11[%c0_39, %c128] : memref<32x1152xbf16, #tpu.memory_space<vmem>>, vector<32x128xbf16>
    tpu.vector_store %arg11[%c0_39, %c128], %50 {strides = array<i32>} : memref<32x1152xbf16, #tpu.memory_space<vmem>>, vector<32x128xbf16>,
    %c0_40 = arith.constant 0 : index
    %c9 = arith.constant 9 : index
    %c0_41 = arith.constant 0 : index
    %52 = vector.load %arg10[%c0_40, %c9, %c0_41] : memref<6x17x128xf32, #tpu.memory_space<vmem>>, vector<4x8x128xf32>
    %53 = vector.shape_cast %52 : vector<4x8x128xf32> to vector<32x128xf32>
    %54 = arith.truncf %53 : vector<32x128xf32> to vector<32x128xbf16>
    %c0_42 = arith.constant 0 : index
    %c256 = arith.constant 256 : index
    %55 = vector.load %arg11[%c0_42, %c256] : memref<32x1152xbf16, #tpu.memory_space<vmem>>, vector<32x128xbf16>
    tpu.vector_store %arg11[%c0_42, %c256], %54 {strides = array<i32>} : memref<32x1152xbf16, #tpu.memory_space<vmem>>, vector<32x128xbf16>,
    %c1_43 = arith.constant 1 : index
    %c7_44 = arith.constant 7 : index
    %c0_45 = arith.constant 0 : index
    %56 = vector.load %arg10[%c1_43, %c7_44, %c0_45] : memref<6x17x128xf32, #tpu.memory_space<vmem>>, vector<4x8x128xf32>
    %57 = vector.shape_cast %56 : vector<4x8x128xf32> to vector<32x128xf32>
    %58 = arith.truncf %57 : vector<32x128xf32> to vector<32x128xbf16>
    %c0_46 = arith.constant 0 : index
    %c384 = arith.constant 384 : index
    %59 = vector.load %arg11[%c0_46, %c384] : memref<32x1152xbf16, #tpu.memory_space<vmem>>, vector<32x128xbf16>
    tpu.vector_store %arg11[%c0_46, %c384], %58 {strides = array<i32>} : memref<32x1152xbf16, #tpu.memory_space<vmem>>, vector<32x128xbf16>,
    %c1_47 = arith.constant 1 : index
    %c8_48 = arith.constant 8 : index
    %c0_49 = arith.constant 0 : index
    %60 = vector.load %arg10[%c1_47, %c8_48, %c0_49] : memref<6x17x128xf32, #tpu.memory_space<vmem>>, vector<4x8x128xf32>
    %61 = vector.shape_cast %60 : vector<4x8x128xf32> to vector<32x128xf32>
    %62 = arith.truncf %61 : vector<32x128xf32> to vector<32x128xbf16>
    %c0_50 = arith.constant 0 : index
    %c512 = arith.constant 512 : index
    %63 = vector.load %arg11[%c0_50, %c512] : memref<32x1152xbf16, #tpu.memory_space<vmem>>, vector<32x128xbf16>
    tpu.vector_store %arg11[%c0_50, %c512], %62 {strides = array<i32>} : memref<32x1152xbf16, #tpu.memory_space<vmem>>, vector<32x128xbf16>,
    %c1_51 = arith.constant 1 : index
    %c9_52 = arith.constant 9 : index
    %c0_53 = arith.constant 0 : index
    %64 = vector.load %arg10[%c1_51, %c9_52, %c0_53] : memref<6x17x128xf32, #tpu.memory_space<vmem>>, vector<4x8x128xf32>
    %65 = vector.shape_cast %64 : vector<4x8x128xf32> to vector<32x128xf32>
    %66 = arith.truncf %65 : vector<32x128xf32> to vector<32x128xbf16>
    %c0_54 = arith.constant 0 : index
    %c640 = arith.constant 640 : index
    %67 = vector.load %arg11[%c0_54, %c640] : memref<32x1152xbf16, #tpu.memory_space<vmem>>, vector<32x128xbf16>
    tpu.vector_store %arg11[%c0_54, %c640], %66 {strides = array<i32>} : memref<32x1152xbf16, #tpu.memory_space<vmem>>, vector<32x128xbf16>,
    %c2 = arith.constant 2 : index
    %c7_55 = arith.constant 7 : index
    %c0_56 = arith.constant 0 : index
    %68 = vector.load %arg10[%c2, %c7_55, %c0_56] : memref<6x17x128xf32, #tpu.memory_space<vmem>>, vector<4x8x128xf32>
    %69 = vector.shape_cast %68 : vector<4x8x128xf32> to vector<32x128xf32>
    %70 = arith.truncf %69 : vector<32x128xf32> to vector<32x128xbf16>
    %c0_57 = arith.constant 0 : index
    %c768 = arith.constant 768 : index
    %71 = vector.load %arg11[%c0_57, %c768] : memref<32x1152xbf16, #tpu.memory_space<vmem>>, vector<32x128xbf16>
    tpu.vector_store %arg11[%c0_57, %c768], %70 {strides = array<i32>} : memref<32x1152xbf16, #tpu.memory_space<vmem>>, vector<32x128xbf16>,
    %c2_58 = arith.constant 2 : index
    %c8_59 = arith.constant 8 : index
    %c0_60 = arith.constant 0 : index
    %72 = vector.load %arg10[%c2_58, %c8_59, %c0_60] : memref<6x17x128xf32, #tpu.memory_space<vmem>>, vector<4x8x128xf32>
    %73 = vector.shape_cast %72 : vector<4x8x128xf32> to vector<32x128xf32>
    %74 = arith.truncf %73 : vector<32x128xf32> to vector<32x128xbf16>
    %c0_61 = arith.constant 0 : index
    %c896 = arith.constant 896 : index
    %75 = vector.load %arg11[%c0_61, %c896] : memref<32x1152xbf16, #tpu.memory_space<vmem>>, vector<32x128xbf16>
    tpu.vector_store %arg11[%c0_61, %c896], %74 {strides = array<i32>} : memref<32x1152xbf16, #tpu.memory_space<vmem>>, vector<32x128xbf16>,
    %c2_62 = arith.constant 2 : index
    %c9_63 = arith.constant 9 : index
    %c0_64 = arith.constant 0 : index
    %76 = vector.load %arg10[%c2_62, %c9_63, %c0_64] : memref<6x17x128xf32, #tpu.memory_space<vmem>>, vector<4x8x128xf32>
    %77 = vector.shape_cast %76 : vector<4x8x128xf32> to vector<32x128xf32>
    %78 = arith.truncf %77 : vector<32x128xf32> to vector<32x128xbf16>
    %c0_65 = arith.constant 0 : index
    %c1024 = arith.constant 1024 : index
    %79 = vector.load %arg11[%c0_65, %c1024] : memref<32x1152xbf16, #tpu.memory_space<vmem>>, vector<32x128xbf16>
    tpu.vector_store %arg11[%c0_65, %c1024], %78 {strides = array<i32>} : memref<32x1152xbf16, #tpu.memory_space<vmem>>, vector<32x128xbf16>,
    %c0_66 = arith.constant 0 : index
    %c0_67 = arith.constant 0 : index
    %80 = vector.load %arg11[%c0_66, %c0_67] : memref<32x1152xbf16, #tpu.memory_space<vmem>>, vector<32x1152xbf16>
    %c0_68 = arith.constant 0 : index
    %c0_69 = arith.constant 0 : index
    %81 = vector.load %arg6[%c0_68, %c0_69] : memref<1152x128xbf16, #tpu.memory_space<vmem>>, vector<1152x128xbf16>
    %cst_70 = arith.constant dense<0.000000e+00> : vector<32x128xf32>
    %82 = tpu.matmul %80, %81, %cst_70 {dimension_numbers = #tpu.dot_dimension_numbers<[1], [0], [0], [1], [0, 0, 1, 1], [], []>} : vector<32x1152xbf16>, vector<1152x128xbf16>, vector<32x128xf32> -> vector<32x128xf32>
    %c0_71 = arith.constant 0 : index
    %c0_72 = arith.constant 0 : index
    %83 = vector.load %arg7[%c0_71, %c0_72] : memref<1x128xf32, #tpu.memory_space<vmem>>, vector<1x128xf32>
    %84 = vector.broadcast %83 : vector<1x128xf32> to vector<32x128xf32>
    %85 = arith.addf %82, %84 : vector<32x128xf32>
    %c0_73 = arith.constant 0 : index
    %c0_74 = arith.constant 0 : index
    %c0_75 = arith.constant 0 : index
    %86 = vector.load %arg8[%c0_73, %c0_74, %c0_75] : memref<1x32x128xf32, #tpu.memory_space<vmem>>, vector<1x32x128xf32>
    %87 = vector.shape_cast %86 : vector<1x32x128xf32> to vector<32x128xf32>
    %88 = vector.shape_cast %85 : vector<32x128xf32> to vector<1x32x128xf32>
    tpu.vector_store %arg8[%c0_73, %c0_74, %c0_75], %88 {strides = array<i32>} : memref<1x32x128xf32, #tpu.memory_space<vmem>>, vector<1x32x128xf32>,
    %cst_76 = arith.constant dense<0.000000e+00> : vector<128xf32>
    %89 = vector.multi_reduction <add>, %85, %cst_76 [0] : vector<32x128xf32> to vector<128xf32>
    %90 = vector.shape_cast %89 : vector<128xf32> to vector<1x128xf32>
    %91 = arith.mulf %85, %85 : vector<32x128xf32>
    %cst_77 = arith.constant dense<0.000000e+00> : vector<128xf32>
    %92 = vector.multi_reduction <add>, %91, %cst_77 [0] : vector<32x128xf32> to vector<128xf32>
    %93 = vector.shape_cast %92 : vector<128xf32> to vector<1x128xf32>
    %94 = tpu.concatenate %90, %93 in 0 : vector<1x128xf32>, vector<1x128xf32> -> vector<2x128xf32>
    %c0_78 = arith.constant 0 : index
    %c0_79 = arith.constant 0 : index
    %c0_80 = arith.constant 0 : index
    %95 = vector.load %arg9[%c0_78, %c0_79, %c0_80] : memref<1x2x128xf32, #tpu.memory_space<vmem>>, vector<1x2x128xf32>
    %96 = vector.shape_cast %95 : vector<1x2x128xf32> to vector<2x128xf32>
    %97 = vector.shape_cast %94 : vector<2x128xf32> to vector<1x2x128xf32>
    tpu.vector_store %arg9[%c0_78, %c0_79, %c0_80], %97 {strides = array<i32>} : memref<1x2x128xf32, #tpu.memory_space<vmem>>, vector<1x2x128xf32>,
    return
  }
  func.func @transform_0(%arg0: i32) -> (i32, i32, i32) {
    %c0_i32 = arith.constant 0 : i32
    %c0_i32_0 = arith.constant 0 : i32
    %c0_i32_1 = arith.constant 0 : i32
    return %arg0, %c0_i32, %c0_i32_0 : i32, i32, i32
  }
  func.func @transform_1(%arg0: i32) -> (i32, i32, i32) {
    %c0_i32 = arith.constant 0 : i32
    %c0_i32_0 = arith.constant 0 : i32
    %c0_i32_1 = arith.constant 0 : i32
    %c0_i32_2 = arith.constant 0 : i32
    return %c0_i32, %c0_i32_0, %c0_i32_1 : i32, i32, i32
  }
  func.func @transform_2(%arg0: i32) -> (i32, i32) {
    %c0_i32 = arith.constant 0 : i32
    %c0_i32_0 = arith.constant 0 : i32
    %c0_i32_1 = arith.constant 0 : i32
    return %c0_i32, %c0_i32_0 : i32, i32
  }
  func.func @transform_3(%arg0: i32) -> (i32, i32) {
    %c0_i32 = arith.constant 0 : i32
    %c0_i32_0 = arith.constant 0 : i32
    %c0_i32_1 = arith.constant 0 : i32
    return %c0_i32, %c0_i32_0 : i32, i32
  }
  func.func @transform_4(%arg0: i32) -> (i32, i32) {
    %c0_i32 = arith.constant 0 : i32
    %c0_i32_0 = arith.constant 0 : i32
    %c0_i32_1 = arith.constant 0 : i32
    return %c0_i32, %c0_i32_0 : i32, i32
  }
  func.func @transform_5(%arg0: i32) -> (i32, i32) {
    %c0_i32 = arith.constant 0 : i32
    %c0_i32_0 = arith.constant 0 : i32
    %c0_i32_1 = arith.constant 0 : i32
    return %c0_i32, %c0_i32_0 : i32, i32
  }
  func.func @transform_6(%arg0: i32) -> (i32, i32) {
    %c0_i32 = arith.constant 0 : i32
    %c0_i32_0 = arith.constant 0 : i32
    %c0_i32_1 = arith.constant 0 : i32
    return %c0_i32, %c0_i32_0 : i32, i32
  }
  func.func @transform_7(%arg0: i32) -> (i32, i32, i32) {
    %c0_i32 = arith.constant 0 : i32
    %c0_i32_0 = arith.constant 0 : i32
    %c0_i32_1 = arith.constant 0 : i32
    return %arg0, %c0_i32, %c0_i32_0 : i32, i32, i32
  }
  func.func @transform_8(%arg0: i32) -> (i32, i32, i32) {
    %c0_i32 = arith.constant 0 : i32
    %c0_i32_0 = arith.constant 0 : i32
    %c0_i32_1 = arith.constant 0 : i32
    return %arg0, %c0_i32, %c0_i32_0 : i32, i32, i32
  }
}

module attributes {stable_mosaic.version = 11 : i64} {
  func.func @_dual_conv_kernel(%arg0: i32, %arg1: memref<1x32x128xf32, #tpu.memory_space<vmem>>, %arg2: memref<128x128xbf16, #tpu.memory_space<vmem>>, %arg3: memref<1x128xf32, #tpu.memory_space<vmem>>, %arg4: memref<1152x128xbf16, #tpu.memory_space<vmem>>, %arg5: memref<1x128xf32, #tpu.memory_space<vmem>>, %arg6: memref<1x32x128xf32, #tpu.memory_space<vmem>>, %arg7: memref<1x32x128xf32, #tpu.memory_space<vmem>>, %arg8: memref<1x2x128xf32, #tpu.memory_space<vmem>>, %arg9: memref<1x2x128xf32, #tpu.memory_space<vmem>>, %arg10: memref<6x17x128xf32, #tpu.memory_space<vmem>>, %arg11: memref<32x1152xbf16, #tpu.memory_space<vmem>>) attributes {dimension_semantics = [#tpu.dimension_semantics<parallel>], iteration_bounds = array<i64: 2>, scalar_prefetch = 0 : i64, scratch_operands = 2 : i64, tpu.core_type = #tpu.core_type<tc>, window_params = [{transform_indices = @transform_0, window_bounds = array<i64: 1, 32, 128>}, {pipeline_mode = #tpu.pipeline_mode<synchronous>, transform_indices = @transform_1, window_bounds = array<i64: 128, 128>}, {pipeline_mode = #tpu.pipeline_mode<synchronous>, transform_indices = @transform_2, window_bounds = array<i64: 1, 128>}, {pipeline_mode = #tpu.pipeline_mode<synchronous>, transform_indices = @transform_3, window_bounds = array<i64: 1152, 128>}, {pipeline_mode = #tpu.pipeline_mode<synchronous>, transform_indices = @transform_4, window_bounds = array<i64: 1, 128>}, {transform_indices = @transform_5, window_bounds = array<i64: 1, 32, 128>}, {transform_indices = @transform_6, window_bounds = array<i64: 1, 32, 128>}, {transform_indices = @transform_7, window_bounds = array<i64: 1, 2, 128>}, {transform_indices = @transform_8, window_bounds = array<i64: 1, 2, 128>}]} {
    %c0 = arith.constant 0 : index
    %c0_0 = arith.constant 0 : index
    %c0_1 = arith.constant 0 : index
    %0 = vector.load %arg1[%c0, %c0_0, %c0_1] : memref<1x32x128xf32, #tpu.memory_space<vmem>>, vector<1x32x128xf32>
    %1 = vector.shape_cast %0 : vector<1x32x128xf32> to vector<32x128xf32>
    %2 = arith.truncf %1 : vector<32x128xf32> to vector<32x128xbf16>
    %c0_2 = arith.constant 0 : index
    %c0_3 = arith.constant 0 : index
    %3 = vector.load %arg2[%c0_2, %c0_3] : memref<128x128xbf16, #tpu.memory_space<vmem>>, vector<128x128xbf16>
    %cst = arith.constant dense<0.000000e+00> : vector<32x128xf32>
    %4 = tpu.matmul %2, %3, %cst {dimension_numbers = #tpu.dot_dimension_numbers<[1], [0], [0], [1], [0, 0, 1, 1], [], []>} : vector<32x128xbf16>, vector<128x128xbf16>, vector<32x128xf32> -> vector<32x128xf32>
    %c0_4 = arith.constant 0 : index
    %c0_5 = arith.constant 0 : index
    %5 = vector.load %arg3[%c0_4, %c0_5] : memref<1x128xf32, #tpu.memory_space<vmem>>, vector<1x128xf32>
    %6 = vector.broadcast %5 : vector<1x128xf32> to vector<32x128xf32>
    %7 = arith.addf %4, %6 : vector<32x128xf32>
    %c0_6 = arith.constant 0 : index
    %c0_7 = arith.constant 0 : index
    %c0_8 = arith.constant 0 : index
    %8 = vector.load %arg6[%c0_6, %c0_7, %c0_8] : memref<1x32x128xf32, #tpu.memory_space<vmem>>, vector<1x32x128xf32>
    %9 = vector.shape_cast %8 : vector<1x32x128xf32> to vector<32x128xf32>
    %10 = vector.shape_cast %7 : vector<32x128xf32> to vector<1x32x128xf32>
    tpu.vector_store %arg6[%c0_6, %c0_7, %c0_8], %10 {strides = array<i32>} : memref<1x32x128xf32, #tpu.memory_space<vmem>>, vector<1x32x128xf32>,
    %cst_9 = arith.constant dense<0.000000e+00> : vector<128xf32>
    %11 = vector.multi_reduction <add>, %7, %cst_9 [0] : vector<32x128xf32> to vector<128xf32>
    %12 = vector.shape_cast %11 : vector<128xf32> to vector<1x128xf32>
    %13 = arith.mulf %7, %7 : vector<32x128xf32>
    %cst_10 = arith.constant dense<0.000000e+00> : vector<128xf32>
    %14 = vector.multi_reduction <add>, %13, %cst_10 [0] : vector<32x128xf32> to vector<128xf32>
    %15 = vector.shape_cast %14 : vector<128xf32> to vector<1x128xf32>
    %16 = tpu.concatenate %12, %15 in 0 : vector<1x128xf32>, vector<1x128xf32> -> vector<2x128xf32>
    %c0_11 = arith.constant 0 : index
    %c0_12 = arith.constant 0 : index
    %c0_13 = arith.constant 0 : index
    %17 = vector.load %arg8[%c0_11, %c0_12, %c0_13] : memref<1x2x128xf32, #tpu.memory_space<vmem>>, vector<1x2x128xf32>
    %18 = vector.shape_cast %17 : vector<1x2x128xf32> to vector<2x128xf32>
    %19 = vector.shape_cast %16 : vector<2x128xf32> to vector<1x2x128xf32>
    tpu.vector_store %arg8[%c0_11, %c0_12, %c0_13], %19 {strides = array<i32>} : memref<1x2x128xf32, #tpu.memory_space<vmem>>, vector<1x2x128xf32>,
    %cst_14 = arith.constant 0.000000e+00 : f32
    %20 = vector.broadcast %cst_14 : f32 to vector<1x17x128xf32>
    %cst_15 = arith.constant 0.000000e+00 : f32
    %21 = vector.broadcast %cst_15 : f32 to vector<4x1x128xf32>
    %c0_16 = arith.constant 0 : index
    %c0_17 = arith.constant 0 : index
    %c0_18 = arith.constant 0 : index
    %22 = vector.load %arg10[%c0_16, %c0_17, %c0_18] : memref<6x17x128xf32, #tpu.memory_space<vmem>>, vector<1x17x128xf32>
    tpu.vector_store %arg10[%c0_16, %c0_17, %c0_18], %20 {strides = array<i32>} : memref<6x17x128xf32, #tpu.memory_space<vmem>>, vector<1x17x128xf32>,
    %c5 = arith.constant 5 : index
    %c0_19 = arith.constant 0 : index
    %c0_20 = arith.constant 0 : index
    %23 = vector.load %arg10[%c5, %c0_19, %c0_20] : memref<6x17x128xf32, #tpu.memory_space<vmem>>, vector<1x17x128xf32>
    tpu.vector_store %arg10[%c5, %c0_19, %c0_20], %20 {strides = array<i32>} : memref<6x17x128xf32, #tpu.memory_space<vmem>>, vector<1x17x128xf32>,
    %c1 = arith.constant 1 : index
    %c7 = arith.constant 7 : index
    %c0_21 = arith.constant 0 : index
    %24 = vector.load %arg10[%c1, %c7, %c0_21] : memref<6x17x128xf32, #tpu.memory_space<vmem>>, vector<4x1x128xf32>
    tpu.vector_store %arg10[%c1, %c7, %c0_21], %21 {strides = array<i32>} : memref<6x17x128xf32, #tpu.memory_space<vmem>>, vector<4x1x128xf32>,
    %c1_22 = arith.constant 1 : index
    %c16 = arith.constant 16 : index
    %c0_23 = arith.constant 0 : index
    %25 = vector.load %arg10[%c1_22, %c16, %c0_23] : memref<6x17x128xf32, #tpu.memory_space<vmem>>, vector<4x1x128xf32>
    tpu.vector_store %arg10[%c1_22, %c16, %c0_23], %21 {strides = array<i32>} : memref<6x17x128xf32, #tpu.memory_space<vmem>>, vector<4x1x128xf32>,
    %26 = vector.shape_cast %1 : vector<32x128xf32> to vector<4x8x128xf32>
    %c1_24 = arith.constant 1 : index
    %c8 = arith.constant 8 : index
    %c0_25 = arith.constant 0 : index
    %27 = vector.load %arg10[%c1_24, %c8, %c0_25] : memref<6x17x128xf32, #tpu.memory_space<vmem>>, vector<4x8x128xf32>
    tpu.vector_store %arg10[%c1_24, %c8, %c0_25], %26 {strides = array<i32>} : memref<6x17x128xf32, #tpu.memory_space<vmem>>, vector<4x8x128xf32>,
    %c0_26 = arith.constant 0 : index
    %c7_27 = arith.constant 7 : index
    %c0_28 = arith.constant 0 : index
    %28 = vector.load %arg10[%c0_26, %c7_27, %c0_28] : memref<6x17x128xf32, #tpu.memory_space<vmem>>, vector<4x8x128xf32>
    %29 = vector.shape_cast %28 : vector<4x8x128xf32> to vector<32x128xf32>
    %30 = arith.truncf %29 : vector<32x128xf32> to vector<32x128xbf16>
    %c0_29 = arith.constant 0 : index
    %c0_30 = arith.constant 0 : index
    %31 = vector.load %arg11[%c0_29, %c0_30] : memref<32x1152xbf16, #tpu.memory_space<vmem>>, vector<32x128xbf16>
    tpu.vector_store %arg11[%c0_29, %c0_30], %30 {strides = array<i32>} : memref<32x1152xbf16, #tpu.memory_space<vmem>>, vector<32x128xbf16>,
    %c0_31 = arith.constant 0 : index
    %c8_32 = arith.constant 8 : index
    %c0_33 = arith.constant 0 : index
    %32 = vector.load %arg10[%c0_31, %c8_32, %c0_33] : memref<6x17x128xf32, #tpu.memory_space<vmem>>, vector<4x8x128xf32>
    %33 = vector.shape_cast %32 : vector<4x8x128xf32> to vector<32x128xf32>
    %34 = arith.truncf %33 : vector<32x128xf32> to vector<32x128xbf16>
    %c0_34 = arith.constant 0 : index
    %c128 = arith.constant 128 : index
    %35 = vector.load %arg11[%c0_34, %c128] : memref<32x1152xbf16, #tpu.memory_space<vmem>>, vector<32x128xbf16>
    tpu.vector_store %arg11[%c0_34, %c128], %34 {strides = array<i32>} : memref<32x1152xbf16, #tpu.memory_space<vmem>>, vector<32x128xbf16>,
    %c0_35 = arith.constant 0 : index
    %c9 = arith.constant 9 : index
    %c0_36 = arith.constant 0 : index
    %36 = vector.load %arg10[%c0_35, %c9, %c0_36] : memref<6x17x128xf32, #tpu.memory_space<vmem>>, vector<4x8x128xf32>
    %37 = vector.shape_cast %36 : vector<4x8x128xf32> to vector<32x128xf32>
    %38 = arith.truncf %37 : vector<32x128xf32> to vector<32x128xbf16>
    %c0_37 = arith.constant 0 : index
    %c256 = arith.constant 256 : index
    %39 = vector.load %arg11[%c0_37, %c256] : memref<32x1152xbf16, #tpu.memory_space<vmem>>, vector<32x128xbf16>
    tpu.vector_store %arg11[%c0_37, %c256], %38 {strides = array<i32>} : memref<32x1152xbf16, #tpu.memory_space<vmem>>, vector<32x128xbf16>,
    %c1_38 = arith.constant 1 : index
    %c7_39 = arith.constant 7 : index
    %c0_40 = arith.constant 0 : index
    %40 = vector.load %arg10[%c1_38, %c7_39, %c0_40] : memref<6x17x128xf32, #tpu.memory_space<vmem>>, vector<4x8x128xf32>
    %41 = vector.shape_cast %40 : vector<4x8x128xf32> to vector<32x128xf32>
    %42 = arith.truncf %41 : vector<32x128xf32> to vector<32x128xbf16>
    %c0_41 = arith.constant 0 : index
    %c384 = arith.constant 384 : index
    %43 = vector.load %arg11[%c0_41, %c384] : memref<32x1152xbf16, #tpu.memory_space<vmem>>, vector<32x128xbf16>
    tpu.vector_store %arg11[%c0_41, %c384], %42 {strides = array<i32>} : memref<32x1152xbf16, #tpu.memory_space<vmem>>, vector<32x128xbf16>,
    %c1_42 = arith.constant 1 : index
    %c8_43 = arith.constant 8 : index
    %c0_44 = arith.constant 0 : index
    %44 = vector.load %arg10[%c1_42, %c8_43, %c0_44] : memref<6x17x128xf32, #tpu.memory_space<vmem>>, vector<4x8x128xf32>
    %45 = vector.shape_cast %44 : vector<4x8x128xf32> to vector<32x128xf32>
    %46 = arith.truncf %45 : vector<32x128xf32> to vector<32x128xbf16>
    %c0_45 = arith.constant 0 : index
    %c512 = arith.constant 512 : index
    %47 = vector.load %arg11[%c0_45, %c512] : memref<32x1152xbf16, #tpu.memory_space<vmem>>, vector<32x128xbf16>
    tpu.vector_store %arg11[%c0_45, %c512], %46 {strides = array<i32>} : memref<32x1152xbf16, #tpu.memory_space<vmem>>, vector<32x128xbf16>,
    %c1_46 = arith.constant 1 : index
    %c9_47 = arith.constant 9 : index
    %c0_48 = arith.constant 0 : index
    %48 = vector.load %arg10[%c1_46, %c9_47, %c0_48] : memref<6x17x128xf32, #tpu.memory_space<vmem>>, vector<4x8x128xf32>
    %49 = vector.shape_cast %48 : vector<4x8x128xf32> to vector<32x128xf32>
    %50 = arith.truncf %49 : vector<32x128xf32> to vector<32x128xbf16>
    %c0_49 = arith.constant 0 : index
    %c640 = arith.constant 640 : index
    %51 = vector.load %arg11[%c0_49, %c640] : memref<32x1152xbf16, #tpu.memory_space<vmem>>, vector<32x128xbf16>
    tpu.vector_store %arg11[%c0_49, %c640], %50 {strides = array<i32>} : memref<32x1152xbf16, #tpu.memory_space<vmem>>, vector<32x128xbf16>,
    %c2 = arith.constant 2 : index
    %c7_50 = arith.constant 7 : index
    %c0_51 = arith.constant 0 : index
    %52 = vector.load %arg10[%c2, %c7_50, %c0_51] : memref<6x17x128xf32, #tpu.memory_space<vmem>>, vector<4x8x128xf32>
    %53 = vector.shape_cast %52 : vector<4x8x128xf32> to vector<32x128xf32>
    %54 = arith.truncf %53 : vector<32x128xf32> to vector<32x128xbf16>
    %c0_52 = arith.constant 0 : index
    %c768 = arith.constant 768 : index
    %55 = vector.load %arg11[%c0_52, %c768] : memref<32x1152xbf16, #tpu.memory_space<vmem>>, vector<32x128xbf16>
    tpu.vector_store %arg11[%c0_52, %c768], %54 {strides = array<i32>} : memref<32x1152xbf16, #tpu.memory_space<vmem>>, vector<32x128xbf16>,
    %c2_53 = arith.constant 2 : index
    %c8_54 = arith.constant 8 : index
    %c0_55 = arith.constant 0 : index
    %56 = vector.load %arg10[%c2_53, %c8_54, %c0_55] : memref<6x17x128xf32, #tpu.memory_space<vmem>>, vector<4x8x128xf32>
    %57 = vector.shape_cast %56 : vector<4x8x128xf32> to vector<32x128xf32>
    %58 = arith.truncf %57 : vector<32x128xf32> to vector<32x128xbf16>
    %c0_56 = arith.constant 0 : index
    %c896 = arith.constant 896 : index
    %59 = vector.load %arg11[%c0_56, %c896] : memref<32x1152xbf16, #tpu.memory_space<vmem>>, vector<32x128xbf16>
    tpu.vector_store %arg11[%c0_56, %c896], %58 {strides = array<i32>} : memref<32x1152xbf16, #tpu.memory_space<vmem>>, vector<32x128xbf16>,
    %c2_57 = arith.constant 2 : index
    %c9_58 = arith.constant 9 : index
    %c0_59 = arith.constant 0 : index
    %60 = vector.load %arg10[%c2_57, %c9_58, %c0_59] : memref<6x17x128xf32, #tpu.memory_space<vmem>>, vector<4x8x128xf32>
    %61 = vector.shape_cast %60 : vector<4x8x128xf32> to vector<32x128xf32>
    %62 = arith.truncf %61 : vector<32x128xf32> to vector<32x128xbf16>
    %c0_60 = arith.constant 0 : index
    %c1024 = arith.constant 1024 : index
    %63 = vector.load %arg11[%c0_60, %c1024] : memref<32x1152xbf16, #tpu.memory_space<vmem>>, vector<32x128xbf16>
    tpu.vector_store %arg11[%c0_60, %c1024], %62 {strides = array<i32>} : memref<32x1152xbf16, #tpu.memory_space<vmem>>, vector<32x128xbf16>,
    %c0_61 = arith.constant 0 : index
    %c0_62 = arith.constant 0 : index
    %64 = vector.load %arg11[%c0_61, %c0_62] : memref<32x1152xbf16, #tpu.memory_space<vmem>>, vector<32x1152xbf16>
    %c0_63 = arith.constant 0 : index
    %c0_64 = arith.constant 0 : index
    %65 = vector.load %arg4[%c0_63, %c0_64] : memref<1152x128xbf16, #tpu.memory_space<vmem>>, vector<1152x128xbf16>
    %cst_65 = arith.constant dense<0.000000e+00> : vector<32x128xf32>
    %66 = tpu.matmul %64, %65, %cst_65 {dimension_numbers = #tpu.dot_dimension_numbers<[1], [0], [0], [1], [0, 0, 1, 1], [], []>} : vector<32x1152xbf16>, vector<1152x128xbf16>, vector<32x128xf32> -> vector<32x128xf32>
    %c0_66 = arith.constant 0 : index
    %c0_67 = arith.constant 0 : index
    %67 = vector.load %arg5[%c0_66, %c0_67] : memref<1x128xf32, #tpu.memory_space<vmem>>, vector<1x128xf32>
    %68 = vector.broadcast %67 : vector<1x128xf32> to vector<32x128xf32>
    %69 = arith.addf %66, %68 : vector<32x128xf32>
    %c0_68 = arith.constant 0 : index
    %c0_69 = arith.constant 0 : index
    %c0_70 = arith.constant 0 : index
    %70 = vector.load %arg7[%c0_68, %c0_69, %c0_70] : memref<1x32x128xf32, #tpu.memory_space<vmem>>, vector<1x32x128xf32>
    %71 = vector.shape_cast %70 : vector<1x32x128xf32> to vector<32x128xf32>
    %72 = vector.shape_cast %69 : vector<32x128xf32> to vector<1x32x128xf32>
    tpu.vector_store %arg7[%c0_68, %c0_69, %c0_70], %72 {strides = array<i32>} : memref<1x32x128xf32, #tpu.memory_space<vmem>>, vector<1x32x128xf32>,
    %cst_71 = arith.constant dense<0.000000e+00> : vector<128xf32>
    %73 = vector.multi_reduction <add>, %69, %cst_71 [0] : vector<32x128xf32> to vector<128xf32>
    %74 = vector.shape_cast %73 : vector<128xf32> to vector<1x128xf32>
    %75 = arith.mulf %69, %69 : vector<32x128xf32>
    %cst_72 = arith.constant dense<0.000000e+00> : vector<128xf32>
    %76 = vector.multi_reduction <add>, %75, %cst_72 [0] : vector<32x128xf32> to vector<128xf32>
    %77 = vector.shape_cast %76 : vector<128xf32> to vector<1x128xf32>
    %78 = tpu.concatenate %74, %77 in 0 : vector<1x128xf32>, vector<1x128xf32> -> vector<2x128xf32>
    %c0_73 = arith.constant 0 : index
    %c0_74 = arith.constant 0 : index
    %c0_75 = arith.constant 0 : index
    %79 = vector.load %arg9[%c0_73, %c0_74, %c0_75] : memref<1x2x128xf32, #tpu.memory_space<vmem>>, vector<1x2x128xf32>
    %80 = vector.shape_cast %79 : vector<1x2x128xf32> to vector<2x128xf32>
    %81 = vector.shape_cast %78 : vector<2x128xf32> to vector<1x2x128xf32>
    tpu.vector_store %arg9[%c0_73, %c0_74, %c0_75], %81 {strides = array<i32>} : memref<1x2x128xf32, #tpu.memory_space<vmem>>, vector<1x2x128xf32>,
    return
  }
  func.func @transform_0(%arg0: i32) -> (i32, i32, i32) {
    %c0_i32 = arith.constant 0 : i32
    %c0_i32_0 = arith.constant 0 : i32
    %c0_i32_1 = arith.constant 0 : i32
    return %arg0, %c0_i32, %c0_i32_0 : i32, i32, i32
  }
  func.func @transform_1(%arg0: i32) -> (i32, i32) {
    %c0_i32 = arith.constant 0 : i32
    %c0_i32_0 = arith.constant 0 : i32
    %c0_i32_1 = arith.constant 0 : i32
    return %c0_i32, %c0_i32_0 : i32, i32
  }
  func.func @transform_2(%arg0: i32) -> (i32, i32) {
    %c0_i32 = arith.constant 0 : i32
    %c0_i32_0 = arith.constant 0 : i32
    %c0_i32_1 = arith.constant 0 : i32
    return %c0_i32, %c0_i32_0 : i32, i32
  }
  func.func @transform_3(%arg0: i32) -> (i32, i32) {
    %c0_i32 = arith.constant 0 : i32
    %c0_i32_0 = arith.constant 0 : i32
    %c0_i32_1 = arith.constant 0 : i32
    return %c0_i32, %c0_i32_0 : i32, i32
  }
  func.func @transform_4(%arg0: i32) -> (i32, i32) {
    %c0_i32 = arith.constant 0 : i32
    %c0_i32_0 = arith.constant 0 : i32
    %c0_i32_1 = arith.constant 0 : i32
    return %c0_i32, %c0_i32_0 : i32, i32
  }
  func.func @transform_5(%arg0: i32) -> (i32, i32, i32) {
    %c0_i32 = arith.constant 0 : i32
    %c0_i32_0 = arith.constant 0 : i32
    %c0_i32_1 = arith.constant 0 : i32
    return %arg0, %c0_i32, %c0_i32_0 : i32, i32, i32
  }
  func.func @transform_6(%arg0: i32) -> (i32, i32, i32) {
    %c0_i32 = arith.constant 0 : i32
    %c0_i32_0 = arith.constant 0 : i32
    %c0_i32_1 = arith.constant 0 : i32
    return %arg0, %c0_i32, %c0_i32_0 : i32, i32, i32
  }
  func.func @transform_7(%arg0: i32) -> (i32, i32, i32) {
    %c0_i32 = arith.constant 0 : i32
    %c0_i32_0 = arith.constant 0 : i32
    %c0_i32_1 = arith.constant 0 : i32
    return %arg0, %c0_i32, %c0_i32_0 : i32, i32, i32
  }
  func.func @transform_8(%arg0: i32) -> (i32, i32, i32) {
    %c0_i32 = arith.constant 0 : i32
    %c0_i32_0 = arith.constant 0 : i32
    %c0_i32_1 = arith.constant 0 : i32
    return %arg0, %c0_i32, %c0_i32_0 : i32, i32, i32
  }
}

module attributes {stable_mosaic.version = 11 : i64} {
  func.func @_merge_conv_kernel(%arg0: i32, %arg1: memref<1x32x128xf32, #tpu.memory_space<vmem>>, %arg2: memref<1x32x128xf32, #tpu.memory_space<vmem>>, %arg3: memref<2x2x128xf32, #tpu.memory_space<vmem>>, %arg4: memref<1x128xf32, #tpu.memory_space<vmem>>, %arg5: memref<1x128xf32, #tpu.memory_space<vmem>>, %arg6: memref<2x2x128xf32, #tpu.memory_space<vmem>>, %arg7: memref<1x128xf32, #tpu.memory_space<vmem>>, %arg8: memref<1x128xf32, #tpu.memory_space<vmem>>, %arg9: memref<128x128xf32, #tpu.memory_space<vmem>>, %arg10: memref<1152x128xbf16, #tpu.memory_space<vmem>>, %arg11: memref<1x128xf32, #tpu.memory_space<vmem>>, %arg12: memref<1x32x128xf32, #tpu.memory_space<vmem>>, %arg13: memref<1x32x128xf32, #tpu.memory_space<vmem>>, %arg14: memref<1x2x128xf32, #tpu.memory_space<vmem>>, %arg15: memref<6x17x128xf32, #tpu.memory_space<vmem>>, %arg16: memref<32x1152xbf16, #tpu.memory_space<vmem>>) attributes {dimension_semantics = [#tpu.dimension_semantics<parallel>], iteration_bounds = array<i64: 2>, scalar_prefetch = 0 : i64, scratch_operands = 2 : i64, tpu.core_type = #tpu.core_type<tc>, window_params = [{transform_indices = @transform_0, window_bounds = array<i64: 1, 32, 128>}, {transform_indices = @transform_1, window_bounds = array<i64: 1, 32, 128>}, {pipeline_mode = #tpu.pipeline_mode<synchronous>, transform_indices = @transform_2, window_bounds = array<i64: 2, 2, 128>}, {pipeline_mode = #tpu.pipeline_mode<synchronous>, transform_indices = @transform_3, window_bounds = array<i64: 1, 128>}, {pipeline_mode = #tpu.pipeline_mode<synchronous>, transform_indices = @transform_4, window_bounds = array<i64: 1, 128>}, {pipeline_mode = #tpu.pipeline_mode<synchronous>, transform_indices = @transform_5, window_bounds = array<i64: 2, 2, 128>}, {pipeline_mode = #tpu.pipeline_mode<synchronous>, transform_indices = @transform_6, window_bounds = array<i64: 1, 128>}, {pipeline_mode = #tpu.pipeline_mode<synchronous>, transform_indices = @transform_7, window_bounds = array<i64: 1, 128>}, {pipeline_mode = #tpu.pipeline_mode<synchronous>, transform_indices = @transform_8, window_bounds = array<i64: 128, 128>}, {pipeline_mode = #tpu.pipeline_mode<synchronous>, transform_indices = @transform_9, window_bounds = array<i64: 1152, 128>}, {pipeline_mode = #tpu.pipeline_mode<synchronous>, transform_indices = @transform_10, window_bounds = array<i64: 1, 128>}, {transform_indices = @transform_11, window_bounds = array<i64: 1, 32, 128>}, {transform_indices = @transform_12, window_bounds = array<i64: 1, 32, 128>}, {transform_indices = @transform_13, window_bounds = array<i64: 1, 2, 128>}]} {
    %c0 = arith.constant 0 : index
    %c0_0 = arith.constant 0 : index
    %0 = vector.load %arg9[%c0, %c0_0] : memref<128x128xf32, #tpu.memory_space<vmem>>, vector<128x128xf32>
    %c0_1 = arith.constant 0 : index
    %c0_2 = arith.constant 0 : index
    %c0_3 = arith.constant 0 : index
    %1 = vector.load %arg3[%c0_1, %c0_2, %c0_3] : memref<2x2x128xf32, #tpu.memory_space<vmem>>, vector<2x2x128xf32>
    %c0_4 = arith.constant 0 : index
    %c0_5 = arith.constant 0 : index
    %2 = vector.load %arg4[%c0_4, %c0_5] : memref<1x128xf32, #tpu.memory_space<vmem>>, vector<1x128xf32>
    %c0_6 = arith.constant 0 : index
    %c0_7 = arith.constant 0 : index
    %3 = vector.load %arg5[%c0_6, %c0_7] : memref<1x128xf32, #tpu.memory_space<vmem>>, vector<1x128xf32>
    %cst = arith.constant dense<0.000000e+00> : vector<2x128xf32>
    %4 = vector.multi_reduction <add>, %1, %cst [0] : vector<2x2x128xf32> to vector<2x128xf32>
    %cst_8 = arith.constant dense<0.000000e+00> : vector<2x128xf32>
    %5 = tpu.matmul %4, %0, %cst_8 {dimension_numbers = #tpu.dot_dimension_numbers<[1], [0], [0], [1], [0, 0, 1, 1], [], []>} : vector<2x128xf32>, vector<128x128xf32>, vector<2x128xf32> -> vector<2x128xf32>
    %6 = vector.extract_strided_slice %5 {offsets = [0, 0], sizes = [1, 128], strides = [1, 1]} : vector<2x128xf32> to vector<1x128xf32>
    %cst_9 = arith.constant 5.120000e+02 : f32
    %7 = vector.broadcast %cst_9 : f32 to vector<1x128xf32>
    %8 = arith.divf %6, %7 : vector<1x128xf32>
    %9 = vector.extract_strided_slice %5 {offsets = [1, 0], sizes = [1, 128], strides = [1, 1]} : vector<2x128xf32> to vector<1x128xf32>
    %cst_10 = arith.constant 5.120000e+02 : f32
    %10 = vector.broadcast %cst_10 : f32 to vector<1x128xf32>
    %11 = arith.divf %9, %10 : vector<1x128xf32>
    %12 = arith.mulf %8, %8 : vector<1x128xf32>
    %13 = arith.subf %11, %12 : vector<1x128xf32>
    %cst_11 = arith.constant 0.000000e+00 : f32
    %14 = vector.broadcast %cst_11 : f32 to vector<1x128xf32>
    %15 = arith.maximumf %13, %14 : vector<1x128xf32>
    %cst_12 = arith.constant 9.99999974E-6 : f32
    %16 = vector.broadcast %cst_12 : f32 to vector<1x128xf32>
    %17 = arith.addf %15, %16 : vector<1x128xf32>
    %18 = math.rsqrt %17 : vector<1x128xf32>
    %19 = arith.mulf %2, %18 : vector<1x128xf32>
    %20 = arith.mulf %8, %19 : vector<1x128xf32>
    %21 = arith.subf %3, %20 : vector<1x128xf32>
    %c0_13 = arith.constant 0 : index
    %c0_14 = arith.constant 0 : index
    %c0_15 = arith.constant 0 : index
    %22 = vector.load %arg6[%c0_13, %c0_14, %c0_15] : memref<2x2x128xf32, #tpu.memory_space<vmem>>, vector<2x2x128xf32>
    %c0_16 = arith.constant 0 : index
    %c0_17 = arith.constant 0 : index
    %23 = vector.load %arg7[%c0_16, %c0_17] : memref<1x128xf32, #tpu.memory_space<vmem>>, vector<1x128xf32>
    %c0_18 = arith.constant 0 : index
    %c0_19 = arith.constant 0 : index
    %24 = vector.load %arg8[%c0_18, %c0_19] : memref<1x128xf32, #tpu.memory_space<vmem>>, vector<1x128xf32>
    %cst_20 = arith.constant dense<0.000000e+00> : vector<2x128xf32>
    %25 = vector.multi_reduction <add>, %22, %cst_20 [0] : vector<2x2x128xf32> to vector<2x128xf32>
    %cst_21 = arith.constant dense<0.000000e+00> : vector<2x128xf32>
    %26 = tpu.matmul %25, %0, %cst_21 {dimension_numbers = #tpu.dot_dimension_numbers<[1], [0], [0], [1], [0, 0, 1, 1], [], []>} : vector<2x128xf32>, vector<128x128xf32>, vector<2x128xf32> -> vector<2x128xf32>
    %27 = vector.extract_strided_slice %26 {offsets = [0, 0], sizes = [1, 128], strides = [1, 1]} : vector<2x128xf32> to vector<1x128xf32>
    %cst_22 = arith.constant 5.120000e+02 : f32
    %28 = vector.broadcast %cst_22 : f32 to vector<1x128xf32>
    %29 = arith.divf %27, %28 : vector<1x128xf32>
    %30 = vector.extract_strided_slice %26 {offsets = [1, 0], sizes = [1, 128], strides = [1, 1]} : vector<2x128xf32> to vector<1x128xf32>
    %cst_23 = arith.constant 5.120000e+02 : f32
    %31 = vector.broadcast %cst_23 : f32 to vector<1x128xf32>
    %32 = arith.divf %30, %31 : vector<1x128xf32>
    %33 = arith.mulf %29, %29 : vector<1x128xf32>
    %34 = arith.subf %32, %33 : vector<1x128xf32>
    %cst_24 = arith.constant 0.000000e+00 : f32
    %35 = vector.broadcast %cst_24 : f32 to vector<1x128xf32>
    %36 = arith.maximumf %34, %35 : vector<1x128xf32>
    %cst_25 = arith.constant 9.99999974E-6 : f32
    %37 = vector.broadcast %cst_25 : f32 to vector<1x128xf32>
    %38 = arith.addf %36, %37 : vector<1x128xf32>
    %39 = math.rsqrt %38 : vector<1x128xf32>
    %40 = arith.mulf %23, %39 : vector<1x128xf32>
    %41 = arith.mulf %29, %40 : vector<1x128xf32>
    %42 = arith.subf %24, %41 : vector<1x128xf32>
    %c0_26 = arith.constant 0 : index
    %c0_27 = arith.constant 0 : index
    %c0_28 = arith.constant 0 : index
    %43 = vector.load %arg1[%c0_26, %c0_27, %c0_28] : memref<1x32x128xf32, #tpu.memory_space<vmem>>, vector<1x32x128xf32>
    %44 = vector.shape_cast %43 : vector<1x32x128xf32> to vector<32x128xf32>
    %45 = vector.broadcast %19 : vector<1x128xf32> to vector<32x128xf32>
    %46 = arith.mulf %44, %45 : vector<32x128xf32>
    %47 = vector.broadcast %21 : vector<1x128xf32> to vector<32x128xf32>
    %48 = arith.addf %46, %47 : vector<32x128xf32>
    %c0_29 = arith.constant 0 : index
    %c0_30 = arith.constant 0 : index
    %c0_31 = arith.constant 0 : index
    %49 = vector.load %arg2[%c0_29, %c0_30, %c0_31] : memref<1x32x128xf32, #tpu.memory_space<vmem>>, vector<1x32x128xf32>
    %50 = vector.shape_cast %49 : vector<1x32x128xf32> to vector<32x128xf32>
    %51 = vector.broadcast %40 : vector<1x128xf32> to vector<32x128xf32>
    %52 = arith.mulf %50, %51 : vector<32x128xf32>
    %53 = arith.addf %48, %52 : vector<32x128xf32>
    %54 = vector.broadcast %42 : vector<1x128xf32> to vector<32x128xf32>
    %55 = arith.addf %53, %54 : vector<32x128xf32>
    %c0_32 = arith.constant 0 : index
    %c0_33 = arith.constant 0 : index
    %c0_34 = arith.constant 0 : index
    %56 = vector.load %arg12[%c0_32, %c0_33, %c0_34] : memref<1x32x128xf32, #tpu.memory_space<vmem>>, vector<1x32x128xf32>
    %57 = vector.shape_cast %56 : vector<1x32x128xf32> to vector<32x128xf32>
    %58 = vector.shape_cast %55 : vector<32x128xf32> to vector<1x32x128xf32>
    tpu.vector_store %arg12[%c0_32, %c0_33, %c0_34], %58 {strides = array<i32>} : memref<1x32x128xf32, #tpu.memory_space<vmem>>, vector<1x32x128xf32>,
    %cst_35 = arith.constant 0.000000e+00 : f32
    %59 = vector.broadcast %cst_35 : f32 to vector<1x17x128xf32>
    %cst_36 = arith.constant 0.000000e+00 : f32
    %60 = vector.broadcast %cst_36 : f32 to vector<4x1x128xf32>
    %c0_37 = arith.constant 0 : index
    %c0_38 = arith.constant 0 : index
    %c0_39 = arith.constant 0 : index
    %61 = vector.load %arg15[%c0_37, %c0_38, %c0_39] : memref<6x17x128xf32, #tpu.memory_space<vmem>>, vector<1x17x128xf32>
    tpu.vector_store %arg15[%c0_37, %c0_38, %c0_39], %59 {strides = array<i32>} : memref<6x17x128xf32, #tpu.memory_space<vmem>>, vector<1x17x128xf32>,
    %c5 = arith.constant 5 : index
    %c0_40 = arith.constant 0 : index
    %c0_41 = arith.constant 0 : index
    %62 = vector.load %arg15[%c5, %c0_40, %c0_41] : memref<6x17x128xf32, #tpu.memory_space<vmem>>, vector<1x17x128xf32>
    tpu.vector_store %arg15[%c5, %c0_40, %c0_41], %59 {strides = array<i32>} : memref<6x17x128xf32, #tpu.memory_space<vmem>>, vector<1x17x128xf32>,
    %c1 = arith.constant 1 : index
    %c7 = arith.constant 7 : index
    %c0_42 = arith.constant 0 : index
    %63 = vector.load %arg15[%c1, %c7, %c0_42] : memref<6x17x128xf32, #tpu.memory_space<vmem>>, vector<4x1x128xf32>
    tpu.vector_store %arg15[%c1, %c7, %c0_42], %60 {strides = array<i32>} : memref<6x17x128xf32, #tpu.memory_space<vmem>>, vector<4x1x128xf32>,
    %c1_43 = arith.constant 1 : index
    %c16 = arith.constant 16 : index
    %c0_44 = arith.constant 0 : index
    %64 = vector.load %arg15[%c1_43, %c16, %c0_44] : memref<6x17x128xf32, #tpu.memory_space<vmem>>, vector<4x1x128xf32>
    tpu.vector_store %arg15[%c1_43, %c16, %c0_44], %60 {strides = array<i32>} : memref<6x17x128xf32, #tpu.memory_space<vmem>>, vector<4x1x128xf32>,
    %65 = vector.shape_cast %55 : vector<32x128xf32> to vector<4x8x128xf32>
    %c1_45 = arith.constant 1 : index
    %c8 = arith.constant 8 : index
    %c0_46 = arith.constant 0 : index
    %66 = vector.load %arg15[%c1_45, %c8, %c0_46] : memref<6x17x128xf32, #tpu.memory_space<vmem>>, vector<4x8x128xf32>
    tpu.vector_store %arg15[%c1_45, %c8, %c0_46], %65 {strides = array<i32>} : memref<6x17x128xf32, #tpu.memory_space<vmem>>, vector<4x8x128xf32>,
    %c0_47 = arith.constant 0 : index
    %c7_48 = arith.constant 7 : index
    %c0_49 = arith.constant 0 : index
    %67 = vector.load %arg15[%c0_47, %c7_48, %c0_49] : memref<6x17x128xf32, #tpu.memory_space<vmem>>, vector<4x8x128xf32>
    %68 = vector.shape_cast %67 : vector<4x8x128xf32> to vector<32x128xf32>
    %69 = arith.truncf %68 : vector<32x128xf32> to vector<32x128xbf16>
    %c0_50 = arith.constant 0 : index
    %c0_51 = arith.constant 0 : index
    %70 = vector.load %arg16[%c0_50, %c0_51] : memref<32x1152xbf16, #tpu.memory_space<vmem>>, vector<32x128xbf16>
    tpu.vector_store %arg16[%c0_50, %c0_51], %69 {strides = array<i32>} : memref<32x1152xbf16, #tpu.memory_space<vmem>>, vector<32x128xbf16>,
    %c0_52 = arith.constant 0 : index
    %c8_53 = arith.constant 8 : index
    %c0_54 = arith.constant 0 : index
    %71 = vector.load %arg15[%c0_52, %c8_53, %c0_54] : memref<6x17x128xf32, #tpu.memory_space<vmem>>, vector<4x8x128xf32>
    %72 = vector.shape_cast %71 : vector<4x8x128xf32> to vector<32x128xf32>
    %73 = arith.truncf %72 : vector<32x128xf32> to vector<32x128xbf16>
    %c0_55 = arith.constant 0 : index
    %c128 = arith.constant 128 : index
    %74 = vector.load %arg16[%c0_55, %c128] : memref<32x1152xbf16, #tpu.memory_space<vmem>>, vector<32x128xbf16>
    tpu.vector_store %arg16[%c0_55, %c128], %73 {strides = array<i32>} : memref<32x1152xbf16, #tpu.memory_space<vmem>>, vector<32x128xbf16>,
    %c0_56 = arith.constant 0 : index
    %c9 = arith.constant 9 : index
    %c0_57 = arith.constant 0 : index
    %75 = vector.load %arg15[%c0_56, %c9, %c0_57] : memref<6x17x128xf32, #tpu.memory_space<vmem>>, vector<4x8x128xf32>
    %76 = vector.shape_cast %75 : vector<4x8x128xf32> to vector<32x128xf32>
    %77 = arith.truncf %76 : vector<32x128xf32> to vector<32x128xbf16>
    %c0_58 = arith.constant 0 : index
    %c256 = arith.constant 256 : index
    %78 = vector.load %arg16[%c0_58, %c256] : memref<32x1152xbf16, #tpu.memory_space<vmem>>, vector<32x128xbf16>
    tpu.vector_store %arg16[%c0_58, %c256], %77 {strides = array<i32>} : memref<32x1152xbf16, #tpu.memory_space<vmem>>, vector<32x128xbf16>,
    %c1_59 = arith.constant 1 : index
    %c7_60 = arith.constant 7 : index
    %c0_61 = arith.constant 0 : index
    %79 = vector.load %arg15[%c1_59, %c7_60, %c0_61] : memref<6x17x128xf32, #tpu.memory_space<vmem>>, vector<4x8x128xf32>
    %80 = vector.shape_cast %79 : vector<4x8x128xf32> to vector<32x128xf32>
    %81 = arith.truncf %80 : vector<32x128xf32> to vector<32x128xbf16>
    %c0_62 = arith.constant 0 : index
    %c384 = arith.constant 384 : index
    %82 = vector.load %arg16[%c0_62, %c384] : memref<32x1152xbf16, #tpu.memory_space<vmem>>, vector<32x128xbf16>
    tpu.vector_store %arg16[%c0_62, %c384], %81 {strides = array<i32>} : memref<32x1152xbf16, #tpu.memory_space<vmem>>, vector<32x128xbf16>,
    %c1_63 = arith.constant 1 : index
    %c8_64 = arith.constant 8 : index
    %c0_65 = arith.constant 0 : index
    %83 = vector.load %arg15[%c1_63, %c8_64, %c0_65] : memref<6x17x128xf32, #tpu.memory_space<vmem>>, vector<4x8x128xf32>
    %84 = vector.shape_cast %83 : vector<4x8x128xf32> to vector<32x128xf32>
    %85 = arith.truncf %84 : vector<32x128xf32> to vector<32x128xbf16>
    %c0_66 = arith.constant 0 : index
    %c512 = arith.constant 512 : index
    %86 = vector.load %arg16[%c0_66, %c512] : memref<32x1152xbf16, #tpu.memory_space<vmem>>, vector<32x128xbf16>
    tpu.vector_store %arg16[%c0_66, %c512], %85 {strides = array<i32>} : memref<32x1152xbf16, #tpu.memory_space<vmem>>, vector<32x128xbf16>,
    %c1_67 = arith.constant 1 : index
    %c9_68 = arith.constant 9 : index
    %c0_69 = arith.constant 0 : index
    %87 = vector.load %arg15[%c1_67, %c9_68, %c0_69] : memref<6x17x128xf32, #tpu.memory_space<vmem>>, vector<4x8x128xf32>
    %88 = vector.shape_cast %87 : vector<4x8x128xf32> to vector<32x128xf32>
    %89 = arith.truncf %88 : vector<32x128xf32> to vector<32x128xbf16>
    %c0_70 = arith.constant 0 : index
    %c640 = arith.constant 640 : index
    %90 = vector.load %arg16[%c0_70, %c640] : memref<32x1152xbf16, #tpu.memory_space<vmem>>, vector<32x128xbf16>
    tpu.vector_store %arg16[%c0_70, %c640], %89 {strides = array<i32>} : memref<32x1152xbf16, #tpu.memory_space<vmem>>, vector<32x128xbf16>,
    %c2 = arith.constant 2 : index
    %c7_71 = arith.constant 7 : index
    %c0_72 = arith.constant 0 : index
    %91 = vector.load %arg15[%c2, %c7_71, %c0_72] : memref<6x17x128xf32, #tpu.memory_space<vmem>>, vector<4x8x128xf32>
    %92 = vector.shape_cast %91 : vector<4x8x128xf32> to vector<32x128xf32>
    %93 = arith.truncf %92 : vector<32x128xf32> to vector<32x128xbf16>
    %c0_73 = arith.constant 0 : index
    %c768 = arith.constant 768 : index
    %94 = vector.load %arg16[%c0_73, %c768] : memref<32x1152xbf16, #tpu.memory_space<vmem>>, vector<32x128xbf16>
    tpu.vector_store %arg16[%c0_73, %c768], %93 {strides = array<i32>} : memref<32x1152xbf16, #tpu.memory_space<vmem>>, vector<32x128xbf16>,
    %c2_74 = arith.constant 2 : index
    %c8_75 = arith.constant 8 : index
    %c0_76 = arith.constant 0 : index
    %95 = vector.load %arg15[%c2_74, %c8_75, %c0_76] : memref<6x17x128xf32, #tpu.memory_space<vmem>>, vector<4x8x128xf32>
    %96 = vector.shape_cast %95 : vector<4x8x128xf32> to vector<32x128xf32>
    %97 = arith.truncf %96 : vector<32x128xf32> to vector<32x128xbf16>
    %c0_77 = arith.constant 0 : index
    %c896 = arith.constant 896 : index
    %98 = vector.load %arg16[%c0_77, %c896] : memref<32x1152xbf16, #tpu.memory_space<vmem>>, vector<32x128xbf16>
    tpu.vector_store %arg16[%c0_77, %c896], %97 {strides = array<i32>} : memref<32x1152xbf16, #tpu.memory_space<vmem>>, vector<32x128xbf16>,
    %c2_78 = arith.constant 2 : index
    %c9_79 = arith.constant 9 : index
    %c0_80 = arith.constant 0 : index
    %99 = vector.load %arg15[%c2_78, %c9_79, %c0_80] : memref<6x17x128xf32, #tpu.memory_space<vmem>>, vector<4x8x128xf32>
    %100 = vector.shape_cast %99 : vector<4x8x128xf32> to vector<32x128xf32>
    %101 = arith.truncf %100 : vector<32x128xf32> to vector<32x128xbf16>
    %c0_81 = arith.constant 0 : index
    %c1024 = arith.constant 1024 : index
    %102 = vector.load %arg16[%c0_81, %c1024] : memref<32x1152xbf16, #tpu.memory_space<vmem>>, vector<32x128xbf16>
    tpu.vector_store %arg16[%c0_81, %c1024], %101 {strides = array<i32>} : memref<32x1152xbf16, #tpu.memory_space<vmem>>, vector<32x128xbf16>,
    %c0_82 = arith.constant 0 : index
    %c0_83 = arith.constant 0 : index
    %103 = vector.load %arg16[%c0_82, %c0_83] : memref<32x1152xbf16, #tpu.memory_space<vmem>>, vector<32x1152xbf16>
    %c0_84 = arith.constant 0 : index
    %c0_85 = arith.constant 0 : index
    %104 = vector.load %arg10[%c0_84, %c0_85] : memref<1152x128xbf16, #tpu.memory_space<vmem>>, vector<1152x128xbf16>
    %cst_86 = arith.constant dense<0.000000e+00> : vector<32x128xf32>
    %105 = tpu.matmul %103, %104, %cst_86 {dimension_numbers = #tpu.dot_dimension_numbers<[1], [0], [0], [1], [0, 0, 1, 1], [], []>} : vector<32x1152xbf16>, vector<1152x128xbf16>, vector<32x128xf32> -> vector<32x128xf32>
    %c0_87 = arith.constant 0 : index
    %c0_88 = arith.constant 0 : index
    %106 = vector.load %arg11[%c0_87, %c0_88] : memref<1x128xf32, #tpu.memory_space<vmem>>, vector<1x128xf32>
    %107 = vector.broadcast %106 : vector<1x128xf32> to vector<32x128xf32>
    %108 = arith.addf %105, %107 : vector<32x128xf32>
    %c0_89 = arith.constant 0 : index
    %c0_90 = arith.constant 0 : index
    %c0_91 = arith.constant 0 : index
    %109 = vector.load %arg13[%c0_89, %c0_90, %c0_91] : memref<1x32x128xf32, #tpu.memory_space<vmem>>, vector<1x32x128xf32>
    %110 = vector.shape_cast %109 : vector<1x32x128xf32> to vector<32x128xf32>
    %111 = vector.shape_cast %108 : vector<32x128xf32> to vector<1x32x128xf32>
    tpu.vector_store %arg13[%c0_89, %c0_90, %c0_91], %111 {strides = array<i32>} : memref<1x32x128xf32, #tpu.memory_space<vmem>>, vector<1x32x128xf32>,
    %cst_92 = arith.constant dense<0.000000e+00> : vector<128xf32>
    %112 = vector.multi_reduction <add>, %108, %cst_92 [0] : vector<32x128xf32> to vector<128xf32>
    %113 = vector.shape_cast %112 : vector<128xf32> to vector<1x128xf32>
    %114 = arith.mulf %108, %108 : vector<32x128xf32>
    %cst_93 = arith.constant dense<0.000000e+00> : vector<128xf32>
    %115 = vector.multi_reduction <add>, %114, %cst_93 [0] : vector<32x128xf32> to vector<128xf32>
    %116 = vector.shape_cast %115 : vector<128xf32> to vector<1x128xf32>
    %117 = tpu.concatenate %113, %116 in 0 : vector<1x128xf32>, vector<1x128xf32> -> vector<2x128xf32>
    %c0_94 = arith.constant 0 : index
    %c0_95 = arith.constant 0 : index
    %c0_96 = arith.constant 0 : index
    %118 = vector.load %arg14[%c0_94, %c0_95, %c0_96] : memref<1x2x128xf32, #tpu.memory_space<vmem>>, vector<1x2x128xf32>
    %119 = vector.shape_cast %118 : vector<1x2x128xf32> to vector<2x128xf32>
    %120 = vector.shape_cast %117 : vector<2x128xf32> to vector<1x2x128xf32>
    tpu.vector_store %arg14[%c0_94, %c0_95, %c0_96], %120 {strides = array<i32>} : memref<1x2x128xf32, #tpu.memory_space<vmem>>, vector<1x2x128xf32>,
    return
  }
  func.func @transform_0(%arg0: i32) -> (i32, i32, i32) {
    %c0_i32 = arith.constant 0 : i32
    %c0_i32_0 = arith.constant 0 : i32
    %c0_i32_1 = arith.constant 0 : i32
    return %arg0, %c0_i32, %c0_i32_0 : i32, i32, i32
  }
  func.func @transform_1(%arg0: i32) -> (i32, i32, i32) {
    %c0_i32 = arith.constant 0 : i32
    %c0_i32_0 = arith.constant 0 : i32
    %c0_i32_1 = arith.constant 0 : i32
    return %arg0, %c0_i32, %c0_i32_0 : i32, i32, i32
  }
  func.func @transform_2(%arg0: i32) -> (i32, i32, i32) {
    %c0_i32 = arith.constant 0 : i32
    %c0_i32_0 = arith.constant 0 : i32
    %c0_i32_1 = arith.constant 0 : i32
    %c0_i32_2 = arith.constant 0 : i32
    return %c0_i32, %c0_i32_0, %c0_i32_1 : i32, i32, i32
  }
  func.func @transform_3(%arg0: i32) -> (i32, i32) {
    %c0_i32 = arith.constant 0 : i32
    %c0_i32_0 = arith.constant 0 : i32
    %c0_i32_1 = arith.constant 0 : i32
    return %c0_i32, %c0_i32_0 : i32, i32
  }
  func.func @transform_4(%arg0: i32) -> (i32, i32) {
    %c0_i32 = arith.constant 0 : i32
    %c0_i32_0 = arith.constant 0 : i32
    %c0_i32_1 = arith.constant 0 : i32
    return %c0_i32, %c0_i32_0 : i32, i32
  }
  func.func @transform_5(%arg0: i32) -> (i32, i32, i32) {
    %c0_i32 = arith.constant 0 : i32
    %c0_i32_0 = arith.constant 0 : i32
    %c0_i32_1 = arith.constant 0 : i32
    %c0_i32_2 = arith.constant 0 : i32
    return %c0_i32, %c0_i32_0, %c0_i32_1 : i32, i32, i32
  }
  func.func @transform_6(%arg0: i32) -> (i32, i32) {
    %c0_i32 = arith.constant 0 : i32
    %c0_i32_0 = arith.constant 0 : i32
    %c0_i32_1 = arith.constant 0 : i32
    return %c0_i32, %c0_i32_0 : i32, i32
  }
  func.func @transform_7(%arg0: i32) -> (i32, i32) {
    %c0_i32 = arith.constant 0 : i32
    %c0_i32_0 = arith.constant 0 : i32
    %c0_i32_1 = arith.constant 0 : i32
    return %c0_i32, %c0_i32_0 : i32, i32
  }
  func.func @transform_8(%arg0: i32) -> (i32, i32) {
    %c0_i32 = arith.constant 0 : i32
    %c0_i32_0 = arith.constant 0 : i32
    %c0_i32_1 = arith.constant 0 : i32
    return %c0_i32, %c0_i32_0 : i32, i32
  }
  func.func @transform_9(%arg0: i32) -> (i32, i32) {
    %c0_i32 = arith.constant 0 : i32
    %c0_i32_0 = arith.constant 0 : i32
    %c0_i32_1 = arith.constant 0 : i32
    return %c0_i32, %c0_i32_0 : i32, i32
  }
  func.func @transform_10(%arg0: i32) -> (i32, i32) {
    %c0_i32 = arith.constant 0 : i32
    %c0_i32_0 = arith.constant 0 : i32
    %c0_i32_1 = arith.constant 0 : i32
    return %c0_i32, %c0_i32_0 : i32, i32
  }
  func.func @transform_11(%arg0: i32) -> (i32, i32, i32) {
    %c0_i32 = arith.constant 0 : i32
    %c0_i32_0 = arith.constant 0 : i32
    %c0_i32_1 = arith.constant 0 : i32
    return %arg0, %c0_i32, %c0_i32_0 : i32, i32, i32
  }
  func.func @transform_12(%arg0: i32) -> (i32, i32, i32) {
    %c0_i32 = arith.constant 0 : i32
    %c0_i32_0 = arith.constant 0 : i32
    %c0_i32_1 = arith.constant 0 : i32
    return %arg0, %c0_i32, %c0_i32_0 : i32, i32, i32
  }
  func.func @transform_13(%arg0: i32) -> (i32, i32, i32) {
    %c0_i32 = arith.constant 0 : i32
    %c0_i32_0 = arith.constant 0 : i32
    %c0_i32_1 = arith.constant 0 : i32
    return %arg0, %c0_i32, %c0_i32_0 : i32, i32, i32
  }
}

module attributes {stable_mosaic.version = 11 : i64} {
  func.func @_final_kernel(%arg0: i32, %arg1: memref<1x32x128xf32, #tpu.memory_space<vmem>>, %arg2: memref<1x32x128xf32, #tpu.memory_space<vmem>>, %arg3: memref<1x32x256xf32, #tpu.memory_space<vmem>>, %arg4: memref<2x2x128xf32, #tpu.memory_space<vmem>>, %arg5: memref<1x128xf32, #tpu.memory_space<vmem>>, %arg6: memref<1x128xf32, #tpu.memory_space<vmem>>, %arg7: memref<128x128xf32, #tpu.memory_space<vmem>>, %arg8: memref<128x128xf32, #tpu.memory_space<vmem>>, %arg9: memref<1x128xf32, #tpu.memory_space<vmem>>, %arg10: memref<1x128xf32, #tpu.memory_space<vmem>>, %arg11: memref<128x256xbf16, #tpu.memory_space<vmem>>, %arg12: memref<1x256xf32, #tpu.memory_space<vmem>>, %arg13: memref<1x32x256xf32, #tpu.memory_space<vmem>>) attributes {dimension_semantics = [#tpu.dimension_semantics<parallel>], iteration_bounds = array<i64: 2>, scalar_prefetch = 0 : i64, scratch_operands = 0 : i64, tpu.core_type = #tpu.core_type<tc>, window_params = [{transform_indices = @transform_0, window_bounds = array<i64: 1, 32, 128>}, {transform_indices = @transform_1, window_bounds = array<i64: 1, 32, 128>}, {transform_indices = @transform_2, window_bounds = array<i64: 1, 32, 256>}, {pipeline_mode = #tpu.pipeline_mode<synchronous>, transform_indices = @transform_3, window_bounds = array<i64: 2, 2, 128>}, {pipeline_mode = #tpu.pipeline_mode<synchronous>, transform_indices = @transform_4, window_bounds = array<i64: 1, 128>}, {pipeline_mode = #tpu.pipeline_mode<synchronous>, transform_indices = @transform_5, window_bounds = array<i64: 1, 128>}, {pipeline_mode = #tpu.pipeline_mode<synchronous>, transform_indices = @transform_6, window_bounds = array<i64: 128, 128>}, {pipeline_mode = #tpu.pipeline_mode<synchronous>, transform_indices = @transform_7, window_bounds = array<i64: 128, 128>}, {pipeline_mode = #tpu.pipeline_mode<synchronous>, transform_indices = @transform_8, window_bounds = array<i64: 1, 128>}, {pipeline_mode = #tpu.pipeline_mode<synchronous>, transform_indices = @transform_9, window_bounds = array<i64: 1, 128>}, {pipeline_mode = #tpu.pipeline_mode<synchronous>, transform_indices = @transform_10, window_bounds = array<i64: 128, 256>}, {pipeline_mode = #tpu.pipeline_mode<synchronous>, transform_indices = @transform_11, window_bounds = array<i64: 1, 256>}, {transform_indices = @transform_12, window_bounds = array<i64: 1, 32, 256>}]} {
    %c0 = arith.constant 0 : index
    %c0_0 = arith.constant 0 : index
    %c0_1 = arith.constant 0 : index
    %0 = vector.load %arg4[%c0, %c0_0, %c0_1] : memref<2x2x128xf32, #tpu.memory_space<vmem>>, vector<2x2x128xf32>
    %c0_2 = arith.constant 0 : index
    %c0_3 = arith.constant 0 : index
    %1 = vector.load %arg7[%c0_2, %c0_3] : memref<128x128xf32, #tpu.memory_space<vmem>>, vector<128x128xf32>
    %c0_4 = arith.constant 0 : index
    %c0_5 = arith.constant 0 : index
    %2 = vector.load %arg5[%c0_4, %c0_5] : memref<1x128xf32, #tpu.memory_space<vmem>>, vector<1x128xf32>
    %c0_6 = arith.constant 0 : index
    %c0_7 = arith.constant 0 : index
    %3 = vector.load %arg6[%c0_6, %c0_7] : memref<1x128xf32, #tpu.memory_space<vmem>>, vector<1x128xf32>
    %cst = arith.constant dense<0.000000e+00> : vector<2x128xf32>
    %4 = vector.multi_reduction <add>, %0, %cst [0] : vector<2x2x128xf32> to vector<2x128xf32>
    %cst_8 = arith.constant dense<0.000000e+00> : vector<2x128xf32>
    %5 = tpu.matmul %4, %1, %cst_8 {dimension_numbers = #tpu.dot_dimension_numbers<[1], [0], [0], [1], [0, 0, 1, 1], [], []>} : vector<2x128xf32>, vector<128x128xf32>, vector<2x128xf32> -> vector<2x128xf32>
    %6 = vector.extract_strided_slice %5 {offsets = [0, 0], sizes = [1, 128], strides = [1, 1]} : vector<2x128xf32> to vector<1x128xf32>
    %cst_9 = arith.constant 5.120000e+02 : f32
    %7 = vector.broadcast %cst_9 : f32 to vector<1x128xf32>
    %8 = arith.divf %6, %7 : vector<1x128xf32>
    %9 = vector.extract_strided_slice %5 {offsets = [1, 0], sizes = [1, 128], strides = [1, 1]} : vector<2x128xf32> to vector<1x128xf32>
    %cst_10 = arith.constant 5.120000e+02 : f32
    %10 = vector.broadcast %cst_10 : f32 to vector<1x128xf32>
    %11 = arith.divf %9, %10 : vector<1x128xf32>
    %12 = arith.mulf %8, %8 : vector<1x128xf32>
    %13 = arith.subf %11, %12 : vector<1x128xf32>
    %cst_11 = arith.constant 0.000000e+00 : f32
    %14 = vector.broadcast %cst_11 : f32 to vector<1x128xf32>
    %15 = arith.maximumf %13, %14 : vector<1x128xf32>
    %cst_12 = arith.constant 9.99999974E-6 : f32
    %16 = vector.broadcast %cst_12 : f32 to vector<1x128xf32>
    %17 = arith.addf %15, %16 : vector<1x128xf32>
    %18 = math.rsqrt %17 : vector<1x128xf32>
    %19 = arith.mulf %2, %18 : vector<1x128xf32>
    %20 = arith.mulf %8, %19 : vector<1x128xf32>
    %21 = arith.subf %3, %20 : vector<1x128xf32>
    %c0_13 = arith.constant 0 : index
    %c0_14 = arith.constant 0 : index
    %c0_15 = arith.constant 0 : index
    %22 = vector.load %arg1[%c0_13, %c0_14, %c0_15] : memref<1x32x128xf32, #tpu.memory_space<vmem>>, vector<1x32x128xf32>
    %23 = vector.shape_cast %22 : vector<1x32x128xf32> to vector<32x128xf32>
    %24 = vector.broadcast %19 : vector<1x128xf32> to vector<32x128xf32>
    %25 = arith.mulf %23, %24 : vector<32x128xf32>
    %26 = vector.broadcast %21 : vector<1x128xf32> to vector<32x128xf32>
    %27 = arith.addf %25, %26 : vector<32x128xf32>
    %c0_16 = arith.constant 0 : index
    %c0_17 = arith.constant 0 : index
    %c0_18 = arith.constant 0 : index
    %28 = vector.load %arg2[%c0_16, %c0_17, %c0_18] : memref<1x32x128xf32, #tpu.memory_space<vmem>>, vector<1x32x128xf32>
    %29 = vector.shape_cast %28 : vector<1x32x128xf32> to vector<32x128xf32>
    %30 = arith.addf %27, %29 : vector<32x128xf32>
    %cst_19 = arith.constant 5.000000e-01 : f32
    %31 = vector.broadcast %cst_19 : f32 to vector<32x128xf32>
    %32 = arith.mulf %31, %30 : vector<32x128xf32>
    %cst_20 = arith.constant 0.707106769 : f32
    %33 = vector.broadcast %cst_20 : f32 to vector<32x128xf32>
    %34 = arith.mulf %30, %33 : vector<32x128xf32>
    %35 = math.erf %34 : vector<32x128xf32>
    %cst_21 = arith.constant 1.000000e+00 : f32
    %36 = vector.broadcast %cst_21 : f32 to vector<32x128xf32>
    %37 = arith.addf %36, %35 : vector<32x128xf32>
    %38 = arith.mulf %32, %37 : vector<32x128xf32>
    %c0_22 = arith.constant 0 : index
    %c0_23 = arith.constant 0 : index
    %39 = vector.load %arg8[%c0_22, %c0_23] : memref<128x128xf32, #tpu.memory_space<vmem>>, vector<128x128xf32>
    %cst_24 = arith.constant dense<0.000000e+00> : vector<32x128xf32>
    %40 = tpu.matmul %38, %39, %cst_24 {dimension_numbers = #tpu.dot_dimension_numbers<[1], [0], [0], [1], [0, 0, 1, 1], [], []>} : vector<32x128xf32>, vector<128x128xf32>, vector<32x128xf32> -> vector<32x128xf32>
    %41 = arith.subf %38, %40 : vector<32x128xf32>
    %42 = arith.mulf %41, %41 : vector<32x128xf32>
    %cst_25 = arith.constant dense<0.000000e+00> : vector<32x128xf32>
    %43 = tpu.matmul %42, %39, %cst_25 {dimension_numbers = #tpu.dot_dimension_numbers<[1], [0], [0], [1], [0, 0, 1, 1], [], []>} : vector<32x128xf32>, vector<128x128xf32>, vector<32x128xf32> -> vector<32x128xf32>
    %cst_26 = arith.constant 9.99999974E-6 : f32
    %44 = vector.broadcast %cst_26 : f32 to vector<32x128xf32>
    %45 = arith.addf %43, %44 : vector<32x128xf32>
    %46 = math.rsqrt %45 : vector<32x128xf32>
    %47 = arith.mulf %41, %46 : vector<32x128xf32>
    %c0_27 = arith.constant 0 : index
    %c0_28 = arith.constant 0 : index
    %48 = vector.load %arg9[%c0_27, %c0_28] : memref<1x128xf32, #tpu.memory_space<vmem>>, vector<1x128xf32>
    %49 = vector.broadcast %48 : vector<1x128xf32> to vector<32x128xf32>
    %50 = arith.mulf %47, %49 : vector<32x128xf32>
    %c0_29 = arith.constant 0 : index
    %c0_30 = arith.constant 0 : index
    %51 = vector.load %arg10[%c0_29, %c0_30] : memref<1x128xf32, #tpu.memory_space<vmem>>, vector<1x128xf32>
    %52 = vector.broadcast %51 : vector<1x128xf32> to vector<32x128xf32>
    %53 = arith.addf %50, %52 : vector<32x128xf32>
    %54 = arith.truncf %53 : vector<32x128xf32> to vector<32x128xbf16>
    %c0_31 = arith.constant 0 : index
    %c0_32 = arith.constant 0 : index
    %55 = vector.load %arg11[%c0_31, %c0_32] : memref<128x256xbf16, #tpu.memory_space<vmem>>, vector<128x256xbf16>
    %cst_33 = arith.constant dense<0.000000e+00> : vector<32x256xf32>
    %56 = tpu.matmul %54, %55, %cst_33 {dimension_numbers = #tpu.dot_dimension_numbers<[1], [0], [0], [1], [0, 0, 1, 1], [], []>} : vector<32x128xbf16>, vector<128x256xbf16>, vector<32x256xf32> -> vector<32x256xf32>
    %c0_34 = arith.constant 0 : index
    %c0_35 = arith.constant 0 : index
    %57 = vector.load %arg12[%c0_34, %c0_35] : memref<1x256xf32, #tpu.memory_space<vmem>>, vector<1x256xf32>
    %58 = vector.broadcast %57 : vector<1x256xf32> to vector<32x256xf32>
    %59 = arith.addf %56, %58 : vector<32x256xf32>
    %c0_36 = arith.constant 0 : index
    %c0_37 = arith.constant 0 : index
    %c0_38 = arith.constant 0 : index
    %60 = vector.load %arg3[%c0_36, %c0_37, %c0_38] : memref<1x32x256xf32, #tpu.memory_space<vmem>>, vector<1x32x256xf32>
    %61 = vector.shape_cast %60 : vector<1x32x256xf32> to vector<32x256xf32>
    %62 = arith.addf %61, %59 : vector<32x256xf32>
    %c0_39 = arith.constant 0 : index
    %c0_40 = arith.constant 0 : index
    %c0_41 = arith.constant 0 : index
    %63 = vector.load %arg13[%c0_39, %c0_40, %c0_41] : memref<1x32x256xf32, #tpu.memory_space<vmem>>, vector<1x32x256xf32>
    %64 = vector.shape_cast %63 : vector<1x32x256xf32> to vector<32x256xf32>
    %65 = vector.shape_cast %62 : vector<32x256xf32> to vector<1x32x256xf32>
    tpu.vector_store %arg13[%c0_39, %c0_40, %c0_41], %65 {strides = array<i32>} : memref<1x32x256xf32, #tpu.memory_space<vmem>>, vector<1x32x256xf32>,
    return
  }
  func.func @transform_0(%arg0: i32) -> (i32, i32, i32) {
    %c0_i32 = arith.constant 0 : i32
    %c0_i32_0 = arith.constant 0 : i32
    %c0_i32_1 = arith.constant 0 : i32
    return %arg0, %c0_i32, %c0_i32_0 : i32, i32, i32
  }
  func.func @transform_1(%arg0: i32) -> (i32, i32, i32) {
    %c0_i32 = arith.constant 0 : i32
    %c0_i32_0 = arith.constant 0 : i32
    %c0_i32_1 = arith.constant 0 : i32
    return %arg0, %c0_i32, %c0_i32_0 : i32, i32, i32
  }
  func.func @transform_2(%arg0: i32) -> (i32, i32, i32) {
    %c0_i32 = arith.constant 0 : i32
    %c0_i32_0 = arith.constant 0 : i32
    %c0_i32_1 = arith.constant 0 : i32
    return %arg0, %c0_i32, %c0_i32_0 : i32, i32, i32
  }
  func.func @transform_3(%arg0: i32) -> (i32, i32, i32) {
    %c0_i32 = arith.constant 0 : i32
    %c0_i32_0 = arith.constant 0 : i32
    %c0_i32_1 = arith.constant 0 : i32
    %c0_i32_2 = arith.constant 0 : i32
    return %c0_i32, %c0_i32_0, %c0_i32_1 : i32, i32, i32
  }
  func.func @transform_4(%arg0: i32) -> (i32, i32) {
    %c0_i32 = arith.constant 0 : i32
    %c0_i32_0 = arith.constant 0 : i32
    %c0_i32_1 = arith.constant 0 : i32
    return %c0_i32, %c0_i32_0 : i32, i32
  }
  func.func @transform_5(%arg0: i32) -> (i32, i32) {
    %c0_i32 = arith.constant 0 : i32
    %c0_i32_0 = arith.constant 0 : i32
    %c0_i32_1 = arith.constant 0 : i32
    return %c0_i32, %c0_i32_0 : i32, i32
  }
  func.func @transform_6(%arg0: i32) -> (i32, i32) {
    %c0_i32 = arith.constant 0 : i32
    %c0_i32_0 = arith.constant 0 : i32
    %c0_i32_1 = arith.constant 0 : i32
    return %c0_i32, %c0_i32_0 : i32, i32
  }
  func.func @transform_7(%arg0: i32) -> (i32, i32) {
    %c0_i32 = arith.constant 0 : i32
    %c0_i32_0 = arith.constant 0 : i32
    %c0_i32_1 = arith.constant 0 : i32
    return %c0_i32, %c0_i32_0 : i32, i32
  }
  func.func @transform_8(%arg0: i32) -> (i32, i32) {
    %c0_i32 = arith.constant 0 : i32
    %c0_i32_0 = arith.constant 0 : i32
    %c0_i32_1 = arith.constant 0 : i32
    return %c0_i32, %c0_i32_0 : i32, i32
  }
  func.func @transform_9(%arg0: i32) -> (i32, i32) {
    %c0_i32 = arith.constant 0 : i32
    %c0_i32_0 = arith.constant 0 : i32
    %c0_i32_1 = arith.constant 0 : i32
    return %c0_i32, %c0_i32_0 : i32, i32
  }
  func.func @transform_10(%arg0: i32) -> (i32, i32) {
    %c0_i32 = arith.constant 0 : i32
    %c0_i32_0 = arith.constant 0 : i32
    %c0_i32_1 = arith.constant 0 : i32
    return %c0_i32, %c0_i32_0 : i32, i32
  }
  func.func @transform_11(%arg0: i32) -> (i32, i32) {
    %c0_i32 = arith.constant 0 : i32
    %c0_i32_0 = arith.constant 0 : i32
    %c0_i32_1 = arith.constant 0 : i32
    return %c0_i32, %c0_i32_0 : i32, i32
  }
  func.func @transform_12(%arg0: i32) -> (i32, i32, i32) {
    %c0_i32 = arith.constant 0 : i32
    %c0_i32_0 = arith.constant 0 : i32
    %c0_i32_1 = arith.constant 0 : i32
    return %arg0, %c0_i32, %c0_i32_0 : i32, i32, i32
  }
}

</mosaic_0001>

<llo_original>
// kernel: tile.105
$region0: #{tile.105}
  %s0 = inlined_call_operand.vmem [shape: f32[4,8,16], index: 0, kind: input, shape index: {}]
  %s1 = inlined_call_operand.vmem [shape: f32[4,128], index: 1, kind: output, shape index: {}]
  $region1: #{tile.105} parent=0
    #allocation0 [shape = 'u8[4096]{0}', space=vmem, size = 0x1000, scoped, tag = 'scoped mem for output reshape']
    %v2 = vld [vmem:[%s0] ss:$8 sm:$0xf]
    %vm3 = vcmask 130048
    %4 = vst.msk [vmem:[#allocation0] sm:$0xf] %vm3, %v2
    %s5 = scalar_lea.vmem %s0, 7
    %v6 = vld [vmem:[%s5] ss:$8 sm:$0xf]
    %7 = vrot.lane.b32.xlu0 %v6, 112
    %v8 = vpop.permute.xlu0 %7
    %vm9 = vcmask 1048448
    %10 = vst.msk [vmem:[#allocation0] sm:$0xf] %vm9, %v8
    %s11 = scalar_lea.vmem %s0, 6
    %v12 = vld [vmem:[%s11] ss:$8 sm:$0xf]
    %13 = vrot.lane.b32.xlu0 %v12, 96
    %v14 = vpop.permute.xlu0 %13
    %vm15 = vcmask 917248
    %16 = vst.msk [vmem:[#allocation0] sm:$0xf] %vm15, %v14
    %s17 = scalar_lea.vmem %s0, 5
    %v18 = vld [vmem:[%s17] ss:$8 sm:$0xf]
    %19 = vrot.lane.b32.xlu0 %v18, 80
    %v20 = vpop.permute.xlu0 %19
    %vm21 = vcmask 786048
    %22 = vst.msk [vmem:[#allocation0] sm:$0xf] %vm21, %v20
    %s23 = scalar_lea.vmem %s0, 4
    %v24 = vld [vmem:[%s23] ss:$8 sm:$0xf]
    %25 = vrot.lane.b32.xlu0 %v24, 64
    %v26 = vpop.permute.xlu0 %25
    %vm27 = vcmask 654848
    %28 = vst.msk [vmem:[#allocation0] sm:$0xf] %vm27, %v26
    %s29 = scalar_lea.vmem %s0, 3
    %v30 = vld [vmem:[%s29] ss:$8 sm:$0xf]
    %31 = vrot.lane.b32.xlu0 %v30, 48
    %v32 = vpop.permute.xlu0 %31
    %vm33 = vcmask 523648
    %34 = vst.msk [vmem:[#allocation0] sm:$0xf] %vm33, %v32
    %s35 = scalar_lea.vmem %s0, 2
    %v36 = vld [vmem:[%s35] ss:$8 sm:$0xf]
    %37 = vrot.lane.b32.xlu0 %v36, 32
    %v38 = vpop.permute.xlu0 %37
    %vm39 = vcmask 392448
    %40 = vst.msk [vmem:[#allocation0] sm:$0xf] %vm39, %v38
    %s41 = scalar_lea.vmem %s0, 1
    %v42 = vld [vmem:[%s41] ss:$8 sm:$0xf]
    %43 = vrot.lane.b32.xlu0 %v42, 16
    %v44 = vpop.permute.xlu0 %43
    %vm45 = vcmask 261248
    %46 = vst.msk [vmem:[#allocation0] sm:$0xf] %vm45, %v44
    %s48 = ssub.s32 16, 1
    %v49 = vld [vmem:[#allocation0] sm:%s48]
    %s51 = ssub.s32 16, 1
    %52 = vst [vmem:[%s1] sm:%s51] %v49

// kernel: _lambda_.6
$region0: #{_lambda_.6}
  #allocation0 [shape = 'u32[]', space=smem, size = 0x4, offset = 0x4, fixed_abs, tag = 'smem constant byte address 0x4 - core index']
  #allocation1 [shape = 'u32[72,128]{1,0:T(1,128)}', space=vmem, size = 0x9000, scoped, tag = 'internal scratch']
  %s0 = inlined_call_operand.vmem [shape: f32[2,32,256], index: 0, kind: input, shape index: {}]
  %s1 = inlined_call_operand.vmem [shape: f32[256,256], index: 1, kind: input, shape index: {}]
  %s2 = inlined_call_operand.vmem [shape: f32[1,256], index: 2, kind: input, shape index: {}]
  %s3 = inlined_call_operand.vmem [shape: f32[1,256], index: 3, kind: input, shape index: {}]
  %s4 = inlined_call_operand.vmem [shape: bf16[256,128], index: 4, kind: input, shape index: {}]
  %s5 = inlined_call_operand.vmem [shape: f32[1,128], index: 5, kind: input, shape index: {}]
  %s6 = inlined_call_operand.vmem [shape: f32[32,128], index: 6, kind: input, shape index: {}]
  %s7 = inlined_call_operand.vmem [shape: f32[2,32,128], index: 7, kind: output, shape index: {}]
  %s8 = sld [smem:[#allocation0]]
  $region61: #{_lambda_.6} parent=0
    _
  %s10 = ssub.s32 1, %s8
  %s11 = scalar_select 0, %s10, %s8
  loop: start=0, step=1, limit=4
  $region2: #{_lambda_.6} parent=0 // loop_pre_header
    _
  $region3: #{_lambda_.6} parent=0 // loop_header
    %s13 = sphi 0, %s17
    %p14 = scmp.ge.s32.totalorder %s13, 4
    %s23 = sphi 0, %s25
    %s26 = sphi 0, %s23
    %s27 = sphi 0, %s26
    %s43 = sphi 0, %s27
    %s47 = sphi 0, %s47
    %s49 = sphi 0, %s47
    %s50 = sphi 0, %s49
    %s64 = sphi 0, %s50
    %s68 = sphi 0, %s68
    %s70 = sphi 0, %s68
    %s71 = sphi 0, %s70
    %s85 = sphi 0, %s71
    %s89 = sphi 0, %s89
    %s91 = sphi 0, %s89
    %s92 = sphi 0, %s91
    %s106 = sphi 0, %s92
    %s110 = sphi 0, %s110
    %s112 = sphi 0, %s110
    %s113 = sphi 0, %s112
    %s127 = sphi 0, %s113
    %s131 = sphi 0, %s131
    %s133 = sphi 0, %s131
    %s134 = sphi 0, %s133
    %s148 = sphi 0, %s134
    %s152 = sphi 0, %s152
    %s154 = sphi 0, %s152
    %s155 = sphi 0, %s154
    %s169 = sphi 0, %s155
    %s175 = sphi 0, %s177
    %s178 = sphi 0, %s175
    %s179 = sphi 0, %s178
    %s195 = sphi 0, %s179
  $region4: #{_lambda_.6} parent=0 // loop_header_branch
    %16 = sbr.rel (%p14) target = $region8
  $region5: #{_lambda_.6} parent=0 // loop_body
    %s18 = ssub.s32 %s13, 1
    %s19 = ssub.s32 %s13, 2
    %s20 = sadd.s32 %s13, 1
    %s21 = ssub.s32 %s13, %s20
    %p22 = scmp.eq.s32.totalorder %s21, 0
    %s24 = sadd.s32 %s23, 1
    %s25 = scalar_select %p22, %s23, %s24
    %p28 = pneg %p22
    %p29 = scmp.eq.s32.totalorder %s13, 1
    %p30 = por %p28, %p29
    %p31 = scmp.ne.s32.totalorder %s23, %s26
    %p32 = scmp.eq.s32.totalorder %s13, 0
    %p33 = por %p31, %p32
    %p34 = scmp.ne.s32.totalorder %s23, %s26
    %p35 = scmp.eq.s32.totalorder %s18, 1
    %p36 = por %p34, %p35
    %p37 = scmp.ne.s32.totalorder %s26, %s27
    %p38 = scmp.eq.s32.totalorder %s18, 0
    %p39 = por %p37, %p38
    %p40 = scmp.ne.s32.totalorder %s26, %s27
    %p41 = scmp.eq.s32.totalorder %s19, 1
    %p42 = por %p40, %p41
    %p44 = scmp.ne.s32.totalorder %s27, %s43
    %p45 = scmp.eq.s32.totalorder %s19, 0
    %p46 = por %p44, %p45
    %s48 = sadd.s32 %s47, 1
    %p51 = scmp.eq.s32.totalorder %s13, 1
    %p52 = scmp.ne.s32.totalorder %s47, %s49
    %p53 = scmp.eq.s32.totalorder %s13, 0
    %p54 = por %p52, %p53
    %p55 = scmp.ne.s32.totalorder %s47, %s49
    %p56 = scmp.eq.s32.totalorder %s18, 1
    %p57 = por %p55, %p56
    %p58 = scmp.ne.s32.totalorder %s49, %s50
    %p59 = scmp.eq.s32.totalorder %s18, 0
    %p60 = por %p58, %p59
    %p61 = scmp.ne.s32.totalorder %s49, %s50
    %p62 = scmp.eq.s32.totalorder %s19, 1
    %p63 = por %p61, %p62
    %p65 = scmp.ne.s32.totalorder %s50, %s64
    %p66 = scmp.eq.s32.totalorder %s19, 0
    %p67 = por %p65, %p66
    %s69 = sadd.s32 %s68, 1
    %p72 = scmp.eq.s32.totalorder %s13, 1
    %p73 = scmp.ne.s32.totalorder %s68, %s70
    %p74 = scmp.eq.s32.totalorder %s13, 0
    %p75 = por %p73, %p74
    %p76 = scmp.ne.s32.totalorder %s68, %s70
    %p77 = scmp.eq.s32.totalorder %s18, 1
    %p78 = por %p76, %p77
    %p79 = scmp.ne.s32.totalorder %s70, %s71
    %p80 = scmp.eq.s32.totalorder %s18, 0
    %p81 = por %p79, %p80
    %p82 = scmp.ne.s32.totalorder %s70, %s71
    %p83 = scmp.eq.s32.totalorder %s19, 1
    %p84 = por %p82, %p83
    %p86 = scmp.ne.s32.totalorder %s71, %s85
    %p87 = scmp.eq.s32.totalorder %s19, 0
    %p88 = por %p86, %p87
    %s90 = sadd.s32 %s89, 1
    %p93 = scmp.eq.s32.totalorder %s13, 1
    %p94 = scmp.ne.s32.totalorder %s89, %s91
    %p95 = scmp.eq.s32.totalorder %s13, 0
    %p96 = por %p94, %p95
    %p97 = scmp.ne.s32.totalorder %s89, %s91
    %p98 = scmp.eq.s32.totalorder %s18, 1
    %p99 = por %p97, %p98
    %p100 = scmp.ne.s32.totalorder %s91, %s92
    %p101 = scmp.eq.s32.totalorder %s18, 0
    %p102 = por %p100, %p101
    %p103 = scmp.ne.s32.totalorder %s91, %s92
    %p104 = scmp.eq.s32.totalorder %s19, 1
    %p105 = por %p103, %p104
    %p107 = scmp.ne.s32.totalorder %s92, %s106
    %p108 = scmp.eq.s32.totalorder %s19, 0
    %p109 = por %p107, %p108
    %s111 = sadd.s32 %s110, 1
    %p114 = scmp.eq.s32.totalorder %s13, 1
    %p115 = scmp.ne.s32.totalorder %s110, %s112
    %p116 = scmp.eq.s32.totalorder %s13, 0
    %p117 = por %p115, %p116
    %p118 = scmp.ne.s32.totalorder %s110, %s112
    %p119 = scmp.eq.s32.totalorder %s18, 1
    %p120 = por %p118, %p119
    %p121 = scmp.ne.s32.totalorder %s112, %s113
    %p122 = scmp.eq.s32.totalorder %s18, 0
    %p123 = por %p121, %p122
    %p124 = scmp.ne.s32.totalorder %s112, %s113
    %p125 = scmp.eq.s32.totalorder %s19, 1
    %p126 = por %p124, %p125
    %p128 = scmp.ne.s32.totalorder %s113, %s127
    %p129 = scmp.eq.s32.totalorder %s19, 0
    %p130 = por %p128, %p129
    %s132 = sadd.s32 %s131, 1
    %p135 = scmp.eq.s32.totalorder %s13, 1
    %p136 = scmp.ne.s32.totalorder %s131, %s133
    %p137 = scmp.eq.s32.totalorder %s13, 0
    %p138 = por %p136, %p137
    %p139 = scmp.ne.s32.totalorder %s131, %s133
    %p140 = scmp.eq.s32.totalorder %s18, 1
    %p141 = por %p139, %p140
    %p142 = scmp.ne.s32.totalorder %s133, %s134
    %p143 = scmp.eq.s32.totalorder %s18, 0
    %p144 = por %p142, %p143
    %p145 = scmp.ne.s32.totalorder %s133, %s134
    %p146 = scmp.eq.s32.totalorder %s19, 1
    %p147 = por %p145, %p146
    %p149 = scmp.ne.s32.totalorder %s134, %s148
    %p150 = scmp.eq.s32.totalorder %s19, 0
    %p151 = por %p149, %p150
    %s153 = sadd.s32 %s152, 1
    %p156 = scmp.eq.s32.totalorder %s13, 1
    %p157 = scmp.ne.s32.totalorder %s152, %s154
    %p158 = scmp.eq.s32.totalorder %s13, 0
    %p159 = por %p157, %p158
    %p160 = scmp.ne.s32.totalorder %s152, %s154
    %p161 = scmp.eq.s32.totalorder %s18, 1
    %p162 = por %p160, %p161
    %p163 = scmp.ne.s32.totalorder %s154, %s155
    %p164 = scmp.eq.s32.totalorder %s18, 0
    %p165 = por %p163, %p164
    %p166 = scmp.ne.s32.totalorder %s154, %s155
    %p167 = scmp.eq.s32.totalorder %s19, 1
    %p168 = por %p166, %p167
    %p170 = scmp.ne.s32.totalorder %s155, %s169
    %p171 = scmp.eq.s32.totalorder %s19, 0
    %p172 = por %p170, %p171
    %s173 = ssub.s32 %s13, %s20
    %p174 = scmp.eq.s32.totalorder %s173, 0
    %s176 = sadd.s32 %s175, 1
    %s177 = scalar_select %p174, %s175, %s176
    %p180 = pneg %p174
    %p181 = scmp.eq.s32.totalorder %s13, 1
    %p182 = por %p180, %p181
    %p183 = scmp.ne.s32.totalorder %s175, %s178
    %p184 = scmp.eq.s32.totalorder %s13, 0
    %p185 = por %p183, %p184
    %p186 = scmp.ne.s32.totalorder %s175, %s178
    %p187 = scmp.eq.s32.totalorder %s18, 1
    %p188 = por %p186, %p187
    %p189 = scmp.ne.s32.totalorder %s178, %s179
    %p190 = scmp.eq.s32.totalorder %s18, 0
    %p191 = por %p189, %p190
    %p192 = scmp.ne.s32.totalorder %s178, %s179
    %p193 = scmp.eq.s32.totalorder %s19, 1
    %p194 = por %p192, %p193
    %p196 = scmp.ne.s32.totalorder %s179, %s195
    %p197 = scmp.eq.s32.totalorder %s19, 0
    %p198 = por %p196, %p197
    %p199 = scmp.le.s32.totalorder 1, %s13
    %p200 = scmp.lt.s32.totalorder %s13, 3
    %p201 = pnand %p199, %p200
    %p202 = pneg %p201
    // Predicated region
    $region9: #{_lambda_.6} parent=5 // pred_check
      _
    $region10: #{_lambda_.6} parent=5 // pred_check_branch
      %204 = sbr.rel (%p201) target = $region12
    $region11: #{_lambda_.6} parent=5 // pred_region
      %s205 = ssub.s32 %s13, 1
      // Predicated region
      $region13: #{_lambda_.6} parent=11 // pred_check
        %p206 = pneg %p60
      $region14: #{_lambda_.6} parent=11 // pred_check_branch
        %208 = sbr.rel (%p206) target = $region16
      $region15: #{_lambda_.6} parent=11 // pred_region
        _
      $region16: #{_lambda_.6} parent=11 // pred_fallthru
        _
      // Predicated region
      $region17: #{_lambda_.6} parent=11 // pred_check
        %p209 = pneg %p81
      $region18: #{_lambda_.6} parent=11 // pred_check_branch
        %211 = sbr.rel (%p209) target = $region20
      $region19: #{_lambda_.6} parent=11 // pred_region
        _
      $region20: #{_lambda_.6} parent=11 // pred_fallthru
        _
      // Predicated region
      $region21: #{_lambda_.6} parent=11 // pred_check
        %p212 = pneg %p102
      $region22: #{_lambda_.6} parent=11 // pred_check_branch
        %214 = sbr.rel (%p212) target = $region24
      $region23: #{_lambda_.6} parent=11 // pred_region
        _
      $region24: #{_lambda_.6} parent=11 // pred_fallthru
        _
      // Predicated region
      $region25: #{_lambda_.6} parent=11 // pred_check
        %p215 = pneg %p123
      $region26: #{_lambda_.6} parent=11 // pred_check_branch
        %217 = sbr.rel (%p215) target = $region28
      $region27: #{_lambda_.6} parent=11 // pred_region
        _
      $region28: #{_lambda_.6} parent=11 // pred_fallthru
        _
      // Predicated region
      $region29: #{_lambda_.6} parent=11 // pred_check
        %p218 = pneg %p144
      $region30: #{_lambda_.6} parent=11 // pred_check_branch
        %220 = sbr.rel (%p218) target = $region32
      $region31: #{_lambda_.6} parent=11 // pred_region
        _
      $region32: #{_lambda_.6} parent=11 // pred_fallthru
        _
      // Predicated region
      $region33: #{_lambda_.6} parent=11 // pred_check
        %p221 = pneg %p165
      $region34: #{_lambda_.6} parent=11 // pred_check_branch
        %223 = sbr.rel (%p221) target = $region36
      $region35: #{_lambda_.6} parent=11 // pred_region
        _
      $region36: #{_lambda_.6} parent=11 // pred_fallthru
        _
    $region12: #{_lambda_.6} parent=5 // pred_fallthru
      _
    %p224 = scmp.lt.s32.totalorder %s13, 2
    // Predicated region
    $region37: #{_lambda_.6} parent=5 // pred_check
      %p225 = pneg %p224
    $region38: #{_lambda_.6} parent=5 // pred_check_branch
      %227 = sbr.rel (%p225) target = $region40
    $region39: #{_lambda_.6} parent=5 // pred_region
      // Predicated region
      $region41: #{_lambda_.6} parent=39 // pred_check
        %p228 = pneg %p33
      $region42: #{_lambda_.6} parent=39 // pred_check_branch
        %230 = sbr.rel (%p228) target = $region44
      $region43: #{_lambda_.6} parent=39 // pred_region
        %p231 = scmp.lt.s32.totalorder %s13, 1
        %s232 = scalar_select %p231, %s13, 1
        %s233 = smul.addr %s232, 8
        %s234 = smul.addr %s233, 8
        %s235 = scalar_lea.vmem %s0, %s234
      $region44: #{_lambda_.6} parent=39 // pred_fallthru
        _
    $region40: #{_lambda_.6} parent=5 // pred_fallthru
      _
    %p236 = scmp.le.s32.totalorder 1, %s13
    %p237 = scmp.lt.s32.totalorder %s13, 3
    %p238 = pnand %p236, %p237
    %p239 = pneg %p238
    // Predicated region
    $region45: #{_lambda_.6} parent=5 // pred_check
      _
    $region46: #{_lambda_.6} parent=5 // pred_check_branch
      %241 = sbr.rel (%p238) target = $region48
    $region47: #{_lambda_.6} parent=5 // pred_region
      %s242 = ssub.s32 %s13, 1
      %p243 = scmp.lt.s32.totalorder %s18, 1
      %s244 = scalar_select %p243, %s18, 1
      %s245 = smul.addr %s244, 8
      %s246 = smul.addr %s245, 8
      %s247 = scalar_lea.vmem %s0, %s246
      %p248 = pneg %p39
      %p249 = pneg %p36
      %p250 = pneg %p60
      %p251 = pneg %p57
      %p252 = pneg %p81
      %p253 = pneg %p78
      %p254 = pneg %p102
      %p255 = pneg %p99
      %p256 = pneg %p123
      %p257 = pneg %p120
      %p258 = pneg %p144
      %p259 = pneg %p141
      %p260 = pneg %p165
      %p261 = pneg %p162
      %p262 = pneg %p191
      %p263 = pneg %p188
      %p264 = scmp.lt.s32.totalorder %s18, 1
      %s265 = scalar_select %p264, %s18, 1
      %s266 = smul.addr %s265, 4
      %s267 = smul.addr %s266, 8
      %s268 = scalar_lea.vmem %s7, %s267
      %p269 = scmp.lt.s32.totalorder %s18, 1
      %s270 = scalar_select %p269, %s18, 1
      %s271 = smul.addr %s270, 8
      %s272 = smul.addr %s271, 8
      %s273 = scalar_lea.vmem %s0, %s272
      %p274 = scmp.lt.s32.totalorder %s18, 1
      %s275 = scalar_select %p274, %s18, 1
      %s276 = smul.addr %s275, 4
      %s277 = smul.addr %s276, 8
      %s278 = scalar_lea.vmem %s7, %s277
      %v279 = vld [vmem:[%s273] sm:$0xff]
      %v280 = vld [vmem:[%s273 + $0x8] sm:$0xff]
      %v281 = vld [vmem:[%s273 + $0x10] sm:$0xff]
      %v282 = vld [vmem:[%s273 + $0x18] sm:$0xff]
      %v283 = vld [vmem:[%s273 + $0x20] sm:$0xff]
      %v284 = vld [vmem:[%s273 + $0x28] sm:$0xff]
      %v285 = vld [vmem:[%s273 + $0x30] sm:$0xff]
      %v286 = vld [vmem:[%s273 + $0x38] sm:$0xff]
      %v287 = vld [vmem:[%s1] sm:$0xff]
      %v288 = vld [vmem:[%s1 + $0x8] sm:$0xff]
      %v289 = vld [vmem:[%s1 + $0x10] sm:$0xff]
      %v290 = vld [vmem:[%s1 + $0x18] sm:$0xff]
      %v291 = vld [vmem:[%s1 + $0x20] sm:$0xff]
      %v292 = vld [vmem:[%s1 + $0x28] sm:$0xff]
      %v293 = vld [vmem:[%s1 + $0x30] sm:$0xff]
      %v294 = vld [vmem:[%s1 + $0x38] sm:$0xff]
      %v295 = vld [vmem:[%s1 + $0x40] sm:$0xff]
      %v296 = vld [vmem:[%s1 + $0x48] sm:$0xff]
      %v297 = vld [vmem:[%s1 + $0x50] sm:$0xff]
      %v298 = vld [vmem:[%s1 + $0x58] sm:$0xff]
      %v299 = vld [vmem:[%s1 + $0x60] sm:$0xff]
      %v300 = vld [vmem:[%s1 + $0x68] sm:$0xff]
      %v301 = vld [vmem:[%s1 + $0x70] sm:$0xff]
      %v302 = vld [vmem:[%s1 + $0x78] sm:$0xff]
      %v303 = vld [vmem:[%s1 + $0x80] sm:$0xff]
      %v304 = vld [vmem:[%s1 + $0x88] sm:$0xff]
      %v305 = vld [vmem:[%s1 + $0x90] sm:$0xff]
      %v306 = vld [vmem:[%s1 + $0x98] sm:$0xff]
      %v307 = vld [vmem:[%s1 + $0xa0] sm:$0xff]
      %v308 = vld [vmem:[%s1 + $0xa8] sm:$0xff]
      %v309 = vld [vmem:[%s1 + $0xb0] sm:$0xff]
      %v310 = vld [vmem:[%s1 + $0xb8] sm:$0xff]
      %v311 = vld [vmem:[%s1 + $0xc0] sm:$0xff]
      %v312 = vld [vmem:[%s1 + $0xc8] sm:$0xff]
      %v313 = vld [vmem:[%s1 + $0xd0] sm:$0xff]
      %v314 = vld [vmem:[%s1 + $0xd8] sm:$0xff]
      %v315 = vld [vmem:[%s1 + $0xe0] sm:$0xff]
      %v316 = vld [vmem:[%s1 + $0xe8] sm:$0xff]
      %v317 = vld [vmem:[%s1 + $0xf0] sm:$0xff]
      %v318 = vld [vmem:[%s1 + $0xf8] sm:$0xff]
      %v319 = vld [vmem:[%s1 + $0x100] sm:$0xff]
      %v320 = vld [vmem:[%s1 + $0x108] sm:$0xff]
      %v321 = vld [vmem:[%s1 + $0x110] sm:$0xff]
      %v322 = vld [vmem:[%s1 + $0x118] sm:$0xff]
      %v323 = vld [vmem:[%s1 + $0x120] sm:$0xff]
      %v324 = vld [vmem:[%s1 + $0x128] sm:$0xff]
      %v325 = vld [vmem:[%s1 + $0x130] sm:$0xff]
      %v326 = vld [vmem:[%s1 + $0x138] sm:$0xff]
      %v327 = vld [vmem:[%s1 + $0x140] sm:$0xff]
      %v328 = vld [vmem:[%s1 + $0x148] sm:$0xff]
      %v329 = vld [vmem:[%s1 + $0x150] sm:$0xff]
      %v330 = vld [vmem:[%s1 + $0x158] sm:$0xff]
      %v331 = vld [vmem:[%s1 + $0x160] sm:$0xff]
      %v332 = vld [vmem:[%s1 + $0x168] sm:$0xff]
      %v333 = vld [vmem:[%s1 + $0x170] sm:$0xff]
      %v334 = vld [vmem:[%s1 + $0x178] sm:$0xff]
      %v335 = vld [vmem:[%s1 + $0x180] sm:$0xff]
      %v336 = vld [vmem:[%s1 + $0x188] sm:$0xff]
      %v337 = vld [vmem:[%s1 + $0x190] sm:$0xff]
      %v338 = vld [vmem:[%s1 + $0x198] sm:$0xff]
      %v339 = vld [vmem:[%s1 + $0x1a0] sm:$0xff]
      %v340 = vld [vmem:[%s1 + $0x1a8] sm:$0xff]
      %v341 = vld [vmem:[%s1 + $0x1b0] sm:$0xff]
      %v342 = vld [vmem:[%s1 + $0x1b8] sm:$0xff]
      %v343 = vld [vmem:[%s1 + $0x1c0] sm:$0xff]
      %v344 = vld [vmem:[%s1 + $0x1c8] sm:$0xff]
      %v345 = vld [vmem:[%s1 + $0x1d0] sm:$0xff]
      %v346 = vld [vmem:[%s1 + $0x1d8] sm:$0xff]
      %v347 = vld [vmem:[%s1 + $0x1e0] sm:$0xff]
      %v348 = vld [vmem:[%s1 + $0x1e8] sm:$0xff]
      %v349 = vld [vmem:[%s1 + $0x1f0] sm:$0xff]
      %v350 = vld [vmem:[%s1 + $0x1f8] sm:$0xff]
      %351 = vmatpush.msra.mxu0 %v317
      %352 = vmatpush.msra.mxu0 %v315
      %353 = vmatpush.msra.mxu0 %v313
      %354 = vmatpush.msra.mxu0 %v311
      %355 = vmatpush.msra.mxu0 %v309
      %356 = vmatpush.msra.mxu0 %v307
      %357 = vmatpush.msra.mxu0 %v305
      %358 = vmatpush.msra.mxu0 %v303
      %359 = vmatpush.msra.mxu0 %v301
      %360 = vmatpush.msra.mxu0 %v299
      %361 = vmatpush.msra.mxu0 %v297
      %362 = vmatpush.msra.mxu0 %v295
      %363 = vmatpush.msra.mxu0 %v293
      %364 = vmatpush.msra.mxu0 %v291
      %365 = vmatpush.msra.mxu0 %v289
      %366 = vmatpush.msra.mxu0 %v287
      %367 = vmatmul.f32.gmra.mxu0 %v279
      %v368 = vpop.f32.mrf.mxu0
      %v369 = vadd.f32 0.0, %v368
      %370 = vmatmul.f32.gmra.mxu0 %v281
      %v371 = vpop.f32.mrf.mxu0
      %v372 = vadd.f32 0.0, %v371
      %373 = vmatmul.f32.gmra.mxu0 %v283
      %v374 = vpop.f32.mrf.mxu0
      %v375 = vadd.f32 0.0, %v374
      %376 = vmatmul.f32.gmra.mxu0 %v285
      %v377 = vpop.f32.mrf.mxu0
      %v378 = vadd.f32 0.0, %v377
      %379 = vdwg.mxu0
      %380 = vmatpush.msra.mxu0 %v349
      %381 = vmatpush.msra.mxu0 %v347
      %382 = vmatpush.msra.mxu0 %v345
      %383 = vmatpush.msra.mxu0 %v343
      %384 = vmatpush.msra.mxu0 %v341
      %385 = vmatpush.msra.mxu0 %v339
      %386 = vmatpush.msra.mxu0 %v337
      %387 = vmatpush.msra.mxu0 %v335
      %388 = vmatpush.msra.mxu0 %v333
      %389 = vmatpush.msra.mxu0 %v331
      %390 = vmatpush.msra.mxu0 %v329
      %391 = vmatpush.msra.mxu0 %v327
      %392 = vmatpush.msra.mxu0 %v325
      %393 = vmatpush.msra.mxu0 %v323
      %394 = vmatpush.msra.mxu0 %v321
      %395 = vmatpush.msra.mxu0 %v319
      %396 = vmatmul.f32.gmra.mxu0 %v280
      %v397 = vpop.f32.mrf.mxu0
      %v398 = vadd.f32 %v369, %v397
      %399 = vmatmul.f32.gmra.mxu0 %v282
      %v400 = vpop.f32.mrf.mxu0
      %v401 = vadd.f32 %v372, %v400
      %402 = vmatmul.f32.gmra.mxu0 %v284
      %v403 = vpop.f32.mrf.mxu0
      %v404 = vadd.f32 %v375, %v403
      %405 = vmatmul.f32.gmra.mxu0 %v286
      %v406 = vpop.f32.mrf.mxu0
      %v407 = vadd.f32 %v378, %v406
      %408 = vdwg.mxu0
      %409 = vmatpush.msra.mxu0 %v318
      %410 = vmatpush.msra.mxu0 %v316
      %411 = vmatpush.msra.mxu0 %v314
      %412 = vmatpush.msra.mxu0 %v312
      %413 = vmatpush.msra.mxu0 %v310
      %414 = vmatpush.msra.mxu0 %v308
      %415 = vmatpush.msra.mxu0 %v306
      %416 = vmatpush.msra.mxu0 %v304
      %417 = vmatpush.msra.mxu0 %v302
      %418 = vmatpush.msra.mxu0 %v300
      %419 = vmatpush.msra.mxu0 %v298
      %420 = vmatpush.msra.mxu0 %v296
      %421 = vmatpush.msra.mxu0 %v294
      %422 = vmatpush.msra.mxu0 %v292
      %423 = vmatpush.msra.mxu0 %v290
      %424 = vmatpush.msra.mxu0 %v288
      %425 = vmatmul.f32.gmra.mxu0 %v279
      %v426 = vpop.f32.mrf.mxu0
      %v427 = vadd.f32 0.0, %v426
      %428 = vmatmul.f32.gmra.mxu0 %v281
      %v429 = vpop.f32.mrf.mxu0
      %v430 = vadd.f32 0.0, %v429
      %431 = vmatmul.f32.gmra.mxu0 %v283
      %v432 = vpop.f32.mrf.mxu0
      %v433 = vadd.f32 0.0, %v432
      %434 = vmatmul.f32.gmra.mxu0 %v285
      %v435 = vpop.f32.mrf.mxu0
      %v436 = vadd.f32 0.0, %v435
      %437 = vdwg.mxu0
      %438 = vmatpush.msra.mxu0 %v350
      %439 = vmatpush.msra.mxu0 %v348
      %440 = vmatpush.msra.mxu0 %v346
      %441 = vmatpush.msra.mxu0 %v344
      %442 = vmatpush.msra.mxu0 %v342
      %443 = vmatpush.msra.mxu0 %v340
      %444 = vmatpush.msra.mxu0 %v338
      %445 = vmatpush.msra.mxu0 %v336
      %446 = vmatpush.msra.mxu0 %v334
      %447 = vmatpush.msra.mxu0 %v332
      %448 = vmatpush.msra.mxu0 %v330
      %449 = vmatpush.msra.mxu0 %v328
      %450 = vmatpush.msra.mxu0 %v326
      %451 = vmatpush.msra.mxu0 %v324
      %452 = vmatpush.msra.mxu0 %v322
      %453 = vmatpush.msra.mxu0 %v320
      %454 = vmatmul.f32.gmra.mxu0 %v280
      %v455 = vpop.f32.mrf.mxu0
      %v456 = vadd.f32 %v427, %v455
      %457 = vmatmul.f32.gmra.mxu0 %v282
      %v458 = vpop.f32.mrf.mxu0
      %v459 = vadd.f32 %v430, %v458
      %460 = vmatmul.f32.gmra.mxu0 %v284
      %v461 = vpop.f32.mrf.mxu0
      %v462 = vadd.f32 %v433, %v461
      %463 = vmatmul.f32.gmra.mxu0 %v286
      %v464 = vpop.f32.mrf.mxu0
      %v465 = vadd.f32 %v436, %v464
      %466 = vdwg.mxu0
      %v467 = vsub.f32 %v279, %v398
      %v468 = vsub.f32 %v280, %v456
      %v469 = vsub.f32 %v281, %v401
      %v470 = vsub.f32 %v282, %v459
      %v471 = vsub.f32 %v283, %v404
      %v472 = vsub.f32 %v284, %v462
      %v473 = vsub.f32 %v285, %v407
      %v474 = vsub.f32 %v286, %v465
      %v475 = vmul.f32 %v467, %v467
      %v476 = vmul.f32 %v468, %v468
      %v477 = vmul.f32 %v469, %v469
      %v478 = vmul.f32 %v470, %v470
      %v479 = vmul.f32 %v471, %v471
      %v480 = vmul.f32 %v472, %v472
      %v481 = vmul.f32 %v473, %v473
      %v482 = vmul.f32 %v474, %v474
      %483 = vmatpush.msra.mxu0 %v317
      %484 = vmatpush.msra.mxu0 %v315
      %485 = vmatpush.msra.mxu0 %v313
      %486 = vmatpush.msra.mxu0 %v311
      %487 = vmatpush.msra.mxu0 %v309
      %488 = vmatpush.msra.mxu0 %v307
      %489 = vmatpush.msra.mxu0 %v305
      %490 = vmatpush.msra.mxu0 %v303
      %491 = vmatpush.msra.mxu0 %v301
      %492 = vmatpush.msra.mxu0 %v299
      %493 = vmatpush.msra.mxu0 %v297
      %494 = vmatpush.msra.mxu0 %v295
      %495 = vmatpush.msra.mxu0 %v293
      %496 = vmatpush.msra.mxu0 %v291
      %497 = vmatpush.msra.mxu0 %v289
      %498 = vmatpush.msra.mxu0 %v287
      %499 = vmatmul.f32.gmra.mxu0 %v475
      %v500 = vpop.f32.mrf.mxu0
      %v501 = vadd.f32 1e-05, %v500
      %502 = vmatmul.f32.gmra.mxu0 %v477
      %v503 = vpop.f32.mrf.mxu0
      %v504 = vadd.f32 1e-05, %v503
      %505 = vmatmul.f32.gmra.mxu0 %v479
      %v506 = vpop.f32.mrf.mxu0
      %v507 = vadd.f32 1e-05, %v506
      %508 = vmatmul.f32.gmra.mxu0 %v481
      %v509 = vpop.f32.mrf.mxu0
      %v510 = vadd.f32 1e-05, %v509
      %511 = vdwg.mxu0
      %512 = vmatpush.msra.mxu0 %v349
      %513 = vmatpush.msra.mxu0 %v347
      %514 = vmatpush.msra.mxu0 %v345
      %515 = vmatpush.msra.mxu0 %v343
      %516 = vmatpush.msra.mxu0 %v341
      %517 = vmatpush.msra.mxu0 %v339
      %518 = vmatpush.msra.mxu0 %v337
      %519 = vmatpush.msra.mxu0 %v335
      %520 = vmatpush.msra.mxu0 %v333
      %521 = vmatpush.msra.mxu0 %v331
      %522 = vmatpush.msra.mxu0 %v329
      %523 = vmatpush.msra.mxu0 %v327
      %524 = vmatpush.msra.mxu0 %v325
      %525 = vmatpush.msra.mxu0 %v323
      %526 = vmatpush.msra.mxu0 %v321
      %527 = vmatpush.msra.mxu0 %v319
      %528 = vmatmul.f32.gmra.mxu0 %v476
      %v529 = vpop.f32.mrf.mxu0
      %v530 = vadd.f32 %v501, %v529
      %531 = vmatmul.f32.gmra.mxu0 %v478
      %v532 = vpop.f32.mrf.mxu0
      %v533 = vadd.f32 %v504, %v532
      %534 = vmatmul.f32.gmra.mxu0 %v480
      %v535 = vpop.f32.mrf.mxu0
      %v536 = vadd.f32 %v507, %v535
      %537 = vmatmul.f32.gmra.mxu0 %v482
      %v538 = vpop.f32.mrf.mxu0
      %v539 = vadd.f32 %v510, %v538
      %540 = vdwg.mxu0
      %541 = vmatpush.msra.mxu0 %v318
      %542 = vmatpush.msra.mxu0 %v316
      %543 = vmatpush.msra.mxu0 %v314
      %544 = vmatpush.msra.mxu0 %v312
      %545 = vmatpush.msra.mxu0 %v310
      %546 = vmatpush.msra.mxu0 %v308
      %547 = vmatpush.msra.mxu0 %v306
      %548 = vmatpush.msra.mxu0 %v304
      %549 = vmatpush.msra.mxu0 %v302
      %550 = vmatpush.msra.mxu0 %v300
      %551 = vmatpush.msra.mxu0 %v298
      %552 = vmatpush.msra.mxu0 %v296
      %553 = vmatpush.msra.mxu0 %v294
      %554 = vmatpush.msra.mxu0 %v292
      %555 = vmatpush.msra.mxu0 %v290
      %556 = vmatpush.msra.mxu0 %v288
      %557 = vmatmul.f32.gmra.mxu0 %v475
      %v558 = vpop.f32.mrf.mxu0
      %v559 = vadd.f32 1e-05, %v558
      %560 = vmatmul.f32.gmra.mxu0 %v477
      %v561 = vpop.f32.mrf.mxu0
      %v562 = vadd.f32 1e-05, %v561
      %563 = vmatmul.f32.gmra.mxu0 %v479
      %v564 = vpop.f32.mrf.mxu0
      %v565 = vadd.f32 1e-05, %v564
      %566 = vmatmul.f32.gmra.mxu0 %v481
      %v567 = vpop.f32.mrf.mxu0
      %v568 = vadd.f32 1e-05, %v567
      %569 = vdwg.mxu0
      %570 = vmatpush.msra.mxu0 %v350
      %571 = vmatpush.msra.mxu0 %v348
      %572 = vmatpush.msra.mxu0 %v346
      %573 = vmatpush.msra.mxu0 %v344
      %574 = vmatpush.msra.mxu0 %v342
      %575 = vmatpush.msra.mxu0 %v340
      %576 = vmatpush.msra.mxu0 %v338
      %577 = vmatpush.msra.mxu0 %v336
      %578 = vmatpush.msra.mxu0 %v334
      %579 = vmatpush.msra.mxu0 %v332
      %580 = vmatpush.msra.mxu0 %v330
      %581 = vmatpush.msra.mxu0 %v328
      %582 = vmatpush.msra.mxu0 %v326
      %583 = vmatpush.msra.mxu0 %v324
      %584 = vmatpush.msra.mxu0 %v322
      %585 = vmatpush.msra.mxu0 %v320
      %586 = vmatmul.f32.gmra.mxu0 %v476
      %v587 = vpop.f32.mrf.mxu0
      %v588 = vadd.f32 %v559, %v587
      %589 = vmatmul.f32.gmra.mxu0 %v478
      %v590 = vpop.f32.mrf.mxu0
      %v591 = vadd.f32 %v562, %v590
      %592 = vmatmul.f32.gmra.mxu0 %v480
      %v593 = vpop.f32.mrf.mxu0
      %v594 = vadd.f32 %v565, %v593
      %595 = vmatmul.f32.gmra.mxu0 %v482
      %v596 = vpop.f32.mrf.mxu0
      %v597 = vadd.f32 %v568, %v596
      %598 = vdwg.mxu0
      %v599 = vrsqrt.pop %v530
      %v600 = vmul.f32 %v599, %v530
      %v601 = vmul.f32 %v600, %v599
      %v602 = vmul.f32 0.5, %v601
      %v603 = vsub.f32 1.5, %v602
      %v604 = vmul.f32 %v599, %v603
      %vm605 = vweird.f32 %v530
      %vm606 = vweird.f32 %v599
      %vm607 = vmor %vm605, %vm606
      %v608 = vsel %vm607, %v599, %v604
      %v609 = vrsqrt.pop %v588
      %v610 = vmul.f32 %v609, %v588
      %v611 = vmul.f32 %v610, %v609
      %v612 = vmul.f32 0.5, %v611
      %v613 = vsub.f32 1.5, %v612
      %v614 = vmul.f32 %v609, %v613
      %vm615 = vweird.f32 %v588
      %vm616 = vweird.f32 %v609
      %vm617 = vmor %vm615, %vm616
      %v618 = vsel %vm617, %v609, %v614
      %v619 = vrsqrt.pop %v533
      %v620 = vmul.f32 %v619, %v533
      %v621 = vmul.f32 %v620, %v619
      %v622 = vmul.f32 0.5, %v621
      %v623 = vsub.f32 1.5, %v622
      %v624 = vmul.f32 %v619, %v623
      %vm625 = vweird.f32 %v533
      %vm626 = vweird.f32 %v619
      %vm627 = vmor %vm625, %vm626
      %v628 = vsel %vm627, %v619, %v624
      %v629 = vrsqrt.pop %v591
      %v630 = vmul.f32 %v629, %v591
      %v631 = vmul.f32 %v630, %v629
      %v632 = vmul.f32 0.5, %v631
      %v633 = vsub.f32 1.5, %v632
      %v634 = vmul.f32 %v629, %v633
      %vm635 = vweird.f32 %v591
      %vm636 = vweird.f32 %v629
      %vm637 = vmor %vm635, %vm636
      %v638 = vsel %vm637, %v629, %v634
      %v639 = vrsqrt.pop %v536
      %v640 = vmul.f32 %v639, %v536
      %v641 = vmul.f32 %v640, %v639
      %v642 = vmul.f32 0.5, %v641
      %v643 = vsub.f32 1.5, %v642
      %v644 = vmul.f32 %v639, %v643
      %vm645 = vweird.f32 %v536
      %vm646 = vweird.f32 %v639
      %vm647 = vmor %vm645, %vm646
      %v648 = vsel %vm647, %v639, %v644
      %v649 = vrsqrt.pop %v594
      %v650 = vmul.f32 %v649, %v594
      %v651 = vmul.f32 %v650, %v649
      %v652 = vmul.f32 0.5, %v651
      %v653 = vsub.f32 1.5, %v652
      %v654 = vmul.f32 %v649, %v653
      %vm655 = vweird.f32 %v594
      %vm656 = vweird.f32 %v649
      %vm657 = vmor %vm655, %vm656
      %v658 = vsel %vm657, %v649, %v654
      %v659 = vrsqrt.pop %v539
      %v660 = vmul.f32 %v659, %v539
      %v661 = vmul.f32 %v660, %v659
      %v662 = vmul.f32 0.5, %v661
      %v663 = vsub.f32 1.5, %v662
      %v664 = vmul.f32 %v659, %v663
      %vm665 = vweird.f32 %v539
      %vm666 = vweird.f32 %v659
      %vm667 = vmor %vm665, %vm666
      %v668 = vsel %vm667, %v659, %v664
      %v669 = vrsqrt.pop %v597
      %v670 = vmul.f32 %v669, %v597
      %v671 = vmul.f32 %v670, %v669
      %v672 = vmul.f32 0.5, %v671
      %v673 = vsub.f32 1.5, %v672
      %v674 = vmul.f32 %v669, %v673
      %vm675 = vweird.f32 %v597
      %vm676 = vweird.f32 %v669
      %vm677 = vmor %vm675, %vm676
      %v678 = vsel %vm677, %v669, %v674
      %v679 = vmul.f32 %v467, %v608
      %v680 = vmul.f32 %v468, %v618
      %v681 = vmul.f32 %v469, %v628
      %v682 = vmul.f32 %v470, %v638
      %v683 = vmul.f32 %v471, %v648
      %v684 = vmul.f32 %v472, %v658
      %v685 = vmul.f32 %v473, %v668
      %v686 = vmul.f32 %v474, %v678
      %v687 = vld [vmem:[%s2] sm:$0x3]
      %v689 = vperm.slane %v687, 0
      %v690 = vperm.slane %v687, 1
      %v693 = vmul.f32 %v679, %v689
      %v694 = vmul.f32 %v680, %v690
      %v695 = vmul.f32 %v681, %v689
      %v696 = vmul.f32 %v682, %v690
      %v697 = vmul.f32 %v683, %v689
      %v698 = vmul.f32 %v684, %v690
      %v699 = vmul.f32 %v685, %v689
      %v700 = vmul.f32 %v686, %v690
      %v701 = vld [vmem:[%s3] sm:$0x3]
      %v703 = vperm.slane %v701, 0
      %v704 = vperm.slane %v701, 1
      %v707 = vadd.f32 %v693, %v703
      %v708 = vadd.f32 %v694, %v704
      %v709 = vadd.f32 %v695, %v703
      %v710 = vadd.f32 %v696, %v704
      %v711 = vadd.f32 %v697, %v703
      %v712 = vadd.f32 %v698, %v704
      %v713 = vadd.f32 %v699, %v703
      %v714 = vadd.f32 %v700, %v704
      %v715 = vpack.c.bf16 %v709, %v707
      %v716 = vpack.c.bf16 %v710, %v708
      %v717 = vpack.c.bf16 %v713, %v711
      %v718 = vpack.c.bf16 %v714, %v712
      %v719 = vld [vmem:[%s4] sm:$0xf]
      %v720 = vld [vmem:[%s4 + $0x4] sm:$0xf]
      %v721 = vld [vmem:[%s4 + $0x8] sm:$0xf]
      %v722 = vld [vmem:[%s4 + $0xc] sm:$0xf]
      %v723 = vld [vmem:[%s4 + $0x10] sm:$0xf]
      %v724 = vld [vmem:[%s4 + $0x14] sm:$0xf]
      %v725 = vld [vmem:[%s4 + $0x18] sm:$0xf]
      %v726 = vld [vmem:[%s4 + $0x1c] sm:$0xf]
      %v727 = vld [vmem:[%s4 + $0x20] sm:$0xf]
      %v728 = vld [vmem:[%s4 + $0x24] sm:$0xf]
      %v729 = vld [vmem:[%s4 + $0x28] sm:$0xf]
      %v730 = vld [vmem:[%s4 + $0x2c] sm:$0xf]
      %v731 = vld [vmem:[%s4 + $0x30] sm:$0xf]
      %v732 = vld [vmem:[%s4 + $0x34] sm:$0xf]
      %v733 = vld [vmem:[%s4 + $0x38] sm:$0xf]
      %v734 = vld [vmem:[%s4 + $0x3c] sm:$0xf]
      %v735 = vld [vmem:[%s4 + $0x40] sm:$0xf]
      %v736 = vld [vmem:[%s4 + $0x44] sm:$0xf]
      %v737 = vld [vmem:[%s4 + $0x48] sm:$0xf]
      %v738 = vld [vmem:[%s4 + $0x4c] sm:$0xf]
      %v739 = vld [vmem:[%s4 + $0x50] sm:$0xf]
      %v740 = vld [vmem:[%s4 + $0x54] sm:$0xf]
      %v741 = vld [vmem:[%s4 + $0x58] sm:$0xf]
      %v742 = vld [vmem:[%s4 + $0x5c] sm:$0xf]
      %v743 = vld [vmem:[%s4 + $0x60] sm:$0xf]
      %v744 = vld [vmem:[%s4 + $0x64] sm:$0xf]
      %v745 = vld [vmem:[%s4 + $0x68] sm:$0xf]
      %v746 = vld [vmem:[%s4 + $0x6c] sm:$0xf]
      %v747 = vld [vmem:[%s4 + $0x70] sm:$0xf]
      %v748 = vld [vmem:[%s4 + $0x74] sm:$0xf]
      %v749 = vld [vmem:[%s4 + $0x78] sm:$0xf]
      %v750 = vld [vmem:[%s4 + $0x7c] sm:$0xf]
      %v751 = vld [vmem:[%s5] sm:$0x1]
      %v753 = vperm.slane %v751, 0
      %v787 = vunpack.c.l.b16 %v719
      %v788 = vunpack.c.l.b16 %v720
      %v789 = vunpack.c.l.b16 %v721
      %v790 = vunpack.c.l.b16 %v722
      %v791 = vunpack.c.l.b16 %v723
      %v792 = vunpack.c.l.b16 %v724
      %v793 = vunpack.c.l.b16 %v725
      %v794 = vunpack.c.l.b16 %v726
      %v795 = vunpack.c.l.b16 %v727
      %v796 = vunpack.c.l.b16 %v728
      %v797 = vunpack.c.l.b16 %v729
      %v798 = vunpack.c.l.b16 %v730
      %v799 = vunpack.c.l.b16 %v731
      %v800 = vunpack.c.l.b16 %v732
      %v801 = vunpack.c.l.b16 %v733
      %v802 = vunpack.c.l.b16 %v734
      %v803 = vunpack.c.l.b16 %v735
      %v804 = vunpack.c.l.b16 %v736
      %v805 = vunpack.c.l.b16 %v737
      %v806 = vunpack.c.l.b16 %v738
      %v807 = vunpack.c.l.b16 %v739
      %v808 = vunpack.c.l.b16 %v740
      %v809 = vunpack.c.l.b16 %v741
      %v810 = vunpack.c.l.b16 %v742
      %v811 = vunpack.c.l.b16 %v743
      %v812 = vunpack.c.l.b16 %v744
      %v813 = vunpack.c.l.b16 %v745
      %v814 = vunpack.c.l.b16 %v746
      %v815 = vunpack.c.l.b16 %v747
      %v816 = vunpack.c.l.b16 %v748
      %v817 = vunpack.c.l.b16 %v749
      %v818 = vunpack.c.l.b16 %v750
      %v819 = vpack.c.b16 %v788, %v787
      %v820 = vpack.c.b16 %v790, %v789
      %v821 = vpack.c.b16 %v792, %v791
      %v822 = vpack.c.b16 %v794, %v793
      %v823 = vpack.c.b16 %v796, %v795
      %v824 = vpack.c.b16 %v798, %v797
      %v825 = vpack.c.b16 %v800, %v799
      %v826 = vpack.c.b16 %v802, %v801
      %v827 = vpack.c.b16 %v804, %v803
      %v828 = vpack.c.b16 %v806, %v805
      %v829 = vpack.c.b16 %v808, %v807
      %v830 = vpack.c.b16 %v810, %v809
      %v831 = vpack.c.b16 %v812, %v811
      %v832 = vpack.c.b16 %v814, %v813
      %v833 = vpack.c.b16 %v816, %v815
      %v834 = vpack.c.b16 %v818, %v817
      %851 = vmatpush.bf16.msra.mxu0 %v826
      %852 = vmatpush.bf16.msra.mxu0 %v825
      %853 = vmatpush.bf16.msra.mxu0 %v824
      %854 = vmatpush.bf16.msra.mxu0 %v823
      %855 = vmatpush.bf16.msra.mxu0 %v822
      %856 = vmatpush.bf16.msra.mxu0 %v821
      %857 = vmatpush.bf16.msra.mxu0 %v820
      %858 = vmatpush.bf16.msra.mxu0 %v819
      %859 = vmatmul.bf16.gmra.mxu0 %v715
      %v860 = vpop.f32.mrf.mxu0
      %v861 = vadd.f32 %v753, %v860
      %v862 = vpop.f32.mrf.mxu0
      %v863 = vadd.f32 %v753, %v862
      %864 = vmatmul.bf16.gmra.mxu0 %v717
      %v865 = vpop.f32.mrf.mxu0
      %v866 = vadd.f32 %v753, %v865
      %v867 = vpop.f32.mrf.mxu0
      %v868 = vadd.f32 %v753, %v867
      %869 = vdwg.mxu0
      %870 = vmatpush.bf16.msra.mxu0 %v834
      %871 = vmatpush.bf16.msra.mxu0 %v833
      %872 = vmatpush.bf16.msra.mxu0 %v832
      %873 = vmatpush.bf16.msra.mxu0 %v831
      %874 = vmatpush.bf16.msra.mxu0 %v830
      %875 = vmatpush.bf16.msra.mxu0 %v829
      %876 = vmatpush.bf16.msra.mxu0 %v828
      %877 = vmatpush.bf16.msra.mxu0 %v827
      %878 = vmatmul.bf16.gmra.mxu0 %v716
      %v879 = vpop.f32.mrf.mxu0
      %v880 = vadd.f32 %v861, %v879
      %v881 = vpop.f32.mrf.mxu0
      %v882 = vadd.f32 %v863, %v881
      %883 = vmatmul.bf16.gmra.mxu0 %v718
      %v884 = vpop.f32.mrf.mxu0
      %v885 = vadd.f32 %v866, %v884
      %v886 = vpop.f32.mrf.mxu0
      %v887 = vadd.f32 %v868, %v886
      %888 = vdwg.mxu0
      %v889 = vld [vmem:[%s6] sm:$0xff]
      %v890 = vld [vmem:[%s6 + $0x8] sm:$0xff]
      %v891 = vld [vmem:[%s6 + $0x10] sm:$0xff]
      %v892 = vld [vmem:[%s6 + $0x18] sm:$0xff]
      %v893 = vadd.f32 %v880, %v889
      %v894 = vadd.f32 %v882, %v890
      %v895 = vadd.f32 %v885, %v891
      %v896 = vadd.f32 %v887, %v892
      %897 = vst [vmem:[%s278] sm:$0xff] %v893
      %898 = vst [vmem:[%s278 + $0x8] sm:$0xff] %v894
      %899 = vst [vmem:[%s278 + $0x10] sm:$0xff] %v895
      %900 = vst [vmem:[%s278 + $0x18] sm:$0xff] %v896
      %p901 = scmp.lt.s32.totalorder %s18, 1
      %s902 = scalar_select %p901, %s18, 1
      %s903 = smul.addr %s902, 4
      %s904 = smul.addr %s903, 8
      %s905 = scalar_lea.vmem %s7, %s904
      // Predicated region
      $region49: #{_lambda_.6} parent=47 // pred_check
        %p906 = pneg %p188
      $region50: #{_lambda_.6} parent=47 // pred_check_branch
        %908 = sbr.rel (%p906) target = $region52
      $region51: #{_lambda_.6} parent=47 // pred_region
        _
      $region52: #{_lambda_.6} parent=47 // pred_fallthru
        _
    $region48: #{_lambda_.6} parent=5 // pred_fallthru
      _
    %p909 = scmp.le.s32.totalorder 2, %s13
    // Predicated region
    $region53: #{_lambda_.6} parent=5 // pred_check
      %p910 = pneg %p909
    $region54: #{_lambda_.6} parent=5 // pred_check_branch
      %912 = sbr.rel (%p910) target = $region56
    $region55: #{_lambda_.6} parent=5 // pred_region
      %s913 = ssub.s32 %s13, 2
      // Predicated region
      $region57: #{_lambda_.6} parent=55 // pred_check
        %p914 = pneg %p194
      $region58: #{_lambda_.6} parent=55 // pred_check_branch
        %916 = sbr.rel (%p914) target = $region60
      $region59: #{_lambda_.6} parent=55 // pred_region
        %p917 = scmp.lt.s32.totalorder %s19, 1
        %s918 = scalar_select %p917, %s19, 1
        %s919 = smul.addr %s918, 4
        %s920 = smul.addr %s919, 8
        %s921 = scalar_lea.vmem %s7, %s920
      $region60: #{_lambda_.6} parent=55 // pred_fallthru
        _
    $region56: #{_lambda_.6} parent=5 // pred_fallthru
      _
  $region6: #{_lambda_.6} parent=0 // loop_footer
    %s17 = sadd.s32 1, %s13
  $region7: #{_lambda_.6} parent=0 // loop_footer_branch
    %12 = sbr.rel target = $region3
  $region8: #{_lambda_.6} parent=0 // loop_exit
    _

// kernel: _lambda_.7
$region0: #{_lambda_.7}
  #allocation0 [shape = 'u32[]', space=smem, size = 0x4, offset = 0x4, fixed_abs, tag = 'smem constant byte address 0x4 - core index']
  #allocation1 [shape = 'u32[72,128]{1,0:T(1,128)}', space=vmem, size = 0x9000, scoped, tag = 'internal scratch']
  #allocation2 [shape = 'f32[6,17,128]{2,1,0:T(8,128)}', space=vmem, size = 0x12000, scoped, tag = 'scratch operand']
  #allocation3 [shape = 'bf16[32,1152]{1,0:T(8,128)(2,1)}', space=vmem, size = 0x12000, scoped, tag = 'scratch operand']
  %s0 = inlined_call_operand.vmem [shape: f32[2,32,128], index: 0, kind: input, shape index: {}]
  %s1 = inlined_call_operand.vmem [shape: bf16[128,128], index: 1, kind: input, shape index: {}]
  %s2 = inlined_call_operand.vmem [shape: f32[1,128], index: 2, kind: input, shape index: {}]
  %s3 = inlined_call_operand.vmem [shape: bf16[1152,128], index: 3, kind: input, shape index: {}]
  %s4 = inlined_call_operand.vmem [shape: f32[1,128], index: 4, kind: input, shape index: {}]
  %s5 = inlined_call_operand.vmem [shape: f32[2,32,128], index: 5, kind: output, shape index: {0}]
  %s6 = inlined_call_operand.vmem [shape: f32[2,32,128], index: 6, kind: output, shape index: {1}]
  %s7 = inlined_call_operand.vmem [shape: f32[2,2,128], index: 7, kind: output, shape index: {2}]
  %s8 = inlined_call_operand.vmem [shape: f32[2,2,128], index: 8, kind: output, shape index: {3}]
  %9 = xla_tuple %s5, %s6, %s7, %s8
  %s10 = sld [smem:[#allocation0]]
  $region77: #{_lambda_.7} parent=0
    _
  %s12 = ssub.s32 1, %s10
  %s13 = scalar_select 0, %s12, %s10
  loop: start=0, step=1, limit=4
  $region2: #{_lambda_.7} parent=0 // loop_pre_header
    _
  $region3: #{_lambda_.7} parent=0 // loop_header
    %s15 = sphi 0, %s19
    %p16 = scmp.ge.s32.totalorder %s15, 4
    %s25 = sphi 0, %s27
    %s28 = sphi 0, %s25
    %s29 = sphi 0, %s28
    %s45 = sphi 0, %s29
    %s49 = sphi 0, %s49
    %s51 = sphi 0, %s49
    %s52 = sphi 0, %s51
    %s66 = sphi 0, %s52
    %s70 = sphi 0, %s70
    %s72 = sphi 0, %s70
    %s73 = sphi 0, %s72
    %s87 = sphi 0, %s73
    %s91 = sphi 0, %s91
    %s93 = sphi 0, %s91
    %s94 = sphi 0, %s93
    %s108 = sphi 0, %s94
    %s112 = sphi 0, %s112
    %s114 = sphi 0, %s112
    %s115 = sphi 0, %s114
    %s129 = sphi 0, %s115
    %s135 = sphi 0, %s137
    %s138 = sphi 0, %s135
    %s139 = sphi 0, %s138
    %s155 = sphi 0, %s139
    %s161 = sphi 0, %s163
    %s164 = sphi 0, %s161
    %s165 = sphi 0, %s164
    %s181 = sphi 0, %s165
    %s187 = sphi 0, %s189
    %s190 = sphi 0, %s187
    %s191 = sphi 0, %s190
    %s207 = sphi 0, %s191
    %s213 = sphi 0, %s215
    %s216 = sphi 0, %s213
    %s217 = sphi 0, %s216
    %s233 = sphi 0, %s217
  $region4: #{_lambda_.7} parent=0 // loop_header_branch
    %18 = sbr.rel (%p16) target = $region8
  $region5: #{_lambda_.7} parent=0 // loop_body
    %s20 = ssub.s32 %s15, 1
    %s21 = ssub.s32 %s15, 2
    %s22 = sadd.s32 %s15, 1
    %s23 = ssub.s32 %s15, %s22
    %p24 = scmp.eq.s32.totalorder %s23, 0
    %s26 = sadd.s32 %s25, 1
    %s27 = scalar_select %p24, %s25, %s26
    %p30 = pneg %p24
    %p31 = scmp.eq.s32.totalorder %s15, 1
    %p32 = por %p30, %p31
    %p33 = scmp.ne.s32.totalorder %s25, %s28
    %p34 = scmp.eq.s32.totalorder %s15, 0
    %p35 = por %p33, %p34
    %p36 = scmp.ne.s32.totalorder %s25, %s28
    %p37 = scmp.eq.s32.totalorder %s20, 1
    %p38 = por %p36, %p37
    %p39 = scmp.ne.s32.totalorder %s28, %s29
    %p40 = scmp.eq.s32.totalorder %s20, 0
    %p41 = por %p39, %p40
    %p42 = scmp.ne.s32.totalorder %s28, %s29
    %p43 = scmp.eq.s32.totalorder %s21, 1
    %p44 = por %p42, %p43
    %p46 = scmp.ne.s32.totalorder %s29, %s45
    %p47 = scmp.eq.s32.totalorder %s21, 0
    %p48 = por %p46, %p47
    %s50 = sadd.s32 %s49, 1
    %p53 = scmp.eq.s32.totalorder %s15, 1
    %p54 = scmp.ne.s32.totalorder %s49, %s51
    %p55 = scmp.eq.s32.totalorder %s15, 0
    %p56 = por %p54, %p55
    %p57 = scmp.ne.s32.totalorder %s49, %s51
    %p58 = scmp.eq.s32.totalorder %s20, 1
    %p59 = por %p57, %p58
    %p60 = scmp.ne.s32.totalorder %s51, %s52
    %p61 = scmp.eq.s32.totalorder %s20, 0
    %p62 = por %p60, %p61
    %p63 = scmp.ne.s32.totalorder %s51, %s52
    %p64 = scmp.eq.s32.totalorder %s21, 1
    %p65 = por %p63, %p64
    %p67 = scmp.ne.s32.totalorder %s52, %s66
    %p68 = scmp.eq.s32.totalorder %s21, 0
    %p69 = por %p67, %p68
    %s71 = sadd.s32 %s70, 1
    %p74 = scmp.eq.s32.totalorder %s15, 1
    %p75 = scmp.ne.s32.totalorder %s70, %s72
    %p76 = scmp.eq.s32.totalorder %s15, 0
    %p77 = por %p75, %p76
    %p78 = scmp.ne.s32.totalorder %s70, %s72
    %p79 = scmp.eq.s32.totalorder %s20, 1
    %p80 = por %p78, %p79
    %p81 = scmp.ne.s32.totalorder %s72, %s73
    %p82 = scmp.eq.s32.totalorder %s20, 0
    %p83 = por %p81, %p82
    %p84 = scmp.ne.s32.totalorder %s72, %s73
    %p85 = scmp.eq.s32.totalorder %s21, 1
    %p86 = por %p84, %p85
    %p88 = scmp.ne.s32.totalorder %s73, %s87
    %p89 = scmp.eq.s32.totalorder %s21, 0
    %p90 = por %p88, %p89
    %s92 = sadd.s32 %s91, 1
    %p95 = scmp.eq.s32.totalorder %s15, 1
    %p96 = scmp.ne.s32.totalorder %s91, %s93
    %p97 = scmp.eq.s32.totalorder %s15, 0
    %p98 = por %p96, %p97
    %p99 = scmp.ne.s32.totalorder %s91, %s93
    %p100 = scmp.eq.s32.totalorder %s20, 1
    %p101 = por %p99, %p100
    %p102 = scmp.ne.s32.totalorder %s93, %s94
    %p103 = scmp.eq.s32.totalorder %s20, 0
    %p104 = por %p102, %p103
    %p105 = scmp.ne.s32.totalorder %s93, %s94
    %p106 = scmp.eq.s32.totalorder %s21, 1
    %p107 = por %p105, %p106
    %p109 = scmp.ne.s32.totalorder %s94, %s108
    %p110 = scmp.eq.s32.totalorder %s21, 0
    %p111 = por %p109, %p110
    %s113 = sadd.s32 %s112, 1
    %p116 = scmp.eq.s32.totalorder %s15, 1
    %p117 = scmp.ne.s32.totalorder %s112, %s114
    %p118 = scmp.eq.s32.totalorder %s15, 0
    %p119 = por %p117, %p118
    %p120 = scmp.ne.s32.totalorder %s112, %s114
    %p121 = scmp.eq.s32.totalorder %s20, 1
    %p122 = por %p120, %p121
    %p123 = scmp.ne.s32.totalorder %s114, %s115
    %p124 = scmp.eq.s32.totalorder %s20, 0
    %p125 = por %p123, %p124
    %p126 = scmp.ne.s32.totalorder %s114, %s115
    %p127 = scmp.eq.s32.totalorder %s21, 1
    %p128 = por %p126, %p127
    %p130 = scmp.ne.s32.totalorder %s115, %s129
    %p131 = scmp.eq.s32.totalorder %s21, 0
    %p132 = por %p130, %p131
    %s133 = ssub.s32 %s15, %s22
    %p134 = scmp.eq.s32.totalorder %s133, 0
    %s136 = sadd.s32 %s135, 1
    %s137 = scalar_select %p134, %s135, %s136
    %p140 = pneg %p134
    %p141 = scmp.eq.s32.totalorder %s15, 1
    %p142 = por %p140, %p141
    %p143 = scmp.ne.s32.totalorder %s135, %s138
    %p144 = scmp.eq.s32.totalorder %s15, 0
    %p145 = por %p143, %p144
    %p146 = scmp.ne.s32.totalorder %s135, %s138
    %p147 = scmp.eq.s32.totalorder %s20, 1
    %p148 = por %p146, %p147
    %p149 = scmp.ne.s32.totalorder %s138, %s139
    %p150 = scmp.eq.s32.totalorder %s20, 0
    %p151 = por %p149, %p150
    %p152 = scmp.ne.s32.totalorder %s138, %s139
    %p153 = scmp.eq.s32.totalorder %s21, 1
    %p154 = por %p152, %p153
    %p156 = scmp.ne.s32.totalorder %s139, %s155
    %p157 = scmp.eq.s32.totalorder %s21, 0
    %p158 = por %p156, %p157
    %s159 = ssub.s32 %s15, %s22
    %p160 = scmp.eq.s32.totalorder %s159, 0
    %s162 = sadd.s32 %s161, 1
    %s163 = scalar_select %p160, %s161, %s162
    %p166 = pneg %p160
    %p167 = scmp.eq.s32.totalorder %s15, 1
    %p168 = por %p166, %p167
    %p169 = scmp.ne.s32.totalorder %s161, %s164
    %p170 = scmp.eq.s32.totalorder %s15, 0
    %p171 = por %p169, %p170
    %p172 = scmp.ne.s32.totalorder %s161, %s164
    %p173 = scmp.eq.s32.totalorder %s20, 1
    %p174 = por %p172, %p173
    %p175 = scmp.ne.s32.totalorder %s164, %s165
    %p176 = scmp.eq.s32.totalorder %s20, 0
    %p177 = por %p175, %p176
    %p178 = scmp.ne.s32.totalorder %s164, %s165
    %p179 = scmp.eq.s32.totalorder %s21, 1
    %p180 = por %p178, %p179
    %p182 = scmp.ne.s32.totalorder %s165, %s181
    %p183 = scmp.eq.s32.totalorder %s21, 0
    %p184 = por %p182, %p183
    %s185 = ssub.s32 %s15, %s22
    %p186 = scmp.eq.s32.totalorder %s185, 0
    %s188 = sadd.s32 %s187, 1
    %s189 = scalar_select %p186, %s187, %s188
    %p192 = pneg %p186
    %p193 = scmp.eq.s32.totalorder %s15, 1
    %p194 = por %p192, %p193
    %p195 = scmp.ne.s32.totalorder %s187, %s190
    %p196 = scmp.eq.s32.totalorder %s15, 0
    %p197 = por %p195, %p196
    %p198 = scmp.ne.s32.totalorder %s187, %s190
    %p199 = scmp.eq.s32.totalorder %s20, 1
    %p200 = por %p198, %p199
    %p201 = scmp.ne.s32.totalorder %s190, %s191
    %p202 = scmp.eq.s32.totalorder %s20, 0
    %p203 = por %p201, %p202
    %p204 = scmp.ne.s32.totalorder %s190, %s191
    %p205 = scmp.eq.s32.totalorder %s21, 1
    %p206 = por %p204, %p205
    %p208 = scmp.ne.s32.totalorder %s191, %s207
    %p209 = scmp.eq.s32.totalorder %s21, 0
    %p210 = por %p208, %p209
    %s211 = ssub.s32 %s15, %s22
    %p212 = scmp.eq.s32.totalorder %s211, 0
    %s214 = sadd.s32 %s213, 1
    %s215 = scalar_select %p212, %s213, %s214
    %p218 = pneg %p212
    %p219 = scmp.eq.s32.totalorder %s15, 1
    %p220 = por %p218, %p219
    %p221 = scmp.ne.s32.totalorder %s213, %s216
    %p222 = scmp.eq.s32.totalorder %s15, 0
    %p223 = por %p221, %p222
    %p224 = scmp.ne.s32.totalorder %s213, %s216
    %p225 = scmp.eq.s32.totalorder %s20, 1
    %p226 = por %p224, %p225
    %p227 = scmp.ne.s32.totalorder %s216, %s217
    %p228 = scmp.eq.s32.totalorder %s20, 0
    %p229 = por %p227, %p228
    %p230 = scmp.ne.s32.totalorder %s216, %s217
    %p231 = scmp.eq.s32.totalorder %s21, 1
    %p232 = por %p230, %p231
    %p234 = scmp.ne.s32.totalorder %s217, %s233
    %p235 = scmp.eq.s32.totalorder %s21, 0
    %p236 = por %p234, %p235
    %p237 = scmp.le.s32.totalorder 1, %s15
    %p238 = scmp.lt.s32.totalorder %s15, 3
    %p239 = pnand %p237, %p238
    %p240 = pneg %p239
    // Predicated region
    $region9: #{_lambda_.7} parent=5 // pred_check
      _
    $region10: #{_lambda_.7} parent=5 // pred_check_branch
      %242 = sbr.rel (%p239) target = $region12
    $region11: #{_lambda_.7} parent=5 // pred_region
      %s243 = ssub.s32 %s15, 1
      // Predicated region
      $region13: #{_lambda_.7} parent=11 // pred_check
        %p244 = pneg %p62
      $region14: #{_lambda_.7} parent=11 // pred_check_branch
        %246 = sbr.rel (%p244) target = $region16
      $region15: #{_lambda_.7} parent=11 // pred_region
        _
      $region16: #{_lambda_.7} parent=11 // pred_fallthru
        _
      // Predicated region
      $region17: #{_lambda_.7} parent=11 // pred_check
        %p247 = pneg %p83
      $region18: #{_lambda_.7} parent=11 // pred_check_branch
        %249 = sbr.rel (%p247) target = $region20
      $region19: #{_lambda_.7} parent=11 // pred_region
        _
      $region20: #{_lambda_.7} parent=11 // pred_fallthru
        _
      // Predicated region
      $region21: #{_lambda_.7} parent=11 // pred_check
        %p250 = pneg %p104
      $region22: #{_lambda_.7} parent=11 // pred_check_branch
        %252 = sbr.rel (%p250) target = $region24
      $region23: #{_lambda_.7} parent=11 // pred_region
        _
      $region24: #{_lambda_.7} parent=11 // pred_fallthru
        _
      // Predicated region
      $region25: #{_lambda_.7} parent=11 // pred_check
        %p253 = pneg %p125
      $region26: #{_lambda_.7} parent=11 // pred_check_branch
        %255 = sbr.rel (%p253) target = $region28
      $region27: #{_lambda_.7} parent=11 // pred_region
        _
      $region28: #{_lambda_.7} parent=11 // pred_fallthru
        _
    $region12: #{_lambda_.7} parent=5 // pred_fallthru
      _
    %p256 = scmp.lt.s32.totalorder %s15, 2
    // Predicated region
    $region29: #{_lambda_.7} parent=5 // pred_check
      %p257 = pneg %p256
    $region30: #{_lambda_.7} parent=5 // pred_check_branch
      %259 = sbr.rel (%p257) target = $region32
    $region31: #{_lambda_.7} parent=5 // pred_region
      // Predicated region
      $region33: #{_lambda_.7} parent=31 // pred_check
        %p260 = pneg %p35
      $region34: #{_lambda_.7} parent=31 // pred_check_branch
        %262 = sbr.rel (%p260) target = $region36
      $region35: #{_lambda_.7} parent=31 // pred_region
        %p263 = scmp.lt.s32.totalorder %s15, 1
        %s264 = scalar_select %p263, %s15, 1
        %s265 = smul.addr %s264, 4
        %s266 = smul.addr %s265, 8
        %s267 = scalar_lea.vmem %s0, %s266
      $region36: #{_lambda_.7} parent=31 // pred_fallthru
        _
    $region32: #{_lambda_.7} parent=5 // pred_fallthru
      _
    %p268 = scmp.le.s32.totalorder 1, %s15
    %p269 = scmp.lt.s32.totalorder %s15, 3
    %p270 = pnand %p268, %p269
    %p271 = pneg %p270
    // Predicated region
    $region37: #{_lambda_.7} parent=5 // pred_check
      _
    $region38: #{_lambda_.7} parent=5 // pred_check_branch
      %273 = sbr.rel (%p270) target = $region40
    $region39: #{_lambda_.7} parent=5 // pred_region
      %s274 = ssub.s32 %s15, 1
      %p275 = scmp.lt.s32.totalorder %s20, 1
      %s276 = scalar_select %p275, %s20, 1
      %s277 = smul.addr %s276, 4
      %s278 = smul.addr %s277, 8
      %s279 = scalar_lea.vmem %s0, %s278
      %p280 = pneg %p41
      %p281 = pneg %p38
      %p282 = pneg %p62
      %p283 = pneg %p59
      %p284 = pneg %p83
      %p285 = pneg %p80
      %p286 = pneg %p104
      %p287 = pneg %p101
      %p288 = pneg %p125
      %p289 = pneg %p122
      %p290 = pneg %p151
      %p291 = pneg %p148
      %p292 = scmp.lt.s32.totalorder %s20, 1
      %s293 = scalar_select %p292, %s20, 1
      %s294 = smul.addr %s293, 4
      %s295 = smul.addr %s294, 8
      %s296 = scalar_lea.vmem %s5, %s295
      %p297 = pneg %p177
      %p298 = pneg %p174
      %p299 = scmp.lt.s32.totalorder %s20, 1
      %s300 = scalar_select %p299, %s20, 1
      %s301 = smul.addr %s300, 4
      %s302 = smul.addr %s301, 8
      %s303 = scalar_lea.vmem %s6, %s302
      %p304 = pneg %p203
      %p305 = pneg %p200
      %p306 = scmp.lt.s32.totalorder %s20, 1
      %s307 = scalar_select %p306, %s20, 1
      %s308 = smul.addr %s307, 2
      %s309 = scalar_lea.vmem %s7, %s308
      %p310 = pneg %p229
      %p311 = pneg %p226
      %p312 = scmp.lt.s32.totalorder %s20, 1
      %s313 = scalar_select %p312, %s20, 1
      %s314 = smul.addr %s313, 2
      %s315 = scalar_lea.vmem %s8, %s314
      %p316 = scmp.lt.s32.totalorder %s20, 1
      %s317 = scalar_select %p316, %s20, 1
      %s318 = smul.addr %s317, 4
      %s319 = smul.addr %s318, 8
      %s320 = scalar_lea.vmem %s0, %s319
      %p321 = scmp.lt.s32.totalorder %s20, 1
      %s322 = scalar_select %p321, %s20, 1
      %s323 = smul.addr %s322, 4
      %s324 = smul.addr %s323, 8
      %s325 = scalar_lea.vmem %s5, %s324
      %p326 = scmp.lt.s32.totalorder %s20, 1
      %s327 = scalar_select %p326, %s20, 1
      %s328 = smul.addr %s327, 4
      %s329 = smul.addr %s328, 8
      %s330 = scalar_lea.vmem %s6, %s329
      %p331 = scmp.lt.s32.totalorder %s20, 1
      %s332 = scalar_select %p331, %s20, 1
      %s333 = smul.addr %s332, 2
      %s334 = scalar_lea.vmem %s7, %s333
      %p335 = scmp.lt.s32.totalorder %s20, 1
      %s336 = scalar_select %p335, %s20, 1
      %s337 = smul.addr %s336, 2
      %s338 = scalar_lea.vmem %s8, %s337
      %v339 = vld [vmem:[%s320] sm:$0xff]
      %v340 = vld [vmem:[%s320 + $0x8] sm:$0xff]
      %v341 = vld [vmem:[%s320 + $0x10] sm:$0xff]
      %v342 = vld [vmem:[%s320 + $0x18] sm:$0xff]
      %v343 = vpack.c.bf16 %v340, %v339
      %v344 = vpack.c.bf16 %v342, %v341
      %v345 = vld [vmem:[%s1] sm:$0xf]
      %v346 = vld [vmem:[%s1 + $0x4] sm:$0xf]
      %v347 = vld [vmem:[%s1 + $0x8] sm:$0xf]
      %v348 = vld [vmem:[%s1 + $0xc] sm:$0xf]
      %v349 = vld [vmem:[%s1 + $0x10] sm:$0xf]
      %v350 = vld [vmem:[%s1 + $0x14] sm:$0xf]
      %v351 = vld [vmem:[%s1 + $0x18] sm:$0xf]
      %v352 = vld [vmem:[%s1 + $0x1c] sm:$0xf]
      %v353 = vld [vmem:[%s1 + $0x20] sm:$0xf]
      %v354 = vld [vmem:[%s1 + $0x24] sm:$0xf]
      %v355 = vld [vmem:[%s1 + $0x28] sm:$0xf]
      %v356 = vld [vmem:[%s1 + $0x2c] sm:$0xf]
      %v357 = vld [vmem:[%s1 + $0x30] sm:$0xf]
      %v358 = vld [vmem:[%s1 + $0x34] sm:$0xf]
      %v359 = vld [vmem:[%s1 + $0x38] sm:$0xf]
      %v360 = vld [vmem:[%s1 + $0x3c] sm:$0xf]
      %v361 = vld [vmem:[%s2] sm:$0x1]
      %v363 = vperm.slane %v361, 0
      %v381 = vunpack.c.l.b16 %v345
      %v382 = vunpack.c.l.b16 %v346
      %v383 = vunpack.c.l.b16 %v347
      %v384 = vunpack.c.l.b16 %v348
      %v385 = vunpack.c.l.b16 %v349
      %v386 = vunpack.c.l.b16 %v350
      %v387 = vunpack.c.l.b16 %v351
      %v388 = vunpack.c.l.b16 %v352
      %v389 = vunpack.c.l.b16 %v353
      %v390 = vunpack.c.l.b16 %v354
      %v391 = vunpack.c.l.b16 %v355
      %v392 = vunpack.c.l.b16 %v356
      %v393 = vunpack.c.l.b16 %v357
      %v394 = vunpack.c.l.b16 %v358
      %v395 = vunpack.c.l.b16 %v359
      %v396 = vunpack.c.l.b16 %v360
      %v397 = vpack.c.b16 %v382, %v381
      %v398 = vpack.c.b16 %v384, %v383
      %v399 = vpack.c.b16 %v386, %v385
      %v400 = vpack.c.b16 %v388, %v387
      %v401 = vpack.c.b16 %v390, %v389
      %v402 = vpack.c.b16 %v392, %v391
      %v403 = vpack.c.b16 %v394, %v393
      %v404 = vpack.c.b16 %v396, %v395
      %413 = vmatpush.bf16.msra.mxu0 %v404
      %414 = vmatpush.bf16.msra.mxu0 %v403
      %415 = vmatpush.bf16.msra.mxu0 %v402
      %416 = vmatpush.bf16.msra.mxu0 %v401
      %417 = vmatpush.bf16.msra.mxu0 %v400
      %418 = vmatpush.bf16.msra.mxu0 %v399
      %419 = vmatpush.bf16.msra.mxu0 %v398
      %420 = vmatpush.bf16.msra.mxu0 %v397
      %421 = vmatmul.bf16.gmra.mxu0 %v343
      %v422 = vpop.f32.mrf.mxu0
      %v423 = vadd.f32 %v363, %v422
      %v424 = vpop.f32.mrf.mxu0
      %v425 = vadd.f32 %v363, %v424
      %426 = vmatmul.bf16.gmra.mxu0 %v344
      %v427 = vpop.f32.mrf.mxu0
      %v428 = vadd.f32 %v363, %v427
      %v429 = vpop.f32.mrf.mxu0
      %v430 = vadd.f32 %v363, %v429
      %431 = vdwg.mxu0
      %432 = vst [vmem:[%s325] sm:$0xff] %v423
      %433 = vst [vmem:[%s325 + $0x8] sm:$0xff] %v425
      %434 = vst [vmem:[%s325 + $0x10] sm:$0xff] %v428
      %435 = vst [vmem:[%s325 + $0x18] sm:$0xff] %v430
      %v436 = vadd.f32 %v423, %v425
      %v437 = vadd.f32 %v436, %v428
      %v438 = vadd.f32 %v437, %v430
      %v439 = vrot.slane %v438, 4
      %v440 = vadd.f32 %v438, %v439
      %v441 = vrot.slane %v440, 2
      %v442 = vadd.f32 %v440, %v441
      %v443 = vrot.slane %v442, 1
      %v444 = vadd.f32 %v442, %v443
      %v445 = vmul.f32 %v423, %v423
      %v446 = vmul.f32 %v425, %v425
      %v447 = vmul.f32 %v428, %v428
      %v448 = vmul.f32 %v430, %v430
      %v449 = vadd.f32 %v445, %v446
      %v450 = vadd.f32 %v449, %v447
      %v451 = vadd.f32 %v450, %v448
      %v452 = vrot.slane %v451, 4
      %v453 = vadd.f32 %v451, %v452
      %v454 = vrot.slane %v453, 2
      %v455 = vadd.f32 %v453, %v454
      %v456 = vrot.slane %v455, 1
      %v457 = vadd.f32 %v455, %v456
      %vm458 = vcmask 1040384
      %v459 = vsel %vm458, %v444, %v457
      %460 = vst [vmem:[%s334] sm:$0x3] %v459
      %461 = vst [vmem:[#allocation2] sm:$0xff] 0.0
      %462 = vst [vmem:[#allocation2 + $0x8] sm:$0xff] 0.0
      %463 = vst [vmem:[#allocation2 + $0x10] sm:$0x1] 0.0
      %s464 = scalar_lea.vmem [#allocation2], 120
      %465 = vst [vmem:[%s464] sm:$0xff] 0.0
      %466 = vst [vmem:[%s464 + $0x8] sm:$0xff] 0.0
      %467 = vst [vmem:[%s464 + $0x10] sm:$0x1] 0.0
      %s468 = scalar_lea.vmem [#allocation2], 24
      %469 = vst [vmem:[%s468 + $0x7] sm:$0x1] 0.0
      %470 = vst [vmem:[%s468 + $0x1f] sm:$0x1] 0.0
      %471 = vst [vmem:[%s468 + $0x37] sm:$0x1] 0.0
      %472 = vst [vmem:[%s468 + $0x4f] sm:$0x1] 0.0
      %473 = vst [vmem:[%s468 + $0x10] sm:$0x1] 0.0
      %474 = vst [vmem:[%s468 + $0x28] sm:$0x1] 0.0
      %475 = vst [vmem:[%s468 + $0x40] sm:$0x1] 0.0
      %476 = vst [vmem:[%s468 + $0x58] sm:$0x1] 0.0
      %477 = vst [vmem:[%s468 + $0x8] sm:$0xff] %v339
      %478 = vst [vmem:[%s468 + $0x20] sm:$0xff] %v340
      %479 = vst [vmem:[%s468 + $0x38] sm:$0xff] %v341
      %480 = vst [vmem:[%s468 + $0x50] sm:$0xff] %v342
      %v481 = vld [vmem:[#allocation2 + $0x7] sm:$0xff]
      %v482 = vld [vmem:[#allocation2 + $0x1f] sm:$0xff]
      %v483 = vld [vmem:[#allocation2 + $0x37] sm:$0xff]
      %v484 = vld [vmem:[#allocation2 + $0x4f] sm:$0xff]
      %v485 = vpack.c.bf16 %v481, %v481
      %v486 = vpack.c.bf16 %v482, %v482
      %v487 = vpack.c.bf16 %v483, %v483
      %v488 = vpack.c.bf16 %v484, %v484
      %489 = vst [vmem:[#allocation3] sm:$0xf] %v485
      %490 = vst [vmem:[#allocation3 + $0x24] sm:$0xf] %v486
      %491 = vst [vmem:[#allocation3 + $0x48] sm:$0xf] %v487
      %492 = vst [vmem:[#allocation3 + $0x6c] sm:$0xf] %v488
      %v493 = vld [vmem:[#allocation2 + $0x8] sm:$0xff]
      %v494 = vld [vmem:[#allocation2 + $0x20] sm:$0xff]
      %v495 = vld [vmem:[#allocation2 + $0x38] sm:$0xff]
      %v496 = vld [vmem:[#allocation2 + $0x50] sm:$0xff]
      %v497 = vpack.c.bf16 %v493, %v493
      %v498 = vpack.c.bf16 %v494, %v494
      %v499 = vpack.c.bf16 %v495, %v495
      %v500 = vpack.c.bf16 %v496, %v496
      %501 = vst [vmem:[#allocation3 + $0x4] sm:$0xf] %v497
      %502 = vst [vmem:[#allocation3 + $0x28] sm:$0xf] %v498
      %503 = vst [vmem:[#allocation3 + $0x4c] sm:$0xf] %v499
      %504 = vst [vmem:[#allocation3 + $0x70] sm:$0xf] %v500
      %v505 = vld [vmem:[#allocation2 + $0x9] sm:$0xff]
      %v506 = vld [vmem:[#allocation2 + $0x21] sm:$0xff]
      %v507 = vld [vmem:[#allocation2 + $0x39] sm:$0xff]
      %v508 = vld [vmem:[#allocation2 + $0x51] sm:$0xff]
      %v509 = vpack.c.bf16 %v505, %v505
      %v510 = vpack.c.bf16 %v506, %v506
      %v511 = vpack.c.bf16 %v507, %v507
      %v512 = vpack.c.bf16 %v508, %v508
      %513 = vst [vmem:[#allocation3 + $0x8] sm:$0xf] %v509
      %514 = vst [vmem:[#allocation3 + $0x2c] sm:$0xf] %v510
      %515 = vst [vmem:[#allocation3 + $0x50] sm:$0xf] %v511
      %516 = vst [vmem:[#allocation3 + $0x74] sm:$0xf] %v512
      %v517 = vld [vmem:[%s468 + $0x7] sm:$0xff]
      %v518 = vld [vmem:[%s468 + $0x1f] sm:$0xff]
      %v519 = vld [vmem:[%s468 + $0x37] sm:$0xff]
      %v520 = vld [vmem:[%s468 + $0x4f] sm:$0xff]
      %v521 = vpack.c.bf16 %v517, %v517
      %v522 = vpack.c.bf16 %v518, %v518
      %v523 = vpack.c.bf16 %v519, %v519
      %v524 = vpack.c.bf16 %v520, %v520
      %525 = vst [vmem:[#allocation3 + $0xc] sm:$0xf] %v521
      %526 = vst [vmem:[#allocation3 + $0x30] sm:$0xf] %v522
      %527 = vst [vmem:[#allocation3 + $0x54] sm:$0xf] %v523
      %528 = vst [vmem:[#allocation3 + $0x78] sm:$0xf] %v524
      %v529 = vld [vmem:[%s468 + $0x8] sm:$0xff]
      %v530 = vld [vmem:[%s468 + $0x20] sm:$0xff]
      %v531 = vld [vmem:[%s468 + $0x38] sm:$0xff]
      %v532 = vld [vmem:[%s468 + $0x50] sm:$0xff]
      %v533 = vpack.c.bf16 %v529, %v529
      %v534 = vpack.c.bf16 %v530, %v530
      %v535 = vpack.c.bf16 %v531, %v531
      %v536 = vpack.c.bf16 %v532, %v532
      %537 = vst [vmem:[#allocation3 + $0x10] sm:$0xf] %v533
      %538 = vst [vmem:[#allocation3 + $0x34] sm:$0xf] %v534
      %539 = vst [vmem:[#allocation3 + $0x58] sm:$0xf] %v535
      %540 = vst [vmem:[#allocation3 + $0x7c] sm:$0xf] %v536
      %v541 = vld [vmem:[%s468 + $0x9] sm:$0xff]
      %v542 = vld [vmem:[%s468 + $0x21] sm:$0xff]
      %v543 = vld [vmem:[%s468 + $0x39] sm:$0xff]
      %v544 = vld [vmem:[%s468 + $0x51] sm:$0xff]
      %v545 = vpack.c.bf16 %v541, %v541
      %v546 = vpack.c.bf16 %v542, %v542
      %v547 = vpack.c.bf16 %v543, %v543
      %v548 = vpack.c.bf16 %v544, %v544
      %549 = vst [vmem:[#allocation3 + $0x14] sm:$0xf] %v545
      %550 = vst [vmem:[#allocation3 + $0x38] sm:$0xf] %v546
      %551 = vst [vmem:[#allocation3 + $0x5c] sm:$0xf] %v547
      %552 = vst [vmem:[#allocation3 + $0x80] sm:$0xf] %v548
      %s553 = scalar_lea.vmem [#allocation2], 48
      %v554 = vld [vmem:[%s553 + $0x7] sm:$0xff]
      %v555 = vld [vmem:[%s553 + $0x1f] sm:$0xff]
      %v556 = vld [vmem:[%s553 + $0x37] sm:$0xff]
      %v557 = vld [vmem:[%s553 + $0x4f] sm:$0xff]
      %v558 = vpack.c.bf16 %v554, %v554
      %v559 = vpack.c.bf16 %v555, %v555
      %v560 = vpack.c.bf16 %v556, %v556
      %v561 = vpack.c.bf16 %v557, %v557
      %562 = vst [vmem:[#allocation3 + $0x18] sm:$0xf] %v558
      %563 = vst [vmem:[#allocation3 + $0x3c] sm:$0xf] %v559
      %564 = vst [vmem:[#allocation3 + $0x60] sm:$0xf] %v560
      %565 = vst [vmem:[#allocation3 + $0x84] sm:$0xf] %v561
      %v566 = vld [vmem:[%s553 + $0x8] sm:$0xff]
      %v567 = vld [vmem:[%s553 + $0x20] sm:$0xff]
      %v568 = vld [vmem:[%s553 + $0x38] sm:$0xff]
      %v569 = vld [vmem:[%s553 + $0x50] sm:$0xff]
      %v570 = vpack.c.bf16 %v566, %v566
      %v571 = vpack.c.bf16 %v567, %v567
      %v572 = vpack.c.bf16 %v568, %v568
      %v573 = vpack.c.bf16 %v569, %v569
      %574 = vst [vmem:[#allocation3 + $0x1c] sm:$0xf] %v570
      %575 = vst [vmem:[#allocation3 + $0x40] sm:$0xf] %v571
      %576 = vst [vmem:[#allocation3 + $0x64] sm:$0xf] %v572
      %577 = vst [vmem:[#allocation3 + $0x88] sm:$0xf] %v573
      %v578 = vld [vmem:[%s553 + $0x9] sm:$0xff]
      %v579 = vld [vmem:[%s553 + $0x21] sm:$0xff]
      %v580 = vld [vmem:[%s553 + $0x39] sm:$0xff]
      %v581 = vld [vmem:[%s553 + $0x51] sm:$0xff]
      %v582 = vpack.c.bf16 %v578, %v578
      %v583 = vpack.c.bf16 %v579, %v579
      %v584 = vpack.c.bf16 %v580, %v580
      %v585 = vpack.c.bf16 %v581, %v581
      %586 = vst [vmem:[#allocation3 + $0x20] sm:$0xf] %v582
      %587 = vst [vmem:[#allocation3 + $0x44] sm:$0xf] %v583
      %588 = vst [vmem:[#allocation3 + $0x68] sm:$0xf] %v584
      %589 = vst [vmem:[#allocation3 + $0x8c] sm:$0xf] %v585
      %v590 = vld [vmem:[#allocation3] sm:$0xff]
      %v591 = vld [vmem:[#allocation3 + $0x8] sm:$0xff]
      %v592 = vld [vmem:[#allocation3 + $0x10] sm:$0xff]
      %v593 = vld [vmem:[#allocation3 + $0x18] sm:$0xff]
      %v594 = vld [vmem:[#allocation3 + $0x20] sm:$0xf]
      %v595 = vld [vmem:[#allocation3 + $0x24] sm:$0xff]
      %v596 = vld [vmem:[#allocation3 + $0x2c] sm:$0xff]
      %v597 = vld [vmem:[#allocation3 + $0x34] sm:$0xff]
      %v598 = vld [vmem:[#allocation3 + $0x3c] sm:$0xff]
      %v599 = vld [vmem:[#allocation3 + $0x44] sm:$0xf]
      %v600 = vld [vmem:[#allocation3 + $0x48] sm:$0xff]
      %v601 = vld [vmem:[#allocation3 + $0x50] sm:$0xff]
      %v602 = vld [vmem:[#allocation3 + $0x58] sm:$0xff]
      %v603 = vld [vmem:[#allocation3 + $0x60] sm:$0xff]
      %v604 = vld [vmem:[#allocation3 + $0x68] sm:$0xf]
      %v605 = vld [vmem:[#allocation3 + $0x6c] sm:$0xff]
      %v606 = vld [vmem:[#allocation3 + $0x74] sm:$0xff]
      %v607 = vld [vmem:[#allocation3 + $0x7c] sm:$0xff]
      %v608 = vld [vmem:[#allocation3 + $0x84] sm:$0xff]
      %v609 = vld [vmem:[#allocation3 + $0x8c] sm:$0xf]
      %v610 = vld [vmem:[%s3] sm:$0xf]
      %v611 = vld [vmem:[%s3 + $0x4] sm:$0xf]
      %v612 = vld [vmem:[%s3 + $0x8] sm:$0xf]
      %v613 = vld [vmem:[%s3 + $0xc] sm:$0xf]
      %v614 = vld [vmem:[%s3 + $0x10] sm:$0xf]
      %v615 = vld [vmem:[%s3 + $0x14] sm:$0xf]
      %v616 = vld [vmem:[%s3 + $0x18] sm:$0xf]
      %v617 = vld [vmem:[%s3 + $0x1c] sm:$0xf]
      %v618 = vld [vmem:[%s3 + $0x20] sm:$0xf]
      %v619 = vld [vmem:[%s3 + $0x24] sm:$0xf]
      %v620 = vld [vmem:[%s3 + $0x28] sm:$0xf]
      %v621 = vld [vmem:[%s3 + $0x2c] sm:$0xf]
      %v622 = vld [vmem:[%s3 + $0x30] sm:$0xf]
      %v623 = vld [vmem:[%s3 + $0x34] sm:$0xf]
      %v624 = vld [vmem:[%s3 + $0x38] sm:$0xf]
      %v625 = vld [vmem:[%s3 + $0x3c] sm:$0xf]
      %v626 = vld [vmem:[%s3 + $0x40] sm:$0xf]
      %v627 = vld [vmem:[%s3 + $0x44] sm:$0xf]
      %v628 = vld [vmem:[%s3 + $0x48] sm:$0xf]
      %v629 = vld [vmem:[%s3 + $0x4c] sm:$0xf]
      %v630 = vld [vmem:[%s3 + $0x50] sm:$0xf]
      %v631 = vld [vmem:[%s3 + $0x54] sm:$0xf]
      %v632 = vld [vmem:[%s3 + $0x58] sm:$0xf]
      %v633 = vld [vmem:[%s3 + $0x5c] sm:$0xf]
      %v634 = vld [vmem:[%s3 + $0x60] sm:$0xf]
      %v635 = vld [vmem:[%s3 + $0x64] sm:$0xf]
      %v636 = vld [vmem:[%s3 + $0x68] sm:$0xf]
      %v637 = vld [vmem:[%s3 + $0x6c] sm:$0xf]
      %v638 = vld [vmem:[%s3 + $0x70] sm:$0xf]
      %v639 = vld [vmem:[%s3 + $0x74] sm:$0xf]
      %v640 = vld [vmem:[%s3 + $0x78] sm:$0xf]
      %v641 = vld [vmem:[%s3 + $0x7c] sm:$0xf]
      %v642 = vld [vmem:[%s3 + $0x80] sm:$0xf]
      %v643 = vld [vmem:[%s3 + $0x84] sm:$0xf]
      %v644 = vld [vmem:[%s3 + $0x88] sm:$0xf]
      %v645 = vld [vmem:[%s3 + $0x8c] sm:$0xf]
      %v646 = vld [vmem:[%s3 + $0x90] sm:$0xf]
      %v647 = vld [vmem:[%s3 + $0x94] sm:$0xf]
      %v648 = vld [vmem:[%s3 + $0x98] sm:$0xf]
      %v649 = vld [vmem:[%s3 + $0x9c] sm:$0xf]
      %v650 = vld [vmem:[%s3 + $0xa0] sm:$0xf]
      %v651 = vld [vmem:[%s3 + $0xa4] sm:$0xf]
      %v652 = vld [vmem:[%s3 + $0xa8] sm:$0xf]
      %v653 = vld [vmem:[%s3 + $0xac] sm:$0xf]
      %v654 = vld [vmem:[%s3 + $0xb0] sm:$0xf]
      %v655 = vld [vmem:[%s3 + $0xb4] sm:$0xf]
      %v656 = vld [vmem:[%s3 + $0xb8] sm:$0xf]
      %v657 = vld [vmem:[%s3 + $0xbc] sm:$0xf]
      %v658 = vld [vmem:[%s3 + $0xc0] sm:$0xf]
      %v659 = vld [vmem:[%s3 + $0xc4] sm:$0xf]
      %v660 = vld [vmem:[%s3 + $0xc8] sm:$0xf]
      %v661 = vld [vmem:[%s3 + $0xcc] sm:$0xf]
      %v662 = vld [vmem:[%s3 + $0xd0] sm:$0xf]
      %v663 = vld [vmem:[%s3 + $0xd4] sm:$0xf]
      %v664 = vld [vmem:[%s3 + $0xd8] sm:$0xf]
      %v665 = vld [vmem:[%s3 + $0xdc] sm:$0xf]
      %v666 = vld [vmem:[%s3 + $0xe0] sm:$0xf]
      %v667 = vld [vmem:[%s3 + $0xe4] sm:$0xf]
      %v668 = vld [vmem:[%s3 + $0xe8] sm:$0xf]
      %v669 = vld [vmem:[%s3 + $0xec] sm:$0xf]
      %v670 = vld [vmem:[%s3 + $0xf0] sm:$0xf]
      %v671 = vld [vmem:[%s3 + $0xf4] sm:$0xf]
      %v672 = vld [vmem:[%s3 + $0xf8] sm:$0xf]
      %v673 = vld [vmem:[%s3 + $0xfc] sm:$0xf]
      %v674 = vld [vmem:[%s3 + $0x100] sm:$0xf]
      %v675 = vld [vmem:[%s3 + $0x104] sm:$0xf]
      %v676 = vld [vmem:[%s3 + $0x108] sm:$0xf]
      %v677 = vld [vmem:[%s3 + $0x10c] sm:$0xf]
      %v678 = vld [vmem:[%s3 + $0x110] sm:$0xf]
      %v679 = vld [vmem:[%s3 + $0x114] sm:$0xf]
      %v680 = vld [vmem:[%s3 + $0x118] sm:$0xf]
      %v681 = vld [vmem:[%s3 + $0x11c] sm:$0xf]
      %v682 = vld [vmem:[%s3 + $0x120] sm:$0xf]
      %v683 = vld [vmem:[%s3 + $0x124] sm:$0xf]
      %v684 = vld [vmem:[%s3 + $0x128] sm:$0xf]
      %v685 = vld [vmem:[%s3 + $0x12c] sm:$0xf]
      %v686 = vld [vmem:[%s3 + $0x130] sm:$0xf]
      %v687 = vld [vmem:[%s3 + $0x134] sm:$0xf]
      %v688 = vld [vmem:[%s3 + $0x138] sm:$0xf]
      %v689 = vld [vmem:[%s3 + $0x13c] sm:$0xf]
      %v690 = vld [vmem:[%s3 + $0x140] sm:$0xf]
      %v691 = vld [vmem:[%s3 + $0x144] sm:$0xf]
      %v692 = vld [vmem:[%s3 + $0x148] sm:$0xf]
      %v693 = vld [vmem:[%s3 + $0x14c] sm:$0xf]
      %v694 = vld [vmem:[%s3 + $0x150] sm:$0xf]
      %v695 = vld [vmem:[%s3 + $0x154] sm:$0xf]
      %v696 = vld [vmem:[%s3 + $0x158] sm:$0xf]
      %v697 = vld [vmem:[%s3 + $0x15c] sm:$0xf]
      %v698 = vld [vmem:[%s3 + $0x160] sm:$0xf]
      %v699 = vld [vmem:[%s3 + $0x164] sm:$0xf]
      %v700 = vld [vmem:[%s3 + $0x168] sm:$0xf]
      %v701 = vld [vmem:[%s3 + $0x16c] sm:$0xf]
      %v702 = vld [vmem:[%s3 + $0x170] sm:$0xf]
      %v703 = vld [vmem:[%s3 + $0x174] sm:$0xf]
      %v704 = vld [vmem:[%s3 + $0x178] sm:$0xf]
      %v705 = vld [vmem:[%s3 + $0x17c] sm:$0xf]
      %v706 = vld [vmem:[%s3 + $0x180] sm:$0xf]
      %v707 = vld [vmem:[%s3 + $0x184] sm:$0xf]
      %v708 = vld [vmem:[%s3 + $0x188] sm:$0xf]
      %v709 = vld [vmem:[%s3 + $0x18c] sm:$0xf]
      %v710 = vld [vmem:[%s3 + $0x190] sm:$0xf]
      %v711 = vld [vmem:[%s3 + $0x194] sm:$0xf]
      %v712 = vld [vmem:[%s3 + $0x198] sm:$0xf]
      %v713 = vld [vmem:[%s3 + $0x19c] sm:$0xf]
      %v714 = vld [vmem:[%s3 + $0x1a0] sm:$0xf]
      %v715 = vld [vmem:[%s3 + $0x1a4] sm:$0xf]
      %v716 = vld [vmem:[%s3 + $0x1a8] sm:$0xf]
      %v717 = vld [vmem:[%s3 + $0x1ac] sm:$0xf]
      %v718 = vld [vmem:[%s3 + $0x1b0] sm:$0xf]
      %v719 = vld [vmem:[%s3 + $0x1b4] sm:$0xf]
      %v720 = vld [vmem:[%s3 + $0x1b8] sm:$0xf]
      %v721 = vld [vmem:[%s3 + $0x1bc] sm:$0xf]
      %v722 = vld [vmem:[%s3 + $0x1c0] sm:$0xf]
      %v723 = vld [vmem:[%s3 + $0x1c4] sm:$0xf]
      %v724 = vld [vmem:[%s3 + $0x1c8] sm:$0xf]
      %v725 = vld [vmem:[%s3 + $0x1cc] sm:$0xf]
      %v726 = vld [vmem:[%s3 + $0x1d0] sm:$0xf]
      %v727 = vld [vmem:[%s3 + $0x1d4] sm:$0xf]
      %v728 = vld [vmem:[%s3 + $0x1d8] sm:$0xf]
      %v729 = vld [vmem:[%s3 + $0x1dc] sm:$0xf]
      %v730 = vld [vmem:[%s3 + $0x1e0] sm:$0xf]
      %v731 = vld [vmem:[%s3 + $0x1e4] sm:$0xf]
      %v732 = vld [vmem:[%s3 + $0x1e8] sm:$0xf]
      %v733 = vld [vmem:[%s3 + $0x1ec] sm:$0xf]
      %v734 = vld [vmem:[%s3 + $0x1f0] sm:$0xf]
      %v735 = vld [vmem:[%s3 + $0x1f4] sm:$0xf]
      %v736 = vld [vmem:[%s3 + $0x1f8] sm:$0xf]
      %v737 = vld [vmem:[%s3 + $0x1fc] sm:$0xf]
      %v738 = vld [vmem:[%s3 + $0x200] sm:$0xf]
      %v739 = vld [vmem:[%s3 + $0x204] sm:$0xf]
      %v740 = vld [vmem:[%s3 + $0x208] sm:$0xf]
      %v741 = vld [vmem:[%s3 + $0x20c] sm:$0xf]
      %v742 = vld [vmem:[%s3 + $0x210] sm:$0xf]
      %v743 = vld [vmem:[%s3 + $0x214] sm:$0xf]
      %v744 = vld [vmem:[%s3 + $0x218] sm:$0xf]
      %v745 = vld [vmem:[%s3 + $0x21c] sm:$0xf]
      %v746 = vld [vmem:[%s3 + $0x220] sm:$0xf]
      %v747 = vld [vmem:[%s3 + $0x224] sm:$0xf]
      %v748 = vld [vmem:[%s3 + $0x228] sm:$0xf]
      %v749 = vld [vmem:[%s3 + $0x22c] sm:$0xf]
      %v750 = vld [vmem:[%s3 + $0x230] sm:$0xf]
      %v751 = vld [vmem:[%s3 + $0x234] sm:$0xf]
      %v752 = vld [vmem:[%s3 + $0x238] sm:$0xf]
      %v753 = vld [vmem:[%s3 + $0x23c] sm:$0xf]
      %v754 = vld [vmem:[%s4] sm:$0x1]
      %v756 = vperm.slane %v754, 0
      %v778 = vunpack.c.l.b16 %v590
      %v779 = vunpack.c.h.b16 %v590
      %v780 = vunpack.c.l.b16 %v591
      %v781 = vunpack.c.h.b16 %v591
      %v782 = vunpack.c.l.b16 %v592
      %v783 = vunpack.c.h.b16 %v592
      %v784 = vunpack.c.l.b16 %v593
      %v785 = vunpack.c.h.b16 %v593
      %v786 = vunpack.c.l.b16 %v594
      %v787 = vunpack.c.l.b16 %v595
      %v788 = vunpack.c.h.b16 %v595
      %v789 = vunpack.c.l.b16 %v596
      %v790 = vunpack.c.h.b16 %v596
      %v791 = vunpack.c.l.b16 %v597
      %v792 = vunpack.c.h.b16 %v597
      %v793 = vunpack.c.l.b16 %v598
      %v794 = vunpack.c.h.b16 %v598
      %v795 = vunpack.c.l.b16 %v599
      %v796 = vunpack.c.l.b16 %v600
      %v797 = vunpack.c.h.b16 %v600
      %v798 = vunpack.c.l.b16 %v601
      %v799 = vunpack.c.h.b16 %v601
      %v800 = vunpack.c.l.b16 %v602
      %v801 = vunpack.c.h.b16 %v602
      %v802 = vunpack.c.l.b16 %v603
      %v803 = vunpack.c.h.b16 %v603
      %v804 = vunpack.c.l.b16 %v604
      %v805 = vunpack.c.l.b16 %v605
      %v806 = vunpack.c.h.b16 %v605
      %v807 = vunpack.c.l.b16 %v606
      %v808 = vunpack.c.h.b16 %v606
      %v809 = vunpack.c.l.b16 %v607
      %v810 = vunpack.c.h.b16 %v607
      %v811 = vunpack.c.l.b16 %v608
      %v812 = vunpack.c.h.b16 %v608
      %v813 = vunpack.c.l.b16 %v609
      %v814 = vpack.c.b16 %v787, %v778
      %v815 = vpack.c.b16 %v788, %v779
      %v816 = vpack.c.b16 %v789, %v780
      %v817 = vpack.c.b16 %v790, %v781
      %v818 = vpack.c.b16 %v791, %v782
      %v819 = vpack.c.b16 %v792, %v783
      %v820 = vpack.c.b16 %v793, %v784
      %v821 = vpack.c.b16 %v794, %v785
      %v822 = vpack.c.b16 %v795, %v786
      %v823 = vpack.c.b16 %v805, %v796
      %v824 = vpack.c.b16 %v806, %v797
      %v825 = vpack.c.b16 %v807, %v798
      %v826 = vpack.c.b16 %v808, %v799
      %v827 = vpack.c.b16 %v809, %v800
      %v828 = vpack.c.b16 %v810, %v801
      %v829 = vpack.c.b16 %v811, %v802
      %v830 = vpack.c.b16 %v812, %v803
      %v831 = vpack.c.b16 %v813, %v804
      %v994 = vunpack.c.l.b16 %v610
      %v995 = vunpack.c.l.b16 %v611
      %v996 = vunpack.c.l.b16 %v612
      %v997 = vunpack.c.l.b16 %v613
      %v998 = vunpack.c.l.b16 %v614
      %v999 = vunpack.c.l.b16 %v615
      %v1000 = vunpack.c.l.b16 %v616
      %v1001 = vunpack.c.l.b16 %v617
      %v1002 = vunpack.c.l.b16 %v618
      %v1003 = vunpack.c.l.b16 %v619
      %v1004 = vunpack.c.l.b16 %v620
      %v1005 = vunpack.c.l.b16 %v621
      %v1006 = vunpack.c.l.b16 %v622
      %v1007 = vunpack.c.l.b16 %v623
      %v1008 = vunpack.c.l.b16 %v624
      %v1009 = vunpack.c.l.b16 %v625
      %v1010 = vunpack.c.l.b16 %v626
      %v1011 = vunpack.c.l.b16 %v627
      %v1012 = vunpack.c.l.b16 %v628
      %v1013 = vunpack.c.l.b16 %v629
      %v1014 = vunpack.c.l.b16 %v630
      %v1015 = vunpack.c.l.b16 %v631
      %v1016 = vunpack.c.l.b16 %v632
      %v1017 = vunpack.c.l.b16 %v633
      %v1018 = vunpack.c.l.b16 %v634
      %v1019 = vunpack.c.l.b16 %v635
      %v1020 = vunpack.c.l.b16 %v636
      %v1021 = vunpack.c.l.b16 %v637
      %v1022 = vunpack.c.l.b16 %v638
      %v1023 = vunpack.c.l.b16 %v639
      %v1024 = vunpack.c.l.b16 %v640
      %v1025 = vunpack.c.l.b16 %v641
      %v1026 = vunpack.c.l.b16 %v642
      %v1027 = vunpack.c.l.b16 %v643
      %v1028 = vunpack.c.l.b16 %v644
      %v1029 = vunpack.c.l.b16 %v645
      %v1030 = vunpack.c.l.b16 %v646
      %v1031 = vunpack.c.l.b16 %v647
      %v1032 = vunpack.c.l.b16 %v648
      %v1033 = vunpack.c.l.b16 %v649
      %v1034 = vunpack.c.l.b16 %v650
      %v1035 = vunpack.c.l.b16 %v651
      %v1036 = vunpack.c.l.b16 %v652
      %v1037 = vunpack.c.l.b16 %v653
      %v1038 = vunpack.c.l.b16 %v654
      %v1039 = vunpack.c.l.b16 %v655
      %v1040 = vunpack.c.l.b16 %v656
      %v1041 = vunpack.c.l.b16 %v657
      %v1042 = vunpack.c.l.b16 %v658
      %v1043 = vunpack.c.l.b16 %v659
      %v1044 = vunpack.c.l.b16 %v660
      %v1045 = vunpack.c.l.b16 %v661
      %v1046 = vunpack.c.l.b16 %v662
      %v1047 = vunpack.c.l.b16 %v663
      %v1048 = vunpack.c.l.b16 %v664
      %v1049 = vunpack.c.l.b16 %v665
      %v1050 = vunpack.c.l.b16 %v666
      %v1051 = vunpack.c.l.b16 %v667
      %v1052 = vunpack.c.l.b16 %v668
      %v1053 = vunpack.c.l.b16 %v669
      %v1054 = vunpack.c.l.b16 %v670
      %v1055 = vunpack.c.l.b16 %v671
      %v1056 = vunpack.c.l.b16 %v672
      %v1057 = vunpack.c.l.b16 %v673
      %v1058 = vunpack.c.l.b16 %v674
      %v1059 = vunpack.c.l.b16 %v675
      %v1060 = vunpack.c.l.b16 %v676
      %v1061 = vunpack.c.l.b16 %v677
      %v1062 = vunpack.c.l.b16 %v678
      %v1063 = vunpack.c.l.b16 %v679
      %v1064 = vunpack.c.l.b16 %v680
      %v1065 = vunpack.c.l.b16 %v681
      %v1066 = vunpack.c.l.b16 %v682
      %v1067 = vunpack.c.l.b16 %v683
      %v1068 = vunpack.c.l.b16 %v684
      %v1069 = vunpack.c.l.b16 %v685
      %v1070 = vunpack.c.l.b16 %v686
      %v1071 = vunpack.c.l.b16 %v687
      %v1072 = vunpack.c.l.b16 %v688
      %v1073 = vunpack.c.l.b16 %v689
      %v1074 = vunpack.c.l.b16 %v690
      %v1075 = vunpack.c.l.b16 %v691
      %v1076 = vunpack.c.l.b16 %v692
      %v1077 = vunpack.c.l.b16 %v693
      %v1078 = vunpack.c.l.b16 %v694
      %v1079 = vunpack.c.l.b16 %v695
      %v1080 = vunpack.c.l.b16 %v696
      %v1081 = vunpack.c.l.b16 %v697
      %v1082 = vunpack.c.l.b16 %v698
      %v1083 = vunpack.c.l.b16 %v699
      %v1084 = vunpack.c.l.b16 %v700
      %v1085 = vunpack.c.l.b16 %v701
      %v1086 = vunpack.c.l.b16 %v702
      %v1087 = vunpack.c.l.b16 %v703
      %v1088 = vunpack.c.l.b16 %v704
      %v1089 = vunpack.c.l.b16 %v705
      %v1090 = vunpack.c.l.b16 %v706
      %v1091 = vunpack.c.l.b16 %v707
      %v1092 = vunpack.c.l.b16 %v708
      %v1093 = vunpack.c.l.b16 %v709
      %v1094 = vunpack.c.l.b16 %v710
      %v1095 = vunpack.c.l.b16 %v711
      %v1096 = vunpack.c.l.b16 %v712
      %v1097 = vunpack.c.l.b16 %v713
      %v1098 = vunpack.c.l.b16 %v714
      %v1099 = vunpack.c.l.b16 %v715
      %v1100 = vunpack.c.l.b16 %v716
      %v1101 = vunpack.c.l.b16 %v717
      %v1102 = vunpack.c.l.b16 %v718
      %v1103 = vunpack.c.l.b16 %v719
      %v1104 = vunpack.c.l.b16 %v720
      %v1105 = vunpack.c.l.b16 %v721
      %v1106 = vunpack.c.l.b16 %v722
      %v1107 = vunpack.c.l.b16 %v723
      %v1108 = vunpack.c.l.b16 %v724
      %v1109 = vunpack.c.l.b16 %v725
      %v1110 = vunpack.c.l.b16 %v726
      %v1111 = vunpack.c.l.b16 %v727
      %v1112 = vunpack.c.l.b16 %v728
      %v1113 = vunpack.c.l.b16 %v729
      %v1114 = vunpack.c.l.b16 %v730
      %v1115 = vunpack.c.l.b16 %v731
      %v1116 = vunpack.c.l.b16 %v732
      %v1117 = vunpack.c.l.b16 %v733
      %v1118 = vunpack.c.l.b16 %v734
      %v1119 = vunpack.c.l.b16 %v735
      %v1120 = vunpack.c.l.b16 %v736
      %v1121 = vunpack.c.l.b16 %v737
      %v1122 = vunpack.c.l.b16 %v738
      %v1123 = vunpack.c.l.b16 %v739
      %v1124 = vunpack.c.l.b16 %v740
      %v1125 = vunpack.c.l.b16 %v741
      %v1126 = vunpack.c.l.b16 %v742
      %v1127 = vunpack.c.l.b16 %v743
      %v1128 = vunpack.c.l.b16 %v744
      %v1129 = vunpack.c.l.b16 %v745
      %v1130 = vunpack.c.l.b16 %v746
      %v1131 = vunpack.c.l.b16 %v747
      %v1132 = vunpack.c.l.b16 %v748
      %v1133 = vunpack.c.l.b16 %v749
      %v1134 = vunpack.c.l.b16 %v750
      %v1135 = vunpack.c.l.b16 %v751
      %v1136 = vunpack.c.l.b16 %v752
      %v1137 = vunpack.c.l.b16 %v753
      %v1138 = vpack.c.b16 %v995, %v994
      %v1139 = vpack.c.b16 %v997, %v996
      %v1140 = vpack.c.b16 %v999, %v998
      %v1141 = vpack.c.b16 %v1001, %v1000
      %v1142 = vpack.c.b16 %v1003, %v1002
      %v1143 = vpack.c.b16 %v1005, %v1004
      %v1144 = vpack.c.b16 %v1007, %v1006
      %v1145 = vpack.c.b16 %v1009, %v1008
      %v1146 = vpack.c.b16 %v1011, %v1010
      %v1147 = vpack.c.b16 %v1013, %v1012
      %v1148 = vpack.c.b16 %v1015, %v1014
      %v1149 = vpack.c.b16 %v1017, %v1016
      %v1150 = vpack.c.b16 %v1019, %v1018
      %v1151 = vpack.c.b16 %v1021, %v1020
      %v1152 = vpack.c.b16 %v1023, %v1022
      %v1153 = vpack.c.b16 %v1025, %v1024
      %v1154 = vpack.c.b16 %v1027, %v1026
      %v1155 = vpack.c.b16 %v1029, %v1028
      %v1156 = vpack.c.b16 %v1031, %v1030
      %v1157 = vpack.c.b16 %v1033, %v1032
      %v1158 = vpack.c.b16 %v1035, %v1034
      %v1159 = vpack.c.b16 %v1037, %v1036
      %v1160 = vpack.c.b16 %v1039, %v1038
      %v1161 = vpack.c.b16 %v1041, %v1040
      %v1162 = vpack.c.b16 %v1043, %v1042
      %v1163 = vpack.c.b16 %v1045, %v1044
      %v1164 = vpack.c.b16 %v1047, %v1046
      %v1165 = vpack.c.b16 %v1049, %v1048
      %v1166 = vpack.c.b16 %v1051, %v1050
      %v1167 = vpack.c.b16 %v1053, %v1052
      %v1168 = vpack.c.b16 %v1055, %v1054
      %v1169 = vpack.c.b16 %v1057, %v1056
      %v1170 = vpack.c.b16 %v1059, %v1058
      %v1171 = vpack.c.b16 %v1061, %v1060
      %v1172 = vpack.c.b16 %v1063, %v1062
      %v1173 = vpack.c.b16 %v1065, %v1064
      %v1174 = vpack.c.b16 %v1067, %v1066
      %v1175 = vpack.c.b16 %v1069, %v1068
      %v1176 = vpack.c.b16 %v1071, %v1070
      %v1177 = vpack.c.b16 %v1073, %v1072
      %v1178 = vpack.c.b16 %v1075, %v1074
      %v1179 = vpack.c.b16 %v1077, %v1076
      %v1180 = vpack.c.b16 %v1079, %v1078
      %v1181 = vpack.c.b16 %v1081, %v1080
      %v1182 = vpack.c.b16 %v1083, %v1082
      %v1183 = vpack.c.b16 %v1085, %v1084
      %v1184 = vpack.c.b16 %v1087, %v1086
      %v1185 = vpack.c.b16 %v1089, %v1088
      %v1186 = vpack.c.b16 %v1091, %v1090
      %v1187 = vpack.c.b16 %v1093, %v1092
      %v1188 = vpack.c.b16 %v1095, %v1094
      %v1189 = vpack.c.b16 %v1097, %v1096
      %v1190 = vpack.c.b16 %v1099, %v1098
      %v1191 = vpack.c.b16 %v1101, %v1100
      %v1192 = vpack.c.b16 %v1103, %v1102
      %v1193 = vpack.c.b16 %v1105, %v1104
      %v1194 = vpack.c.b16 %v1107, %v1106
      %v1195 = vpack.c.b16 %v1109, %v1108
      %v1196 = vpack.c.b16 %v1111, %v1110
      %v1197 = vpack.c.b16 %v1113, %v1112
      %v1198 = vpack.c.b16 %v1115, %v1114
      %v1199 = vpack.c.b16 %v1117, %v1116
      %v1200 = vpack.c.b16 %v1119, %v1118
      %v1201 = vpack.c.b16 %v1121, %v1120
      %v1202 = vpack.c.b16 %v1123, %v1122
      %v1203 = vpack.c.b16 %v1125, %v1124
      %v1204 = vpack.c.b16 %v1127, %v1126
      %v1205 = vpack.c.b16 %v1129, %v1128
      %v1206 = vpack.c.b16 %v1131, %v1130
      %v1207 = vpack.c.b16 %v1133, %v1132
      %v1208 = vpack.c.b16 %v1135, %v1134
      %v1209 = vpack.c.b16 %v1137, %v1136
      %1282 = vmatpush.bf16.msra.mxu0 %v1145
      %1283 = vmatpush.bf16.msra.mxu0 %v1144
      %1284 = vmatpush.bf16.msra.mxu0 %v1143
      %1285 = vmatpush.bf16.msra.mxu0 %v1142
      %1286 = vmatpush.bf16.msra.mxu0 %v1141
      %1287 = vmatpush.bf16.msra.mxu0 %v1140
      %1288 = vmatpush.bf16.msra.mxu0 %v1139
      %1289 = vmatpush.bf16.msra.mxu0 %v1138
      %1290 = vmatmul.bf16.gmra.mxu0 %v814
      %v1291 = vpop.f32.mrf.mxu0
      %v1292 = vadd.f32 %v756, %v1291
      %v1293 = vpop.f32.mrf.mxu0
      %v1294 = vadd.f32 %v756, %v1293
      %1295 = vmatmul.bf16.gmra.mxu0 %v823
      %v1296 = vpop.f32.mrf.mxu0
      %v1297 = vadd.f32 %v756, %v1296
      %v1298 = vpop.f32.mrf.mxu0
      %v1299 = vadd.f32 %v756, %v1298
      %1300 = vdwg.mxu0
      %1301 = vmatpush.bf16.msra.mxu0 %v1153
      %1302 = vmatpush.bf16.msra.mxu0 %v1152
      %1303 = vmatpush.bf16.msra.mxu0 %v1151
      %1304 = vmatpush.bf16.msra.mxu0 %v1150
      %1305 = vmatpush.bf16.msra.mxu0 %v1149
      %1306 = vmatpush.bf16.msra.mxu0 %v1148
      %1307 = vmatpush.bf16.msra.mxu0 %v1147
      %1308 = vmatpush.bf16.msra.mxu0 %v1146
      %1309 = vmatmul.bf16.gmra.mxu0 %v815
      %v1310 = vpop.f32.mrf.mxu0
      %v1311 = vadd.f32 %v1292, %v1310
      %v1312 = vpop.f32.mrf.mxu0
      %v1313 = vadd.f32 %v1294, %v1312
      %1314 = vmatmul.bf16.gmra.mxu0 %v824
      %v1315 = vpop.f32.mrf.mxu0
      %v1316 = vadd.f32 %v1297, %v1315
      %v1317 = vpop.f32.mrf.mxu0
      %v1318 = vadd.f32 %v1299, %v1317
      %1319 = vdwg.mxu0
      %1320 = vmatpush.bf16.msra.mxu0 %v1161
      %1321 = vmatpush.bf16.msra.mxu0 %v1160
      %1322 = vmatpush.bf16.msra.mxu0 %v1159
      %1323 = vmatpush.bf16.msra.mxu0 %v1158
      %1324 = vmatpush.bf16.msra.mxu0 %v1157
      %1325 = vmatpush.bf16.msra.mxu0 %v1156
      %1326 = vmatpush.bf16.msra.mxu0 %v1155
      %1327 = vmatpush.bf16.msra.mxu0 %v1154
      %1328 = vmatmul.bf16.gmra.mxu0 %v816
      %v1329 = vpop.f32.mrf.mxu0
      %v1330 = vadd.f32 %v1311, %v1329
      %v1331 = vpop.f32.mrf.mxu0
      %v1332 = vadd.f32 %v1313, %v1331
      %1333 = vmatmul.bf16.gmra.mxu0 %v825
      %v1334 = vpop.f32.mrf.mxu0
      %v1335 = vadd.f32 %v1316, %v1334
      %v1336 = vpop.f32.mrf.mxu0
      %v1337 = vadd.f32 %v1318, %v1336
      %1338 = vdwg.mxu0
      %1339 = vmatpush.bf16.msra.mxu0 %v1169
      %1340 = vmatpush.bf16.msra.mxu0 %v1168
      %1341 = vmatpush.bf16.msra.mxu0 %v1167
      %1342 = vmatpush.bf16.msra.mxu0 %v1166
      %1343 = vmatpush.bf16.msra.mxu0 %v1165
      %1344 = vmatpush.bf16.msra.mxu0 %v1164
      %1345 = vmatpush.bf16.msra.mxu0 %v1163
      %1346 = vmatpush.bf16.msra.mxu0 %v1162
      %1347 = vmatmul.bf16.gmra.mxu0 %v817
      %v1348 = vpop.f32.mrf.mxu0
      %v1349 = vadd.f32 %v1330, %v1348
      %v1350 = vpop.f32.mrf.mxu0
      %v1351 = vadd.f32 %v1332, %v1350
      %1352 = vmatmul.bf16.gmra.mxu0 %v826
      %v1353 = vpop.f32.mrf.mxu0
      %v1354 = vadd.f32 %v1335, %v1353
      %v1355 = vpop.f32.mrf.mxu0
      %v1356 = vadd.f32 %v1337, %v1355
      %1357 = vdwg.mxu0
      %1358 = vmatpush.bf16.msra.mxu0 %v1177
      %1359 = vmatpush.bf16.msra.mxu0 %v1176
      %1360 = vmatpush.bf16.msra.mxu0 %v1175
      %1361 = vmatpush.bf16.msra.mxu0 %v1174
      %1362 = vmatpush.bf16.msra.mxu0 %v1173
      %1363 = vmatpush.bf16.msra.mxu0 %v1172
      %1364 = vmatpush.bf16.msra.mxu0 %v1171
      %1365 = vmatpush.bf16.msra.mxu0 %v1170
      %1366 = vmatmul.bf16.gmra.mxu0 %v818
      %v1367 = vpop.f32.mrf.mxu0
      %v1368 = vadd.f32 %v1349, %v1367
      %v1369 = vpop.f32.mrf.mxu0
      %v1370 = vadd.f32 %v1351, %v1369
      %1371 = vmatmul.bf16.gmra.mxu0 %v827
      %v1372 = vpop.f32.mrf.mxu0
      %v1373 = vadd.f32 %v1354, %v1372
      %v1374 = vpop.f32.mrf.mxu0
      %v1375 = vadd.f32 %v1356, %v1374
      %1376 = vdwg.mxu0
      %1377 = vmatpush.bf16.msra.mxu0 %v1185
      %1378 = vmatpush.bf16.msra.mxu0 %v1184
      %1379 = vmatpush.bf16.msra.mxu0 %v1183
      %1380 = vmatpush.bf16.msra.mxu0 %v1182
      %1381 = vmatpush.bf16.msra.mxu0 %v1181
      %1382 = vmatpush.bf16.msra.mxu0 %v1180
      %1383 = vmatpush.bf16.msra.mxu0 %v1179
      %1384 = vmatpush.bf16.msra.mxu0 %v1178
      %1385 = vmatmul.bf16.gmra.mxu0 %v819
      %v1386 = vpop.f32.mrf.mxu0
      %v1387 = vadd.f32 %v1368, %v1386
      %v1388 = vpop.f32.mrf.mxu0
      %v1389 = vadd.f32 %v1370, %v1388
      %1390 = vmatmul.bf16.gmra.mxu0 %v828
      %v1391 = vpop.f32.mrf.mxu0
      %v1392 = vadd.f32 %v1373, %v1391
      %v1393 = vpop.f32.mrf.mxu0
      %v1394 = vadd.f32 %v1375, %v1393
      %1395 = vdwg.mxu0
      %1396 = vmatpush.bf16.msra.mxu0 %v1193
      %1397 = vmatpush.bf16.msra.mxu0 %v1192
      %1398 = vmatpush.bf16.msra.mxu0 %v1191
      %1399 = vmatpush.bf16.msra.mxu0 %v1190
      %1400 = vmatpush.bf16.msra.mxu0 %v1189
      %1401 = vmatpush.bf16.msra.mxu0 %v1188
      %1402 = vmatpush.bf16.msra.mxu0 %v1187
      %1403 = vmatpush.bf16.msra.mxu0 %v1186
      %1404 = vmatmul.bf16.gmra.mxu0 %v820
      %v1405 = vpop.f32.mrf.mxu0
      %v1406 = vadd.f32 %v1387, %v1405
      %v1407 = vpop.f32.mrf.mxu0
      %v1408 = vadd.f32 %v1389, %v1407
      %1409 = vmatmul.bf16.gmra.mxu0 %v829
      %v1410 = vpop.f32.mrf.mxu0
      %v1411 = vadd.f32 %v1392, %v1410
      %v1412 = vpop.f32.mrf.mxu0
      %v1413 = vadd.f32 %v1394, %v1412
      %1414 = vdwg.mxu0
      %1415 = vmatpush.bf16.msra.mxu0 %v1201
      %1416 = vmatpush.bf16.msra.mxu0 %v1200
      %1417 = vmatpush.bf16.msra.mxu0 %v1199
      %1418 = vmatpush.bf16.msra.mxu0 %v1198
      %1419 = vmatpush.bf16.msra.mxu0 %v1197
      %1420 = vmatpush.bf16.msra.mxu0 %v1196
      %1421 = vmatpush.bf16.msra.mxu0 %v1195
      %1422 = vmatpush.bf16.msra.mxu0 %v1194
      %1423 = vmatmul.bf16.gmra.mxu0 %v821
      %v1424 = vpop.f32.mrf.mxu0
      %v1425 = vadd.f32 %v1406, %v1424
      %v1426 = vpop.f32.mrf.mxu0
      %v1427 = vadd.f32 %v1408, %v1426
      %1428 = vmatmul.bf16.gmra.mxu0 %v830
      %v1429 = vpop.f32.mrf.mxu0
      %v1430 = vadd.f32 %v1411, %v1429
      %v1431 = vpop.f32.mrf.mxu0
      %v1432 = vadd.f32 %v1413, %v1431
      %1433 = vdwg.mxu0
      %1434 = vmatpush.bf16.msra.mxu0 %v1209
      %1435 = vmatpush.bf16.msra.mxu0 %v1208
      %1436 = vmatpush.bf16.msra.mxu0 %v1207
      %1437 = vmatpush.bf16.msra.mxu0 %v1206
      %1438 = vmatpush.bf16.msra.mxu0 %v1205
      %1439 = vmatpush.bf16.msra.mxu0 %v1204
      %1440 = vmatpush.bf16.msra.mxu0 %v1203
      %1441 = vmatpush.bf16.msra.mxu0 %v1202
      %1442 = vmatmul.bf16.gmra.mxu0 %v822
      %v1443 = vpop.f32.mrf.mxu0
      %v1444 = vadd.f32 %v1425, %v1443
      %v1445 = vpop.f32.mrf.mxu0
      %v1446 = vadd.f32 %v1427, %v1445
      %1447 = vmatmul.bf16.gmra.mxu0 %v831
      %v1448 = vpop.f32.mrf.mxu0
      %v1449 = vadd.f32 %v1430, %v1448
      %v1450 = vpop.f32.mrf.mxu0
      %v1451 = vadd.f32 %v1432, %v1450
      %1452 = vdwg.mxu0
      %1453 = vst [vmem:[%s330] sm:$0xff] %v1444
      %1454 = vst [vmem:[%s330 + $0x8] sm:$0xff] %v1446
      %1455 = vst [vmem:[%s330 + $0x10] sm:$0xff] %v1449
      %1456 = vst [vmem:[%s330 + $0x18] sm:$0xff] %v1451
      %v1457 = vadd.f32 %v1444, %v1446
      %v1458 = vadd.f32 %v1457, %v1449
      %v1459 = vadd.f32 %v1458, %v1451
      %v1460 = vrot.slane %v1459, 4
      %v1461 = vadd.f32 %v1459, %v1460
      %v1462 = vrot.slane %v1461, 2
      %v1463 = vadd.f32 %v1461, %v1462
      %v1464 = vrot.slane %v1463, 1
      %v1465 = vadd.f32 %v1463, %v1464
      %v1466 = vmul.f32 %v1444, %v1444
      %v1467 = vmul.f32 %v1446, %v1446
      %v1468 = vmul.f32 %v1449, %v1449
      %v1469 = vmul.f32 %v1451, %v1451
      %v1470 = vadd.f32 %v1466, %v1467
      %v1471 = vadd.f32 %v1470, %v1468
      %v1472 = vadd.f32 %v1471, %v1469
      %v1473 = vrot.slane %v1472, 4
      %v1474 = vadd.f32 %v1472, %v1473
      %v1475 = vrot.slane %v1474, 2
      %v1476 = vadd.f32 %v1474, %v1475
      %v1477 = vrot.slane %v1476, 1
      %v1478 = vadd.f32 %v1476, %v1477
      %v1479 = vsel %vm458, %v1465, %v1478
      %1480 = vst [vmem:[%s338] sm:$0x3] %v1479
      %p1481 = scmp.lt.s32.totalorder %s20, 1
      %s1482 = scalar_select %p1481, %s20, 1
      %s1483 = smul.addr %s1482, 4
      %s1484 = smul.addr %s1483, 8
      %s1485 = scalar_lea.vmem %s5, %s1484
      %p1486 = scmp.lt.s32.totalorder %s20, 1
      %s1487 = scalar_select %p1486, %s20, 1
      %s1488 = smul.addr %s1487, 4
      %s1489 = smul.addr %s1488, 8
      %s1490 = scalar_lea.vmem %s6, %s1489
      %p1491 = scmp.lt.s32.totalorder %s20, 1
      %s1492 = scalar_select %p1491, %s20, 1
      %s1493 = smul.addr %s1492, 2
      %s1494 = scalar_lea.vmem %s7, %s1493
      %p1495 = scmp.lt.s32.totalorder %s20, 1
      %s1496 = scalar_select %p1495, %s20, 1
      %s1497 = smul.addr %s1496, 2
      %s1498 = scalar_lea.vmem %s8, %s1497
      // Predicated region
      $region41: #{_lambda_.7} parent=39 // pred_check
        %p1499 = pneg %p148
      $region42: #{_lambda_.7} parent=39 // pred_check_branch
        %1501 = sbr.rel (%p1499) target = $region44
      $region43: #{_lambda_.7} parent=39 // pred_region
        _
      $region44: #{_lambda_.7} parent=39 // pred_fallthru
        _
      // Predicated region
      $region45: #{_lambda_.7} parent=39 // pred_check
        %p1502 = pneg %p174
      $region46: #{_lambda_.7} parent=39 // pred_check_branch
        %1504 = sbr.rel (%p1502) target = $region48
      $region47: #{_lambda_.7} parent=39 // pred_region
        _
      $region48: #{_lambda_.7} parent=39 // pred_fallthru
        _
      // Predicated region
      $region49: #{_lambda_.7} parent=39 // pred_check
        %p1505 = pneg %p200
      $region50: #{_lambda_.7} parent=39 // pred_check_branch
        %1507 = sbr.rel (%p1505) target = $region52
      $region51: #{_lambda_.7} parent=39 // pred_region
        _
      $region52: #{_lambda_.7} parent=39 // pred_fallthru
        _
      // Predicated region
      $region53: #{_lambda_.7} parent=39 // pred_check
        %p1508 = pneg %p226
      $region54: #{_lambda_.7} parent=39 // pred_check_branch
        %1510 = sbr.rel (%p1508) target = $region56
      $region55: #{_lambda_.7} parent=39 // pred_region
        _
      $region56: #{_lambda_.7} parent=39 // pred_fallthru
        _
    $region40: #{_lambda_.7} parent=5 // pred_fallthru
      _
    %p1511 = scmp.le.s32.totalorder 2, %s15
    // Predicated region
    $region57: #{_lambda_.7} parent=5 // pred_check
      %p1512 = pneg %p1511
    $region58: #{_lambda_.7} parent=5 // pred_check_branch
      %1514 = sbr.rel (%p1512) target = $region60
    $region59: #{_lambda_.7} parent=5 // pred_region
      %s1515 = ssub.s32 %s15, 2
      // Predicated region
      $region61: #{_lambda_.7} parent=59 // pred_check
        %p1516 = pneg %p154
      $region62: #{_lambda_.7} parent=59 // pred_check_branch
        %1518 = sbr.rel (%p1516) target = $region64
      $region63: #{_lambda_.7} parent=59 // pred_region
        %p1519 = scmp.lt.s32.totalorder %s21, 1
        %s1520 = scalar_select %p1519, %s21, 1
        %s1521 = smul.addr %s1520, 4
        %s1522 = smul.addr %s1521, 8
        %s1523 = scalar_lea.vmem %s5, %s1522
      $region64: #{_lambda_.7} parent=59 // pred_fallthru
        _
      // Predicated region
      $region65: #{_lambda_.7} parent=59 // pred_check
        %p1524 = pneg %p180
      $region66: #{_lambda_.7} parent=59 // pred_check_branch
        %1526 = sbr.rel (%p1524) target = $region68
      $region67: #{_lambda_.7} parent=59 // pred_region
        %p1527 = scmp.lt.s32.totalorder %s21, 1
        %s1528 = scalar_select %p1527, %s21, 1
        %s1529 = smul.addr %s1528, 4
        %s1530 = smul.addr %s1529, 8
        %s1531 = scalar_lea.vmem %s6, %s1530
      $region68: #{_lambda_.7} parent=59 // pred_fallthru
        _
      // Predicated region
      $region69: #{_lambda_.7} parent=59 // pred_check
        %p1532 = pneg %p206
      $region70: #{_lambda_.7} parent=59 // pred_check_branch
        %1534 = sbr.rel (%p1532) target = $region72
      $region71: #{_lambda_.7} parent=59 // pred_region
        %p1535 = scmp.lt.s32.totalorder %s21, 1
        %s1536 = scalar_select %p1535, %s21, 1
        %s1537 = smul.addr %s1536, 2
        %s1538 = scalar_lea.vmem %s7, %s1537
      $region72: #{_lambda_.7} parent=59 // pred_fallthru
        _
      // Predicated region
      $region73: #{_lambda_.7} parent=59 // pred_check
        %p1539 = pneg %p232
      $region74: #{_lambda_.7} parent=59 // pred_check_branch
        %1541 = sbr.rel (%p1539) target = $region76
      $region75: #{_lambda_.7} parent=59 // pred_region
        %p1542 = scmp.lt.s32.totalorder %s21, 1
        %s1543 = scalar_select %p1542, %s21, 1
        %s1544 = smul.addr %s1543, 2
        %s1545 = scalar_lea.vmem %s8, %s1544
      $region76: #{_lambda_.7} parent=59 // pred_fallthru
        _
    $region60: #{_lambda_.7} parent=5 // pred_fallthru
      _
  $region6: #{_lambda_.7} parent=0 // loop_footer
    %s19 = sadd.s32 1, %s15
  $region7: #{_lambda_.7} parent=0 // loop_footer_branch
    %14 = sbr.rel target = $region3
  $region8: #{_lambda_.7} parent=0 // loop_exit
    _

// kernel: _lambda_.8
$region0: #{_lambda_.8}
  #allocation0 [shape = 'u32[]', space=smem, size = 0x4, offset = 0x4, fixed_abs, tag = 'smem constant byte address 0x4 - core index']
  #allocation1 [shape = 'u32[72,128]{1,0:T(1,128)}', space=vmem, size = 0x9000, scoped, tag = 'internal scratch']
  #allocation2 [shape = 'f32[6,17,128]{2,1,0:T(8,128)}', space=vmem, size = 0x12000, scoped, tag = 'scratch operand']
  #allocation3 [shape = 'bf16[32,1152]{1,0:T(8,128)(2,1)}', space=vmem, size = 0x12000, scoped, tag = 'scratch operand']
  %s0 = inlined_call_operand.vmem [shape: f32[2,32,128], index: 0, kind: input, shape index: {}]
  %s1 = inlined_call_operand.vmem [shape: f32[2,2,128], index: 1, kind: input, shape index: {}]
  %s2 = inlined_call_operand.vmem [shape: f32[1,128], index: 2, kind: input, shape index: {}]
  %s3 = inlined_call_operand.vmem [shape: f32[1,128], index: 3, kind: input, shape index: {}]
  %s4 = inlined_call_operand.vmem [shape: f32[128,128], index: 4, kind: input, shape index: {}]
  %s5 = inlined_call_operand.vmem [shape: bf16[1152,128], index: 5, kind: input, shape index: {}]
  %s6 = inlined_call_operand.vmem [shape: f32[1,128], index: 6, kind: input, shape index: {}]
  %s7 = inlined_call_operand.vmem [shape: f32[2,32,128], index: 7, kind: output, shape index: {0}]
  %s8 = inlined_call_operand.vmem [shape: f32[2,2,128], index: 8, kind: output, shape index: {1}]
  %9 = xla_tuple %s7, %s8
  %s10 = sld [smem:[#allocation0]]
  $region69: #{_lambda_.8} parent=0
    _
  %s12 = ssub.s32 1, %s10
  %s13 = scalar_select 0, %s12, %s10
  loop: start=0, step=1, limit=4
  $region2: #{_lambda_.8} parent=0 // loop_pre_header
    _
  $region3: #{_lambda_.8} parent=0 // loop_header
    %s15 = sphi 0, %s19
    %p16 = scmp.ge.s32.totalorder %s15, 4
    %s25 = sphi 0, %s27
    %s28 = sphi 0, %s25
    %s29 = sphi 0, %s28
    %s45 = sphi 0, %s29
    %s49 = sphi 0, %s49
    %s51 = sphi 0, %s49
    %s52 = sphi 0, %s51
    %s66 = sphi 0, %s52
    %s70 = sphi 0, %s70
    %s72 = sphi 0, %s70
    %s73 = sphi 0, %s72
    %s87 = sphi 0, %s73
    %s91 = sphi 0, %s91
    %s93 = sphi 0, %s91
    %s94 = sphi 0, %s93
    %s108 = sphi 0, %s94
    %s112 = sphi 0, %s112
    %s114 = sphi 0, %s112
    %s115 = sphi 0, %s114
    %s129 = sphi 0, %s115
    %s133 = sphi 0, %s133
    %s135 = sphi 0, %s133
    %s136 = sphi 0, %s135
    %s150 = sphi 0, %s136
    %s154 = sphi 0, %s154
    %s156 = sphi 0, %s154
    %s157 = sphi 0, %s156
    %s171 = sphi 0, %s157
    %s177 = sphi 0, %s179
    %s180 = sphi 0, %s177
    %s181 = sphi 0, %s180
    %s197 = sphi 0, %s181
    %s203 = sphi 0, %s205
    %s206 = sphi 0, %s203
    %s207 = sphi 0, %s206
    %s223 = sphi 0, %s207
  $region4: #{_lambda_.8} parent=0 // loop_header_branch
    %18 = sbr.rel (%p16) target = $region8
  $region5: #{_lambda_.8} parent=0 // loop_body
    %s20 = ssub.s32 %s15, 1
    %s21 = ssub.s32 %s15, 2
    %s22 = sadd.s32 %s15, 1
    %s23 = ssub.s32 %s15, %s22
    %p24 = scmp.eq.s32.totalorder %s23, 0
    %s26 = sadd.s32 %s25, 1
    %s27 = scalar_select %p24, %s25, %s26
    %p30 = pneg %p24
    %p31 = scmp.eq.s32.totalorder %s15, 1
    %p32 = por %p30, %p31
    %p33 = scmp.ne.s32.totalorder %s25, %s28
    %p34 = scmp.eq.s32.totalorder %s15, 0
    %p35 = por %p33, %p34
    %p36 = scmp.ne.s32.totalorder %s25, %s28
    %p37 = scmp.eq.s32.totalorder %s20, 1
    %p38 = por %p36, %p37
    %p39 = scmp.ne.s32.totalorder %s28, %s29
    %p40 = scmp.eq.s32.totalorder %s20, 0
    %p41 = por %p39, %p40
    %p42 = scmp.ne.s32.totalorder %s28, %s29
    %p43 = scmp.eq.s32.totalorder %s21, 1
    %p44 = por %p42, %p43
    %p46 = scmp.ne.s32.totalorder %s29, %s45
    %p47 = scmp.eq.s32.totalorder %s21, 0
    %p48 = por %p46, %p47
    %s50 = sadd.s32 %s49, 1
    %p53 = scmp.eq.s32.totalorder %s15, 1
    %p54 = scmp.ne.s32.totalorder %s49, %s51
    %p55 = scmp.eq.s32.totalorder %s15, 0
    %p56 = por %p54, %p55
    %p57 = scmp.ne.s32.totalorder %s49, %s51
    %p58 = scmp.eq.s32.totalorder %s20, 1
    %p59 = por %p57, %p58
    %p60 = scmp.ne.s32.totalorder %s51, %s52
    %p61 = scmp.eq.s32.totalorder %s20, 0
    %p62 = por %p60, %p61
    %p63 = scmp.ne.s32.totalorder %s51, %s52
    %p64 = scmp.eq.s32.totalorder %s21, 1
    %p65 = por %p63, %p64
    %p67 = scmp.ne.s32.totalorder %s52, %s66
    %p68 = scmp.eq.s32.totalorder %s21, 0
    %p69 = por %p67, %p68
    %s71 = sadd.s32 %s70, 1
    %p74 = scmp.eq.s32.totalorder %s15, 1
    %p75 = scmp.ne.s32.totalorder %s70, %s72
    %p76 = scmp.eq.s32.totalorder %s15, 0
    %p77 = por %p75, %p76
    %p78 = scmp.ne.s32.totalorder %s70, %s72
    %p79 = scmp.eq.s32.totalorder %s20, 1
    %p80 = por %p78, %p79
    %p81 = scmp.ne.s32.totalorder %s72, %s73
    %p82 = scmp.eq.s32.totalorder %s20, 0
    %p83 = por %p81, %p82
    %p84 = scmp.ne.s32.totalorder %s72, %s73
    %p85 = scmp.eq.s32.totalorder %s21, 1
    %p86 = por %p84, %p85
    %p88 = scmp.ne.s32.totalorder %s73, %s87
    %p89 = scmp.eq.s32.totalorder %s21, 0
    %p90 = por %p88, %p89
    %s92 = sadd.s32 %s91, 1
    %p95 = scmp.eq.s32.totalorder %s15, 1
    %p96 = scmp.ne.s32.totalorder %s91, %s93
    %p97 = scmp.eq.s32.totalorder %s15, 0
    %p98 = por %p96, %p97
    %p99 = scmp.ne.s32.totalorder %s91, %s93
    %p100 = scmp.eq.s32.totalorder %s20, 1
    %p101 = por %p99, %p100
    %p102 = scmp.ne.s32.totalorder %s93, %s94
    %p103 = scmp.eq.s32.totalorder %s20, 0
    %p104 = por %p102, %p103
    %p105 = scmp.ne.s32.totalorder %s93, %s94
    %p106 = scmp.eq.s32.totalorder %s21, 1
    %p107 = por %p105, %p106
    %p109 = scmp.ne.s32.totalorder %s94, %s108
    %p110 = scmp.eq.s32.totalorder %s21, 0
    %p111 = por %p109, %p110
    %s113 = sadd.s32 %s112, 1
    %p116 = scmp.eq.s32.totalorder %s15, 1
    %p117 = scmp.ne.s32.totalorder %s112, %s114
    %p118 = scmp.eq.s32.totalorder %s15, 0
    %p119 = por %p117, %p118
    %p120 = scmp.ne.s32.totalorder %s112, %s114
    %p121 = scmp.eq.s32.totalorder %s20, 1
    %p122 = por %p120, %p121
    %p123 = scmp.ne.s32.totalorder %s114, %s115
    %p124 = scmp.eq.s32.totalorder %s20, 0
    %p125 = por %p123, %p124
    %p126 = scmp.ne.s32.totalorder %s114, %s115
    %p127 = scmp.eq.s32.totalorder %s21, 1
    %p128 = por %p126, %p127
    %p130 = scmp.ne.s32.totalorder %s115, %s129
    %p131 = scmp.eq.s32.totalorder %s21, 0
    %p132 = por %p130, %p131
    %s134 = sadd.s32 %s133, 1
    %p137 = scmp.eq.s32.totalorder %s15, 1
    %p138 = scmp.ne.s32.totalorder %s133, %s135
    %p139 = scmp.eq.s32.totalorder %s15, 0
    %p140 = por %p138, %p139
    %p141 = scmp.ne.s32.totalorder %s133, %s135
    %p142 = scmp.eq.s32.totalorder %s20, 1
    %p143 = por %p141, %p142
    %p144 = scmp.ne.s32.totalorder %s135, %s136
    %p145 = scmp.eq.s32.totalorder %s20, 0
    %p146 = por %p144, %p145
    %p147 = scmp.ne.s32.totalorder %s135, %s136
    %p148 = scmp.eq.s32.totalorder %s21, 1
    %p149 = por %p147, %p148
    %p151 = scmp.ne.s32.totalorder %s136, %s150
    %p152 = scmp.eq.s32.totalorder %s21, 0
    %p153 = por %p151, %p152
    %s155 = sadd.s32 %s154, 1
    %p158 = scmp.eq.s32.totalorder %s15, 1
    %p159 = scmp.ne.s32.totalorder %s154, %s156
    %p160 = scmp.eq.s32.totalorder %s15, 0
    %p161 = por %p159, %p160
    %p162 = scmp.ne.s32.totalorder %s154, %s156
    %p163 = scmp.eq.s32.totalorder %s20, 1
    %p164 = por %p162, %p163
    %p165 = scmp.ne.s32.totalorder %s156, %s157
    %p166 = scmp.eq.s32.totalorder %s20, 0
    %p167 = por %p165, %p166
    %p168 = scmp.ne.s32.totalorder %s156, %s157
    %p169 = scmp.eq.s32.totalorder %s21, 1
    %p170 = por %p168, %p169
    %p172 = scmp.ne.s32.totalorder %s157, %s171
    %p173 = scmp.eq.s32.totalorder %s21, 0
    %p174 = por %p172, %p173
    %s175 = ssub.s32 %s15, %s22
    %p176 = scmp.eq.s32.totalorder %s175, 0
    %s178 = sadd.s32 %s177, 1
    %s179 = scalar_select %p176, %s177, %s178
    %p182 = pneg %p176
    %p183 = scmp.eq.s32.totalorder %s15, 1
    %p184 = por %p182, %p183
    %p185 = scmp.ne.s32.totalorder %s177, %s180
    %p186 = scmp.eq.s32.totalorder %s15, 0
    %p187 = por %p185, %p186
    %p188 = scmp.ne.s32.totalorder %s177, %s180
    %p189 = scmp.eq.s32.totalorder %s20, 1
    %p190 = por %p188, %p189
    %p191 = scmp.ne.s32.totalorder %s180, %s181
    %p192 = scmp.eq.s32.totalorder %s20, 0
    %p193 = por %p191, %p192
    %p194 = scmp.ne.s32.totalorder %s180, %s181
    %p195 = scmp.eq.s32.totalorder %s21, 1
    %p196 = por %p194, %p195
    %p198 = scmp.ne.s32.totalorder %s181, %s197
    %p199 = scmp.eq.s32.totalorder %s21, 0
    %p200 = por %p198, %p199
    %s201 = ssub.s32 %s15, %s22
    %p202 = scmp.eq.s32.totalorder %s201, 0
    %s204 = sadd.s32 %s203, 1
    %s205 = scalar_select %p202, %s203, %s204
    %p208 = pneg %p202
    %p209 = scmp.eq.s32.totalorder %s15, 1
    %p210 = por %p208, %p209
    %p211 = scmp.ne.s32.totalorder %s203, %s206
    %p212 = scmp.eq.s32.totalorder %s15, 0
    %p213 = por %p211, %p212
    %p214 = scmp.ne.s32.totalorder %s203, %s206
    %p215 = scmp.eq.s32.totalorder %s20, 1
    %p216 = por %p214, %p215
    %p217 = scmp.ne.s32.totalorder %s206, %s207
    %p218 = scmp.eq.s32.totalorder %s20, 0
    %p219 = por %p217, %p218
    %p220 = scmp.ne.s32.totalorder %s206, %s207
    %p221 = scmp.eq.s32.totalorder %s21, 1
    %p222 = por %p220, %p221
    %p224 = scmp.ne.s32.totalorder %s207, %s223
    %p225 = scmp.eq.s32.totalorder %s21, 0
    %p226 = por %p224, %p225
    %p227 = scmp.le.s32.totalorder 1, %s15
    %p228 = scmp.lt.s32.totalorder %s15, 3
    %p229 = pnand %p227, %p228
    %p230 = pneg %p229
    // Predicated region
    $region9: #{_lambda_.8} parent=5 // pred_check
      _
    $region10: #{_lambda_.8} parent=5 // pred_check_branch
      %232 = sbr.rel (%p229) target = $region12
    $region11: #{_lambda_.8} parent=5 // pred_region
      %s233 = ssub.s32 %s15, 1
      // Predicated region
      $region13: #{_lambda_.8} parent=11 // pred_check
        %p234 = pneg %p62
      $region14: #{_lambda_.8} parent=11 // pred_check_branch
        %236 = sbr.rel (%p234) target = $region16
      $region15: #{_lambda_.8} parent=11 // pred_region
        _
      $region16: #{_lambda_.8} parent=11 // pred_fallthru
        _
      // Predicated region
      $region17: #{_lambda_.8} parent=11 // pred_check
        %p237 = pneg %p83
      $region18: #{_lambda_.8} parent=11 // pred_check_branch
        %239 = sbr.rel (%p237) target = $region20
      $region19: #{_lambda_.8} parent=11 // pred_region
        _
      $region20: #{_lambda_.8} parent=11 // pred_fallthru
        _
      // Predicated region
      $region21: #{_lambda_.8} parent=11 // pred_check
        %p240 = pneg %p104
      $region22: #{_lambda_.8} parent=11 // pred_check_branch
        %242 = sbr.rel (%p240) target = $region24
      $region23: #{_lambda_.8} parent=11 // pred_region
        _
      $region24: #{_lambda_.8} parent=11 // pred_fallthru
        _
      // Predicated region
      $region25: #{_lambda_.8} parent=11 // pred_check
        %p243 = pneg %p125
      $region26: #{_lambda_.8} parent=11 // pred_check_branch
        %245 = sbr.rel (%p243) target = $region28
      $region27: #{_lambda_.8} parent=11 // pred_region
        _
      $region28: #{_lambda_.8} parent=11 // pred_fallthru
        _
      // Predicated region
      $region29: #{_lambda_.8} parent=11 // pred_check
        %p246 = pneg %p146
      $region30: #{_lambda_.8} parent=11 // pred_check_branch
        %248 = sbr.rel (%p246) target = $region32
      $region31: #{_lambda_.8} parent=11 // pred_region
        _
      $region32: #{_lambda_.8} parent=11 // pred_fallthru
        _
      // Predicated region
      $region33: #{_lambda_.8} parent=11 // pred_check
        %p249 = pneg %p167
      $region34: #{_lambda_.8} parent=11 // pred_check_branch
        %251 = sbr.rel (%p249) target = $region36
      $region35: #{_lambda_.8} parent=11 // pred_region
        _
      $region36: #{_lambda_.8} parent=11 // pred_fallthru
        _
    $region12: #{_lambda_.8} parent=5 // pred_fallthru
      _
    %p252 = scmp.lt.s32.totalorder %s15, 2
    // Predicated region
    $region37: #{_lambda_.8} parent=5 // pred_check
      %p253 = pneg %p252
    $region38: #{_lambda_.8} parent=5 // pred_check_branch
      %255 = sbr.rel (%p253) target = $region40
    $region39: #{_lambda_.8} parent=5 // pred_region
      // Predicated region
      $region41: #{_lambda_.8} parent=39 // pred_check
        %p256 = pneg %p35
      $region42: #{_lambda_.8} parent=39 // pred_check_branch
        %258 = sbr.rel (%p256) target = $region44
      $region43: #{_lambda_.8} parent=39 // pred_region
        %p259 = scmp.lt.s32.totalorder %s15, 1
        %s260 = scalar_select %p259, %s15, 1
        %s261 = smul.addr %s260, 4
        %s262 = smul.addr %s261, 8
        %s263 = scalar_lea.vmem %s0, %s262
      $region44: #{_lambda_.8} parent=39 // pred_fallthru
        _
    $region40: #{_lambda_.8} parent=5 // pred_fallthru
      _
    %p264 = scmp.le.s32.totalorder 1, %s15
    %p265 = scmp.lt.s32.totalorder %s15, 3
    %p266 = pnand %p264, %p265
    %p267 = pneg %p266
    // Predicated region
    $region45: #{_lambda_.8} parent=5 // pred_check
      _
    $region46: #{_lambda_.8} parent=5 // pred_check_branch
      %269 = sbr.rel (%p266) target = $region48
    $region47: #{_lambda_.8} parent=5 // pred_region
      %s270 = ssub.s32 %s15, 1
      %p271 = scmp.lt.s32.totalorder %s20, 1
      %s272 = scalar_select %p271, %s20, 1
      %s273 = smul.addr %s272, 4
      %s274 = smul.addr %s273, 8
      %s275 = scalar_lea.vmem %s0, %s274
      %p276 = pneg %p41
      %p277 = pneg %p38
      %p278 = pneg %p62
      %p279 = pneg %p59
      %p280 = pneg %p83
      %p281 = pneg %p80
      %p282 = pneg %p104
      %p283 = pneg %p101
      %p284 = pneg %p125
      %p285 = pneg %p122
      %p286 = pneg %p146
      %p287 = pneg %p143
      %p288 = pneg %p167
      %p289 = pneg %p164
      %p290 = pneg %p193
      %p291 = pneg %p190
      %p292 = scmp.lt.s32.totalorder %s20, 1
      %s293 = scalar_select %p292, %s20, 1
      %s294 = smul.addr %s293, 4
      %s295 = smul.addr %s294, 8
      %s296 = scalar_lea.vmem %s7, %s295
      %p297 = pneg %p219
      %p298 = pneg %p216
      %p299 = scmp.lt.s32.totalorder %s20, 1
      %s300 = scalar_select %p299, %s20, 1
      %s301 = smul.addr %s300, 2
      %s302 = scalar_lea.vmem %s8, %s301
      %p303 = scmp.lt.s32.totalorder %s20, 1
      %s304 = scalar_select %p303, %s20, 1
      %s305 = smul.addr %s304, 4
      %s306 = smul.addr %s305, 8
      %s307 = scalar_lea.vmem %s0, %s306
      %p308 = scmp.lt.s32.totalorder %s20, 1
      %s309 = scalar_select %p308, %s20, 1
      %s310 = smul.addr %s309, 4
      %s311 = smul.addr %s310, 8
      %s312 = scalar_lea.vmem %s7, %s311
      %p313 = scmp.lt.s32.totalorder %s20, 1
      %s314 = scalar_select %p313, %s20, 1
      %s315 = smul.addr %s314, 2
      %s316 = scalar_lea.vmem %s8, %s315
      %v317 = vld [vmem:[%s1] sm:$0x3]
      %v318 = vld [vmem:[%s1 + $0x2] sm:$0x3]
      %v319 = vld [vmem:[%s4] sm:$0xff]
      %v320 = vld [vmem:[%s4 + $0x8] sm:$0xff]
      %v321 = vld [vmem:[%s4 + $0x10] sm:$0xff]
      %v322 = vld [vmem:[%s4 + $0x18] sm:$0xff]
      %v323 = vld [vmem:[%s4 + $0x20] sm:$0xff]
      %v324 = vld [vmem:[%s4 + $0x28] sm:$0xff]
      %v325 = vld [vmem:[%s4 + $0x30] sm:$0xff]
      %v326 = vld [vmem:[%s4 + $0x38] sm:$0xff]
      %v327 = vld [vmem:[%s4 + $0x40] sm:$0xff]
      %v328 = vld [vmem:[%s4 + $0x48] sm:$0xff]
      %v329 = vld [vmem:[%s4 + $0x50] sm:$0xff]
      %v330 = vld [vmem:[%s4 + $0x58] sm:$0xff]
      %v331 = vld [vmem:[%s4 + $0x60] sm:$0xff]
      %v332 = vld [vmem:[%s4 + $0x68] sm:$0xff]
      %v333 = vld [vmem:[%s4 + $0x70] sm:$0xff]
      %v334 = vld [vmem:[%s4 + $0x78] sm:$0xff]
      %v335 = vld [vmem:[%s2] sm:$0x1]
      %v336 = vld [vmem:[%s3] sm:$0x1]
      %vm337 = vcmask 1041408
      %v338 = vsel %vm337, %v317, 0.0
      %v339 = vsel %vm337, %v318, 0.0
      %v340 = vadd.f32 %v338, %v339
      %341 = vmatpush.msra.mxu0 %v334
      %342 = vmatpush.msra.mxu0 %v333
      %343 = vmatpush.msra.mxu0 %v332
      %344 = vmatpush.msra.mxu0 %v331
      %345 = vmatpush.msra.mxu0 %v330
      %346 = vmatpush.msra.mxu0 %v329
      %347 = vmatpush.msra.mxu0 %v328
      %348 = vmatpush.msra.mxu0 %v327
      %349 = vmatpush.msra.mxu0 %v326
      %350 = vmatpush.msra.mxu0 %v325
      %351 = vmatpush.msra.mxu0 %v324
      %352 = vmatpush.msra.mxu0 %v323
      %353 = vmatpush.msra.mxu0 %v322
      %354 = vmatpush.msra.mxu0 %v321
      %355 = vmatpush.msra.mxu0 %v320
      %356 = vmatpush.msra.mxu0 %v319
      %357 = vmatmul.f32.gmra.mxu0 %v340
      %v358 = vpop.f32.mrf.mxu0
      %v359 = vadd.f32 0.0, %v358
      %360 = vdwg.mxu0
      %v361 = vrcp.pop 512.0
      %v362 = vmul.f32 512.0, %v361
      %v363 = vsub.f32 1.0, %v362
      %v364 = vmul.f32 %v361, %v363
      %v365 = vadd.f32 %v361, %v364
      %vm366 = vweird.f32 %v361
      %v367 = vsel %vm366, %v361, %v365
      %v368 = vmul.f32 %v359, %v367
      %v369 = vmul.f32 %v368, %v368
      %v371 = vrot.slane %v369, 7
      %v373 = vsub.f32 %v368, %v371
      %v374 = vmax.f32 %v373, 0.0
      %v375 = vadd.f32 %v374, 1e-05
      %v376 = vrsqrt.pop %v375
      %v377 = vmul.f32 %v376, %v375
      %v378 = vmul.f32 %v377, %v376
      %v379 = vmul.f32 0.5, %v378
      %v380 = vsub.f32 1.5, %v379
      %v381 = vmul.f32 %v376, %v380
      %vm382 = vweird.f32 %v375
      %vm383 = vweird.f32 %v376
      %vm384 = vmor %vm382, %vm383
      %v385 = vsel %vm384, %v376, %v381
      %387 = vst [vmem:[#allocation1] sm:$0xff] %v385
      %s388 = scalar_lea.vmem [#allocation1], 1
      %v389 = vld [vmem:[%s388] ss:$9 sm:$0xff]
      %v391 = vmul.f32 %v335, %v389
      %v392 = vmul.f32 %v368, %v391
      %v393 = vsub.f32 %v336, %v392
      %v394 = vld [vmem:[%s307] sm:$0xff]
      %v395 = vld [vmem:[%s307 + $0x8] sm:$0xff]
      %v396 = vld [vmem:[%s307 + $0x10] sm:$0xff]
      %v397 = vld [vmem:[%s307 + $0x18] sm:$0xff]
      %v399 = vperm.slane %v391, 0
      %v401 = vmul.f32 %v394, %v399
      %v402 = vmul.f32 %v395, %v399
      %v403 = vmul.f32 %v396, %v399
      %v404 = vmul.f32 %v397, %v399
      %v406 = vperm.slane %v393, 0
      %v408 = vadd.f32 %v401, %v406
      %v409 = vadd.f32 %v402, %v406
      %v410 = vadd.f32 %v403, %v406
      %v411 = vadd.f32 %v404, %v406
      %v412 = vmul.f32 %v408, 0.5
      %v413 = vmul.f32 %v409, 0.5
      %v414 = vmul.f32 %v410, 0.5
      %v415 = vmul.f32 %v411, 0.5
      %v416 = vmul.f32 %v408, 0.70710677
      %v417 = vmul.f32 %v409, 0.70710677
      %v418 = vmul.f32 %v410, 0.70710677
      %v419 = vmul.f32 %v411, 0.70710677
      %v420 = vmul.f32 %v416, %v416
      %v421 = vmin.f32 16.0, %v420
      %v422 = vmul.f32 %v421, 2.1237322e-06
      %v423 = vadd.f32 %v422, 0.00028619796
      %v424 = vmul.f32 %v421, %v423
      %v425 = vadd.f32 %v424, 0.0036580483
      %v426 = vmul.f32 %v421, %v425
      %v427 = vadd.f32 %v426, 0.05243302
      %v428 = vmul.f32 %v421, %v427
      %v429 = vadd.f32 %v428, 0.18741608
      %v430 = vmul.f32 %v421, %v429
      %v431 = vadd.f32 %v430, 1.1283791
      %v432 = vmul.f32 %v416, %v431
      %v433 = vmul.f32 %v421, 3.8918573e-05
      %v434 = vadd.f32 %v433, 0.001143296
      %v435 = vmul.f32 %v421, %v434
      %v436 = vadd.f32 %v435, 0.014752088
      %v437 = vmul.f32 %v421, %v436
      %v438 = vadd.f32 %v437, 0.112945676
      %v439 = vmul.f32 %v421, %v438
      %v440 = vadd.f32 %v439, 0.4994258
      %v441 = vmul.f32 %v421, %v440
      %v442 = vadd.f32 %v441, 1.0
      %v443 = vrcp.pop %v442
      %v444 = vmul.f32 %v442, %v443
      %v445 = vsub.f32 1.0, %v444
      %v446 = vmul.f32 %v443, %v445
      %v447 = vadd.f32 %v443, %v446
      %vm448 = vweird.f32 %v442
      %vm449 = vweird.f32 %v443
      %vm450 = vmor %vm448, %vm449
      %v451 = vsel %vm450, %v443, %v447
      %v452 = vand.u32 2147483647, %v442
      %vm453 = vcmp.eq.f32.partialorder %v452, 8.507059e+37
      %v454 = vand.u32 %v442, 2147483648
      %v455 = vor.u32 1.1754944e-38, %v454
      %v456 = vsel %vm453, %v455, %v451
      %v457 = vmul.f32 %v432, %v456
      %v458 = vmin.f32 %v457, 1.0
      %v459 = vmax.f32 %v458, -1.0
      %v460 = vmul.f32 %v417, %v417
      %v461 = vmin.f32 16.0, %v460
      %v462 = vmul.f32 %v461, 2.1237322e-06
      %v463 = vadd.f32 %v462, 0.00028619796
      %v464 = vmul.f32 %v461, %v463
      %v465 = vadd.f32 %v464, 0.0036580483
      %v466 = vmul.f32 %v461, %v465
      %v467 = vadd.f32 %v466, 0.05243302
      %v468 = vmul.f32 %v461, %v467
      %v469 = vadd.f32 %v468, 0.18741608
      %v470 = vmul.f32 %v461, %v469
      %v471 = vadd.f32 %v470, 1.1283791
      %v472 = vmul.f32 %v417, %v471
      %v473 = vmul.f32 %v461, 3.8918573e-05
      %v474 = vadd.f32 %v473, 0.001143296
      %v475 = vmul.f32 %v461, %v474
      %v476 = vadd.f32 %v475, 0.014752088
      %v477 = vmul.f32 %v461, %v476
      %v478 = vadd.f32 %v477, 0.112945676
      %v479 = vmul.f32 %v461, %v478
      %v480 = vadd.f32 %v479, 0.4994258
      %v481 = vmul.f32 %v461, %v480
      %v482 = vadd.f32 %v481, 1.0
      %v483 = vrcp.pop %v482
      %v484 = vmul.f32 %v482, %v483
      %v485 = vsub.f32 1.0, %v484
      %v486 = vmul.f32 %v483, %v485
      %v487 = vadd.f32 %v483, %v486
      %vm488 = vweird.f32 %v482
      %vm489 = vweird.f32 %v483
      %vm490 = vmor %vm488, %vm489
      %v491 = vsel %vm490, %v483, %v487
      %v492 = vand.u32 2147483647, %v482
      %vm493 = vcmp.eq.f32.partialorder %v492, 8.507059e+37
      %v494 = vand.u32 %v482, 2147483648
      %v495 = vor.u32 1.1754944e-38, %v494
      %v496 = vsel %vm493, %v495, %v491
      %v497 = vmul.f32 %v472, %v496
      %v498 = vmin.f32 %v497, 1.0
      %v499 = vmax.f32 %v498, -1.0
      %v500 = vmul.f32 %v418, %v418
      %v501 = vmin.f32 16.0, %v500
      %v502 = vmul.f32 %v501, 2.1237322e-06
      %v503 = vadd.f32 %v502, 0.00028619796
      %v504 = vmul.f32 %v501, %v503
      %v505 = vadd.f32 %v504, 0.0036580483
      %v506 = vmul.f32 %v501, %v505
      %v507 = vadd.f32 %v506, 0.05243302
      %v508 = vmul.f32 %v501, %v507
      %v509 = vadd.f32 %v508, 0.18741608
      %v510 = vmul.f32 %v501, %v509
      %v511 = vadd.f32 %v510, 1.1283791
      %v512 = vmul.f32 %v418, %v511
      %v513 = vmul.f32 %v501, 3.8918573e-05
      %v514 = vadd.f32 %v513, 0.001143296
      %v515 = vmul.f32 %v501, %v514
      %v516 = vadd.f32 %v515, 0.014752088
      %v517 = vmul.f32 %v501, %v516
      %v518 = vadd.f32 %v517, 0.112945676
      %v519 = vmul.f32 %v501, %v518
      %v520 = vadd.f32 %v519, 0.4994258
      %v521 = vmul.f32 %v501, %v520
      %v522 = vadd.f32 %v521, 1.0
      %v523 = vrcp.pop %v522
      %v524 = vmul.f32 %v522, %v523
      %v525 = vsub.f32 1.0, %v524
      %v526 = vmul.f32 %v523, %v525
      %v527 = vadd.f32 %v523, %v526
      %vm528 = vweird.f32 %v522
      %vm529 = vweird.f32 %v523
      %vm530 = vmor %vm528, %vm529
      %v531 = vsel %vm530, %v523, %v527
      %v532 = vand.u32 2147483647, %v522
      %vm533 = vcmp.eq.f32.partialorder %v532, 8.507059e+37
      %v534 = vand.u32 %v522, 2147483648
      %v535 = vor.u32 1.1754944e-38, %v534
      %v536 = vsel %vm533, %v535, %v531
      %v537 = vmul.f32 %v512, %v536
      %v538 = vmin.f32 %v537, 1.0
      %v539 = vmax.f32 %v538, -1.0
      %v540 = vmul.f32 %v419, %v419
      %v541 = vmin.f32 16.0, %v540
      %v542 = vmul.f32 %v541, 2.1237322e-06
      %v543 = vadd.f32 %v542, 0.00028619796
      %v544 = vmul.f32 %v541, %v543
      %v545 = vadd.f32 %v544, 0.0036580483
      %v546 = vmul.f32 %v541, %v545
      %v547 = vadd.f32 %v546, 0.05243302
      %v548 = vmul.f32 %v541, %v547
      %v549 = vadd.f32 %v548, 0.18741608
      %v550 = vmul.f32 %v541, %v549
      %v551 = vadd.f32 %v550, 1.1283791
      %v552 = vmul.f32 %v419, %v551
      %v553 = vmul.f32 %v541, 3.8918573e-05
      %v554 = vadd.f32 %v553, 0.001143296
      %v555 = vmul.f32 %v541, %v554
      %v556 = vadd.f32 %v555, 0.014752088
      %v557 = vmul.f32 %v541, %v556
      %v558 = vadd.f32 %v557, 0.112945676
      %v559 = vmul.f32 %v541, %v558
      %v560 = vadd.f32 %v559, 0.4994258
      %v561 = vmul.f32 %v541, %v560
      %v562 = vadd.f32 %v561, 1.0
      %v563 = vrcp.pop %v562
      %v564 = vmul.f32 %v562, %v563
      %v565 = vsub.f32 1.0, %v564
      %v566 = vmul.f32 %v563, %v565
      %v567 = vadd.f32 %v563, %v566
      %vm568 = vweird.f32 %v562
      %vm569 = vweird.f32 %v563
      %vm570 = vmor %vm568, %vm569
      %v571 = vsel %vm570, %v563, %v567
      %v572 = vand.u32 2147483647, %v562
      %vm573 = vcmp.eq.f32.partialorder %v572, 8.507059e+37
      %v574 = vand.u32 %v562, 2147483648
      %v575 = vor.u32 1.1754944e-38, %v574
      %v576 = vsel %vm573, %v575, %v571
      %v577 = vmul.f32 %v552, %v576
      %v578 = vmin.f32 %v577, 1.0
      %v579 = vmax.f32 %v578, -1.0
      %v580 = vadd.f32 %v459, 1.0
      %v581 = vadd.f32 %v499, 1.0
      %v582 = vadd.f32 %v539, 1.0
      %v583 = vadd.f32 %v579, 1.0
      %v584 = vmul.f32 %v412, %v580
      %v585 = vmul.f32 %v413, %v581
      %v586 = vmul.f32 %v414, %v582
      %v587 = vmul.f32 %v415, %v583
      %588 = vst [vmem:[#allocation2] sm:$0xff] 0.0
      %589 = vst [vmem:[#allocation2 + $0x8] sm:$0xff] 0.0
      %590 = vst [vmem:[#allocation2 + $0x10] sm:$0x1] 0.0
      %s591 = scalar_lea.vmem [#allocation2], 120
      %592 = vst [vmem:[%s591] sm:$0xff] 0.0
      %593 = vst [vmem:[%s591 + $0x8] sm:$0xff] 0.0
      %594 = vst [vmem:[%s591 + $0x10] sm:$0x1] 0.0
      %s595 = scalar_lea.vmem [#allocation2], 24
      %596 = vst [vmem:[%s595 + $0x7] sm:$0x1] 0.0
      %597 = vst [vmem:[%s595 + $0x1f] sm:$0x1] 0.0
      %598 = vst [vmem:[%s595 + $0x37] sm:$0x1] 0.0
      %599 = vst [vmem:[%s595 + $0x4f] sm:$0x1] 0.0
      %600 = vst [vmem:[%s595 + $0x10] sm:$0x1] 0.0
      %601 = vst [vmem:[%s595 + $0x28] sm:$0x1] 0.0
      %602 = vst [vmem:[%s595 + $0x40] sm:$0x1] 0.0
      %603 = vst [vmem:[%s595 + $0x58] sm:$0x1] 0.0
      %604 = vst [vmem:[%s595 + $0x8] sm:$0xff] %v584
      %605 = vst [vmem:[%s595 + $0x20] sm:$0xff] %v585
      %606 = vst [vmem:[%s595 + $0x38] sm:$0xff] %v586
      %607 = vst [vmem:[%s595 + $0x50] sm:$0xff] %v587
      %v608 = vld [vmem:[#allocation2 + $0x7] sm:$0xff]
      %v609 = vld [vmem:[#allocation2 + $0x1f] sm:$0xff]
      %v610 = vld [vmem:[#allocation2 + $0x37] sm:$0xff]
      %v611 = vld [vmem:[#allocation2 + $0x4f] sm:$0xff]
      %v612 = vpack.c.bf16 %v608, %v608
      %v613 = vpack.c.bf16 %v609, %v609
      %v614 = vpack.c.bf16 %v610, %v610
      %v615 = vpack.c.bf16 %v611, %v611
      %616 = vst [vmem:[#allocation3] sm:$0xf] %v612
      %617 = vst [vmem:[#allocation3 + $0x24] sm:$0xf] %v613
      %618 = vst [vmem:[#allocation3 + $0x48] sm:$0xf] %v614
      %619 = vst [vmem:[#allocation3 + $0x6c] sm:$0xf] %v615
      %v620 = vld [vmem:[#allocation2 + $0x8] sm:$0xff]
      %v621 = vld [vmem:[#allocation2 + $0x20] sm:$0xff]
      %v622 = vld [vmem:[#allocation2 + $0x38] sm:$0xff]
      %v623 = vld [vmem:[#allocation2 + $0x50] sm:$0xff]
      %v624 = vpack.c.bf16 %v620, %v620
      %v625 = vpack.c.bf16 %v621, %v621
      %v626 = vpack.c.bf16 %v622, %v622
      %v627 = vpack.c.bf16 %v623, %v623
      %628 = vst [vmem:[#allocation3 + $0x4] sm:$0xf] %v624
      %629 = vst [vmem:[#allocation3 + $0x28] sm:$0xf] %v625
      %630 = vst [vmem:[#allocation3 + $0x4c] sm:$0xf] %v626
      %631 = vst [vmem:[#allocation3 + $0x70] sm:$0xf] %v627
      %v632 = vld [vmem:[#allocation2 + $0x9] sm:$0xff]
      %v633 = vld [vmem:[#allocation2 + $0x21] sm:$0xff]
      %v634 = vld [vmem:[#allocation2 + $0x39] sm:$0xff]
      %v635 = vld [vmem:[#allocation2 + $0x51] sm:$0xff]
      %v636 = vpack.c.bf16 %v632, %v632
      %v637 = vpack.c.bf16 %v633, %v633
      %v638 = vpack.c.bf16 %v634, %v634
      %v639 = vpack.c.bf16 %v635, %v635
      %640 = vst [vmem:[#allocation3 + $0x8] sm:$0xf] %v636
      %641 = vst [vmem:[#allocation3 + $0x2c] sm:$0xf] %v637
      %642 = vst [vmem:[#allocation3 + $0x50] sm:$0xf] %v638
      %643 = vst [vmem:[#allocation3 + $0x74] sm:$0xf] %v639
      %v644 = vld [vmem:[%s595 + $0x7] sm:$0xff]
      %v645 = vld [vmem:[%s595 + $0x1f] sm:$0xff]
      %v646 = vld [vmem:[%s595 + $0x37] sm:$0xff]
      %v647 = vld [vmem:[%s595 + $0x4f] sm:$0xff]
      %v648 = vpack.c.bf16 %v644, %v644
      %v649 = vpack.c.bf16 %v645, %v645
      %v650 = vpack.c.bf16 %v646, %v646
      %v651 = vpack.c.bf16 %v647, %v647
      %652 = vst [vmem:[#allocation3 + $0xc] sm:$0xf] %v648
      %653 = vst [vmem:[#allocation3 + $0x30] sm:$0xf] %v649
      %654 = vst [vmem:[#allocation3 + $0x54] sm:$0xf] %v650
      %655 = vst [vmem:[#allocation3 + $0x78] sm:$0xf] %v651
      %v656 = vld [vmem:[%s595 + $0x8] sm:$0xff]
      %v657 = vld [vmem:[%s595 + $0x20] sm:$0xff]
      %v658 = vld [vmem:[%s595 + $0x38] sm:$0xff]
      %v659 = vld [vmem:[%s595 + $0x50] sm:$0xff]
      %v660 = vpack.c.bf16 %v656, %v656
      %v661 = vpack.c.bf16 %v657, %v657
      %v662 = vpack.c.bf16 %v658, %v658
      %v663 = vpack.c.bf16 %v659, %v659
      %664 = vst [vmem:[#allocation3 + $0x10] sm:$0xf] %v660
      %665 = vst [vmem:[#allocation3 + $0x34] sm:$0xf] %v661
      %666 = vst [vmem:[#allocation3 + $0x58] sm:$0xf] %v662
      %667 = vst [vmem:[#allocation3 + $0x7c] sm:$0xf] %v663
      %v668 = vld [vmem:[%s595 + $0x9] sm:$0xff]
      %v669 = vld [vmem:[%s595 + $0x21] sm:$0xff]
      %v670 = vld [vmem:[%s595 + $0x39] sm:$0xff]
      %v671 = vld [vmem:[%s595 + $0x51] sm:$0xff]
      %v672 = vpack.c.bf16 %v668, %v668
      %v673 = vpack.c.bf16 %v669, %v669
      %v674 = vpack.c.bf16 %v670, %v670
      %v675 = vpack.c.bf16 %v671, %v671
      %676 = vst [vmem:[#allocation3 + $0x14] sm:$0xf] %v672
      %677 = vst [vmem:[#allocation3 + $0x38] sm:$0xf] %v673
      %678 = vst [vmem:[#allocation3 + $0x5c] sm:$0xf] %v674
      %679 = vst [vmem:[#allocation3 + $0x80] sm:$0xf] %v675
      %s680 = scalar_lea.vmem [#allocation2], 48
      %v681 = vld [vmem:[%s680 + $0x7] sm:$0xff]
      %v682 = vld [vmem:[%s680 + $0x1f] sm:$0xff]
      %v683 = vld [vmem:[%s680 + $0x37] sm:$0xff]
      %v684 = vld [vmem:[%s680 + $0x4f] sm:$0xff]
      %v685 = vpack.c.bf16 %v681, %v681
      %v686 = vpack.c.bf16 %v682, %v682
      %v687 = vpack.c.bf16 %v683, %v683
      %v688 = vpack.c.bf16 %v684, %v684
      %689 = vst [vmem:[#allocation3 + $0x18] sm:$0xf] %v685
      %690 = vst [vmem:[#allocation3 + $0x3c] sm:$0xf] %v686
      %691 = vst [vmem:[#allocation3 + $0x60] sm:$0xf] %v687
      %692 = vst [vmem:[#allocation3 + $0x84] sm:$0xf] %v688
      %v693 = vld [vmem:[%s680 + $0x8] sm:$0xff]
      %v694 = vld [vmem:[%s680 + $0x20] sm:$0xff]
      %v695 = vld [vmem:[%s680 + $0x38] sm:$0xff]
      %v696 = vld [vmem:[%s680 + $0x50] sm:$0xff]
      %v697 = vpack.c.bf16 %v693, %v693
      %v698 = vpack.c.bf16 %v694, %v694
      %v699 = vpack.c.bf16 %v695, %v695
      %v700 = vpack.c.bf16 %v696, %v696
      %701 = vst [vmem:[#allocation3 + $0x1c] sm:$0xf] %v697
      %702 = vst [vmem:[#allocation3 + $0x40] sm:$0xf] %v698
      %703 = vst [vmem:[#allocation3 + $0x64] sm:$0xf] %v699
      %704 = vst [vmem:[#allocation3 + $0x88] sm:$0xf] %v700
      %v705 = vld [vmem:[%s680 + $0x9] sm:$0xff]
      %v706 = vld [vmem:[%s680 + $0x21] sm:$0xff]
      %v707 = vld [vmem:[%s680 + $0x39] sm:$0xff]
      %v708 = vld [vmem:[%s680 + $0x51] sm:$0xff]
      %v709 = vpack.c.bf16 %v705, %v705
      %v710 = vpack.c.bf16 %v706, %v706
      %v711 = vpack.c.bf16 %v707, %v707
      %v712 = vpack.c.bf16 %v708, %v708
      %713 = vst [vmem:[#allocation3 + $0x20] sm:$0xf] %v709
      %714 = vst [vmem:[#allocation3 + $0x44] sm:$0xf] %v710
      %715 = vst [vmem:[#allocation3 + $0x68] sm:$0xf] %v711
      %716 = vst [vmem:[#allocation3 + $0x8c] sm:$0xf] %v712
      %v717 = vld [vmem:[#allocation3] sm:$0xff]
      %v718 = vld [vmem:[#allocation3 + $0x8] sm:$0xff]
      %v719 = vld [vmem:[#allocation3 + $0x10] sm:$0xff]
      %v720 = vld [vmem:[#allocation3 + $0x18] sm:$0xff]
      %v721 = vld [vmem:[#allocation3 + $0x20] sm:$0xf]
      %v722 = vld [vmem:[#allocation3 + $0x24] sm:$0xff]
      %v723 = vld [vmem:[#allocation3 + $0x2c] sm:$0xff]
      %v724 = vld [vmem:[#allocation3 + $0x34] sm:$0xff]
      %v725 = vld [vmem:[#allocation3 + $0x3c] sm:$0xff]
      %v726 = vld [vmem:[#allocation3 + $0x44] sm:$0xf]
      %v727 = vld [vmem:[#allocation3 + $0x48] sm:$0xff]
      %v728 = vld [vmem:[#allocation3 + $0x50] sm:$0xff]
      %v729 = vld [vmem:[#allocation3 + $0x58] sm:$0xff]
      %v730 = vld [vmem:[#allocation3 + $0x60] sm:$0xff]
      %v731 = vld [vmem:[#allocation3 + $0x68] sm:$0xf]
      %v732 = vld [vmem:[#allocation3 + $0x6c] sm:$0xff]
      %v733 = vld [vmem:[#allocation3 + $0x74] sm:$0xff]
      %v734 = vld [vmem:[#allocation3 + $0x7c] sm:$0xff]
      %v735 = vld [vmem:[#allocation3 + $0x84] sm:$0xff]
      %v736 = vld [vmem:[#allocation3 + $0x8c] sm:$0xf]
      %v737 = vld [vmem:[%s5] sm:$0xf]
      %v738 = vld [vmem:[%s5 + $0x4] sm:$0xf]
      %v739 = vld [vmem:[%s5 + $0x8] sm:$0xf]
      %v740 = vld [vmem:[%s5 + $0xc] sm:$0xf]
      %v741 = vld [vmem:[%s5 + $0x10] sm:$0xf]
      %v742 = vld [vmem:[%s5 + $0x14] sm:$0xf]
      %v743 = vld [vmem:[%s5 + $0x18] sm:$0xf]
      %v744 = vld [vmem:[%s5 + $0x1c] sm:$0xf]
      %v745 = vld [vmem:[%s5 + $0x20] sm:$0xf]
      %v746 = vld [vmem:[%s5 + $0x24] sm:$0xf]
      %v747 = vld [vmem:[%s5 + $0x28] sm:$0xf]
      %v748 = vld [vmem:[%s5 + $0x2c] sm:$0xf]
      %v749 = vld [vmem:[%s5 + $0x30] sm:$0xf]
      %v750 = vld [vmem:[%s5 + $0x34] sm:$0xf]
      %v751 = vld [vmem:[%s5 + $0x38] sm:$0xf]
      %v752 = vld [vmem:[%s5 + $0x3c] sm:$0xf]
      %v753 = vld [vmem:[%s5 + $0x40] sm:$0xf]
      %v754 = vld [vmem:[%s5 + $0x44] sm:$0xf]
      %v755 = vld [vmem:[%s5 + $0x48] sm:$0xf]
      %v756 = vld [vmem:[%s5 + $0x4c] sm:$0xf]
      %v757 = vld [vmem:[%s5 + $0x50] sm:$0xf]
      %v758 = vld [vmem:[%s5 + $0x54] sm:$0xf]
      %v759 = vld [vmem:[%s5 + $0x58] sm:$0xf]
      %v760 = vld [vmem:[%s5 + $0x5c] sm:$0xf]
      %v761 = vld [vmem:[%s5 + $0x60] sm:$0xf]
      %v762 = vld [vmem:[%s5 + $0x64] sm:$0xf]
      %v763 = vld [vmem:[%s5 + $0x68] sm:$0xf]
      %v764 = vld [vmem:[%s5 + $0x6c] sm:$0xf]
      %v765 = vld [vmem:[%s5 + $0x70] sm:$0xf]
      %v766 = vld [vmem:[%s5 + $0x74] sm:$0xf]
      %v767 = vld [vmem:[%s5 + $0x78] sm:$0xf]
      %v768 = vld [vmem:[%s5 + $0x7c] sm:$0xf]
      %v769 = vld [vmem:[%s5 + $0x80] sm:$0xf]
      %v770 = vld [vmem:[%s5 + $0x84] sm:$0xf]
      %v771 = vld [vmem:[%s5 + $0x88] sm:$0xf]
      %v772 = vld [vmem:[%s5 + $0x8c] sm:$0xf]
      %v773 = vld [vmem:[%s5 + $0x90] sm:$0xf]
      %v774 = vld [vmem:[%s5 + $0x94] sm:$0xf]
      %v775 = vld [vmem:[%s5 + $0x98] sm:$0xf]
      %v776 = vld [vmem:[%s5 + $0x9c] sm:$0xf]
      %v777 = vld [vmem:[%s5 + $0xa0] sm:$0xf]
      %v778 = vld [vmem:[%s5 + $0xa4] sm:$0xf]
      %v779 = vld [vmem:[%s5 + $0xa8] sm:$0xf]
      %v780 = vld [vmem:[%s5 + $0xac] sm:$0xf]
      %v781 = vld [vmem:[%s5 + $0xb0] sm:$0xf]
      %v782 = vld [vmem:[%s5 + $0xb4] sm:$0xf]
      %v783 = vld [vmem:[%s5 + $0xb8] sm:$0xf]
      %v784 = vld [vmem:[%s5 + $0xbc] sm:$0xf]
      %v785 = vld [vmem:[%s5 + $0xc0] sm:$0xf]
      %v786 = vld [vmem:[%s5 + $0xc4] sm:$0xf]
      %v787 = vld [vmem:[%s5 + $0xc8] sm:$0xf]
      %v788 = vld [vmem:[%s5 + $0xcc] sm:$0xf]
      %v789 = vld [vmem:[%s5 + $0xd0] sm:$0xf]
      %v790 = vld [vmem:[%s5 + $0xd4] sm:$0xf]
      %v791 = vld [vmem:[%s5 + $0xd8] sm:$0xf]
      %v792 = vld [vmem:[%s5 + $0xdc] sm:$0xf]
      %v793 = vld [vmem:[%s5 + $0xe0] sm:$0xf]
      %v794 = vld [vmem:[%s5 + $0xe4] sm:$0xf]
      %v795 = vld [vmem:[%s5 + $0xe8] sm:$0xf]
      %v796 = vld [vmem:[%s5 + $0xec] sm:$0xf]
      %v797 = vld [vmem:[%s5 + $0xf0] sm:$0xf]
      %v798 = vld [vmem:[%s5 + $0xf4] sm:$0xf]
      %v799 = vld [vmem:[%s5 + $0xf8] sm:$0xf]
      %v800 = vld [vmem:[%s5 + $0xfc] sm:$0xf]
      %v801 = vld [vmem:[%s5 + $0x100] sm:$0xf]
      %v802 = vld [vmem:[%s5 + $0x104] sm:$0xf]
      %v803 = vld [vmem:[%s5 + $0x108] sm:$0xf]
      %v804 = vld [vmem:[%s5 + $0x10c] sm:$0xf]
      %v805 = vld [vmem:[%s5 + $0x110] sm:$0xf]
      %v806 = vld [vmem:[%s5 + $0x114] sm:$0xf]
      %v807 = vld [vmem:[%s5 + $0x118] sm:$0xf]
      %v808 = vld [vmem:[%s5 + $0x11c] sm:$0xf]
      %v809 = vld [vmem:[%s5 + $0x120] sm:$0xf]
      %v810 = vld [vmem:[%s5 + $0x124] sm:$0xf]
      %v811 = vld [vmem:[%s5 + $0x128] sm:$0xf]
      %v812 = vld [vmem:[%s5 + $0x12c] sm:$0xf]
      %v813 = vld [vmem:[%s5 + $0x130] sm:$0xf]
      %v814 = vld [vmem:[%s5 + $0x134] sm:$0xf]
      %v815 = vld [vmem:[%s5 + $0x138] sm:$0xf]
      %v816 = vld [vmem:[%s5 + $0x13c] sm:$0xf]
      %v817 = vld [vmem:[%s5 + $0x140] sm:$0xf]
      %v818 = vld [vmem:[%s5 + $0x144] sm:$0xf]
      %v819 = vld [vmem:[%s5 + $0x148] sm:$0xf]
      %v820 = vld [vmem:[%s5 + $0x14c] sm:$0xf]
      %v821 = vld [vmem:[%s5 + $0x150] sm:$0xf]
      %v822 = vld [vmem:[%s5 + $0x154] sm:$0xf]
      %v823 = vld [vmem:[%s5 + $0x158] sm:$0xf]
      %v824 = vld [vmem:[%s5 + $0x15c] sm:$0xf]
      %v825 = vld [vmem:[%s5 + $0x160] sm:$0xf]
      %v826 = vld [vmem:[%s5 + $0x164] sm:$0xf]
      %v827 = vld [vmem:[%s5 + $0x168] sm:$0xf]
      %v828 = vld [vmem:[%s5 + $0x16c] sm:$0xf]
      %v829 = vld [vmem:[%s5 + $0x170] sm:$0xf]
      %v830 = vld [vmem:[%s5 + $0x174] sm:$0xf]
      %v831 = vld [vmem:[%s5 + $0x178] sm:$0xf]
      %v832 = vld [vmem:[%s5 + $0x17c] sm:$0xf]
      %v833 = vld [vmem:[%s5 + $0x180] sm:$0xf]
      %v834 = vld [vmem:[%s5 + $0x184] sm:$0xf]
      %v835 = vld [vmem:[%s5 + $0x188] sm:$0xf]
      %v836 = vld [vmem:[%s5 + $0x18c] sm:$0xf]
      %v837 = vld [vmem:[%s5 + $0x190] sm:$0xf]
      %v838 = vld [vmem:[%s5 + $0x194] sm:$0xf]
      %v839 = vld [vmem:[%s5 + $0x198] sm:$0xf]
      %v840 = vld [vmem:[%s5 + $0x19c] sm:$0xf]
      %v841 = vld [vmem:[%s5 + $0x1a0] sm:$0xf]
      %v842 = vld [vmem:[%s5 + $0x1a4] sm:$0xf]
      %v843 = vld [vmem:[%s5 + $0x1a8] sm:$0xf]
      %v844 = vld [vmem:[%s5 + $0x1ac] sm:$0xf]
      %v845 = vld [vmem:[%s5 + $0x1b0] sm:$0xf]
      %v846 = vld [vmem:[%s5 + $0x1b4] sm:$0xf]
      %v847 = vld [vmem:[%s5 + $0x1b8] sm:$0xf]
      %v848 = vld [vmem:[%s5 + $0x1bc] sm:$0xf]
      %v849 = vld [vmem:[%s5 + $0x1c0] sm:$0xf]
      %v850 = vld [vmem:[%s5 + $0x1c4] sm:$0xf]
      %v851 = vld [vmem:[%s5 + $0x1c8] sm:$0xf]
      %v852 = vld [vmem:[%s5 + $0x1cc] sm:$0xf]
      %v853 = vld [vmem:[%s5 + $0x1d0] sm:$0xf]
      %v854 = vld [vmem:[%s5 + $0x1d4] sm:$0xf]
      %v855 = vld [vmem:[%s5 + $0x1d8] sm:$0xf]
      %v856 = vld [vmem:[%s5 + $0x1dc] sm:$0xf]
      %v857 = vld [vmem:[%s5 + $0x1e0] sm:$0xf]
      %v858 = vld [vmem:[%s5 + $0x1e4] sm:$0xf]
      %v859 = vld [vmem:[%s5 + $0x1e8] sm:$0xf]
      %v860 = vld [vmem:[%s5 + $0x1ec] sm:$0xf]
      %v861 = vld [vmem:[%s5 + $0x1f0] sm:$0xf]
      %v862 = vld [vmem:[%s5 + $0x1f4] sm:$0xf]
      %v863 = vld [vmem:[%s5 + $0x1f8] sm:$0xf]
      %v864 = vld [vmem:[%s5 + $0x1fc] sm:$0xf]
      %v865 = vld [vmem:[%s5 + $0x200] sm:$0xf]
      %v866 = vld [vmem:[%s5 + $0x204] sm:$0xf]
      %v867 = vld [vmem:[%s5 + $0x208] sm:$0xf]
      %v868 = vld [vmem:[%s5 + $0x20c] sm:$0xf]
      %v869 = vld [vmem:[%s5 + $0x210] sm:$0xf]
      %v870 = vld [vmem:[%s5 + $0x214] sm:$0xf]
      %v871 = vld [vmem:[%s5 + $0x218] sm:$0xf]
      %v872 = vld [vmem:[%s5 + $0x21c] sm:$0xf]
      %v873 = vld [vmem:[%s5 + $0x220] sm:$0xf]
      %v874 = vld [vmem:[%s5 + $0x224] sm:$0xf]
      %v875 = vld [vmem:[%s5 + $0x228] sm:$0xf]
      %v876 = vld [vmem:[%s5 + $0x22c] sm:$0xf]
      %v877 = vld [vmem:[%s5 + $0x230] sm:$0xf]
      %v878 = vld [vmem:[%s5 + $0x234] sm:$0xf]
      %v879 = vld [vmem:[%s5 + $0x238] sm:$0xf]
      %v880 = vld [vmem:[%s5 + $0x23c] sm:$0xf]
      %v881 = vld [vmem:[%s6] sm:$0x1]
      %v883 = vperm.slane %v881, 0
      %v905 = vunpack.c.l.b16 %v717
      %v906 = vunpack.c.h.b16 %v717
      %v907 = vunpack.c.l.b16 %v718
      %v908 = vunpack.c.h.b16 %v718
      %v909 = vunpack.c.l.b16 %v719
      %v910 = vunpack.c.h.b16 %v719
      %v911 = vunpack.c.l.b16 %v720
      %v912 = vunpack.c.h.b16 %v720
      %v913 = vunpack.c.l.b16 %v721
      %v914 = vunpack.c.l.b16 %v722
      %v915 = vunpack.c.h.b16 %v722
      %v916 = vunpack.c.l.b16 %v723
      %v917 = vunpack.c.h.b16 %v723
      %v918 = vunpack.c.l.b16 %v724
      %v919 = vunpack.c.h.b16 %v724
      %v920 = vunpack.c.l.b16 %v725
      %v921 = vunpack.c.h.b16 %v725
      %v922 = vunpack.c.l.b16 %v726
      %v923 = vunpack.c.l.b16 %v727
      %v924 = vunpack.c.h.b16 %v727
      %v925 = vunpack.c.l.b16 %v728
      %v926 = vunpack.c.h.b16 %v728
      %v927 = vunpack.c.l.b16 %v729
      %v928 = vunpack.c.h.b16 %v729
      %v929 = vunpack.c.l.b16 %v730
      %v930 = vunpack.c.h.b16 %v730
      %v931 = vunpack.c.l.b16 %v731
      %v932 = vunpack.c.l.b16 %v732
      %v933 = vunpack.c.h.b16 %v732
      %v934 = vunpack.c.l.b16 %v733
      %v935 = vunpack.c.h.b16 %v733
      %v936 = vunpack.c.l.b16 %v734
      %v937 = vunpack.c.h.b16 %v734
      %v938 = vunpack.c.l.b16 %v735
      %v939 = vunpack.c.h.b16 %v735
      %v940 = vunpack.c.l.b16 %v736
      %v941 = vpack.c.b16 %v914, %v905
      %v942 = vpack.c.b16 %v915, %v906
      %v943 = vpack.c.b16 %v916, %v907
      %v944 = vpack.c.b16 %v917, %v908
      %v945 = vpack.c.b16 %v918, %v909
      %v946 = vpack.c.b16 %v919, %v910
      %v947 = vpack.c.b16 %v920, %v911
      %v948 = vpack.c.b16 %v921, %v912
      %v949 = vpack.c.b16 %v922, %v913
      %v950 = vpack.c.b16 %v932, %v923
      %v951 = vpack.c.b16 %v933, %v924
      %v952 = vpack.c.b16 %v934, %v925
      %v953 = vpack.c.b16 %v935, %v926
      %v954 = vpack.c.b16 %v936, %v927
      %v955 = vpack.c.b16 %v937, %v928
      %v956 = vpack.c.b16 %v938, %v929
      %v957 = vpack.c.b16 %v939, %v930
      %v958 = vpack.c.b16 %v940, %v931
      %v1121 = vunpack.c.l.b16 %v737
      %v1122 = vunpack.c.l.b16 %v738
      %v1123 = vunpack.c.l.b16 %v739
      %v1124 = vunpack.c.l.b16 %v740
      %v1125 = vunpack.c.l.b16 %v741
      %v1126 = vunpack.c.l.b16 %v742
      %v1127 = vunpack.c.l.b16 %v743
      %v1128 = vunpack.c.l.b16 %v744
      %v1129 = vunpack.c.l.b16 %v745
      %v1130 = vunpack.c.l.b16 %v746
      %v1131 = vunpack.c.l.b16 %v747
      %v1132 = vunpack.c.l.b16 %v748
      %v1133 = vunpack.c.l.b16 %v749
      %v1134 = vunpack.c.l.b16 %v750
      %v1135 = vunpack.c.l.b16 %v751
      %v1136 = vunpack.c.l.b16 %v752
      %v1137 = vunpack.c.l.b16 %v753
      %v1138 = vunpack.c.l.b16 %v754
      %v1139 = vunpack.c.l.b16 %v755
      %v1140 = vunpack.c.l.b16 %v756
      %v1141 = vunpack.c.l.b16 %v757
      %v1142 = vunpack.c.l.b16 %v758
      %v1143 = vunpack.c.l.b16 %v759
      %v1144 = vunpack.c.l.b16 %v760
      %v1145 = vunpack.c.l.b16 %v761
      %v1146 = vunpack.c.l.b16 %v762
      %v1147 = vunpack.c.l.b16 %v763
      %v1148 = vunpack.c.l.b16 %v764
      %v1149 = vunpack.c.l.b16 %v765
      %v1150 = vunpack.c.l.b16 %v766
      %v1151 = vunpack.c.l.b16 %v767
      %v1152 = vunpack.c.l.b16 %v768
      %v1153 = vunpack.c.l.b16 %v769
      %v1154 = vunpack.c.l.b16 %v770
      %v1155 = vunpack.c.l.b16 %v771
      %v1156 = vunpack.c.l.b16 %v772
      %v1157 = vunpack.c.l.b16 %v773
      %v1158 = vunpack.c.l.b16 %v774
      %v1159 = vunpack.c.l.b16 %v775
      %v1160 = vunpack.c.l.b16 %v776
      %v1161 = vunpack.c.l.b16 %v777
      %v1162 = vunpack.c.l.b16 %v778
      %v1163 = vunpack.c.l.b16 %v779
      %v1164 = vunpack.c.l.b16 %v780
      %v1165 = vunpack.c.l.b16 %v781
      %v1166 = vunpack.c.l.b16 %v782
      %v1167 = vunpack.c.l.b16 %v783
      %v1168 = vunpack.c.l.b16 %v784
      %v1169 = vunpack.c.l.b16 %v785
      %v1170 = vunpack.c.l.b16 %v786
      %v1171 = vunpack.c.l.b16 %v787
      %v1172 = vunpack.c.l.b16 %v788
      %v1173 = vunpack.c.l.b16 %v789
      %v1174 = vunpack.c.l.b16 %v790
      %v1175 = vunpack.c.l.b16 %v791
      %v1176 = vunpack.c.l.b16 %v792
      %v1177 = vunpack.c.l.b16 %v793
      %v1178 = vunpack.c.l.b16 %v794
      %v1179 = vunpack.c.l.b16 %v795
      %v1180 = vunpack.c.l.b16 %v796
      %v1181 = vunpack.c.l.b16 %v797
      %v1182 = vunpack.c.l.b16 %v798
      %v1183 = vunpack.c.l.b16 %v799
      %v1184 = vunpack.c.l.b16 %v800
      %v1185 = vunpack.c.l.b16 %v801
      %v1186 = vunpack.c.l.b16 %v802
      %v1187 = vunpack.c.l.b16 %v803
      %v1188 = vunpack.c.l.b16 %v804
      %v1189 = vunpack.c.l.b16 %v805
      %v1190 = vunpack.c.l.b16 %v806
      %v1191 = vunpack.c.l.b16 %v807
      %v1192 = vunpack.c.l.b16 %v808
      %v1193 = vunpack.c.l.b16 %v809
      %v1194 = vunpack.c.l.b16 %v810
      %v1195 = vunpack.c.l.b16 %v811
      %v1196 = vunpack.c.l.b16 %v812
      %v1197 = vunpack.c.l.b16 %v813
      %v1198 = vunpack.c.l.b16 %v814
      %v1199 = vunpack.c.l.b16 %v815
      %v1200 = vunpack.c.l.b16 %v816
      %v1201 = vunpack.c.l.b16 %v817
      %v1202 = vunpack.c.l.b16 %v818
      %v1203 = vunpack.c.l.b16 %v819
      %v1204 = vunpack.c.l.b16 %v820
      %v1205 = vunpack.c.l.b16 %v821
      %v1206 = vunpack.c.l.b16 %v822
      %v1207 = vunpack.c.l.b16 %v823
      %v1208 = vunpack.c.l.b16 %v824
      %v1209 = vunpack.c.l.b16 %v825
      %v1210 = vunpack.c.l.b16 %v826
      %v1211 = vunpack.c.l.b16 %v827
      %v1212 = vunpack.c.l.b16 %v828
      %v1213 = vunpack.c.l.b16 %v829
      %v1214 = vunpack.c.l.b16 %v830
      %v1215 = vunpack.c.l.b16 %v831
      %v1216 = vunpack.c.l.b16 %v832
      %v1217 = vunpack.c.l.b16 %v833
      %v1218 = vunpack.c.l.b16 %v834
      %v1219 = vunpack.c.l.b16 %v835
      %v1220 = vunpack.c.l.b16 %v836
      %v1221 = vunpack.c.l.b16 %v837
      %v1222 = vunpack.c.l.b16 %v838
      %v1223 = vunpack.c.l.b16 %v839
      %v1224 = vunpack.c.l.b16 %v840
      %v1225 = vunpack.c.l.b16 %v841
      %v1226 = vunpack.c.l.b16 %v842
      %v1227 = vunpack.c.l.b16 %v843
      %v1228 = vunpack.c.l.b16 %v844
      %v1229 = vunpack.c.l.b16 %v845
      %v1230 = vunpack.c.l.b16 %v846
      %v1231 = vunpack.c.l.b16 %v847
      %v1232 = vunpack.c.l.b16 %v848
      %v1233 = vunpack.c.l.b16 %v849
      %v1234 = vunpack.c.l.b16 %v850
      %v1235 = vunpack.c.l.b16 %v851
      %v1236 = vunpack.c.l.b16 %v852
      %v1237 = vunpack.c.l.b16 %v853
      %v1238 = vunpack.c.l.b16 %v854
      %v1239 = vunpack.c.l.b16 %v855
      %v1240 = vunpack.c.l.b16 %v856
      %v1241 = vunpack.c.l.b16 %v857
      %v1242 = vunpack.c.l.b16 %v858
      %v1243 = vunpack.c.l.b16 %v859
      %v1244 = vunpack.c.l.b16 %v860
      %v1245 = vunpack.c.l.b16 %v861
      %v1246 = vunpack.c.l.b16 %v862
      %v1247 = vunpack.c.l.b16 %v863
      %v1248 = vunpack.c.l.b16 %v864
      %v1249 = vunpack.c.l.b16 %v865
      %v1250 = vunpack.c.l.b16 %v866
      %v1251 = vunpack.c.l.b16 %v867
      %v1252 = vunpack.c.l.b16 %v868
      %v1253 = vunpack.c.l.b16 %v869
      %v1254 = vunpack.c.l.b16 %v870
      %v1255 = vunpack.c.l.b16 %v871
      %v1256 = vunpack.c.l.b16 %v872
      %v1257 = vunpack.c.l.b16 %v873
      %v1258 = vunpack.c.l.b16 %v874
      %v1259 = vunpack.c.l.b16 %v875
      %v1260 = vunpack.c.l.b16 %v876
      %v1261 = vunpack.c.l.b16 %v877
      %v1262 = vunpack.c.l.b16 %v878
      %v1263 = vunpack.c.l.b16 %v879
      %v1264 = vunpack.c.l.b16 %v880
      %v1265 = vpack.c.b16 %v1122, %v1121
      %v1266 = vpack.c.b16 %v1124, %v1123
      %v1267 = vpack.c.b16 %v1126, %v1125
      %v1268 = vpack.c.b16 %v1128, %v1127
      %v1269 = vpack.c.b16 %v1130, %v1129
      %v1270 = vpack.c.b16 %v1132, %v1131
      %v1271 = vpack.c.b16 %v1134, %v1133
      %v1272 = vpack.c.b16 %v1136, %v1135
      %v1273 = vpack.c.b16 %v1138, %v1137
      %v1274 = vpack.c.b16 %v1140, %v1139
      %v1275 = vpack.c.b16 %v1142, %v1141
      %v1276 = vpack.c.b16 %v1144, %v1143
      %v1277 = vpack.c.b16 %v1146, %v1145
      %v1278 = vpack.c.b16 %v1148, %v1147
      %v1279 = vpack.c.b16 %v1150, %v1149
      %v1280 = vpack.c.b16 %v1152, %v1151
      %v1281 = vpack.c.b16 %v1154, %v1153
      %v1282 = vpack.c.b16 %v1156, %v1155
      %v1283 = vpack.c.b16 %v1158, %v1157
      %v1284 = vpack.c.b16 %v1160, %v1159
      %v1285 = vpack.c.b16 %v1162, %v1161
      %v1286 = vpack.c.b16 %v1164, %v1163
      %v1287 = vpack.c.b16 %v1166, %v1165
      %v1288 = vpack.c.b16 %v1168, %v1167
      %v1289 = vpack.c.b16 %v1170, %v1169
      %v1290 = vpack.c.b16 %v1172, %v1171
      %v1291 = vpack.c.b16 %v1174, %v1173
      %v1292 = vpack.c.b16 %v1176, %v1175
      %v1293 = vpack.c.b16 %v1178, %v1177
      %v1294 = vpack.c.b16 %v1180, %v1179
      %v1295 = vpack.c.b16 %v1182, %v1181
      %v1296 = vpack.c.b16 %v1184, %v1183
      %v1297 = vpack.c.b16 %v1186, %v1185
      %v1298 = vpack.c.b16 %v1188, %v1187
      %v1299 = vpack.c.b16 %v1190, %v1189
      %v1300 = vpack.c.b16 %v1192, %v1191
      %v1301 = vpack.c.b16 %v1194, %v1193
      %v1302 = vpack.c.b16 %v1196, %v1195
      %v1303 = vpack.c.b16 %v1198, %v1197
      %v1304 = vpack.c.b16 %v1200, %v1199
      %v1305 = vpack.c.b16 %v1202, %v1201
      %v1306 = vpack.c.b16 %v1204, %v1203
      %v1307 = vpack.c.b16 %v1206, %v1205
      %v1308 = vpack.c.b16 %v1208, %v1207
      %v1309 = vpack.c.b16 %v1210, %v1209
      %v1310 = vpack.c.b16 %v1212, %v1211
      %v1311 = vpack.c.b16 %v1214, %v1213
      %v1312 = vpack.c.b16 %v1216, %v1215
      %v1313 = vpack.c.b16 %v1218, %v1217
      %v1314 = vpack.c.b16 %v1220, %v1219
      %v1315 = vpack.c.b16 %v1222, %v1221
      %v1316 = vpack.c.b16 %v1224, %v1223
      %v1317 = vpack.c.b16 %v1226, %v1225
      %v1318 = vpack.c.b16 %v1228, %v1227
      %v1319 = vpack.c.b16 %v1230, %v1229
      %v1320 = vpack.c.b16 %v1232, %v1231
      %v1321 = vpack.c.b16 %v1234, %v1233
      %v1322 = vpack.c.b16 %v1236, %v1235
      %v1323 = vpack.c.b16 %v1238, %v1237
      %v1324 = vpack.c.b16 %v1240, %v1239
      %v1325 = vpack.c.b16 %v1242, %v1241
      %v1326 = vpack.c.b16 %v1244, %v1243
      %v1327 = vpack.c.b16 %v1246, %v1245
      %v1328 = vpack.c.b16 %v1248, %v1247
      %v1329 = vpack.c.b16 %v1250, %v1249
      %v1330 = vpack.c.b16 %v1252, %v1251
      %v1331 = vpack.c.b16 %v1254, %v1253
      %v1332 = vpack.c.b16 %v1256, %v1255
      %v1333 = vpack.c.b16 %v1258, %v1257
      %v1334 = vpack.c.b16 %v1260, %v1259
      %v1335 = vpack.c.b16 %v1262, %v1261
      %v1336 = vpack.c.b16 %v1264, %v1263
      %1409 = vmatpush.bf16.msra.mxu0 %v1272
      %1410 = vmatpush.bf16.msra.mxu0 %v1271
      %1411 = vmatpush.bf16.msra.mxu0 %v1270
      %1412 = vmatpush.bf16.msra.mxu0 %v1269
      %1413 = vmatpush.bf16.msra.mxu0 %v1268
      %1414 = vmatpush.bf16.msra.mxu0 %v1267
      %1415 = vmatpush.bf16.msra.mxu0 %v1266
      %1416 = vmatpush.bf16.msra.mxu0 %v1265
      %1417 = vmatmul.bf16.gmra.mxu0 %v941
      %v1418 = vpop.f32.mrf.mxu0
      %v1419 = vadd.f32 %v883, %v1418
      %v1420 = vpop.f32.mrf.mxu0
      %v1421 = vadd.f32 %v883, %v1420
      %1422 = vmatmul.bf16.gmra.mxu0 %v950
      %v1423 = vpop.f32.mrf.mxu0
      %v1424 = vadd.f32 %v883, %v1423
      %v1425 = vpop.f32.mrf.mxu0
      %v1426 = vadd.f32 %v883, %v1425
      %1427 = vdwg.mxu0
      %1428 = vmatpush.bf16.msra.mxu0 %v1280
      %1429 = vmatpush.bf16.msra.mxu0 %v1279
      %1430 = vmatpush.bf16.msra.mxu0 %v1278
      %1431 = vmatpush.bf16.msra.mxu0 %v1277
      %1432 = vmatpush.bf16.msra.mxu0 %v1276
      %1433 = vmatpush.bf16.msra.mxu0 %v1275
      %1434 = vmatpush.bf16.msra.mxu0 %v1274
      %1435 = vmatpush.bf16.msra.mxu0 %v1273
      %1436 = vmatmul.bf16.gmra.mxu0 %v942
      %v1437 = vpop.f32.mrf.mxu0
      %v1438 = vadd.f32 %v1419, %v1437
      %v1439 = vpop.f32.mrf.mxu0
      %v1440 = vadd.f32 %v1421, %v1439
      %1441 = vmatmul.bf16.gmra.mxu0 %v951
      %v1442 = vpop.f32.mrf.mxu0
      %v1443 = vadd.f32 %v1424, %v1442
      %v1444 = vpop.f32.mrf.mxu0
      %v1445 = vadd.f32 %v1426, %v1444
      %1446 = vdwg.mxu0
      %1447 = vmatpush.bf16.msra.mxu0 %v1288
      %1448 = vmatpush.bf16.msra.mxu0 %v1287
      %1449 = vmatpush.bf16.msra.mxu0 %v1286
      %1450 = vmatpush.bf16.msra.mxu0 %v1285
      %1451 = vmatpush.bf16.msra.mxu0 %v1284
      %1452 = vmatpush.bf16.msra.mxu0 %v1283
      %1453 = vmatpush.bf16.msra.mxu0 %v1282
      %1454 = vmatpush.bf16.msra.mxu0 %v1281
      %1455 = vmatmul.bf16.gmra.mxu0 %v943
      %v1456 = vpop.f32.mrf.mxu0
      %v1457 = vadd.f32 %v1438, %v1456
      %v1458 = vpop.f32.mrf.mxu0
      %v1459 = vadd.f32 %v1440, %v1458
      %1460 = vmatmul.bf16.gmra.mxu0 %v952
      %v1461 = vpop.f32.mrf.mxu0
      %v1462 = vadd.f32 %v1443, %v1461
      %v1463 = vpop.f32.mrf.mxu0
      %v1464 = vadd.f32 %v1445, %v1463
      %1465 = vdwg.mxu0
      %1466 = vmatpush.bf16.msra.mxu0 %v1296
      %1467 = vmatpush.bf16.msra.mxu0 %v1295
      %1468 = vmatpush.bf16.msra.mxu0 %v1294
      %1469 = vmatpush.bf16.msra.mxu0 %v1293
      %1470 = vmatpush.bf16.msra.mxu0 %v1292
      %1471 = vmatpush.bf16.msra.mxu0 %v1291
      %1472 = vmatpush.bf16.msra.mxu0 %v1290
      %1473 = vmatpush.bf16.msra.mxu0 %v1289
      %1474 = vmatmul.bf16.gmra.mxu0 %v944
      %v1475 = vpop.f32.mrf.mxu0
      %v1476 = vadd.f32 %v1457, %v1475
      %v1477 = vpop.f32.mrf.mxu0
      %v1478 = vadd.f32 %v1459, %v1477
      %1479 = vmatmul.bf16.gmra.mxu0 %v953
      %v1480 = vpop.f32.mrf.mxu0
      %v1481 = vadd.f32 %v1462, %v1480
      %v1482 = vpop.f32.mrf.mxu0
      %v1483 = vadd.f32 %v1464, %v1482
      %1484 = vdwg.mxu0
      %1485 = vmatpush.bf16.msra.mxu0 %v1304
      %1486 = vmatpush.bf16.msra.mxu0 %v1303
      %1487 = vmatpush.bf16.msra.mxu0 %v1302
      %1488 = vmatpush.bf16.msra.mxu0 %v1301
      %1489 = vmatpush.bf16.msra.mxu0 %v1300
      %1490 = vmatpush.bf16.msra.mxu0 %v1299
      %1491 = vmatpush.bf16.msra.mxu0 %v1298
      %1492 = vmatpush.bf16.msra.mxu0 %v1297
      %1493 = vmatmul.bf16.gmra.mxu0 %v945
      %v1494 = vpop.f32.mrf.mxu0
      %v1495 = vadd.f32 %v1476, %v1494
      %v1496 = vpop.f32.mrf.mxu0
      %v1497 = vadd.f32 %v1478, %v1496
      %1498 = vmatmul.bf16.gmra.mxu0 %v954
      %v1499 = vpop.f32.mrf.mxu0
      %v1500 = vadd.f32 %v1481, %v1499
      %v1501 = vpop.f32.mrf.mxu0
      %v1502 = vadd.f32 %v1483, %v1501
      %1503 = vdwg.mxu0
      %1504 = vmatpush.bf16.msra.mxu0 %v1312
      %1505 = vmatpush.bf16.msra.mxu0 %v1311
      %1506 = vmatpush.bf16.msra.mxu0 %v1310
      %1507 = vmatpush.bf16.msra.mxu0 %v1309
      %1508 = vmatpush.bf16.msra.mxu0 %v1308
      %1509 = vmatpush.bf16.msra.mxu0 %v1307
      %1510 = vmatpush.bf16.msra.mxu0 %v1306
      %1511 = vmatpush.bf16.msra.mxu0 %v1305
      %1512 = vmatmul.bf16.gmra.mxu0 %v946
      %v1513 = vpop.f32.mrf.mxu0
      %v1514 = vadd.f32 %v1495, %v1513
      %v1515 = vpop.f32.mrf.mxu0
      %v1516 = vadd.f32 %v1497, %v1515
      %1517 = vmatmul.bf16.gmra.mxu0 %v955
      %v1518 = vpop.f32.mrf.mxu0
      %v1519 = vadd.f32 %v1500, %v1518
      %v1520 = vpop.f32.mrf.mxu0
      %v1521 = vadd.f32 %v1502, %v1520
      %1522 = vdwg.mxu0
      %1523 = vmatpush.bf16.msra.mxu0 %v1320
      %1524 = vmatpush.bf16.msra.mxu0 %v1319
      %1525 = vmatpush.bf16.msra.mxu0 %v1318
      %1526 = vmatpush.bf16.msra.mxu0 %v1317
      %1527 = vmatpush.bf16.msra.mxu0 %v1316
      %1528 = vmatpush.bf16.msra.mxu0 %v1315
      %1529 = vmatpush.bf16.msra.mxu0 %v1314
      %1530 = vmatpush.bf16.msra.mxu0 %v1313
      %1531 = vmatmul.bf16.gmra.mxu0 %v947
      %v1532 = vpop.f32.mrf.mxu0
      %v1533 = vadd.f32 %v1514, %v1532
      %v1534 = vpop.f32.mrf.mxu0
      %v1535 = vadd.f32 %v1516, %v1534
      %1536 = vmatmul.bf16.gmra.mxu0 %v956
      %v1537 = vpop.f32.mrf.mxu0
      %v1538 = vadd.f32 %v1519, %v1537
      %v1539 = vpop.f32.mrf.mxu0
      %v1540 = vadd.f32 %v1521, %v1539
      %1541 = vdwg.mxu0
      %1542 = vmatpush.bf16.msra.mxu0 %v1328
      %1543 = vmatpush.bf16.msra.mxu0 %v1327
      %1544 = vmatpush.bf16.msra.mxu0 %v1326
      %1545 = vmatpush.bf16.msra.mxu0 %v1325
      %1546 = vmatpush.bf16.msra.mxu0 %v1324
      %1547 = vmatpush.bf16.msra.mxu0 %v1323
      %1548 = vmatpush.bf16.msra.mxu0 %v1322
      %1549 = vmatpush.bf16.msra.mxu0 %v1321
      %1550 = vmatmul.bf16.gmra.mxu0 %v948
      %v1551 = vpop.f32.mrf.mxu0
      %v1552 = vadd.f32 %v1533, %v1551
      %v1553 = vpop.f32.mrf.mxu0
      %v1554 = vadd.f32 %v1535, %v1553
      %1555 = vmatmul.bf16.gmra.mxu0 %v957
      %v1556 = vpop.f32.mrf.mxu0
      %v1557 = vadd.f32 %v1538, %v1556
      %v1558 = vpop.f32.mrf.mxu0
      %v1559 = vadd.f32 %v1540, %v1558
      %1560 = vdwg.mxu0
      %1561 = vmatpush.bf16.msra.mxu0 %v1336
      %1562 = vmatpush.bf16.msra.mxu0 %v1335
      %1563 = vmatpush.bf16.msra.mxu0 %v1334
      %1564 = vmatpush.bf16.msra.mxu0 %v1333
      %1565 = vmatpush.bf16.msra.mxu0 %v1332
      %1566 = vmatpush.bf16.msra.mxu0 %v1331
      %1567 = vmatpush.bf16.msra.mxu0 %v1330
      %1568 = vmatpush.bf16.msra.mxu0 %v1329
      %1569 = vmatmul.bf16.gmra.mxu0 %v949
      %v1570 = vpop.f32.mrf.mxu0
      %v1571 = vadd.f32 %v1552, %v1570
      %v1572 = vpop.f32.mrf.mxu0
      %v1573 = vadd.f32 %v1554, %v1572
      %1574 = vmatmul.bf16.gmra.mxu0 %v958
      %v1575 = vpop.f32.mrf.mxu0
      %v1576 = vadd.f32 %v1557, %v1575
      %v1577 = vpop.f32.mrf.mxu0
      %v1578 = vadd.f32 %v1559, %v1577
      %1579 = vdwg.mxu0
      %1580 = vst [vmem:[%s312] sm:$0xff] %v1571
      %1581 = vst [vmem:[%s312 + $0x8] sm:$0xff] %v1573
      %1582 = vst [vmem:[%s312 + $0x10] sm:$0xff] %v1576
      %1583 = vst [vmem:[%s312 + $0x18] sm:$0xff] %v1578
      %v1584 = vadd.f32 %v1571, %v1573
      %v1585 = vadd.f32 %v1584, %v1576
      %v1586 = vadd.f32 %v1585, %v1578
      %v1587 = vrot.slane %v1586, 4
      %v1588 = vadd.f32 %v1586, %v1587
      %v1589 = vrot.slane %v1588, 2
      %v1590 = vadd.f32 %v1588, %v1589
      %v1591 = vrot.slane %v1590, 1
      %v1592 = vadd.f32 %v1590, %v1591
      %v1593 = vmul.f32 %v1571, %v1571
      %v1594 = vmul.f32 %v1573, %v1573
      %v1595 = vmul.f32 %v1576, %v1576
      %v1596 = vmul.f32 %v1578, %v1578
      %v1597 = vadd.f32 %v1593, %v1594
      %v1598 = vadd.f32 %v1597, %v1595
      %v1599 = vadd.f32 %v1598, %v1596
      %v1600 = vrot.slane %v1599, 4
      %v1601 = vadd.f32 %v1599, %v1600
      %v1602 = vrot.slane %v1601, 2
      %v1603 = vadd.f32 %v1601, %v1602
      %v1604 = vrot.slane %v1603, 1
      %v1605 = vadd.f32 %v1603, %v1604
      %vm1606 = vcmask 1040384
      %v1607 = vsel %vm1606, %v1592, %v1605
      %1608 = vst [vmem:[%s316] sm:$0x3] %v1607
      %p1609 = scmp.lt.s32.totalorder %s20, 1
      %s1610 = scalar_select %p1609, %s20, 1
      %s1611 = smul.addr %s1610, 4
      %s1612 = smul.addr %s1611, 8
      %s1613 = scalar_lea.vmem %s7, %s1612
      %p1614 = scmp.lt.s32.totalorder %s20, 1
      %s1615 = scalar_select %p1614, %s20, 1
      %s1616 = smul.addr %s1615, 2
      %s1617 = scalar_lea.vmem %s8, %s1616
      // Predicated region
      $region49: #{_lambda_.8} parent=47 // pred_check
        %p1618 = pneg %p190
      $region50: #{_lambda_.8} parent=47 // pred_check_branch
        %1620 = sbr.rel (%p1618) target = $region52
      $region51: #{_lambda_.8} parent=47 // pred_region
        _
      $region52: #{_lambda_.8} parent=47 // pred_fallthru
        _
      // Predicated region
      $region53: #{_lambda_.8} parent=47 // pred_check
        %p1621 = pneg %p216
      $region54: #{_lambda_.8} parent=47 // pred_check_branch
        %1623 = sbr.rel (%p1621) target = $region56
      $region55: #{_lambda_.8} parent=47 // pred_region
        _
      $region56: #{_lambda_.8} parent=47 // pred_fallthru
        _
    $region48: #{_lambda_.8} parent=5 // pred_fallthru
      _
    %p1624 = scmp.le.s32.totalorder 2, %s15
    // Predicated region
    $region57: #{_lambda_.8} parent=5 // pred_check
      %p1625 = pneg %p1624
    $region58: #{_lambda_.8} parent=5 // pred_check_branch
      %1627 = sbr.rel (%p1625) target = $region60
    $region59: #{_lambda_.8} parent=5 // pred_region
      %s1628 = ssub.s32 %s15, 2
      // Predicated region
      $region61: #{_lambda_.8} parent=59 // pred_check
        %p1629 = pneg %p196
      $region62: #{_lambda_.8} parent=59 // pred_check_branch
        %1631 = sbr.rel (%p1629) target = $region64
      $region63: #{_lambda_.8} parent=59 // pred_region
        %p1632 = scmp.lt.s32.totalorder %s21, 1
        %s1633 = scalar_select %p1632, %s21, 1
        %s1634 = smul.addr %s1633, 4
        %s1635 = smul.addr %s1634, 8
        %s1636 = scalar_lea.vmem %s7, %s1635
      $region64: #{_lambda_.8} parent=59 // pred_fallthru
        _
      // Predicated region
      $region65: #{_lambda_.8} parent=59 // pred_check
        %p1637 = pneg %p222
      $region66: #{_lambda_.8} parent=59 // pred_check_branch
        %1639 = sbr.rel (%p1637) target = $region68
      $region67: #{_lambda_.8} parent=59 // pred_region
        %p1640 = scmp.lt.s32.totalorder %s21, 1
        %s1641 = scalar_select %p1640, %s21, 1
        %s1642 = smul.addr %s1641, 2
        %s1643 = scalar_lea.vmem %s8, %s1642
      $region68: #{_lambda_.8} parent=59 // pred_fallthru
        _
    $region60: #{_lambda_.8} parent=5 // pred_fallthru
      _
  $region6: #{_lambda_.8} parent=0 // loop_footer
    %s19 = sadd.s32 1, %s15
  $region7: #{_lambda_.8} parent=0 // loop_footer_branch
    %14 = sbr.rel target = $region3
  $region8: #{_lambda_.8} parent=0 // loop_exit
    _

// kernel: _lambda_.11
$region0: #{_lambda_.11}
  #allocation0 [shape = 'u32[]', space=smem, size = 0x4, offset = 0x4, fixed_abs, tag = 'smem constant byte address 0x4 - core index']
  #allocation1 [shape = 'u32[72,128]{1,0:T(1,128)}', space=vmem, size = 0x9000, scoped, tag = 'internal scratch']
  %s0 = inlined_call_operand.vmem [shape: f32[2,32,128], index: 0, kind: input, shape index: {}]
  %s1 = inlined_call_operand.vmem [shape: f32[2,32,128], index: 1, kind: input, shape index: {}]
  %s2 = inlined_call_operand.vmem [shape: f32[2,32,256], index: 2, kind: input, shape index: {}]
  %s3 = inlined_call_operand.vmem [shape: f32[2,2,128], index: 3, kind: input, shape index: {}]
  %s4 = inlined_call_operand.vmem [shape: f32[1,128], index: 4, kind: input, shape index: {}]
  %s5 = inlined_call_operand.vmem [shape: f32[1,128], index: 5, kind: input, shape index: {}]
  %s6 = inlined_call_operand.vmem [shape: f32[128,128], index: 6, kind: input, shape index: {}]
  %s7 = inlined_call_operand.vmem [shape: f32[128,128], index: 7, kind: input, shape index: {}]
  %s8 = inlined_call_operand.vmem [shape: f32[1,128], index: 8, kind: input, shape index: {}]
  %s9 = inlined_call_operand.vmem [shape: f32[1,128], index: 9, kind: input, shape index: {}]
  %s10 = inlined_call_operand.vmem [shape: bf16[128,256], index: 10, kind: input, shape index: {}]
  %s11 = inlined_call_operand.vmem [shape: f32[1,256], index: 11, kind: input, shape index: {}]
  %s12 = inlined_call_operand.vmem [shape: f32[2,32,256], index: 12, kind: output, shape index: {}]
  %s13 = sld [smem:[#allocation0]]
  $region81: #{_lambda_.11} parent=0
    _
  %s15 = ssub.s32 1, %s13
  %s16 = scalar_select 0, %s15, %s13
  loop: start=0, step=1, limit=4
  $region2: #{_lambda_.11} parent=0 // loop_pre_header
    _
  $region3: #{_lambda_.11} parent=0 // loop_header
    %s18 = sphi 0, %s22
    %p19 = scmp.ge.s32.totalorder %s18, 4
    %s28 = sphi 0, %s30
    %s31 = sphi 0, %s28
    %s32 = sphi 0, %s31
    %s48 = sphi 0, %s32
    %s54 = sphi 0, %s56
    %s57 = sphi 0, %s54
    %s58 = sphi 0, %s57
    %s74 = sphi 0, %s58
    %s80 = sphi 0, %s82
    %s83 = sphi 0, %s80
    %s84 = sphi 0, %s83
    %s100 = sphi 0, %s84
    %s104 = sphi 0, %s104
    %s106 = sphi 0, %s104
    %s107 = sphi 0, %s106
    %s121 = sphi 0, %s107
    %s125 = sphi 0, %s125
    %s127 = sphi 0, %s125
    %s128 = sphi 0, %s127
    %s142 = sphi 0, %s128
    %s146 = sphi 0, %s146
    %s148 = sphi 0, %s146
    %s149 = sphi 0, %s148
    %s163 = sphi 0, %s149
    %s167 = sphi 0, %s167
    %s169 = sphi 0, %s167
    %s170 = sphi 0, %s169
    %s184 = sphi 0, %s170
    %s188 = sphi 0, %s188
    %s190 = sphi 0, %s188
    %s191 = sphi 0, %s190
    %s205 = sphi 0, %s191
    %s209 = sphi 0, %s209
    %s211 = sphi 0, %s209
    %s212 = sphi 0, %s211
    %s226 = sphi 0, %s212
    %s230 = sphi 0, %s230
    %s232 = sphi 0, %s230
    %s233 = sphi 0, %s232
    %s247 = sphi 0, %s233
    %s251 = sphi 0, %s251
    %s253 = sphi 0, %s251
    %s254 = sphi 0, %s253
    %s268 = sphi 0, %s254
    %s272 = sphi 0, %s272
    %s274 = sphi 0, %s272
    %s275 = sphi 0, %s274
    %s289 = sphi 0, %s275
    %s295 = sphi 0, %s297
    %s298 = sphi 0, %s295
    %s299 = sphi 0, %s298
    %s315 = sphi 0, %s299
  $region4: #{_lambda_.11} parent=0 // loop_header_branch
    %21 = sbr.rel (%p19) target = $region8
  $region5: #{_lambda_.11} parent=0 // loop_body
    %s23 = ssub.s32 %s18, 1
    %s24 = ssub.s32 %s18, 2
    %s25 = sadd.s32 %s18, 1
    %s26 = ssub.s32 %s18, %s25
    %p27 = scmp.eq.s32.totalorder %s26, 0
    %s29 = sadd.s32 %s28, 1
    %s30 = scalar_select %p27, %s28, %s29
    %p33 = pneg %p27
    %p34 = scmp.eq.s32.totalorder %s18, 1
    %p35 = por %p33, %p34
    %p36 = scmp.ne.s32.totalorder %s28, %s31
    %p37 = scmp.eq.s32.totalorder %s18, 0
    %p38 = por %p36, %p37
    %p39 = scmp.ne.s32.totalorder %s28, %s31
    %p40 = scmp.eq.s32.totalorder %s23, 1
    %p41 = por %p39, %p40
    %p42 = scmp.ne.s32.totalorder %s31, %s32
    %p43 = scmp.eq.s32.totalorder %s23, 0
    %p44 = por %p42, %p43
    %p45 = scmp.ne.s32.totalorder %s31, %s32
    %p46 = scmp.eq.s32.totalorder %s24, 1
    %p47 = por %p45, %p46
    %p49 = scmp.ne.s32.totalorder %s32, %s48
    %p50 = scmp.eq.s32.totalorder %s24, 0
    %p51 = por %p49, %p50
    %s52 = ssub.s32 %s18, %s25
    %p53 = scmp.eq.s32.totalorder %s52, 0
    %s55 = sadd.s32 %s54, 1
    %s56 = scalar_select %p53, %s54, %s55
    %p59 = pneg %p53
    %p60 = scmp.eq.s32.totalorder %s18, 1
    %p61 = por %p59, %p60
    %p62 = scmp.ne.s32.totalorder %s54, %s57
    %p63 = scmp.eq.s32.totalorder %s18, 0
    %p64 = por %p62, %p63
    %p65 = scmp.ne.s32.totalorder %s54, %s57
    %p66 = scmp.eq.s32.totalorder %s23, 1
    %p67 = por %p65, %p66
    %p68 = scmp.ne.s32.totalorder %s57, %s58
    %p69 = scmp.eq.s32.totalorder %s23, 0
    %p70 = por %p68, %p69
    %p71 = scmp.ne.s32.totalorder %s57, %s58
    %p72 = scmp.eq.s32.totalorder %s24, 1
    %p73 = por %p71, %p72
    %p75 = scmp.ne.s32.totalorder %s58, %s74
    %p76 = scmp.eq.s32.totalorder %s24, 0
    %p77 = por %p75, %p76
    %s78 = ssub.s32 %s18, %s25
    %p79 = scmp.eq.s32.totalorder %s78, 0
    %s81 = sadd.s32 %s80, 1
    %s82 = scalar_select %p79, %s80, %s81
    %p85 = pneg %p79
    %p86 = scmp.eq.s32.totalorder %s18, 1
    %p87 = por %p85, %p86
    %p88 = scmp.ne.s32.totalorder %s80, %s83
    %p89 = scmp.eq.s32.totalorder %s18, 0
    %p90 = por %p88, %p89
    %p91 = scmp.ne.s32.totalorder %s80, %s83
    %p92 = scmp.eq.s32.totalorder %s23, 1
    %p93 = por %p91, %p92
    %p94 = scmp.ne.s32.totalorder %s83, %s84
    %p95 = scmp.eq.s32.totalorder %s23, 0
    %p96 = por %p94, %p95
    %p97 = scmp.ne.s32.totalorder %s83, %s84
    %p98 = scmp.eq.s32.totalorder %s24, 1
    %p99 = por %p97, %p98
    %p101 = scmp.ne.s32.totalorder %s84, %s100
    %p102 = scmp.eq.s32.totalorder %s24, 0
    %p103 = por %p101, %p102
    %s105 = sadd.s32 %s104, 1
    %p108 = scmp.eq.s32.totalorder %s18, 1
    %p109 = scmp.ne.s32.totalorder %s104, %s106
    %p110 = scmp.eq.s32.totalorder %s18, 0
    %p111 = por %p109, %p110
    %p112 = scmp.ne.s32.totalorder %s104, %s106
    %p113 = scmp.eq.s32.totalorder %s23, 1
    %p114 = por %p112, %p113
    %p115 = scmp.ne.s32.totalorder %s106, %s107
    %p116 = scmp.eq.s32.totalorder %s23, 0
    %p117 = por %p115, %p116
    %p118 = scmp.ne.s32.totalorder %s106, %s107
    %p119 = scmp.eq.s32.totalorder %s24, 1
    %p120 = por %p118, %p119
    %p122 = scmp.ne.s32.totalorder %s107, %s121
    %p123 = scmp.eq.s32.totalorder %s24, 0
    %p124 = por %p122, %p123
    %s126 = sadd.s32 %s125, 1
    %p129 = scmp.eq.s32.totalorder %s18, 1
    %p130 = scmp.ne.s32.totalorder %s125, %s127
    %p131 = scmp.eq.s32.totalorder %s18, 0
    %p132 = por %p130, %p131
    %p133 = scmp.ne.s32.totalorder %s125, %s127
    %p134 = scmp.eq.s32.totalorder %s23, 1
    %p135 = por %p133, %p134
    %p136 = scmp.ne.s32.totalorder %s127, %s128
    %p137 = scmp.eq.s32.totalorder %s23, 0
    %p138 = por %p136, %p137
    %p139 = scmp.ne.s32.totalorder %s127, %s128
    %p140 = scmp.eq.s32.totalorder %s24, 1
    %p141 = por %p139, %p140
    %p143 = scmp.ne.s32.totalorder %s128, %s142
    %p144 = scmp.eq.s32.totalorder %s24, 0
    %p145 = por %p143, %p144
    %s147 = sadd.s32 %s146, 1
    %p150 = scmp.eq.s32.totalorder %s18, 1
    %p151 = scmp.ne.s32.totalorder %s146, %s148
    %p152 = scmp.eq.s32.totalorder %s18, 0
    %p153 = por %p151, %p152
    %p154 = scmp.ne.s32.totalorder %s146, %s148
    %p155 = scmp.eq.s32.totalorder %s23, 1
    %p156 = por %p154, %p155
    %p157 = scmp.ne.s32.totalorder %s148, %s149
    %p158 = scmp.eq.s32.totalorder %s23, 0
    %p159 = por %p157, %p158
    %p160 = scmp.ne.s32.totalorder %s148, %s149
    %p161 = scmp.eq.s32.totalorder %s24, 1
    %p162 = por %p160, %p161
    %p164 = scmp.ne.s32.totalorder %s149, %s163
    %p165 = scmp.eq.s32.totalorder %s24, 0
    %p166 = por %p164, %p165
    %s168 = sadd.s32 %s167, 1
    %p171 = scmp.eq.s32.totalorder %s18, 1
    %p172 = scmp.ne.s32.totalorder %s167, %s169
    %p173 = scmp.eq.s32.totalorder %s18, 0
    %p174 = por %p172, %p173
    %p175 = scmp.ne.s32.totalorder %s167, %s169
    %p176 = scmp.eq.s32.totalorder %s23, 1
    %p177 = por %p175, %p176
    %p178 = scmp.ne.s32.totalorder %s169, %s170
    %p179 = scmp.eq.s32.totalorder %s23, 0
    %p180 = por %p178, %p179
    %p181 = scmp.ne.s32.totalorder %s169, %s170
    %p182 = scmp.eq.s32.totalorder %s24, 1
    %p183 = por %p181, %p182
    %p185 = scmp.ne.s32.totalorder %s170, %s184
    %p186 = scmp.eq.s32.totalorder %s24, 0
    %p187 = por %p185, %p186
    %s189 = sadd.s32 %s188, 1
    %p192 = scmp.eq.s32.totalorder %s18, 1
    %p193 = scmp.ne.s32.totalorder %s188, %s190
    %p194 = scmp.eq.s32.totalorder %s18, 0
    %p195 = por %p193, %p194
    %p196 = scmp.ne.s32.totalorder %s188, %s190
    %p197 = scmp.eq.s32.totalorder %s23, 1
    %p198 = por %p196, %p197
    %p199 = scmp.ne.s32.totalorder %s190, %s191
    %p200 = scmp.eq.s32.totalorder %s23, 0
    %p201 = por %p199, %p200
    %p202 = scmp.ne.s32.totalorder %s190, %s191
    %p203 = scmp.eq.s32.totalorder %s24, 1
    %p204 = por %p202, %p203
    %p206 = scmp.ne.s32.totalorder %s191, %s205
    %p207 = scmp.eq.s32.totalorder %s24, 0
    %p208 = por %p206, %p207
    %s210 = sadd.s32 %s209, 1
    %p213 = scmp.eq.s32.totalorder %s18, 1
    %p214 = scmp.ne.s32.totalorder %s209, %s211
    %p215 = scmp.eq.s32.totalorder %s18, 0
    %p216 = por %p214, %p215
    %p217 = scmp.ne.s32.totalorder %s209, %s211
    %p218 = scmp.eq.s32.totalorder %s23, 1
    %p219 = por %p217, %p218
    %p220 = scmp.ne.s32.totalorder %s211, %s212
    %p221 = scmp.eq.s32.totalorder %s23, 0
    %p222 = por %p220, %p221
    %p223 = scmp.ne.s32.totalorder %s211, %s212
    %p224 = scmp.eq.s32.totalorder %s24, 1
    %p225 = por %p223, %p224
    %p227 = scmp.ne.s32.totalorder %s212, %s226
    %p228 = scmp.eq.s32.totalorder %s24, 0
    %p229 = por %p227, %p228
    %s231 = sadd.s32 %s230, 1
    %p234 = scmp.eq.s32.totalorder %s18, 1
    %p235 = scmp.ne.s32.totalorder %s230, %s232
    %p236 = scmp.eq.s32.totalorder %s18, 0
    %p237 = por %p235, %p236
    %p238 = scmp.ne.s32.totalorder %s230, %s232
    %p239 = scmp.eq.s32.totalorder %s23, 1
    %p240 = por %p238, %p239
    %p241 = scmp.ne.s32.totalorder %s232, %s233
    %p242 = scmp.eq.s32.totalorder %s23, 0
    %p243 = por %p241, %p242
    %p244 = scmp.ne.s32.totalorder %s232, %s233
    %p245 = scmp.eq.s32.totalorder %s24, 1
    %p246 = por %p244, %p245
    %p248 = scmp.ne.s32.totalorder %s233, %s247
    %p249 = scmp.eq.s32.totalorder %s24, 0
    %p250 = por %p248, %p249
    %s252 = sadd.s32 %s251, 1
    %p255 = scmp.eq.s32.totalorder %s18, 1
    %p256 = scmp.ne.s32.totalorder %s251, %s253
    %p257 = scmp.eq.s32.totalorder %s18, 0
    %p258 = por %p256, %p257
    %p259 = scmp.ne.s32.totalorder %s251, %s253
    %p260 = scmp.eq.s32.totalorder %s23, 1
    %p261 = por %p259, %p260
    %p262 = scmp.ne.s32.totalorder %s253, %s254
    %p263 = scmp.eq.s32.totalorder %s23, 0
    %p264 = por %p262, %p263
    %p265 = scmp.ne.s32.totalorder %s253, %s254
    %p266 = scmp.eq.s32.totalorder %s24, 1
    %p267 = por %p265, %p266
    %p269 = scmp.ne.s32.totalorder %s254, %s268
    %p270 = scmp.eq.s32.totalorder %s24, 0
    %p271 = por %p269, %p270
    %s273 = sadd.s32 %s272, 1
    %p276 = scmp.eq.s32.totalorder %s18, 1
    %p277 = scmp.ne.s32.totalorder %s272, %s274
    %p278 = scmp.eq.s32.totalorder %s18, 0
    %p279 = por %p277, %p278
    %p280 = scmp.ne.s32.totalorder %s272, %s274
    %p281 = scmp.eq.s32.totalorder %s23, 1
    %p282 = por %p280, %p281
    %p283 = scmp.ne.s32.totalorder %s274, %s275
    %p284 = scmp.eq.s32.totalorder %s23, 0
    %p285 = por %p283, %p284
    %p286 = scmp.ne.s32.totalorder %s274, %s275
    %p287 = scmp.eq.s32.totalorder %s24, 1
    %p288 = por %p286, %p287
    %p290 = scmp.ne.s32.totalorder %s275, %s289
    %p291 = scmp.eq.s32.totalorder %s24, 0
    %p292 = por %p290, %p291
    %s293 = ssub.s32 %s18, %s25
    %p294 = scmp.eq.s32.totalorder %s293, 0
    %s296 = sadd.s32 %s295, 1
    %s297 = scalar_select %p294, %s295, %s296
    %p300 = pneg %p294
    %p301 = scmp.eq.s32.totalorder %s18, 1
    %p302 = por %p300, %p301
    %p303 = scmp.ne.s32.totalorder %s295, %s298
    %p304 = scmp.eq.s32.totalorder %s18, 0
    %p305 = por %p303, %p304
    %p306 = scmp.ne.s32.totalorder %s295, %s298
    %p307 = scmp.eq.s32.totalorder %s23, 1
    %p308 = por %p306, %p307
    %p309 = scmp.ne.s32.totalorder %s298, %s299
    %p310 = scmp.eq.s32.totalorder %s23, 0
    %p311 = por %p309, %p310
    %p312 = scmp.ne.s32.totalorder %s298, %s299
    %p313 = scmp.eq.s32.totalorder %s24, 1
    %p314 = por %p312, %p313
    %p316 = scmp.ne.s32.totalorder %s299, %s315
    %p317 = scmp.eq.s32.totalorder %s24, 0
    %p318 = por %p316, %p317
    %p319 = scmp.le.s32.totalorder 1, %s18
    %p320 = scmp.lt.s32.totalorder %s18, 3
    %p321 = pnand %p319, %p320
    %p322 = pneg %p321
    // Predicated region
    $region9: #{_lambda_.11} parent=5 // pred_check
      _
    $region10: #{_lambda_.11} parent=5 // pred_check_branch
      %324 = sbr.rel (%p321) target = $region12
    $region11: #{_lambda_.11} parent=5 // pred_region
      %s325 = ssub.s32 %s18, 1
      // Predicated region
      $region13: #{_lambda_.11} parent=11 // pred_check
        %p326 = pneg %p117
      $region14: #{_lambda_.11} parent=11 // pred_check_branch
        %328 = sbr.rel (%p326) target = $region16
      $region15: #{_lambda_.11} parent=11 // pred_region
        _
      $region16: #{_lambda_.11} parent=11 // pred_fallthru
        _
      // Predicated region
      $region17: #{_lambda_.11} parent=11 // pred_check
        %p329 = pneg %p138
      $region18: #{_lambda_.11} parent=11 // pred_check_branch
        %331 = sbr.rel (%p329) target = $region20
      $region19: #{_lambda_.11} parent=11 // pred_region
        _
      $region20: #{_lambda_.11} parent=11 // pred_fallthru
        _
      // Predicated region
      $region21: #{_lambda_.11} parent=11 // pred_check
        %p332 = pneg %p159
      $region22: #{_lambda_.11} parent=11 // pred_check_branch
        %334 = sbr.rel (%p332) target = $region24
      $region23: #{_lambda_.11} parent=11 // pred_region
        _
      $region24: #{_lambda_.11} parent=11 // pred_fallthru
        _
      // Predicated region
      $region25: #{_lambda_.11} parent=11 // pred_check
        %p335 = pneg %p180
      $region26: #{_lambda_.11} parent=11 // pred_check_branch
        %337 = sbr.rel (%p335) target = $region28
      $region27: #{_lambda_.11} parent=11 // pred_region
        _
      $region28: #{_lambda_.11} parent=11 // pred_fallthru
        _
      // Predicated region
      $region29: #{_lambda_.11} parent=11 // pred_check
        %p338 = pneg %p201
      $region30: #{_lambda_.11} parent=11 // pred_check_branch
        %340 = sbr.rel (%p338) target = $region32
      $region31: #{_lambda_.11} parent=11 // pred_region
        _
      $region32: #{_lambda_.11} parent=11 // pred_fallthru
        _
      // Predicated region
      $region33: #{_lambda_.11} parent=11 // pred_check
        %p341 = pneg %p222
      $region34: #{_lambda_.11} parent=11 // pred_check_branch
        %343 = sbr.rel (%p341) target = $region36
      $region35: #{_lambda_.11} parent=11 // pred_region
        _
      $region36: #{_lambda_.11} parent=11 // pred_fallthru
        _
      // Predicated region
      $region37: #{_lambda_.11} parent=11 // pred_check
        %p344 = pneg %p243
      $region38: #{_lambda_.11} parent=11 // pred_check_branch
        %346 = sbr.rel (%p344) target = $region40
      $region39: #{_lambda_.11} parent=11 // pred_region
        _
      $region40: #{_lambda_.11} parent=11 // pred_fallthru
        _
      // Predicated region
      $region41: #{_lambda_.11} parent=11 // pred_check
        %p347 = pneg %p264
      $region42: #{_lambda_.11} parent=11 // pred_check_branch
        %349 = sbr.rel (%p347) target = $region44
      $region43: #{_lambda_.11} parent=11 // pred_region
        _
      $region44: #{_lambda_.11} parent=11 // pred_fallthru
        _
      // Predicated region
      $region45: #{_lambda_.11} parent=11 // pred_check
        %p350 = pneg %p285
      $region46: #{_lambda_.11} parent=11 // pred_check_branch
        %352 = sbr.rel (%p350) target = $region48
      $region47: #{_lambda_.11} parent=11 // pred_region
        _
      $region48: #{_lambda_.11} parent=11 // pred_fallthru
        _
    $region12: #{_lambda_.11} parent=5 // pred_fallthru
      _
    %p353 = scmp.lt.s32.totalorder %s18, 2
    // Predicated region
    $region49: #{_lambda_.11} parent=5 // pred_check
      %p354 = pneg %p353
    $region50: #{_lambda_.11} parent=5 // pred_check_branch
      %356 = sbr.rel (%p354) target = $region52
    $region51: #{_lambda_.11} parent=5 // pred_region
      // Predicated region
      $region53: #{_lambda_.11} parent=51 // pred_check
        %p357 = pneg %p38
      $region54: #{_lambda_.11} parent=51 // pred_check_branch
        %359 = sbr.rel (%p357) target = $region56
      $region55: #{_lambda_.11} parent=51 // pred_region
        %p360 = scmp.lt.s32.totalorder %s18, 1
        %s361 = scalar_select %p360, %s18, 1
        %s362 = smul.addr %s361, 4
        %s363 = smul.addr %s362, 8
        %s364 = scalar_lea.vmem %s0, %s363
      $region56: #{_lambda_.11} parent=51 // pred_fallthru
        _
      // Predicated region
      $region57: #{_lambda_.11} parent=51 // pred_check
        %p365 = pneg %p64
      $region58: #{_lambda_.11} parent=51 // pred_check_branch
        %367 = sbr.rel (%p365) target = $region60
      $region59: #{_lambda_.11} parent=51 // pred_region
        %p368 = scmp.lt.s32.totalorder %s18, 1
        %s369 = scalar_select %p368, %s18, 1
        %s370 = smul.addr %s369, 4
        %s371 = smul.addr %s370, 8
        %s372 = scalar_lea.vmem %s1, %s371
      $region60: #{_lambda_.11} parent=51 // pred_fallthru
        _
      // Predicated region
      $region61: #{_lambda_.11} parent=51 // pred_check
        %p373 = pneg %p90
      $region62: #{_lambda_.11} parent=51 // pred_check_branch
        %375 = sbr.rel (%p373) target = $region64
      $region63: #{_lambda_.11} parent=51 // pred_region
        %p376 = scmp.lt.s32.totalorder %s18, 1
        %s377 = scalar_select %p376, %s18, 1
        %s378 = smul.addr %s377, 8
        %s379 = smul.addr %s378, 8
        %s380 = scalar_lea.vmem %s2, %s379
      $region64: #{_lambda_.11} parent=51 // pred_fallthru
        _
    $region52: #{_lambda_.11} parent=5 // pred_fallthru
      _
    %p381 = scmp.le.s32.totalorder 1, %s18
    %p382 = scmp.lt.s32.totalorder %s18, 3
    %p383 = pnand %p381, %p382
    %p384 = pneg %p383
    // Predicated region
    $region65: #{_lambda_.11} parent=5 // pred_check
      _
    $region66: #{_lambda_.11} parent=5 // pred_check_branch
      %386 = sbr.rel (%p383) target = $region68
    $region67: #{_lambda_.11} parent=5 // pred_region
      %s387 = ssub.s32 %s18, 1
      %p388 = scmp.lt.s32.totalorder %s23, 1
      %s389 = scalar_select %p388, %s23, 1
      %s390 = smul.addr %s389, 4
      %s391 = smul.addr %s390, 8
      %s392 = scalar_lea.vmem %s0, %s391
      %p393 = pneg %p44
      %p394 = pneg %p41
      %p395 = scmp.lt.s32.totalorder %s23, 1
      %s396 = scalar_select %p395, %s23, 1
      %s397 = smul.addr %s396, 4
      %s398 = smul.addr %s397, 8
      %s399 = scalar_lea.vmem %s1, %s398
      %p400 = pneg %p70
      %p401 = pneg %p67
      %p402 = scmp.lt.s32.totalorder %s23, 1
      %s403 = scalar_select %p402, %s23, 1
      %s404 = smul.addr %s403, 8
      %s405 = smul.addr %s404, 8
      %s406 = scalar_lea.vmem %s2, %s405
      %p407 = pneg %p96
      %p408 = pneg %p93
      %p409 = pneg %p117
      %p410 = pneg %p114
      %p411 = pneg %p138
      %p412 = pneg %p135
      %p413 = pneg %p159
      %p414 = pneg %p156
      %p415 = pneg %p180
      %p416 = pneg %p177
      %p417 = pneg %p201
      %p418 = pneg %p198
      %p419 = pneg %p222
      %p420 = pneg %p219
      %p421 = pneg %p243
      %p422 = pneg %p240
      %p423 = pneg %p264
      %p424 = pneg %p261
      %p425 = pneg %p285
      %p426 = pneg %p282
      %p427 = pneg %p311
      %p428 = pneg %p308
      %p429 = scmp.lt.s32.totalorder %s23, 1
      %s430 = scalar_select %p429, %s23, 1
      %s431 = smul.addr %s430, 8
      %s432 = smul.addr %s431, 8
      %s433 = scalar_lea.vmem %s12, %s432
      %p434 = scmp.lt.s32.totalorder %s23, 1
      %s435 = scalar_select %p434, %s23, 1
      %s436 = smul.addr %s435, 4
      %s437 = smul.addr %s436, 8
      %s438 = scalar_lea.vmem %s0, %s437
      %p439 = scmp.lt.s32.totalorder %s23, 1
      %s440 = scalar_select %p439, %s23, 1
      %s441 = smul.addr %s440, 4
      %s442 = smul.addr %s441, 8
      %s443 = scalar_lea.vmem %s1, %s442
      %p444 = scmp.lt.s32.totalorder %s23, 1
      %s445 = scalar_select %p444, %s23, 1
      %s446 = smul.addr %s445, 8
      %s447 = smul.addr %s446, 8
      %s448 = scalar_lea.vmem %s2, %s447
      %p449 = scmp.lt.s32.totalorder %s23, 1
      %s450 = scalar_select %p449, %s23, 1
      %s451 = smul.addr %s450, 8
      %s452 = smul.addr %s451, 8
      %s453 = scalar_lea.vmem %s12, %s452
      %v454 = vld [vmem:[%s3] sm:$0x3]
      %v455 = vld [vmem:[%s3 + $0x2] sm:$0x3]
      %v456 = vld [vmem:[%s6] sm:$0xff]
      %v457 = vld [vmem:[%s6 + $0x8] sm:$0xff]
      %v458 = vld [vmem:[%s6 + $0x10] sm:$0xff]
      %v459 = vld [vmem:[%s6 + $0x18] sm:$0xff]
      %v460 = vld [vmem:[%s6 + $0x20] sm:$0xff]
      %v461 = vld [vmem:[%s6 + $0x28] sm:$0xff]
      %v462 = vld [vmem:[%s6 + $0x30] sm:$0xff]
      %v463 = vld [vmem:[%s6 + $0x38] sm:$0xff]
      %v464 = vld [vmem:[%s6 + $0x40] sm:$0xff]
      %v465 = vld [vmem:[%s6 + $0x48] sm:$0xff]
      %v466 = vld [vmem:[%s6 + $0x50] sm:$0xff]
      %v467 = vld [vmem:[%s6 + $0x58] sm:$0xff]
      %v468 = vld [vmem:[%s6 + $0x60] sm:$0xff]
      %v469 = vld [vmem:[%s6 + $0x68] sm:$0xff]
      %v470 = vld [vmem:[%s6 + $0x70] sm:$0xff]
      %v471 = vld [vmem:[%s6 + $0x78] sm:$0xff]
      %v472 = vld [vmem:[%s4] sm:$0x1]
      %v473 = vld [vmem:[%s5] sm:$0x1]
      %vm474 = vcmask 1041408
      %v475 = vsel %vm474, %v454, 0.0
      %v476 = vsel %vm474, %v455, 0.0
      %v477 = vadd.f32 %v475, %v476
      %478 = vmatpush.msra.mxu0 %v471
      %479 = vmatpush.msra.mxu0 %v470
      %480 = vmatpush.msra.mxu0 %v469
      %481 = vmatpush.msra.mxu0 %v468
      %482 = vmatpush.msra.mxu0 %v467
      %483 = vmatpush.msra.mxu0 %v466
      %484 = vmatpush.msra.mxu0 %v465
      %485 = vmatpush.msra.mxu0 %v464
      %486 = vmatpush.msra.mxu0 %v463
      %487 = vmatpush.msra.mxu0 %v462
      %488 = vmatpush.msra.mxu0 %v461
      %489 = vmatpush.msra.mxu0 %v460
      %490 = vmatpush.msra.mxu0 %v459
      %491 = vmatpush.msra.mxu0 %v458
      %492 = vmatpush.msra.mxu0 %v457
      %493 = vmatpush.msra.mxu0 %v456
      %494 = vmatmul.f32.gmra.mxu0 %v477
      %v495 = vpop.f32.mrf.mxu0
      %v496 = vadd.f32 0.0, %v495
      %497 = vdwg.mxu0
      %v498 = vrcp.pop 512.0
      %v499 = vmul.f32 512.0, %v498
      %v500 = vsub.f32 1.0, %v499
      %v501 = vmul.f32 %v498, %v500
      %v502 = vadd.f32 %v498, %v501
      %vm503 = vweird.f32 %v498
      %v504 = vsel %vm503, %v498, %v502
      %v505 = vmul.f32 %v496, %v504
      %v506 = vmul.f32 %v505, %v505
      %v508 = vrot.slane %v506, 7
      %v510 = vsub.f32 %v505, %v508
      %v511 = vmax.f32 %v510, 0.0
      %v512 = vadd.f32 %v511, 1e-05
      %v513 = vrsqrt.pop %v512
      %v514 = vmul.f32 %v513, %v512
      %v515 = vmul.f32 %v514, %v513
      %v516 = vmul.f32 0.5, %v515
      %v517 = vsub.f32 1.5, %v516
      %v518 = vmul.f32 %v513, %v517
      %vm519 = vweird.f32 %v512
      %vm520 = vweird.f32 %v513
      %vm521 = vmor %vm519, %vm520
      %v522 = vsel %vm521, %v513, %v518
      %524 = vst [vmem:[#allocation1] sm:$0xff] %v522
      %s525 = scalar_lea.vmem [#allocation1], 1
      %v526 = vld [vmem:[%s525] ss:$9 sm:$0xff]
      %v528 = vmul.f32 %v472, %v526
      %v529 = vmul.f32 %v505, %v528
      %v530 = vsub.f32 %v473, %v529
      %v531 = vld [vmem:[%s438] sm:$0xff]
      %v532 = vld [vmem:[%s438 + $0x8] sm:$0xff]
      %v533 = vld [vmem:[%s438 + $0x10] sm:$0xff]
      %v534 = vld [vmem:[%s438 + $0x18] sm:$0xff]
      %v536 = vperm.slane %v528, 0
      %v538 = vmul.f32 %v531, %v536
      %v539 = vmul.f32 %v532, %v536
      %v540 = vmul.f32 %v533, %v536
      %v541 = vmul.f32 %v534, %v536
      %v543 = vperm.slane %v530, 0
      %v545 = vadd.f32 %v538, %v543
      %v546 = vadd.f32 %v539, %v543
      %v547 = vadd.f32 %v540, %v543
      %v548 = vadd.f32 %v541, %v543
      %v549 = vld [vmem:[%s443] sm:$0xff]
      %v550 = vld [vmem:[%s443 + $0x8] sm:$0xff]
      %v551 = vld [vmem:[%s443 + $0x10] sm:$0xff]
      %v552 = vld [vmem:[%s443 + $0x18] sm:$0xff]
      %v553 = vadd.f32 %v545, %v549
      %v554 = vadd.f32 %v546, %v550
      %v555 = vadd.f32 %v547, %v551
      %v556 = vadd.f32 %v548, %v552
      %v557 = vmul.f32 %v553, 0.5
      %v558 = vmul.f32 %v554, 0.5
      %v559 = vmul.f32 %v555, 0.5
      %v560 = vmul.f32 %v556, 0.5
      %v561 = vmul.f32 %v553, 0.70710677
      %v562 = vmul.f32 %v554, 0.70710677
      %v563 = vmul.f32 %v555, 0.70710677
      %v564 = vmul.f32 %v556, 0.70710677
      %v565 = vmul.f32 %v561, %v561
      %v566 = vmin.f32 16.0, %v565
      %v567 = vmul.f32 %v566, 2.1237322e-06
      %v568 = vadd.f32 %v567, 0.00028619796
      %v569 = vmul.f32 %v566, %v568
      %v570 = vadd.f32 %v569, 0.0036580483
      %v571 = vmul.f32 %v566, %v570
      %v572 = vadd.f32 %v571, 0.05243302
      %v573 = vmul.f32 %v566, %v572
      %v574 = vadd.f32 %v573, 0.18741608
      %v575 = vmul.f32 %v566, %v574
      %v576 = vadd.f32 %v575, 1.1283791
      %v577 = vmul.f32 %v561, %v576
      %v578 = vmul.f32 %v566, 3.8918573e-05
      %v579 = vadd.f32 %v578, 0.001143296
      %v580 = vmul.f32 %v566, %v579
      %v581 = vadd.f32 %v580, 0.014752088
      %v582 = vmul.f32 %v566, %v581
      %v583 = vadd.f32 %v582, 0.112945676
      %v584 = vmul.f32 %v566, %v583
      %v585 = vadd.f32 %v584, 0.4994258
      %v586 = vmul.f32 %v566, %v585
      %v587 = vadd.f32 %v586, 1.0
      %v588 = vrcp.pop %v587
      %v589 = vmul.f32 %v587, %v588
      %v590 = vsub.f32 1.0, %v589
      %v591 = vmul.f32 %v588, %v590
      %v592 = vadd.f32 %v588, %v591
      %vm593 = vweird.f32 %v587
      %vm594 = vweird.f32 %v588
      %vm595 = vmor %vm593, %vm594
      %v596 = vsel %vm595, %v588, %v592
      %v597 = vand.u32 2147483647, %v587
      %vm598 = vcmp.eq.f32.partialorder %v597, 8.507059e+37
      %v599 = vand.u32 %v587, 2147483648
      %v600 = vor.u32 1.1754944e-38, %v599
      %v601 = vsel %vm598, %v600, %v596
      %v602 = vmul.f32 %v577, %v601
      %v603 = vmin.f32 %v602, 1.0
      %v604 = vmax.f32 %v603, -1.0
      %v605 = vmul.f32 %v562, %v562
      %v606 = vmin.f32 16.0, %v605
      %v607 = vmul.f32 %v606, 2.1237322e-06
      %v608 = vadd.f32 %v607, 0.00028619796
      %v609 = vmul.f32 %v606, %v608
      %v610 = vadd.f32 %v609, 0.0036580483
      %v611 = vmul.f32 %v606, %v610
      %v612 = vadd.f32 %v611, 0.05243302
      %v613 = vmul.f32 %v606, %v612
      %v614 = vadd.f32 %v613, 0.18741608
      %v615 = vmul.f32 %v606, %v614
      %v616 = vadd.f32 %v615, 1.1283791
      %v617 = vmul.f32 %v562, %v616
      %v618 = vmul.f32 %v606, 3.8918573e-05
      %v619 = vadd.f32 %v618, 0.001143296
      %v620 = vmul.f32 %v606, %v619
      %v621 = vadd.f32 %v620, 0.014752088
      %v622 = vmul.f32 %v606, %v621
      %v623 = vadd.f32 %v622, 0.112945676
      %v624 = vmul.f32 %v606, %v623
      %v625 = vadd.f32 %v624, 0.4994258
      %v626 = vmul.f32 %v606, %v625
      %v627 = vadd.f32 %v626, 1.0
      %v628 = vrcp.pop %v627
      %v629 = vmul.f32 %v627, %v628
      %v630 = vsub.f32 1.0, %v629
      %v631 = vmul.f32 %v628, %v630
      %v632 = vadd.f32 %v628, %v631
      %vm633 = vweird.f32 %v627
      %vm634 = vweird.f32 %v628
      %vm635 = vmor %vm633, %vm634
      %v636 = vsel %vm635, %v628, %v632
      %v637 = vand.u32 2147483647, %v627
      %vm638 = vcmp.eq.f32.partialorder %v637, 8.507059e+37
      %v639 = vand.u32 %v627, 2147483648
      %v640 = vor.u32 1.1754944e-38, %v639
      %v641 = vsel %vm638, %v640, %v636
      %v642 = vmul.f32 %v617, %v641
      %v643 = vmin.f32 %v642, 1.0
      %v644 = vmax.f32 %v643, -1.0
      %v645 = vmul.f32 %v563, %v563
      %v646 = vmin.f32 16.0, %v645
      %v647 = vmul.f32 %v646, 2.1237322e-06
      %v648 = vadd.f32 %v647, 0.00028619796
      %v649 = vmul.f32 %v646, %v648
      %v650 = vadd.f32 %v649, 0.0036580483
      %v651 = vmul.f32 %v646, %v650
      %v652 = vadd.f32 %v651, 0.05243302
      %v653 = vmul.f32 %v646, %v652
      %v654 = vadd.f32 %v653, 0.18741608
      %v655 = vmul.f32 %v646, %v654
      %v656 = vadd.f32 %v655, 1.1283791
      %v657 = vmul.f32 %v563, %v656
      %v658 = vmul.f32 %v646, 3.8918573e-05
      %v659 = vadd.f32 %v658, 0.001143296
      %v660 = vmul.f32 %v646, %v659
      %v661 = vadd.f32 %v660, 0.014752088
      %v662 = vmul.f32 %v646, %v661
      %v663 = vadd.f32 %v662, 0.112945676
      %v664 = vmul.f32 %v646, %v663
      %v665 = vadd.f32 %v664, 0.4994258
      %v666 = vmul.f32 %v646, %v665
      %v667 = vadd.f32 %v666, 1.0
      %v668 = vrcp.pop %v667
      %v669 = vmul.f32 %v667, %v668
      %v670 = vsub.f32 1.0, %v669
      %v671 = vmul.f32 %v668, %v670
      %v672 = vadd.f32 %v668, %v671
      %vm673 = vweird.f32 %v667
      %vm674 = vweird.f32 %v668
      %vm675 = vmor %vm673, %vm674
      %v676 = vsel %vm675, %v668, %v672
      %v677 = vand.u32 2147483647, %v667
      %vm678 = vcmp.eq.f32.partialorder %v677, 8.507059e+37
      %v679 = vand.u32 %v667, 2147483648
      %v680 = vor.u32 1.1754944e-38, %v679
      %v681 = vsel %vm678, %v680, %v676
      %v682 = vmul.f32 %v657, %v681
      %v683 = vmin.f32 %v682, 1.0
      %v684 = vmax.f32 %v683, -1.0
      %v685 = vmul.f32 %v564, %v564
      %v686 = vmin.f32 16.0, %v685
      %v687 = vmul.f32 %v686, 2.1237322e-06
      %v688 = vadd.f32 %v687, 0.00028619796
      %v689 = vmul.f32 %v686, %v688
      %v690 = vadd.f32 %v689, 0.0036580483
      %v691 = vmul.f32 %v686, %v690
      %v692 = vadd.f32 %v691, 0.05243302
      %v693 = vmul.f32 %v686, %v692
      %v694 = vadd.f32 %v693, 0.18741608
      %v695 = vmul.f32 %v686, %v694
      %v696 = vadd.f32 %v695, 1.1283791
      %v697 = vmul.f32 %v564, %v696
      %v698 = vmul.f32 %v686, 3.8918573e-05
      %v699 = vadd.f32 %v698, 0.001143296
      %v700 = vmul.f32 %v686, %v699
      %v701 = vadd.f32 %v700, 0.014752088
      %v702 = vmul.f32 %v686, %v701
      %v703 = vadd.f32 %v702, 0.112945676
      %v704 = vmul.f32 %v686, %v703
      %v705 = vadd.f32 %v704, 0.4994258
      %v706 = vmul.f32 %v686, %v705
      %v707 = vadd.f32 %v706, 1.0
      %v708 = vrcp.pop %v707
      %v709 = vmul.f32 %v707, %v708
      %v710 = vsub.f32 1.0, %v709
      %v711 = vmul.f32 %v708, %v710
      %v712 = vadd.f32 %v708, %v711
      %vm713 = vweird.f32 %v707
      %vm714 = vweird.f32 %v708
      %vm715 = vmor %vm713, %vm714
      %v716 = vsel %vm715, %v708, %v712
      %v717 = vand.u32 2147483647, %v707
      %vm718 = vcmp.eq.f32.partialorder %v717, 8.507059e+37
      %v719 = vand.u32 %v707, 2147483648
      %v720 = vor.u32 1.1754944e-38, %v719
      %v721 = vsel %vm718, %v720, %v716
      %v722 = vmul.f32 %v697, %v721
      %v723 = vmin.f32 %v722, 1.0
      %v724 = vmax.f32 %v723, -1.0
      %v725 = vadd.f32 %v604, 1.0
      %v726 = vadd.f32 %v644, 1.0
      %v727 = vadd.f32 %v684, 1.0
      %v728 = vadd.f32 %v724, 1.0
      %v729 = vmul.f32 %v557, %v725
      %v730 = vmul.f32 %v558, %v726
      %v731 = vmul.f32 %v559, %v727
      %v732 = vmul.f32 %v560, %v728
      %v733 = vld [vmem:[%s7] sm:$0xff]
      %v734 = vld [vmem:[%s7 + $0x8] sm:$0xff]
      %v735 = vld [vmem:[%s7 + $0x10] sm:$0xff]
      %v736 = vld [vmem:[%s7 + $0x18] sm:$0xff]
      %v737 = vld [vmem:[%s7 + $0x20] sm:$0xff]
      %v738 = vld [vmem:[%s7 + $0x28] sm:$0xff]
      %v739 = vld [vmem:[%s7 + $0x30] sm:$0xff]
      %v740 = vld [vmem:[%s7 + $0x38] sm:$0xff]
      %v741 = vld [vmem:[%s7 + $0x40] sm:$0xff]
      %v742 = vld [vmem:[%s7 + $0x48] sm:$0xff]
      %v743 = vld [vmem:[%s7 + $0x50] sm:$0xff]
      %v744 = vld [vmem:[%s7 + $0x58] sm:$0xff]
      %v745 = vld [vmem:[%s7 + $0x60] sm:$0xff]
      %v746 = vld [vmem:[%s7 + $0x68] sm:$0xff]
      %v747 = vld [vmem:[%s7 + $0x70] sm:$0xff]
      %v748 = vld [vmem:[%s7 + $0x78] sm:$0xff]
      %749 = vmatpush.msra.mxu0 %v748
      %750 = vmatpush.msra.mxu0 %v747
      %751 = vmatpush.msra.mxu0 %v746
      %752 = vmatpush.msra.mxu0 %v745
      %753 = vmatpush.msra.mxu0 %v744
      %754 = vmatpush.msra.mxu0 %v743
      %755 = vmatpush.msra.mxu0 %v742
      %756 = vmatpush.msra.mxu0 %v741
      %757 = vmatpush.msra.mxu0 %v740
      %758 = vmatpush.msra.mxu0 %v739
      %759 = vmatpush.msra.mxu0 %v738
      %760 = vmatpush.msra.mxu0 %v737
      %761 = vmatpush.msra.mxu0 %v736
      %762 = vmatpush.msra.mxu0 %v735
      %763 = vmatpush.msra.mxu0 %v734
      %764 = vmatpush.msra.mxu0 %v733
      %765 = vmatmul.f32.gmra.mxu0 %v729
      %v766 = vpop.f32.mrf.mxu0
      %v767 = vadd.f32 0.0, %v766
      %768 = vmatmul.f32.gmra.mxu0 %v730
      %v769 = vpop.f32.mrf.mxu0
      %v770 = vadd.f32 0.0, %v769
      %771 = vmatmul.f32.gmra.mxu0 %v731
      %v772 = vpop.f32.mrf.mxu0
      %v773 = vadd.f32 0.0, %v772
      %774 = vmatmul.f32.gmra.mxu0 %v732
      %v775 = vpop.f32.mrf.mxu0
      %v776 = vadd.f32 0.0, %v775
      %777 = vdwg.mxu0
      %v778 = vsub.f32 %v729, %v767
      %v779 = vsub.f32 %v730, %v770
      %v780 = vsub.f32 %v731, %v773
      %v781 = vsub.f32 %v732, %v776
      %v782 = vmul.f32 %v778, %v778
      %v783 = vmul.f32 %v779, %v779
      %v784 = vmul.f32 %v780, %v780
      %v785 = vmul.f32 %v781, %v781
      %786 = vmatpush.msra.mxu0 %v748
      %787 = vmatpush.msra.mxu0 %v747
      %788 = vmatpush.msra.mxu0 %v746
      %789 = vmatpush.msra.mxu0 %v745
      %790 = vmatpush.msra.mxu0 %v744
      %791 = vmatpush.msra.mxu0 %v743
      %792 = vmatpush.msra.mxu0 %v742
      %793 = vmatpush.msra.mxu0 %v741
      %794 = vmatpush.msra.mxu0 %v740
      %795 = vmatpush.msra.mxu0 %v739
      %796 = vmatpush.msra.mxu0 %v738
      %797 = vmatpush.msra.mxu0 %v737
      %798 = vmatpush.msra.mxu0 %v736
      %799 = vmatpush.msra.mxu0 %v735
      %800 = vmatpush.msra.mxu0 %v734
      %801 = vmatpush.msra.mxu0 %v733
      %802 = vmatmul.f32.gmra.mxu0 %v782
      %v803 = vpop.f32.mrf.mxu0
      %v804 = vadd.f32 1e-05, %v803
      %805 = vmatmul.f32.gmra.mxu0 %v783
      %v806 = vpop.f32.mrf.mxu0
      %v807 = vadd.f32 1e-05, %v806
      %808 = vmatmul.f32.gmra.mxu0 %v784
      %v809 = vpop.f32.mrf.mxu0
      %v810 = vadd.f32 1e-05, %v809
      %811 = vmatmul.f32.gmra.mxu0 %v785
      %v812 = vpop.f32.mrf.mxu0
      %v813 = vadd.f32 1e-05, %v812
      %814 = vdwg.mxu0
      %v815 = vrsqrt.pop %v804
      %v816 = vmul.f32 %v815, %v804
      %v817 = vmul.f32 %v816, %v815
      %v818 = vmul.f32 0.5, %v817
      %v819 = vsub.f32 1.5, %v818
      %v820 = vmul.f32 %v815, %v819
      %vm821 = vweird.f32 %v804
      %vm822 = vweird.f32 %v815
      %vm823 = vmor %vm821, %vm822
      %v824 = vsel %vm823, %v815, %v820
      %v825 = vrsqrt.pop %v807
      %v826 = vmul.f32 %v825, %v807
      %v827 = vmul.f32 %v826, %v825
      %v828 = vmul.f32 0.5, %v827
      %v829 = vsub.f32 1.5, %v828
      %v830 = vmul.f32 %v825, %v829
      %vm831 = vweird.f32 %v807
      %vm832 = vweird.f32 %v825
      %vm833 = vmor %vm831, %vm832
      %v834 = vsel %vm833, %v825, %v830
      %v835 = vrsqrt.pop %v810
      %v836 = vmul.f32 %v835, %v810
      %v837 = vmul.f32 %v836, %v835
      %v838 = vmul.f32 0.5, %v837
      %v839 = vsub.f32 1.5, %v838
      %v840 = vmul.f32 %v835, %v839
      %vm841 = vweird.f32 %v810
      %vm842 = vweird.f32 %v835
      %vm843 = vmor %vm841, %vm842
      %v844 = vsel %vm843, %v835, %v840
      %v845 = vrsqrt.pop %v813
      %v846 = vmul.f32 %v845, %v813
      %v847 = vmul.f32 %v846, %v845
      %v848 = vmul.f32 0.5, %v847
      %v849 = vsub.f32 1.5, %v848
      %v850 = vmul.f32 %v845, %v849
      %vm851 = vweird.f32 %v813
      %vm852 = vweird.f32 %v845
      %vm853 = vmor %vm851, %vm852
      %v854 = vsel %vm853, %v845, %v850
      %v855 = vmul.f32 %v778, %v824
      %v856 = vmul.f32 %v779, %v834
      %v857 = vmul.f32 %v780, %v844
      %v858 = vmul.f32 %v781, %v854
      %v859 = vld [vmem:[%s8] sm:$0x1]
      %v861 = vperm.slane %v859, 0
      %v863 = vmul.f32 %v855, %v861
      %v864 = vmul.f32 %v856, %v861
      %v865 = vmul.f32 %v857, %v861
      %v866 = vmul.f32 %v858, %v861
      %v867 = vld [vmem:[%s9] sm:$0x1]
      %v869 = vperm.slane %v867, 0
      %v871 = vadd.f32 %v863, %v869
      %v872 = vadd.f32 %v864, %v869
      %v873 = vadd.f32 %v865, %v869
      %v874 = vadd.f32 %v866, %v869
      %v875 = vpack.c.bf16 %v872, %v871
      %v876 = vpack.c.bf16 %v874, %v873
      %v877 = vld [vmem:[%s10] sm:$0xff]
      %v878 = vld [vmem:[%s10 + $0x8] sm:$0xff]
      %v879 = vld [vmem:[%s10 + $0x10] sm:$0xff]
      %v880 = vld [vmem:[%s10 + $0x18] sm:$0xff]
      %v881 = vld [vmem:[%s10 + $0x20] sm:$0xff]
      %v882 = vld [vmem:[%s10 + $0x28] sm:$0xff]
      %v883 = vld [vmem:[%s10 + $0x30] sm:$0xff]
      %v884 = vld [vmem:[%s10 + $0x38] sm:$0xff]
      %v885 = vld [vmem:[%s10 + $0x40] sm:$0xff]
      %v886 = vld [vmem:[%s10 + $0x48] sm:$0xff]
      %v887 = vld [vmem:[%s10 + $0x50] sm:$0xff]
      %v888 = vld [vmem:[%s10 + $0x58] sm:$0xff]
      %v889 = vld [vmem:[%s10 + $0x60] sm:$0xff]
      %v890 = vld [vmem:[%s10 + $0x68] sm:$0xff]
      %v891 = vld [vmem:[%s10 + $0x70] sm:$0xff]
      %v892 = vld [vmem:[%s10 + $0x78] sm:$0xff]
      %v893 = vld [vmem:[%s11] sm:$0x3]
      %v895 = vperm.slane %v893, 0
      %v896 = vperm.slane %v893, 1
      %v915 = vunpack.c.l.b16 %v877
      %v916 = vunpack.c.h.b16 %v877
      %v917 = vunpack.c.l.b16 %v878
      %v918 = vunpack.c.h.b16 %v878
      %v919 = vunpack.c.l.b16 %v879
      %v920 = vunpack.c.h.b16 %v879
      %v921 = vunpack.c.l.b16 %v880
      %v922 = vunpack.c.h.b16 %v880
      %v923 = vunpack.c.l.b16 %v881
      %v924 = vunpack.c.h.b16 %v881
      %v925 = vunpack.c.l.b16 %v882
      %v926 = vunpack.c.h.b16 %v882
      %v927 = vunpack.c.l.b16 %v883
      %v928 = vunpack.c.h.b16 %v883
      %v929 = vunpack.c.l.b16 %v884
      %v930 = vunpack.c.h.b16 %v884
      %v931 = vunpack.c.l.b16 %v885
      %v932 = vunpack.c.h.b16 %v885
      %v933 = vunpack.c.l.b16 %v886
      %v934 = vunpack.c.h.b16 %v886
      %v935 = vunpack.c.l.b16 %v887
      %v936 = vunpack.c.h.b16 %v887
      %v937 = vunpack.c.l.b16 %v888
      %v938 = vunpack.c.h.b16 %v888
      %v939 = vunpack.c.l.b16 %v889
      %v940 = vunpack.c.h.b16 %v889
      %v941 = vunpack.c.l.b16 %v890
      %v942 = vunpack.c.h.b16 %v890
      %v943 = vunpack.c.l.b16 %v891
      %v944 = vunpack.c.h.b16 %v891
      %v945 = vunpack.c.l.b16 %v892
      %v946 = vunpack.c.h.b16 %v892
      %v947 = vpack.c.b16 %v917, %v915
      %v948 = vpack.c.b16 %v918, %v916
      %v949 = vpack.c.b16 %v921, %v919
      %v950 = vpack.c.b16 %v922, %v920
      %v951 = vpack.c.b16 %v925, %v923
      %v952 = vpack.c.b16 %v926, %v924
      %v953 = vpack.c.b16 %v929, %v927
      %v954 = vpack.c.b16 %v930, %v928
      %v955 = vpack.c.b16 %v933, %v931
      %v956 = vpack.c.b16 %v934, %v932
      %v957 = vpack.c.b16 %v937, %v935
      %v958 = vpack.c.b16 %v938, %v936
      %v959 = vpack.c.b16 %v941, %v939
      %v960 = vpack.c.b16 %v942, %v940
      %v961 = vpack.c.b16 %v945, %v943
      %v962 = vpack.c.b16 %v946, %v944
      %979 = vmatpush.bf16.msra.mxu0 %v961
      %980 = vmatpush.bf16.msra.mxu0 %v959
      %981 = vmatpush.bf16.msra.mxu0 %v957
      %982 = vmatpush.bf16.msra.mxu0 %v955
      %983 = vmatpush.bf16.msra.mxu0 %v953
      %984 = vmatpush.bf16.msra.mxu0 %v951
      %985 = vmatpush.bf16.msra.mxu0 %v949
      %986 = vmatpush.bf16.msra.mxu0 %v947
      %987 = vmatmul.bf16.gmra.mxu0 %v875
      %v988 = vpop.f32.mrf.mxu0
      %v989 = vadd.f32 %v895, %v988
      %v990 = vpop.f32.mrf.mxu0
      %v991 = vadd.f32 %v895, %v990
      %992 = vmatmul.bf16.gmra.mxu0 %v876
      %v993 = vpop.f32.mrf.mxu0
      %v994 = vadd.f32 %v895, %v993
      %v995 = vpop.f32.mrf.mxu0
      %v996 = vadd.f32 %v895, %v995
      %997 = vdwg.mxu0
      %998 = vmatpush.bf16.msra.mxu0 %v962
      %999 = vmatpush.bf16.msra.mxu0 %v960
      %1000 = vmatpush.bf16.msra.mxu0 %v958
      %1001 = vmatpush.bf16.msra.mxu0 %v956
      %1002 = vmatpush.bf16.msra.mxu0 %v954
      %1003 = vmatpush.bf16.msra.mxu0 %v952
      %1004 = vmatpush.bf16.msra.mxu0 %v950
      %1005 = vmatpush.bf16.msra.mxu0 %v948
      %1006 = vmatmul.bf16.gmra.mxu0 %v875
      %v1007 = vpop.f32.mrf.mxu0
      %v1008 = vadd.f32 %v896, %v1007
      %v1009 = vpop.f32.mrf.mxu0
      %v1010 = vadd.f32 %v896, %v1009
      %1011 = vmatmul.bf16.gmra.mxu0 %v876
      %v1012 = vpop.f32.mrf.mxu0
      %v1013 = vadd.f32 %v896, %v1012
      %v1014 = vpop.f32.mrf.mxu0
      %v1015 = vadd.f32 %v896, %v1014
      %1016 = vdwg.mxu0
      %v1017 = vld [vmem:[%s448] sm:$0xff]
      %v1018 = vld [vmem:[%s448 + $0x8] sm:$0xff]
      %v1019 = vld [vmem:[%s448 + $0x10] sm:$0xff]
      %v1020 = vld [vmem:[%s448 + $0x18] sm:$0xff]
      %v1021 = vld [vmem:[%s448 + $0x20] sm:$0xff]
      %v1022 = vld [vmem:[%s448 + $0x28] sm:$0xff]
      %v1023 = vld [vmem:[%s448 + $0x30] sm:$0xff]
      %v1024 = vld [vmem:[%s448 + $0x38] sm:$0xff]
      %v1025 = vadd.f32 %v1017, %v989
      %v1026 = vadd.f32 %v1018, %v1008
      %v1027 = vadd.f32 %v1019, %v991
      %v1028 = vadd.f32 %v1020, %v1010
      %v1029 = vadd.f32 %v1021, %v994
      %v1030 = vadd.f32 %v1022, %v1013
      %v1031 = vadd.f32 %v1023, %v996
      %v1032 = vadd.f32 %v1024, %v1015
      %1033 = vst [vmem:[%s453] sm:$0xff] %v1025
      %1034 = vst [vmem:[%s453 + $0x8] sm:$0xff] %v1026
      %1035 = vst [vmem:[%s453 + $0x10] sm:$0xff] %v1027
      %1036 = vst [vmem:[%s453 + $0x18] sm:$0xff] %v1028
      %1037 = vst [vmem:[%s453 + $0x20] sm:$0xff] %v1029
      %1038 = vst [vmem:[%s453 + $0x28] sm:$0xff] %v1030
      %1039 = vst [vmem:[%s453 + $0x30] sm:$0xff] %v1031
      %1040 = vst [vmem:[%s453 + $0x38] sm:$0xff] %v1032
      %p1041 = scmp.lt.s32.totalorder %s23, 1
      %s1042 = scalar_select %p1041, %s23, 1
      %s1043 = smul.addr %s1042, 8
      %s1044 = smul.addr %s1043, 8
      %s1045 = scalar_lea.vmem %s12, %s1044
      // Predicated region
      $region69: #{_lambda_.11} parent=67 // pred_check
        %p1046 = pneg %p308
      $region70: #{_lambda_.11} parent=67 // pred_check_branch
        %1048 = sbr.rel (%p1046) target = $region72
      $region71: #{_lambda_.11} parent=67 // pred_region
        _
      $region72: #{_lambda_.11} parent=67 // pred_fallthru
        _
    $region68: #{_lambda_.11} parent=5 // pred_fallthru
      _
    %p1049 = scmp.le.s32.totalorder 2, %s18
    // Predicated region
    $region73: #{_lambda_.11} parent=5 // pred_check
      %p1050 = pneg %p1049
    $region74: #{_lambda_.11} parent=5 // pred_check_branch
      %1052 = sbr.rel (%p1050) target = $region76
    $region75: #{_lambda_.11} parent=5 // pred_region
      %s1053 = ssub.s32 %s18, 2
      // Predicated region
      $region77: #{_lambda_.11} parent=75 // pred_check
        %p1054 = pneg %p314
      $region78: #{_lambda_.11} parent=75 // pred_check_branch
        %1056 = sbr.rel (%p1054) target = $region80
      $region79: #{_lambda_.11} parent=75 // pred_region
        %p1057 = scmp.lt.s32.totalorder %s24, 1
        %s1058 = scalar_select %p1057, %s24, 1
        %s1059 = smul.addr %s1058, 8
        %s1060 = smul.addr %s1059, 8
        %s1061 = scalar_lea.vmem %s12, %s1060
      $region80: #{_lambda_.11} parent=75 // pred_fallthru
        _
    $region76: #{_lambda_.11} parent=5 // pred_fallthru
      _
  $region6: #{_lambda_.11} parent=0 // loop_footer
    %s22 = sadd.s32 1, %s18
  $region7: #{_lambda_.11} parent=0 // loop_footer_branch
    %17 = sbr.rel target = $region3
  $region8: #{_lambda_.11} parent=0 // loop_exit
    _

// kernel: _lambda_.9
$region0: #{_lambda_.9}
  #allocation0 [shape = 'u32[]', space=smem, size = 0x4, offset = 0x4, fixed_abs, tag = 'smem constant byte address 0x4 - core index']
  #allocation1 [shape = 'u32[72,128]{1,0:T(1,128)}', space=vmem, size = 0x9000, scoped, tag = 'internal scratch']
  #allocation2 [shape = 'f32[6,17,128]{2,1,0:T(8,128)}', space=vmem, size = 0x12000, scoped, tag = 'scratch operand']
  #allocation3 [shape = 'bf16[32,1152]{1,0:T(8,128)(2,1)}', space=vmem, size = 0x12000, scoped, tag = 'scratch operand']
  %s0 = inlined_call_operand.vmem [shape: f32[2,32,128], index: 0, kind: input, shape index: {}]
  %s1 = inlined_call_operand.vmem [shape: f32[2,32,128], index: 1, kind: input, shape index: {}]
  %s2 = inlined_call_operand.vmem [shape: f32[2,2,128], index: 2, kind: input, shape index: {}]
  %s3 = inlined_call_operand.vmem [shape: f32[1,128], index: 3, kind: input, shape index: {}]
  %s4 = inlined_call_operand.vmem [shape: f32[1,128], index: 4, kind: input, shape index: {}]
  %s5 = inlined_call_operand.vmem [shape: f32[2,2,128], index: 5, kind: input, shape index: {}]
  %s6 = inlined_call_operand.vmem [shape: f32[1,128], index: 6, kind: input, shape index: {}]
  %s7 = inlined_call_operand.vmem [shape: f32[1,128], index: 7, kind: input, shape index: {}]
  %s8 = inlined_call_operand.vmem [shape: f32[128,128], index: 8, kind: input, shape index: {}]
  %s9 = inlined_call_operand.vmem [shape: bf16[1152,128], index: 9, kind: input, shape index: {}]
  %s10 = inlined_call_operand.vmem [shape: f32[1,128], index: 10, kind: input, shape index: {}]
  %s11 = inlined_call_operand.vmem [shape: f32[2,32,128], index: 11, kind: output, shape index: {0}]
  %s12 = inlined_call_operand.vmem [shape: f32[2,32,128], index: 12, kind: output, shape index: {1}]
  %s13 = inlined_call_operand.vmem [shape: f32[2,2,128], index: 13, kind: output, shape index: {2}]
  %14 = xla_tuple %s11, %s12, %s13
  %s15 = sld [smem:[#allocation0]]
  $region93: #{_lambda_.9} parent=0
    _
  %s17 = ssub.s32 1, %s15
  %s18 = scalar_select 0, %s17, %s15
  loop: start=0, step=1, limit=4
  $region2: #{_lambda_.9} parent=0 // loop_pre_header
    _
  $region3: #{_lambda_.9} parent=0 // loop_header
    %s20 = sphi 0, %s24
    %p21 = scmp.ge.s32.totalorder %s20, 4
    %s30 = sphi 0, %s32
    %s33 = sphi 0, %s30
    %s34 = sphi 0, %s33
    %s50 = sphi 0, %s34
    %s56 = sphi 0, %s58
    %s59 = sphi 0, %s56
    %s60 = sphi 0, %s59
    %s76 = sphi 0, %s60
    %s80 = sphi 0, %s80
    %s82 = sphi 0, %s80
    %s83 = sphi 0, %s82
    %s97 = sphi 0, %s83
    %s101 = sphi 0, %s101
    %s103 = sphi 0, %s101
    %s104 = sphi 0, %s103
    %s118 = sphi 0, %s104
    %s122 = sphi 0, %s122
    %s124 = sphi 0, %s122
    %s125 = sphi 0, %s124
    %s139 = sphi 0, %s125
    %s143 = sphi 0, %s143
    %s145 = sphi 0, %s143
    %s146 = sphi 0, %s145
    %s160 = sphi 0, %s146
    %s164 = sphi 0, %s164
    %s166 = sphi 0, %s164
    %s167 = sphi 0, %s166
    %s181 = sphi 0, %s167
    %s185 = sphi 0, %s185
    %s187 = sphi 0, %s185
    %s188 = sphi 0, %s187
    %s202 = sphi 0, %s188
    %s206 = sphi 0, %s206
    %s208 = sphi 0, %s206
    %s209 = sphi 0, %s208
    %s223 = sphi 0, %s209
    %s227 = sphi 0, %s227
    %s229 = sphi 0, %s227
    %s230 = sphi 0, %s229
    %s244 = sphi 0, %s230
    %s248 = sphi 0, %s248
    %s250 = sphi 0, %s248
    %s251 = sphi 0, %s250
    %s265 = sphi 0, %s251
    %s271 = sphi 0, %s273
    %s274 = sphi 0, %s271
    %s275 = sphi 0, %s274
    %s291 = sphi 0, %s275
    %s297 = sphi 0, %s299
    %s300 = sphi 0, %s297
    %s301 = sphi 0, %s300
    %s317 = sphi 0, %s301
    %s323 = sphi 0, %s325
    %s326 = sphi 0, %s323
    %s327 = sphi 0, %s326
    %s343 = sphi 0, %s327
  $region4: #{_lambda_.9} parent=0 // loop_header_branch
    %23 = sbr.rel (%p21) target = $region8
  $region5: #{_lambda_.9} parent=0 // loop_body
    %s25 = ssub.s32 %s20, 1
    %s26 = ssub.s32 %s20, 2
    %s27 = sadd.s32 %s20, 1
    %s28 = ssub.s32 %s20, %s27
    %p29 = scmp.eq.s32.totalorder %s28, 0
    %s31 = sadd.s32 %s30, 1
    %s32 = scalar_select %p29, %s30, %s31
    %p35 = pneg %p29
    %p36 = scmp.eq.s32.totalorder %s20, 1
    %p37 = por %p35, %p36
    %p38 = scmp.ne.s32.totalorder %s30, %s33
    %p39 = scmp.eq.s32.totalorder %s20, 0
    %p40 = por %p38, %p39
    %p41 = scmp.ne.s32.totalorder %s30, %s33
    %p42 = scmp.eq.s32.totalorder %s25, 1
    %p43 = por %p41, %p42
    %p44 = scmp.ne.s32.totalorder %s33, %s34
    %p45 = scmp.eq.s32.totalorder %s25, 0
    %p46 = por %p44, %p45
    %p47 = scmp.ne.s32.totalorder %s33, %s34
    %p48 = scmp.eq.s32.totalorder %s26, 1
    %p49 = por %p47, %p48
    %p51 = scmp.ne.s32.totalorder %s34, %s50
    %p52 = scmp.eq.s32.totalorder %s26, 0
    %p53 = por %p51, %p52
    %s54 = ssub.s32 %s20, %s27
    %p55 = scmp.eq.s32.totalorder %s54, 0
    %s57 = sadd.s32 %s56, 1
    %s58 = scalar_select %p55, %s56, %s57
    %p61 = pneg %p55
    %p62 = scmp.eq.s32.totalorder %s20, 1
    %p63 = por %p61, %p62
    %p64 = scmp.ne.s32.totalorder %s56, %s59
    %p65 = scmp.eq.s32.totalorder %s20, 0
    %p66 = por %p64, %p65
    %p67 = scmp.ne.s32.totalorder %s56, %s59
    %p68 = scmp.eq.s32.totalorder %s25, 1
    %p69 = por %p67, %p68
    %p70 = scmp.ne.s32.totalorder %s59, %s60
    %p71 = scmp.eq.s32.totalorder %s25, 0
    %p72 = por %p70, %p71
    %p73 = scmp.ne.s32.totalorder %s59, %s60
    %p74 = scmp.eq.s32.totalorder %s26, 1
    %p75 = por %p73, %p74
    %p77 = scmp.ne.s32.totalorder %s60, %s76
    %p78 = scmp.eq.s32.totalorder %s26, 0
    %p79 = por %p77, %p78
    %s81 = sadd.s32 %s80, 1
    %p84 = scmp.eq.s32.totalorder %s20, 1
    %p85 = scmp.ne.s32.totalorder %s80, %s82
    %p86 = scmp.eq.s32.totalorder %s20, 0
    %p87 = por %p85, %p86
    %p88 = scmp.ne.s32.totalorder %s80, %s82
    %p89 = scmp.eq.s32.totalorder %s25, 1
    %p90 = por %p88, %p89
    %p91 = scmp.ne.s32.totalorder %s82, %s83
    %p92 = scmp.eq.s32.totalorder %s25, 0
    %p93 = por %p91, %p92
    %p94 = scmp.ne.s32.totalorder %s82, %s83
    %p95 = scmp.eq.s32.totalorder %s26, 1
    %p96 = por %p94, %p95
    %p98 = scmp.ne.s32.totalorder %s83, %s97
    %p99 = scmp.eq.s32.totalorder %s26, 0
    %p100 = por %p98, %p99
    %s102 = sadd.s32 %s101, 1
    %p105 = scmp.eq.s32.totalorder %s20, 1
    %p106 = scmp.ne.s32.totalorder %s101, %s103
    %p107 = scmp.eq.s32.totalorder %s20, 0
    %p108 = por %p106, %p107
    %p109 = scmp.ne.s32.totalorder %s101, %s103
    %p110 = scmp.eq.s32.totalorder %s25, 1
    %p111 = por %p109, %p110
    %p112 = scmp.ne.s32.totalorder %s103, %s104
    %p113 = scmp.eq.s32.totalorder %s25, 0
    %p114 = por %p112, %p113
    %p115 = scmp.ne.s32.totalorder %s103, %s104
    %p116 = scmp.eq.s32.totalorder %s26, 1
    %p117 = por %p115, %p116
    %p119 = scmp.ne.s32.totalorder %s104, %s118
    %p120 = scmp.eq.s32.totalorder %s26, 0
    %p121 = por %p119, %p120
    %s123 = sadd.s32 %s122, 1
    %p126 = scmp.eq.s32.totalorder %s20, 1
    %p127 = scmp.ne.s32.totalorder %s122, %s124
    %p128 = scmp.eq.s32.totalorder %s20, 0
    %p129 = por %p127, %p128
    %p130 = scmp.ne.s32.totalorder %s122, %s124
    %p131 = scmp.eq.s32.totalorder %s25, 1
    %p132 = por %p130, %p131
    %p133 = scmp.ne.s32.totalorder %s124, %s125
    %p134 = scmp.eq.s32.totalorder %s25, 0
    %p135 = por %p133, %p134
    %p136 = scmp.ne.s32.totalorder %s124, %s125
    %p137 = scmp.eq.s32.totalorder %s26, 1
    %p138 = por %p136, %p137
    %p140 = scmp.ne.s32.totalorder %s125, %s139
    %p141 = scmp.eq.s32.totalorder %s26, 0
    %p142 = por %p140, %p141
    %s144 = sadd.s32 %s143, 1
    %p147 = scmp.eq.s32.totalorder %s20, 1
    %p148 = scmp.ne.s32.totalorder %s143, %s145
    %p149 = scmp.eq.s32.totalorder %s20, 0
    %p150 = por %p148, %p149
    %p151 = scmp.ne.s32.totalorder %s143, %s145
    %p152 = scmp.eq.s32.totalorder %s25, 1
    %p153 = por %p151, %p152
    %p154 = scmp.ne.s32.totalorder %s145, %s146
    %p155 = scmp.eq.s32.totalorder %s25, 0
    %p156 = por %p154, %p155
    %p157 = scmp.ne.s32.totalorder %s145, %s146
    %p158 = scmp.eq.s32.totalorder %s26, 1
    %p159 = por %p157, %p158
    %p161 = scmp.ne.s32.totalorder %s146, %s160
    %p162 = scmp.eq.s32.totalorder %s26, 0
    %p163 = por %p161, %p162
    %s165 = sadd.s32 %s164, 1
    %p168 = scmp.eq.s32.totalorder %s20, 1
    %p169 = scmp.ne.s32.totalorder %s164, %s166
    %p170 = scmp.eq.s32.totalorder %s20, 0
    %p171 = por %p169, %p170
    %p172 = scmp.ne.s32.totalorder %s164, %s166
    %p173 = scmp.eq.s32.totalorder %s25, 1
    %p174 = por %p172, %p173
    %p175 = scmp.ne.s32.totalorder %s166, %s167
    %p176 = scmp.eq.s32.totalorder %s25, 0
    %p177 = por %p175, %p176
    %p178 = scmp.ne.s32.totalorder %s166, %s167
    %p179 = scmp.eq.s32.totalorder %s26, 1
    %p180 = por %p178, %p179
    %p182 = scmp.ne.s32.totalorder %s167, %s181
    %p183 = scmp.eq.s32.totalorder %s26, 0
    %p184 = por %p182, %p183
    %s186 = sadd.s32 %s185, 1
    %p189 = scmp.eq.s32.totalorder %s20, 1
    %p190 = scmp.ne.s32.totalorder %s185, %s187
    %p191 = scmp.eq.s32.totalorder %s20, 0
    %p192 = por %p190, %p191
    %p193 = scmp.ne.s32.totalorder %s185, %s187
    %p194 = scmp.eq.s32.totalorder %s25, 1
    %p195 = por %p193, %p194
    %p196 = scmp.ne.s32.totalorder %s187, %s188
    %p197 = scmp.eq.s32.totalorder %s25, 0
    %p198 = por %p196, %p197
    %p199 = scmp.ne.s32.totalorder %s187, %s188
    %p200 = scmp.eq.s32.totalorder %s26, 1
    %p201 = por %p199, %p200
    %p203 = scmp.ne.s32.totalorder %s188, %s202
    %p204 = scmp.eq.s32.totalorder %s26, 0
    %p205 = por %p203, %p204
    %s207 = sadd.s32 %s206, 1
    %p210 = scmp.eq.s32.totalorder %s20, 1
    %p211 = scmp.ne.s32.totalorder %s206, %s208
    %p212 = scmp.eq.s32.totalorder %s20, 0
    %p213 = por %p211, %p212
    %p214 = scmp.ne.s32.totalorder %s206, %s208
    %p215 = scmp.eq.s32.totalorder %s25, 1
    %p216 = por %p214, %p215
    %p217 = scmp.ne.s32.totalorder %s208, %s209
    %p218 = scmp.eq.s32.totalorder %s25, 0
    %p219 = por %p217, %p218
    %p220 = scmp.ne.s32.totalorder %s208, %s209
    %p221 = scmp.eq.s32.totalorder %s26, 1
    %p222 = por %p220, %p221
    %p224 = scmp.ne.s32.totalorder %s209, %s223
    %p225 = scmp.eq.s32.totalorder %s26, 0
    %p226 = por %p224, %p225
    %s228 = sadd.s32 %s227, 1
    %p231 = scmp.eq.s32.totalorder %s20, 1
    %p232 = scmp.ne.s32.totalorder %s227, %s229
    %p233 = scmp.eq.s32.totalorder %s20, 0
    %p234 = por %p232, %p233
    %p235 = scmp.ne.s32.totalorder %s227, %s229
    %p236 = scmp.eq.s32.totalorder %s25, 1
    %p237 = por %p235, %p236
    %p238 = scmp.ne.s32.totalorder %s229, %s230
    %p239 = scmp.eq.s32.totalorder %s25, 0
    %p240 = por %p238, %p239
    %p241 = scmp.ne.s32.totalorder %s229, %s230
    %p242 = scmp.eq.s32.totalorder %s26, 1
    %p243 = por %p241, %p242
    %p245 = scmp.ne.s32.totalorder %s230, %s244
    %p246 = scmp.eq.s32.totalorder %s26, 0
    %p247 = por %p245, %p246
    %s249 = sadd.s32 %s248, 1
    %p252 = scmp.eq.s32.totalorder %s20, 1
    %p253 = scmp.ne.s32.totalorder %s248, %s250
    %p254 = scmp.eq.s32.totalorder %s20, 0
    %p255 = por %p253, %p254
    %p256 = scmp.ne.s32.totalorder %s248, %s250
    %p257 = scmp.eq.s32.totalorder %s25, 1
    %p258 = por %p256, %p257
    %p259 = scmp.ne.s32.totalorder %s250, %s251
    %p260 = scmp.eq.s32.totalorder %s25, 0
    %p261 = por %p259, %p260
    %p262 = scmp.ne.s32.totalorder %s250, %s251
    %p263 = scmp.eq.s32.totalorder %s26, 1
    %p264 = por %p262, %p263
    %p266 = scmp.ne.s32.totalorder %s251, %s265
    %p267 = scmp.eq.s32.totalorder %s26, 0
    %p268 = por %p266, %p267
    %s269 = ssub.s32 %s20, %s27
    %p270 = scmp.eq.s32.totalorder %s269, 0
    %s272 = sadd.s32 %s271, 1
    %s273 = scalar_select %p270, %s271, %s272
    %p276 = pneg %p270
    %p277 = scmp.eq.s32.totalorder %s20, 1
    %p278 = por %p276, %p277
    %p279 = scmp.ne.s32.totalorder %s271, %s274
    %p280 = scmp.eq.s32.totalorder %s20, 0
    %p281 = por %p279, %p280
    %p282 = scmp.ne.s32.totalorder %s271, %s274
    %p283 = scmp.eq.s32.totalorder %s25, 1
    %p284 = por %p282, %p283
    %p285 = scmp.ne.s32.totalorder %s274, %s275
    %p286 = scmp.eq.s32.totalorder %s25, 0
    %p287 = por %p285, %p286
    %p288 = scmp.ne.s32.totalorder %s274, %s275
    %p289 = scmp.eq.s32.totalorder %s26, 1
    %p290 = por %p288, %p289
    %p292 = scmp.ne.s32.totalorder %s275, %s291
    %p293 = scmp.eq.s32.totalorder %s26, 0
    %p294 = por %p292, %p293
    %s295 = ssub.s32 %s20, %s27
    %p296 = scmp.eq.s32.totalorder %s295, 0
    %s298 = sadd.s32 %s297, 1
    %s299 = scalar_select %p296, %s297, %s298
    %p302 = pneg %p296
    %p303 = scmp.eq.s32.totalorder %s20, 1
    %p304 = por %p302, %p303
    %p305 = scmp.ne.s32.totalorder %s297, %s300
    %p306 = scmp.eq.s32.totalorder %s20, 0
    %p307 = por %p305, %p306
    %p308 = scmp.ne.s32.totalorder %s297, %s300
    %p309 = scmp.eq.s32.totalorder %s25, 1
    %p310 = por %p308, %p309
    %p311 = scmp.ne.s32.totalorder %s300, %s301
    %p312 = scmp.eq.s32.totalorder %s25, 0
    %p313 = por %p311, %p312
    %p314 = scmp.ne.s32.totalorder %s300, %s301
    %p315 = scmp.eq.s32.totalorder %s26, 1
    %p316 = por %p314, %p315
    %p318 = scmp.ne.s32.totalorder %s301, %s317
    %p319 = scmp.eq.s32.totalorder %s26, 0
    %p320 = por %p318, %p319
    %s321 = ssub.s32 %s20, %s27
    %p322 = scmp.eq.s32.totalorder %s321, 0
    %s324 = sadd.s32 %s323, 1
    %s325 = scalar_select %p322, %s323, %s324
    %p328 = pneg %p322
    %p329 = scmp.eq.s32.totalorder %s20, 1
    %p330 = por %p328, %p329
    %p331 = scmp.ne.s32.totalorder %s323, %s326
    %p332 = scmp.eq.s32.totalorder %s20, 0
    %p333 = por %p331, %p332
    %p334 = scmp.ne.s32.totalorder %s323, %s326
    %p335 = scmp.eq.s32.totalorder %s25, 1
    %p336 = por %p334, %p335
    %p337 = scmp.ne.s32.totalorder %s326, %s327
    %p338 = scmp.eq.s32.totalorder %s25, 0
    %p339 = por %p337, %p338
    %p340 = scmp.ne.s32.totalorder %s326, %s327
    %p341 = scmp.eq.s32.totalorder %s26, 1
    %p342 = por %p340, %p341
    %p344 = scmp.ne.s32.totalorder %s327, %s343
    %p345 = scmp.eq.s32.totalorder %s26, 0
    %p346 = por %p344, %p345
    %p347 = scmp.le.s32.totalorder 1, %s20
    %p348 = scmp.lt.s32.totalorder %s20, 3
    %p349 = pnand %p347, %p348
    %p350 = pneg %p349
    // Predicated region
    $region9: #{_lambda_.9} parent=5 // pred_check
      _
    $region10: #{_lambda_.9} parent=5 // pred_check_branch
      %352 = sbr.rel (%p349) target = $region12
    $region11: #{_lambda_.9} parent=5 // pred_region
      %s353 = ssub.s32 %s20, 1
      // Predicated region
      $region13: #{_lambda_.9} parent=11 // pred_check
        %p354 = pneg %p93
      $region14: #{_lambda_.9} parent=11 // pred_check_branch
        %356 = sbr.rel (%p354) target = $region16
      $region15: #{_lambda_.9} parent=11 // pred_region
        _
      $region16: #{_lambda_.9} parent=11 // pred_fallthru
        _
      // Predicated region
      $region17: #{_lambda_.9} parent=11 // pred_check
        %p357 = pneg %p114
      $region18: #{_lambda_.9} parent=11 // pred_check_branch
        %359 = sbr.rel (%p357) target = $region20
      $region19: #{_lambda_.9} parent=11 // pred_region
        _
      $region20: #{_lambda_.9} parent=11 // pred_fallthru
        _
      // Predicated region
      $region21: #{_lambda_.9} parent=11 // pred_check
        %p360 = pneg %p135
      $region22: #{_lambda_.9} parent=11 // pred_check_branch
        %362 = sbr.rel (%p360) target = $region24
      $region23: #{_lambda_.9} parent=11 // pred_region
        _
      $region24: #{_lambda_.9} parent=11 // pred_fallthru
        _
      // Predicated region
      $region25: #{_lambda_.9} parent=11 // pred_check
        %p363 = pneg %p156
      $region26: #{_lambda_.9} parent=11 // pred_check_branch
        %365 = sbr.rel (%p363) target = $region28
      $region27: #{_lambda_.9} parent=11 // pred_region
        _
      $region28: #{_lambda_.9} parent=11 // pred_fallthru
        _
      // Predicated region
      $region29: #{_lambda_.9} parent=11 // pred_check
        %p366 = pneg %p177
      $region30: #{_lambda_.9} parent=11 // pred_check_branch
        %368 = sbr.rel (%p366) target = $region32
      $region31: #{_lambda_.9} parent=11 // pred_region
        _
      $region32: #{_lambda_.9} parent=11 // pred_fallthru
        _
      // Predicated region
      $region33: #{_lambda_.9} parent=11 // pred_check
        %p369 = pneg %p198
      $region34: #{_lambda_.9} parent=11 // pred_check_branch
        %371 = sbr.rel (%p369) target = $region36
      $region35: #{_lambda_.9} parent=11 // pred_region
        _
      $region36: #{_lambda_.9} parent=11 // pred_fallthru
        _
      // Predicated region
      $region37: #{_lambda_.9} parent=11 // pred_check
        %p372 = pneg %p219
      $region38: #{_lambda_.9} parent=11 // pred_check_branch
        %374 = sbr.rel (%p372) target = $region40
      $region39: #{_lambda_.9} parent=11 // pred_region
        _
      $region40: #{_lambda_.9} parent=11 // pred_fallthru
        _
      // Predicated region
      $region41: #{_lambda_.9} parent=11 // pred_check
        %p375 = pneg %p240
      $region42: #{_lambda_.9} parent=11 // pred_check_branch
        %377 = sbr.rel (%p375) target = $region44
      $region43: #{_lambda_.9} parent=11 // pred_region
        _
      $region44: #{_lambda_.9} parent=11 // pred_fallthru
        _
      // Predicated region
      $region45: #{_lambda_.9} parent=11 // pred_check
        %p378 = pneg %p261
      $region46: #{_lambda_.9} parent=11 // pred_check_branch
        %380 = sbr.rel (%p378) target = $region48
      $region47: #{_lambda_.9} parent=11 // pred_region
        _
      $region48: #{_lambda_.9} parent=11 // pred_fallthru
        _
    $region12: #{_lambda_.9} parent=5 // pred_fallthru
      _
    %p381 = scmp.lt.s32.totalorder %s20, 2
    // Predicated region
    $region49: #{_lambda_.9} parent=5 // pred_check
      %p382 = pneg %p381
    $region50: #{_lambda_.9} parent=5 // pred_check_branch
      %384 = sbr.rel (%p382) target = $region52
    $region51: #{_lambda_.9} parent=5 // pred_region
      // Predicated region
      $region53: #{_lambda_.9} parent=51 // pred_check
        %p385 = pneg %p40
      $region54: #{_lambda_.9} parent=51 // pred_check_branch
        %387 = sbr.rel (%p385) target = $region56
      $region55: #{_lambda_.9} parent=51 // pred_region
        %p388 = scmp.lt.s32.totalorder %s20, 1
        %s389 = scalar_select %p388, %s20, 1
        %s390 = smul.addr %s389, 4
        %s391 = smul.addr %s390, 8
        %s392 = scalar_lea.vmem %s0, %s391
      $region56: #{_lambda_.9} parent=51 // pred_fallthru
        _
      // Predicated region
      $region57: #{_lambda_.9} parent=51 // pred_check
        %p393 = pneg %p66
      $region58: #{_lambda_.9} parent=51 // pred_check_branch
        %395 = sbr.rel (%p393) target = $region60
      $region59: #{_lambda_.9} parent=51 // pred_region
        %p396 = scmp.lt.s32.totalorder %s20, 1
        %s397 = scalar_select %p396, %s20, 1
        %s398 = smul.addr %s397, 4
        %s399 = smul.addr %s398, 8
        %s400 = scalar_lea.vmem %s1, %s399
      $region60: #{_lambda_.9} parent=51 // pred_fallthru
        _
    $region52: #{_lambda_.9} parent=5 // pred_fallthru
      _
    %p401 = scmp.le.s32.totalorder 1, %s20
    %p402 = scmp.lt.s32.totalorder %s20, 3
    %p403 = pnand %p401, %p402
    %p404 = pneg %p403
    // Predicated region
    $region61: #{_lambda_.9} parent=5 // pred_check
      _
    $region62: #{_lambda_.9} parent=5 // pred_check_branch
      %406 = sbr.rel (%p403) target = $region64
    $region63: #{_lambda_.9} parent=5 // pred_region
      %s407 = ssub.s32 %s20, 1
      %p408 = scmp.lt.s32.totalorder %s25, 1
      %s409 = scalar_select %p408, %s25, 1
      %s410 = smul.addr %s409, 4
      %s411 = smul.addr %s410, 8
      %s412 = scalar_lea.vmem %s0, %s411
      %p413 = pneg %p46
      %p414 = pneg %p43
      %p415 = scmp.lt.s32.totalorder %s25, 1
      %s416 = scalar_select %p415, %s25, 1
      %s417 = smul.addr %s416, 4
      %s418 = smul.addr %s417, 8
      %s419 = scalar_lea.vmem %s1, %s418
      %p420 = pneg %p72
      %p421 = pneg %p69
      %p422 = pneg %p93
      %p423 = pneg %p90
      %p424 = pneg %p114
      %p425 = pneg %p111
      %p426 = pneg %p135
      %p427 = pneg %p132
      %p428 = pneg %p156
      %p429 = pneg %p153
      %p430 = pneg %p177
      %p431 = pneg %p174
      %p432 = pneg %p198
      %p433 = pneg %p195
      %p434 = pneg %p219
      %p435 = pneg %p216
      %p436 = pneg %p240
      %p437 = pneg %p237
      %p438 = pneg %p261
      %p439 = pneg %p258
      %p440 = pneg %p287
      %p441 = pneg %p284
      %p442 = scmp.lt.s32.totalorder %s25, 1
      %s443 = scalar_select %p442, %s25, 1
      %s444 = smul.addr %s443, 4
      %s445 = smul.addr %s444, 8
      %s446 = scalar_lea.vmem %s11, %s445
      %p447 = pneg %p313
      %p448 = pneg %p310
      %p449 = scmp.lt.s32.totalorder %s25, 1
      %s450 = scalar_select %p449, %s25, 1
      %s451 = smul.addr %s450, 4
      %s452 = smul.addr %s451, 8
      %s453 = scalar_lea.vmem %s12, %s452
      %p454 = pneg %p339
      %p455 = pneg %p336
      %p456 = scmp.lt.s32.totalorder %s25, 1
      %s457 = scalar_select %p456, %s25, 1
      %s458 = smul.addr %s457, 2
      %s459 = scalar_lea.vmem %s13, %s458
      %p460 = scmp.lt.s32.totalorder %s25, 1
      %s461 = scalar_select %p460, %s25, 1
      %s462 = smul.addr %s461, 4
      %s463 = smul.addr %s462, 8
      %s464 = scalar_lea.vmem %s0, %s463
      %p465 = scmp.lt.s32.totalorder %s25, 1
      %s466 = scalar_select %p465, %s25, 1
      %s467 = smul.addr %s466, 4
      %s468 = smul.addr %s467, 8
      %s469 = scalar_lea.vmem %s1, %s468
      %p470 = scmp.lt.s32.totalorder %s25, 1
      %s471 = scalar_select %p470, %s25, 1
      %s472 = smul.addr %s471, 4
      %s473 = smul.addr %s472, 8
      %s474 = scalar_lea.vmem %s11, %s473
      %p475 = scmp.lt.s32.totalorder %s25, 1
      %s476 = scalar_select %p475, %s25, 1
      %s477 = smul.addr %s476, 4
      %s478 = smul.addr %s477, 8
      %s479 = scalar_lea.vmem %s12, %s478
      %p480 = scmp.lt.s32.totalorder %s25, 1
      %s481 = scalar_select %p480, %s25, 1
      %s482 = smul.addr %s481, 2
      %s483 = scalar_lea.vmem %s13, %s482
      %v484 = vld [vmem:[%s8] sm:$0xff]
      %v485 = vld [vmem:[%s8 + $0x8] sm:$0xff]
      %v486 = vld [vmem:[%s8 + $0x10] sm:$0xff]
      %v487 = vld [vmem:[%s8 + $0x18] sm:$0xff]
      %v488 = vld [vmem:[%s8 + $0x20] sm:$0xff]
      %v489 = vld [vmem:[%s8 + $0x28] sm:$0xff]
      %v490 = vld [vmem:[%s8 + $0x30] sm:$0xff]
      %v491 = vld [vmem:[%s8 + $0x38] sm:$0xff]
      %v492 = vld [vmem:[%s8 + $0x40] sm:$0xff]
      %v493 = vld [vmem:[%s8 + $0x48] sm:$0xff]
      %v494 = vld [vmem:[%s8 + $0x50] sm:$0xff]
      %v495 = vld [vmem:[%s8 + $0x58] sm:$0xff]
      %v496 = vld [vmem:[%s8 + $0x60] sm:$0xff]
      %v497 = vld [vmem:[%s8 + $0x68] sm:$0xff]
      %v498 = vld [vmem:[%s8 + $0x70] sm:$0xff]
      %v499 = vld [vmem:[%s8 + $0x78] sm:$0xff]
      %v500 = vld [vmem:[%s2] sm:$0x3]
      %v501 = vld [vmem:[%s2 + $0x2] sm:$0x3]
      %v502 = vld [vmem:[%s3] sm:$0x1]
      %v503 = vld [vmem:[%s4] sm:$0x1]
      %vm504 = vcmask 1041408
      %v505 = vsel %vm504, %v500, 0.0
      %v506 = vsel %vm504, %v501, 0.0
      %v507 = vadd.f32 %v505, %v506
      %508 = vmatpush.msra.mxu0 %v499
      %509 = vmatpush.msra.mxu0 %v498
      %510 = vmatpush.msra.mxu0 %v497
      %511 = vmatpush.msra.mxu0 %v496
      %512 = vmatpush.msra.mxu0 %v495
      %513 = vmatpush.msra.mxu0 %v494
      %514 = vmatpush.msra.mxu0 %v493
      %515 = vmatpush.msra.mxu0 %v492
      %516 = vmatpush.msra.mxu0 %v491
      %517 = vmatpush.msra.mxu0 %v490
      %518 = vmatpush.msra.mxu0 %v489
      %519 = vmatpush.msra.mxu0 %v488
      %520 = vmatpush.msra.mxu0 %v487
      %521 = vmatpush.msra.mxu0 %v486
      %522 = vmatpush.msra.mxu0 %v485
      %523 = vmatpush.msra.mxu0 %v484
      %524 = vmatmul.f32.gmra.mxu0 %v507
      %v525 = vpop.f32.mrf.mxu0
      %v526 = vadd.f32 0.0, %v525
      %527 = vdwg.mxu0
      %v528 = vrcp.pop 512.0
      %v529 = vmul.f32 512.0, %v528
      %v530 = vsub.f32 1.0, %v529
      %v531 = vmul.f32 %v528, %v530
      %v532 = vadd.f32 %v528, %v531
      %vm533 = vweird.f32 %v528
      %v534 = vsel %vm533, %v528, %v532
      %v535 = vmul.f32 %v526, %v534
      %v536 = vmul.f32 %v535, %v535
      %v538 = vrot.slane %v536, 7
      %v540 = vsub.f32 %v535, %v538
      %v541 = vmax.f32 %v540, 0.0
      %v542 = vadd.f32 %v541, 1e-05
      %v543 = vrsqrt.pop %v542
      %v544 = vmul.f32 %v543, %v542
      %v545 = vmul.f32 %v544, %v543
      %v546 = vmul.f32 0.5, %v545
      %v547 = vsub.f32 1.5, %v546
      %v548 = vmul.f32 %v543, %v547
      %vm549 = vweird.f32 %v542
      %vm550 = vweird.f32 %v543
      %vm551 = vmor %vm549, %vm550
      %v552 = vsel %vm551, %v543, %v548
      %554 = vst [vmem:[#allocation1] sm:$0xff] %v552
      %s555 = scalar_lea.vmem [#allocation1], 1
      %v556 = vld [vmem:[%s555] ss:$9 sm:$0xff]
      %v558 = vmul.f32 %v502, %v556
      %v559 = vmul.f32 %v535, %v558
      %v560 = vsub.f32 %v503, %v559
      %v561 = vld [vmem:[%s5] sm:$0x3]
      %v562 = vld [vmem:[%s5 + $0x2] sm:$0x3]
      %v563 = vld [vmem:[%s6] sm:$0x1]
      %v564 = vld [vmem:[%s7] sm:$0x1]
      %v565 = vsel %vm504, %v561, 0.0
      %v566 = vsel %vm504, %v562, 0.0
      %v567 = vadd.f32 %v565, %v566
      %568 = vmatpush.msra.mxu0 %v499
      %569 = vmatpush.msra.mxu0 %v498
      %570 = vmatpush.msra.mxu0 %v497
      %571 = vmatpush.msra.mxu0 %v496
      %572 = vmatpush.msra.mxu0 %v495
      %573 = vmatpush.msra.mxu0 %v494
      %574 = vmatpush.msra.mxu0 %v493
      %575 = vmatpush.msra.mxu0 %v492
      %576 = vmatpush.msra.mxu0 %v491
      %577 = vmatpush.msra.mxu0 %v490
      %578 = vmatpush.msra.mxu0 %v489
      %579 = vmatpush.msra.mxu0 %v488
      %580 = vmatpush.msra.mxu0 %v487
      %581 = vmatpush.msra.mxu0 %v486
      %582 = vmatpush.msra.mxu0 %v485
      %583 = vmatpush.msra.mxu0 %v484
      %584 = vmatmul.f32.gmra.mxu0 %v567
      %v585 = vpop.f32.mrf.mxu0
      %v586 = vadd.f32 0.0, %v585
      %587 = vdwg.mxu0
      %v588 = vmul.f32 %v586, %v534
      %v589 = vmul.f32 %v588, %v588
      %v591 = vrot.slane %v589, 7
      %v593 = vsub.f32 %v588, %v591
      %v594 = vmax.f32 %v593, 0.0
      %v595 = vadd.f32 %v594, 1e-05
      %v596 = vrsqrt.pop %v595
      %v597 = vmul.f32 %v596, %v595
      %v598 = vmul.f32 %v597, %v596
      %v599 = vmul.f32 0.5, %v598
      %v600 = vsub.f32 1.5, %v599
      %v601 = vmul.f32 %v596, %v600
      %vm602 = vweird.f32 %v595
      %vm603 = vweird.f32 %v596
      %vm604 = vmor %vm602, %vm603
      %v605 = vsel %vm604, %v596, %v601
      %607 = vst [vmem:[#allocation1] sm:$0xff] %v605
      %s608 = scalar_lea.vmem [#allocation1], 1
      %v609 = vld [vmem:[%s608] ss:$9 sm:$0xff]
      %v611 = vmul.f32 %v563, %v609
      %v612 = vmul.f32 %v588, %v611
      %v613 = vsub.f32 %v564, %v612
      %v614 = vld [vmem:[%s464] sm:$0xff]
      %v615 = vld [vmem:[%s464 + $0x8] sm:$0xff]
      %v616 = vld [vmem:[%s464 + $0x10] sm:$0xff]
      %v617 = vld [vmem:[%s464 + $0x18] sm:$0xff]
      %v619 = vperm.slane %v558, 0
      %v621 = vmul.f32 %v614, %v619
      %v622 = vmul.f32 %v615, %v619
      %v623 = vmul.f32 %v616, %v619
      %v624 = vmul.f32 %v617, %v619
      %v626 = vperm.slane %v560, 0
      %v628 = vadd.f32 %v621, %v626
      %v629 = vadd.f32 %v622, %v626
      %v630 = vadd.f32 %v623, %v626
      %v631 = vadd.f32 %v624, %v626
      %v632 = vld [vmem:[%s469] sm:$0xff]
      %v633 = vld [vmem:[%s469 + $0x8] sm:$0xff]
      %v634 = vld [vmem:[%s469 + $0x10] sm:$0xff]
      %v635 = vld [vmem:[%s469 + $0x18] sm:$0xff]
      %v637 = vperm.slane %v611, 0
      %v639 = vmul.f32 %v632, %v637
      %v640 = vmul.f32 %v633, %v637
      %v641 = vmul.f32 %v634, %v637
      %v642 = vmul.f32 %v635, %v637
      %v643 = vadd.f32 %v628, %v639
      %v644 = vadd.f32 %v629, %v640
      %v645 = vadd.f32 %v630, %v641
      %v646 = vadd.f32 %v631, %v642
      %v648 = vperm.slane %v613, 0
      %v650 = vadd.f32 %v643, %v648
      %v651 = vadd.f32 %v644, %v648
      %v652 = vadd.f32 %v645, %v648
      %v653 = vadd.f32 %v646, %v648
      %654 = vst [vmem:[%s474] sm:$0xff] %v650
      %655 = vst [vmem:[%s474 + $0x8] sm:$0xff] %v651
      %656 = vst [vmem:[%s474 + $0x10] sm:$0xff] %v652
      %657 = vst [vmem:[%s474 + $0x18] sm:$0xff] %v653
      %658 = vst [vmem:[#allocation2] sm:$0xff] 0.0
      %659 = vst [vmem:[#allocation2 + $0x8] sm:$0xff] 0.0
      %660 = vst [vmem:[#allocation2 + $0x10] sm:$0x1] 0.0
      %s661 = scalar_lea.vmem [#allocation2], 120
      %662 = vst [vmem:[%s661] sm:$0xff] 0.0
      %663 = vst [vmem:[%s661 + $0x8] sm:$0xff] 0.0
      %664 = vst [vmem:[%s661 + $0x10] sm:$0x1] 0.0
      %s665 = scalar_lea.vmem [#allocation2], 24
      %666 = vst [vmem:[%s665 + $0x7] sm:$0x1] 0.0
      %667 = vst [vmem:[%s665 + $0x1f] sm:$0x1] 0.0
      %668 = vst [vmem:[%s665 + $0x37] sm:$0x1] 0.0
      %669 = vst [vmem:[%s665 + $0x4f] sm:$0x1] 0.0
      %670 = vst [vmem:[%s665 + $0x10] sm:$0x1] 0.0
      %671 = vst [vmem:[%s665 + $0x28] sm:$0x1] 0.0
      %672 = vst [vmem:[%s665 + $0x40] sm:$0x1] 0.0
      %673 = vst [vmem:[%s665 + $0x58] sm:$0x1] 0.0
      %674 = vst [vmem:[%s665 + $0x8] sm:$0xff] %v650
      %675 = vst [vmem:[%s665 + $0x20] sm:$0xff] %v651
      %676 = vst [vmem:[%s665 + $0x38] sm:$0xff] %v652
      %677 = vst [vmem:[%s665 + $0x50] sm:$0xff] %v653
      %v678 = vld [vmem:[#allocation2 + $0x7] sm:$0xff]
      %v679 = vld [vmem:[#allocation2 + $0x1f] sm:$0xff]
      %v680 = vld [vmem:[#allocation2 + $0x37] sm:$0xff]
      %v681 = vld [vmem:[#allocation2 + $0x4f] sm:$0xff]
      %v682 = vpack.c.bf16 %v678, %v678
      %v683 = vpack.c.bf16 %v679, %v679
      %v684 = vpack.c.bf16 %v680, %v680
      %v685 = vpack.c.bf16 %v681, %v681
      %686 = vst [vmem:[#allocation3] sm:$0xf] %v682
      %687 = vst [vmem:[#allocation3 + $0x24] sm:$0xf] %v683
      %688 = vst [vmem:[#allocation3 + $0x48] sm:$0xf] %v684
      %689 = vst [vmem:[#allocation3 + $0x6c] sm:$0xf] %v685
      %v690 = vld [vmem:[#allocation2 + $0x8] sm:$0xff]
      %v691 = vld [vmem:[#allocation2 + $0x20] sm:$0xff]
      %v692 = vld [vmem:[#allocation2 + $0x38] sm:$0xff]
      %v693 = vld [vmem:[#allocation2 + $0x50] sm:$0xff]
      %v694 = vpack.c.bf16 %v690, %v690
      %v695 = vpack.c.bf16 %v691, %v691
      %v696 = vpack.c.bf16 %v692, %v692
      %v697 = vpack.c.bf16 %v693, %v693
      %698 = vst [vmem:[#allocation3 + $0x4] sm:$0xf] %v694
      %699 = vst [vmem:[#allocation3 + $0x28] sm:$0xf] %v695
      %700 = vst [vmem:[#allocation3 + $0x4c] sm:$0xf] %v696
      %701 = vst [vmem:[#allocation3 + $0x70] sm:$0xf] %v697
      %v702 = vld [vmem:[#allocation2 + $0x9] sm:$0xff]
      %v703 = vld [vmem:[#allocation2 + $0x21] sm:$0xff]
      %v704 = vld [vmem:[#allocation2 + $0x39] sm:$0xff]
      %v705 = vld [vmem:[#allocation2 + $0x51] sm:$0xff]
      %v706 = vpack.c.bf16 %v702, %v702
      %v707 = vpack.c.bf16 %v703, %v703
      %v708 = vpack.c.bf16 %v704, %v704
      %v709 = vpack.c.bf16 %v705, %v705
      %710 = vst [vmem:[#allocation3 + $0x8] sm:$0xf] %v706
      %711 = vst [vmem:[#allocation3 + $0x2c] sm:$0xf] %v707
      %712 = vst [vmem:[#allocation3 + $0x50] sm:$0xf] %v708
      %713 = vst [vmem:[#allocation3 + $0x74] sm:$0xf] %v709
      %v714 = vld [vmem:[%s665 + $0x7] sm:$0xff]
      %v715 = vld [vmem:[%s665 + $0x1f] sm:$0xff]
      %v716 = vld [vmem:[%s665 + $0x37] sm:$0xff]
      %v717 = vld [vmem:[%s665 + $0x4f] sm:$0xff]
      %v718 = vpack.c.bf16 %v714, %v714
      %v719 = vpack.c.bf16 %v715, %v715
      %v720 = vpack.c.bf16 %v716, %v716
      %v721 = vpack.c.bf16 %v717, %v717
      %722 = vst [vmem:[#allocation3 + $0xc] sm:$0xf] %v718
      %723 = vst [vmem:[#allocation3 + $0x30] sm:$0xf] %v719
      %724 = vst [vmem:[#allocation3 + $0x54] sm:$0xf] %v720
      %725 = vst [vmem:[#allocation3 + $0x78] sm:$0xf] %v721
      %v726 = vld [vmem:[%s665 + $0x8] sm:$0xff]
      %v727 = vld [vmem:[%s665 + $0x20] sm:$0xff]
      %v728 = vld [vmem:[%s665 + $0x38] sm:$0xff]
      %v729 = vld [vmem:[%s665 + $0x50] sm:$0xff]
      %v730 = vpack.c.bf16 %v726, %v726
      %v731 = vpack.c.bf16 %v727, %v727
      %v732 = vpack.c.bf16 %v728, %v728
      %v733 = vpack.c.bf16 %v729, %v729
      %734 = vst [vmem:[#allocation3 + $0x10] sm:$0xf] %v730
      %735 = vst [vmem:[#allocation3 + $0x34] sm:$0xf] %v731
      %736 = vst [vmem:[#allocation3 + $0x58] sm:$0xf] %v732
      %737 = vst [vmem:[#allocation3 + $0x7c] sm:$0xf] %v733
      %v738 = vld [vmem:[%s665 + $0x9] sm:$0xff]
      %v739 = vld [vmem:[%s665 + $0x21] sm:$0xff]
      %v740 = vld [vmem:[%s665 + $0x39] sm:$0xff]
      %v741 = vld [vmem:[%s665 + $0x51] sm:$0xff]
      %v742 = vpack.c.bf16 %v738, %v738
      %v743 = vpack.c.bf16 %v739, %v739
      %v744 = vpack.c.bf16 %v740, %v740
      %v745 = vpack.c.bf16 %v741, %v741
      %746 = vst [vmem:[#allocation3 + $0x14] sm:$0xf] %v742
      %747 = vst [vmem:[#allocation3 + $0x38] sm:$0xf] %v743
      %748 = vst [vmem:[#allocation3 + $0x5c] sm:$0xf] %v744
      %749 = vst [vmem:[#allocation3 + $0x80] sm:$0xf] %v745
      %s750 = scalar_lea.vmem [#allocation2], 48
      %v751 = vld [vmem:[%s750 + $0x7] sm:$0xff]
      %v752 = vld [vmem:[%s750 + $0x1f] sm:$0xff]
      %v753 = vld [vmem:[%s750 + $0x37] sm:$0xff]
      %v754 = vld [vmem:[%s750 + $0x4f] sm:$0xff]
      %v755 = vpack.c.bf16 %v751, %v751
      %v756 = vpack.c.bf16 %v752, %v752
      %v757 = vpack.c.bf16 %v753, %v753
      %v758 = vpack.c.bf16 %v754, %v754
      %759 = vst [vmem:[#allocation3 + $0x18] sm:$0xf] %v755
      %760 = vst [vmem:[#allocation3 + $0x3c] sm:$0xf] %v756
      %761 = vst [vmem:[#allocation3 + $0x60] sm:$0xf] %v757
      %762 = vst [vmem:[#allocation3 + $0x84] sm:$0xf] %v758
      %v763 = vld [vmem:[%s750 + $0x8] sm:$0xff]
      %v764 = vld [vmem:[%s750 + $0x20] sm:$0xff]
      %v765 = vld [vmem:[%s750 + $0x38] sm:$0xff]
      %v766 = vld [vmem:[%s750 + $0x50] sm:$0xff]
      %v767 = vpack.c.bf16 %v763, %v763
      %v768 = vpack.c.bf16 %v764, %v764
      %v769 = vpack.c.bf16 %v765, %v765
      %v770 = vpack.c.bf16 %v766, %v766
      %771 = vst [vmem:[#allocation3 + $0x1c] sm:$0xf] %v767
      %772 = vst [vmem:[#allocation3 + $0x40] sm:$0xf] %v768
      %773 = vst [vmem:[#allocation3 + $0x64] sm:$0xf] %v769
      %774 = vst [vmem:[#allocation3 + $0x88] sm:$0xf] %v770
      %v775 = vld [vmem:[%s750 + $0x9] sm:$0xff]
      %v776 = vld [vmem:[%s750 + $0x21] sm:$0xff]
      %v777 = vld [vmem:[%s750 + $0x39] sm:$0xff]
      %v778 = vld [vmem:[%s750 + $0x51] sm:$0xff]
      %v779 = vpack.c.bf16 %v775, %v775
      %v780 = vpack.c.bf16 %v776, %v776
      %v781 = vpack.c.bf16 %v777, %v777
      %v782 = vpack.c.bf16 %v778, %v778
      %783 = vst [vmem:[#allocation3 + $0x20] sm:$0xf] %v779
      %784 = vst [vmem:[#allocation3 + $0x44] sm:$0xf] %v780
      %785 = vst [vmem:[#allocation3 + $0x68] sm:$0xf] %v781
      %786 = vst [vmem:[#allocation3 + $0x8c] sm:$0xf] %v782
      %v787 = vld [vmem:[#allocation3] sm:$0xff]
      %v788 = vld [vmem:[#allocation3 + $0x8] sm:$0xff]
      %v789 = vld [vmem:[#allocation3 + $0x10] sm:$0xff]
      %v790 = vld [vmem:[#allocation3 + $0x18] sm:$0xff]
      %v791 = vld [vmem:[#allocation3 + $0x20] sm:$0xf]
      %v792 = vld [vmem:[#allocation3 + $0x24] sm:$0xff]
      %v793 = vld [vmem:[#allocation3 + $0x2c] sm:$0xff]
      %v794 = vld [vmem:[#allocation3 + $0x34] sm:$0xff]
      %v795 = vld [vmem:[#allocation3 + $0x3c] sm:$0xff]
      %v796 = vld [vmem:[#allocation3 + $0x44] sm:$0xf]
      %v797 = vld [vmem:[#allocation3 + $0x48] sm:$0xff]
      %v798 = vld [vmem:[#allocation3 + $0x50] sm:$0xff]
      %v799 = vld [vmem:[#allocation3 + $0x58] sm:$0xff]
      %v800 = vld [vmem:[#allocation3 + $0x60] sm:$0xff]
      %v801 = vld [vmem:[#allocation3 + $0x68] sm:$0xf]
      %v802 = vld [vmem:[#allocation3 + $0x6c] sm:$0xff]
      %v803 = vld [vmem:[#allocation3 + $0x74] sm:$0xff]
      %v804 = vld [vmem:[#allocation3 + $0x7c] sm:$0xff]
      %v805 = vld [vmem:[#allocation3 + $0x84] sm:$0xff]
      %v806 = vld [vmem:[#allocation3 + $0x8c] sm:$0xf]
      %v807 = vld [vmem:[%s9] sm:$0xf]
      %v808 = vld [vmem:[%s9 + $0x4] sm:$0xf]
      %v809 = vld [vmem:[%s9 + $0x8] sm:$0xf]
      %v810 = vld [vmem:[%s9 + $0xc] sm:$0xf]
      %v811 = vld [vmem:[%s9 + $0x10] sm:$0xf]
      %v812 = vld [vmem:[%s9 + $0x14] sm:$0xf]
      %v813 = vld [vmem:[%s9 + $0x18] sm:$0xf]
      %v814 = vld [vmem:[%s9 + $0x1c] sm:$0xf]
      %v815 = vld [vmem:[%s9 + $0x20] sm:$0xf]
      %v816 = vld [vmem:[%s9 + $0x24] sm:$0xf]
      %v817 = vld [vmem:[%s9 + $0x28] sm:$0xf]
      %v818 = vld [vmem:[%s9 + $0x2c] sm:$0xf]
      %v819 = vld [vmem:[%s9 + $0x30] sm:$0xf]
      %v820 = vld [vmem:[%s9 + $0x34] sm:$0xf]
      %v821 = vld [vmem:[%s9 + $0x38] sm:$0xf]
      %v822 = vld [vmem:[%s9 + $0x3c] sm:$0xf]
      %v823 = vld [vmem:[%s9 + $0x40] sm:$0xf]
      %v824 = vld [vmem:[%s9 + $0x44] sm:$0xf]
      %v825 = vld [vmem:[%s9 + $0x48] sm:$0xf]
      %v826 = vld [vmem:[%s9 + $0x4c] sm:$0xf]
      %v827 = vld [vmem:[%s9 + $0x50] sm:$0xf]
      %v828 = vld [vmem:[%s9 + $0x54] sm:$0xf]
      %v829 = vld [vmem:[%s9 + $0x58] sm:$0xf]
      %v830 = vld [vmem:[%s9 + $0x5c] sm:$0xf]
      %v831 = vld [vmem:[%s9 + $0x60] sm:$0xf]
      %v832 = vld [vmem:[%s9 + $0x64] sm:$0xf]
      %v833 = vld [vmem:[%s9 + $0x68] sm:$0xf]
      %v834 = vld [vmem:[%s9 + $0x6c] sm:$0xf]
      %v835 = vld [vmem:[%s9 + $0x70] sm:$0xf]
      %v836 = vld [vmem:[%s9 + $0x74] sm:$0xf]
      %v837 = vld [vmem:[%s9 + $0x78] sm:$0xf]
      %v838 = vld [vmem:[%s9 + $0x7c] sm:$0xf]
      %v839 = vld [vmem:[%s9 + $0x80] sm:$0xf]
      %v840 = vld [vmem:[%s9 + $0x84] sm:$0xf]
      %v841 = vld [vmem:[%s9 + $0x88] sm:$0xf]
      %v842 = vld [vmem:[%s9 + $0x8c] sm:$0xf]
      %v843 = vld [vmem:[%s9 + $0x90] sm:$0xf]
      %v844 = vld [vmem:[%s9 + $0x94] sm:$0xf]
      %v845 = vld [vmem:[%s9 + $0x98] sm:$0xf]
      %v846 = vld [vmem:[%s9 + $0x9c] sm:$0xf]
      %v847 = vld [vmem:[%s9 + $0xa0] sm:$0xf]
      %v848 = vld [vmem:[%s9 + $0xa4] sm:$0xf]
      %v849 = vld [vmem:[%s9 + $0xa8] sm:$0xf]
      %v850 = vld [vmem:[%s9 + $0xac] sm:$0xf]
      %v851 = vld [vmem:[%s9 + $0xb0] sm:$0xf]
      %v852 = vld [vmem:[%s9 + $0xb4] sm:$0xf]
      %v853 = vld [vmem:[%s9 + $0xb8] sm:$0xf]
      %v854 = vld [vmem:[%s9 + $0xbc] sm:$0xf]
      %v855 = vld [vmem:[%s9 + $0xc0] sm:$0xf]
      %v856 = vld [vmem:[%s9 + $0xc4] sm:$0xf]
      %v857 = vld [vmem:[%s9 + $0xc8] sm:$0xf]
      %v858 = vld [vmem:[%s9 + $0xcc] sm:$0xf]
      %v859 = vld [vmem:[%s9 + $0xd0] sm:$0xf]
      %v860 = vld [vmem:[%s9 + $0xd4] sm:$0xf]
      %v861 = vld [vmem:[%s9 + $0xd8] sm:$0xf]
      %v862 = vld [vmem:[%s9 + $0xdc] sm:$0xf]
      %v863 = vld [vmem:[%s9 + $0xe0] sm:$0xf]
      %v864 = vld [vmem:[%s9 + $0xe4] sm:$0xf]
      %v865 = vld [vmem:[%s9 + $0xe8] sm:$0xf]
      %v866 = vld [vmem:[%s9 + $0xec] sm:$0xf]
      %v867 = vld [vmem:[%s9 + $0xf0] sm:$0xf]
      %v868 = vld [vmem:[%s9 + $0xf4] sm:$0xf]
      %v869 = vld [vmem:[%s9 + $0xf8] sm:$0xf]
      %v870 = vld [vmem:[%s9 + $0xfc] sm:$0xf]
      %v871 = vld [vmem:[%s9 + $0x100] sm:$0xf]
      %v872 = vld [vmem:[%s9 + $0x104] sm:$0xf]
      %v873 = vld [vmem:[%s9 + $0x108] sm:$0xf]
      %v874 = vld [vmem:[%s9 + $0x10c] sm:$0xf]
      %v875 = vld [vmem:[%s9 + $0x110] sm:$0xf]
      %v876 = vld [vmem:[%s9 + $0x114] sm:$0xf]
      %v877 = vld [vmem:[%s9 + $0x118] sm:$0xf]
      %v878 = vld [vmem:[%s9 + $0x11c] sm:$0xf]
      %v879 = vld [vmem:[%s9 + $0x120] sm:$0xf]
      %v880 = vld [vmem:[%s9 + $0x124] sm:$0xf]
      %v881 = vld [vmem:[%s9 + $0x128] sm:$0xf]
      %v882 = vld [vmem:[%s9 + $0x12c] sm:$0xf]
      %v883 = vld [vmem:[%s9 + $0x130] sm:$0xf]
      %v884 = vld [vmem:[%s9 + $0x134] sm:$0xf]
      %v885 = vld [vmem:[%s9 + $0x138] sm:$0xf]
      %v886 = vld [vmem:[%s9 + $0x13c] sm:$0xf]
      %v887 = vld [vmem:[%s9 + $0x140] sm:$0xf]
      %v888 = vld [vmem:[%s9 + $0x144] sm:$0xf]
      %v889 = vld [vmem:[%s9 + $0x148] sm:$0xf]
      %v890 = vld [vmem:[%s9 + $0x14c] sm:$0xf]
      %v891 = vld [vmem:[%s9 + $0x150] sm:$0xf]
      %v892 = vld [vmem:[%s9 + $0x154] sm:$0xf]
      %v893 = vld [vmem:[%s9 + $0x158] sm:$0xf]
      %v894 = vld [vmem:[%s9 + $0x15c] sm:$0xf]
      %v895 = vld [vmem:[%s9 + $0x160] sm:$0xf]
      %v896 = vld [vmem:[%s9 + $0x164] sm:$0xf]
      %v897 = vld [vmem:[%s9 + $0x168] sm:$0xf]
      %v898 = vld [vmem:[%s9 + $0x16c] sm:$0xf]
      %v899 = vld [vmem:[%s9 + $0x170] sm:$0xf]
      %v900 = vld [vmem:[%s9 + $0x174] sm:$0xf]
      %v901 = vld [vmem:[%s9 + $0x178] sm:$0xf]
      %v902 = vld [vmem:[%s9 + $0x17c] sm:$0xf]
      %v903 = vld [vmem:[%s9 + $0x180] sm:$0xf]
      %v904 = vld [vmem:[%s9 + $0x184] sm:$0xf]
      %v905 = vld [vmem:[%s9 + $0x188] sm:$0xf]
      %v906 = vld [vmem:[%s9 + $0x18c] sm:$0xf]
      %v907 = vld [vmem:[%s9 + $0x190] sm:$0xf]
      %v908 = vld [vmem:[%s9 + $0x194] sm:$0xf]
      %v909 = vld [vmem:[%s9 + $0x198] sm:$0xf]
      %v910 = vld [vmem:[%s9 + $0x19c] sm:$0xf]
      %v911 = vld [vmem:[%s9 + $0x1a0] sm:$0xf]
      %v912 = vld [vmem:[%s9 + $0x1a4] sm:$0xf]
      %v913 = vld [vmem:[%s9 + $0x1a8] sm:$0xf]
      %v914 = vld [vmem:[%s9 + $0x1ac] sm:$0xf]
      %v915 = vld [vmem:[%s9 + $0x1b0] sm:$0xf]
      %v916 = vld [vmem:[%s9 + $0x1b4] sm:$0xf]
      %v917 = vld [vmem:[%s9 + $0x1b8] sm:$0xf]
      %v918 = vld [vmem:[%s9 + $0x1bc] sm:$0xf]
      %v919 = vld [vmem:[%s9 + $0x1c0] sm:$0xf]
      %v920 = vld [vmem:[%s9 + $0x1c4] sm:$0xf]
      %v921 = vld [vmem:[%s9 + $0x1c8] sm:$0xf]
      %v922 = vld [vmem:[%s9 + $0x1cc] sm:$0xf]
      %v923 = vld [vmem:[%s9 + $0x1d0] sm:$0xf]
      %v924 = vld [vmem:[%s9 + $0x1d4] sm:$0xf]
      %v925 = vld [vmem:[%s9 + $0x1d8] sm:$0xf]
      %v926 = vld [vmem:[%s9 + $0x1dc] sm:$0xf]
      %v927 = vld [vmem:[%s9 + $0x1e0] sm:$0xf]
      %v928 = vld [vmem:[%s9 + $0x1e4] sm:$0xf]
      %v929 = vld [vmem:[%s9 + $0x1e8] sm:$0xf]
      %v930 = vld [vmem:[%s9 + $0x1ec] sm:$0xf]
      %v931 = vld [vmem:[%s9 + $0x1f0] sm:$0xf]
      %v932 = vld [vmem:[%s9 + $0x1f4] sm:$0xf]
      %v933 = vld [vmem:[%s9 + $0x1f8] sm:$0xf]
      %v934 = vld [vmem:[%s9 + $0x1fc] sm:$0xf]
      %v935 = vld [vmem:[%s9 + $0x200] sm:$0xf]
      %v936 = vld [vmem:[%s9 + $0x204] sm:$0xf]
      %v937 = vld [vmem:[%s9 + $0x208] sm:$0xf]
      %v938 = vld [vmem:[%s9 + $0x20c] sm:$0xf]
      %v939 = vld [vmem:[%s9 + $0x210] sm:$0xf]
      %v940 = vld [vmem:[%s9 + $0x214] sm:$0xf]
      %v941 = vld [vmem:[%s9 + $0x218] sm:$0xf]
      %v942 = vld [vmem:[%s9 + $0x21c] sm:$0xf]
      %v943 = vld [vmem:[%s9 + $0x220] sm:$0xf]
      %v944 = vld [vmem:[%s9 + $0x224] sm:$0xf]
      %v945 = vld [vmem:[%s9 + $0x228] sm:$0xf]
      %v946 = vld [vmem:[%s9 + $0x22c] sm:$0xf]
      %v947 = vld [vmem:[%s9 + $0x230] sm:$0xf]
      %v948 = vld [vmem:[%s9 + $0x234] sm:$0xf]
      %v949 = vld [vmem:[%s9 + $0x238] sm:$0xf]
      %v950 = vld [vmem:[%s9 + $0x23c] sm:$0xf]
      %v951 = vld [vmem:[%s10] sm:$0x1]
      %v953 = vperm.slane %v951, 0
      %v975 = vunpack.c.l.b16 %v787
      %v976 = vunpack.c.h.b16 %v787
      %v977 = vunpack.c.l.b16 %v788
      %v978 = vunpack.c.h.b16 %v788
      %v979 = vunpack.c.l.b16 %v789
      %v980 = vunpack.c.h.b16 %v789
      %v981 = vunpack.c.l.b16 %v790
      %v982 = vunpack.c.h.b16 %v790
      %v983 = vunpack.c.l.b16 %v791
      %v984 = vunpack.c.l.b16 %v792
      %v985 = vunpack.c.h.b16 %v792
      %v986 = vunpack.c.l.b16 %v793
      %v987 = vunpack.c.h.b16 %v793
      %v988 = vunpack.c.l.b16 %v794
      %v989 = vunpack.c.h.b16 %v794
      %v990 = vunpack.c.l.b16 %v795
      %v991 = vunpack.c.h.b16 %v795
      %v992 = vunpack.c.l.b16 %v796
      %v993 = vunpack.c.l.b16 %v797
      %v994 = vunpack.c.h.b16 %v797
      %v995 = vunpack.c.l.b16 %v798
      %v996 = vunpack.c.h.b16 %v798
      %v997 = vunpack.c.l.b16 %v799
      %v998 = vunpack.c.h.b16 %v799
      %v999 = vunpack.c.l.b16 %v800
      %v1000 = vunpack.c.h.b16 %v800
      %v1001 = vunpack.c.l.b16 %v801
      %v1002 = vunpack.c.l.b16 %v802
      %v1003 = vunpack.c.h.b16 %v802
      %v1004 = vunpack.c.l.b16 %v803
      %v1005 = vunpack.c.h.b16 %v803
      %v1006 = vunpack.c.l.b16 %v804
      %v1007 = vunpack.c.h.b16 %v804
      %v1008 = vunpack.c.l.b16 %v805
      %v1009 = vunpack.c.h.b16 %v805
      %v1010 = vunpack.c.l.b16 %v806
      %v1011 = vpack.c.b16 %v984, %v975
      %v1012 = vpack.c.b16 %v985, %v976
      %v1013 = vpack.c.b16 %v986, %v977
      %v1014 = vpack.c.b16 %v987, %v978
      %v1015 = vpack.c.b16 %v988, %v979
      %v1016 = vpack.c.b16 %v989, %v980
      %v1017 = vpack.c.b16 %v990, %v981
      %v1018 = vpack.c.b16 %v991, %v982
      %v1019 = vpack.c.b16 %v992, %v983
      %v1020 = vpack.c.b16 %v1002, %v993
      %v1021 = vpack.c.b16 %v1003, %v994
      %v1022 = vpack.c.b16 %v1004, %v995
      %v1023 = vpack.c.b16 %v1005, %v996
      %v1024 = vpack.c.b16 %v1006, %v997
      %v1025 = vpack.c.b16 %v1007, %v998
      %v1026 = vpack.c.b16 %v1008, %v999
      %v1027 = vpack.c.b16 %v1009, %v1000
      %v1028 = vpack.c.b16 %v1010, %v1001
      %v1191 = vunpack.c.l.b16 %v807
      %v1192 = vunpack.c.l.b16 %v808
      %v1193 = vunpack.c.l.b16 %v809
      %v1194 = vunpack.c.l.b16 %v810
      %v1195 = vunpack.c.l.b16 %v811
      %v1196 = vunpack.c.l.b16 %v812
      %v1197 = vunpack.c.l.b16 %v813
      %v1198 = vunpack.c.l.b16 %v814
      %v1199 = vunpack.c.l.b16 %v815
      %v1200 = vunpack.c.l.b16 %v816
      %v1201 = vunpack.c.l.b16 %v817
      %v1202 = vunpack.c.l.b16 %v818
      %v1203 = vunpack.c.l.b16 %v819
      %v1204 = vunpack.c.l.b16 %v820
      %v1205 = vunpack.c.l.b16 %v821
      %v1206 = vunpack.c.l.b16 %v822
      %v1207 = vunpack.c.l.b16 %v823
      %v1208 = vunpack.c.l.b16 %v824
      %v1209 = vunpack.c.l.b16 %v825
      %v1210 = vunpack.c.l.b16 %v826
      %v1211 = vunpack.c.l.b16 %v827
      %v1212 = vunpack.c.l.b16 %v828
      %v1213 = vunpack.c.l.b16 %v829
      %v1214 = vunpack.c.l.b16 %v830
      %v1215 = vunpack.c.l.b16 %v831
      %v1216 = vunpack.c.l.b16 %v832
      %v1217 = vunpack.c.l.b16 %v833
      %v1218 = vunpack.c.l.b16 %v834
      %v1219 = vunpack.c.l.b16 %v835
      %v1220 = vunpack.c.l.b16 %v836
      %v1221 = vunpack.c.l.b16 %v837
      %v1222 = vunpack.c.l.b16 %v838
      %v1223 = vunpack.c.l.b16 %v839
      %v1224 = vunpack.c.l.b16 %v840
      %v1225 = vunpack.c.l.b16 %v841
      %v1226 = vunpack.c.l.b16 %v842
      %v1227 = vunpack.c.l.b16 %v843
      %v1228 = vunpack.c.l.b16 %v844
      %v1229 = vunpack.c.l.b16 %v845
      %v1230 = vunpack.c.l.b16 %v846
      %v1231 = vunpack.c.l.b16 %v847
      %v1232 = vunpack.c.l.b16 %v848
      %v1233 = vunpack.c.l.b16 %v849
      %v1234 = vunpack.c.l.b16 %v850
      %v1235 = vunpack.c.l.b16 %v851
      %v1236 = vunpack.c.l.b16 %v852
      %v1237 = vunpack.c.l.b16 %v853
      %v1238 = vunpack.c.l.b16 %v854
      %v1239 = vunpack.c.l.b16 %v855
      %v1240 = vunpack.c.l.b16 %v856
      %v1241 = vunpack.c.l.b16 %v857
      %v1242 = vunpack.c.l.b16 %v858
      %v1243 = vunpack.c.l.b16 %v859
      %v1244 = vunpack.c.l.b16 %v860
      %v1245 = vunpack.c.l.b16 %v861
      %v1246 = vunpack.c.l.b16 %v862
      %v1247 = vunpack.c.l.b16 %v863
      %v1248 = vunpack.c.l.b16 %v864
      %v1249 = vunpack.c.l.b16 %v865
      %v1250 = vunpack.c.l.b16 %v866
      %v1251 = vunpack.c.l.b16 %v867
      %v1252 = vunpack.c.l.b16 %v868
      %v1253 = vunpack.c.l.b16 %v869
      %v1254 = vunpack.c.l.b16 %v870
      %v1255 = vunpack.c.l.b16 %v871
      %v1256 = vunpack.c.l.b16 %v872
      %v1257 = vunpack.c.l.b16 %v873
      %v1258 = vunpack.c.l.b16 %v874
      %v1259 = vunpack.c.l.b16 %v875
      %v1260 = vunpack.c.l.b16 %v876
      %v1261 = vunpack.c.l.b16 %v877
      %v1262 = vunpack.c.l.b16 %v878
      %v1263 = vunpack.c.l.b16 %v879
      %v1264 = vunpack.c.l.b16 %v880
      %v1265 = vunpack.c.l.b16 %v881
      %v1266 = vunpack.c.l.b16 %v882
      %v1267 = vunpack.c.l.b16 %v883
      %v1268 = vunpack.c.l.b16 %v884
      %v1269 = vunpack.c.l.b16 %v885
      %v1270 = vunpack.c.l.b16 %v886
      %v1271 = vunpack.c.l.b16 %v887
      %v1272 = vunpack.c.l.b16 %v888
      %v1273 = vunpack.c.l.b16 %v889
      %v1274 = vunpack.c.l.b16 %v890
      %v1275 = vunpack.c.l.b16 %v891
      %v1276 = vunpack.c.l.b16 %v892
      %v1277 = vunpack.c.l.b16 %v893
      %v1278 = vunpack.c.l.b16 %v894
      %v1279 = vunpack.c.l.b16 %v895
      %v1280 = vunpack.c.l.b16 %v896
      %v1281 = vunpack.c.l.b16 %v897
      %v1282 = vunpack.c.l.b16 %v898
      %v1283 = vunpack.c.l.b16 %v899
      %v1284 = vunpack.c.l.b16 %v900
      %v1285 = vunpack.c.l.b16 %v901
      %v1286 = vunpack.c.l.b16 %v902
      %v1287 = vunpack.c.l.b16 %v903
      %v1288 = vunpack.c.l.b16 %v904
      %v1289 = vunpack.c.l.b16 %v905
      %v1290 = vunpack.c.l.b16 %v906
      %v1291 = vunpack.c.l.b16 %v907
      %v1292 = vunpack.c.l.b16 %v908
      %v1293 = vunpack.c.l.b16 %v909
      %v1294 = vunpack.c.l.b16 %v910
      %v1295 = vunpack.c.l.b16 %v911
      %v1296 = vunpack.c.l.b16 %v912
      %v1297 = vunpack.c.l.b16 %v913
      %v1298 = vunpack.c.l.b16 %v914
      %v1299 = vunpack.c.l.b16 %v915
      %v1300 = vunpack.c.l.b16 %v916
      %v1301 = vunpack.c.l.b16 %v917
      %v1302 = vunpack.c.l.b16 %v918
      %v1303 = vunpack.c.l.b16 %v919
      %v1304 = vunpack.c.l.b16 %v920
      %v1305 = vunpack.c.l.b16 %v921
      %v1306 = vunpack.c.l.b16 %v922
      %v1307 = vunpack.c.l.b16 %v923
      %v1308 = vunpack.c.l.b16 %v924
      %v1309 = vunpack.c.l.b16 %v925
      %v1310 = vunpack.c.l.b16 %v926
      %v1311 = vunpack.c.l.b16 %v927
      %v1312 = vunpack.c.l.b16 %v928
      %v1313 = vunpack.c.l.b16 %v929
      %v1314 = vunpack.c.l.b16 %v930
      %v1315 = vunpack.c.l.b16 %v931
      %v1316 = vunpack.c.l.b16 %v932
      %v1317 = vunpack.c.l.b16 %v933
      %v1318 = vunpack.c.l.b16 %v934
      %v1319 = vunpack.c.l.b16 %v935
      %v1320 = vunpack.c.l.b16 %v936
      %v1321 = vunpack.c.l.b16 %v937
      %v1322 = vunpack.c.l.b16 %v938
      %v1323 = vunpack.c.l.b16 %v939
      %v1324 = vunpack.c.l.b16 %v940
      %v1325 = vunpack.c.l.b16 %v941
      %v1326 = vunpack.c.l.b16 %v942
      %v1327 = vunpack.c.l.b16 %v943
      %v1328 = vunpack.c.l.b16 %v944
      %v1329 = vunpack.c.l.b16 %v945
      %v1330 = vunpack.c.l.b16 %v946
      %v1331 = vunpack.c.l.b16 %v947
      %v1332 = vunpack.c.l.b16 %v948
      %v1333 = vunpack.c.l.b16 %v949
      %v1334 = vunpack.c.l.b16 %v950
      %v1335 = vpack.c.b16 %v1192, %v1191
      %v1336 = vpack.c.b16 %v1194, %v1193
      %v1337 = vpack.c.b16 %v1196, %v1195
      %v1338 = vpack.c.b16 %v1198, %v1197
      %v1339 = vpack.c.b16 %v1200, %v1199
      %v1340 = vpack.c.b16 %v1202, %v1201
      %v1341 = vpack.c.b16 %v1204, %v1203
      %v1342 = vpack.c.b16 %v1206, %v1205
      %v1343 = vpack.c.b16 %v1208, %v1207
      %v1344 = vpack.c.b16 %v1210, %v1209
      %v1345 = vpack.c.b16 %v1212, %v1211
      %v1346 = vpack.c.b16 %v1214, %v1213
      %v1347 = vpack.c.b16 %v1216, %v1215
      %v1348 = vpack.c.b16 %v1218, %v1217
      %v1349 = vpack.c.b16 %v1220, %v1219
      %v1350 = vpack.c.b16 %v1222, %v1221
      %v1351 = vpack.c.b16 %v1224, %v1223
      %v1352 = vpack.c.b16 %v1226, %v1225
      %v1353 = vpack.c.b16 %v1228, %v1227
      %v1354 = vpack.c.b16 %v1230, %v1229
      %v1355 = vpack.c.b16 %v1232, %v1231
      %v1356 = vpack.c.b16 %v1234, %v1233
      %v1357 = vpack.c.b16 %v1236, %v1235
      %v1358 = vpack.c.b16 %v1238, %v1237
      %v1359 = vpack.c.b16 %v1240, %v1239
      %v1360 = vpack.c.b16 %v1242, %v1241
      %v1361 = vpack.c.b16 %v1244, %v1243
      %v1362 = vpack.c.b16 %v1246, %v1245
      %v1363 = vpack.c.b16 %v1248, %v1247
      %v1364 = vpack.c.b16 %v1250, %v1249
      %v1365 = vpack.c.b16 %v1252, %v1251
      %v1366 = vpack.c.b16 %v1254, %v1253
      %v1367 = vpack.c.b16 %v1256, %v1255
      %v1368 = vpack.c.b16 %v1258, %v1257
      %v1369 = vpack.c.b16 %v1260, %v1259
      %v1370 = vpack.c.b16 %v1262, %v1261
      %v1371 = vpack.c.b16 %v1264, %v1263
      %v1372 = vpack.c.b16 %v1266, %v1265
      %v1373 = vpack.c.b16 %v1268, %v1267
      %v1374 = vpack.c.b16 %v1270, %v1269
      %v1375 = vpack.c.b16 %v1272, %v1271
      %v1376 = vpack.c.b16 %v1274, %v1273
      %v1377 = vpack.c.b16 %v1276, %v1275
      %v1378 = vpack.c.b16 %v1278, %v1277
      %v1379 = vpack.c.b16 %v1280, %v1279
      %v1380 = vpack.c.b16 %v1282, %v1281
      %v1381 = vpack.c.b16 %v1284, %v1283
      %v1382 = vpack.c.b16 %v1286, %v1285
      %v1383 = vpack.c.b16 %v1288, %v1287
      %v1384 = vpack.c.b16 %v1290, %v1289
      %v1385 = vpack.c.b16 %v1292, %v1291
      %v1386 = vpack.c.b16 %v1294, %v1293
      %v1387 = vpack.c.b16 %v1296, %v1295
      %v1388 = vpack.c.b16 %v1298, %v1297
      %v1389 = vpack.c.b16 %v1300, %v1299
      %v1390 = vpack.c.b16 %v1302, %v1301
      %v1391 = vpack.c.b16 %v1304, %v1303
      %v1392 = vpack.c.b16 %v1306, %v1305
      %v1393 = vpack.c.b16 %v1308, %v1307
      %v1394 = vpack.c.b16 %v1310, %v1309
      %v1395 = vpack.c.b16 %v1312, %v1311
      %v1396 = vpack.c.b16 %v1314, %v1313
      %v1397 = vpack.c.b16 %v1316, %v1315
      %v1398 = vpack.c.b16 %v1318, %v1317
      %v1399 = vpack.c.b16 %v1320, %v1319
      %v1400 = vpack.c.b16 %v1322, %v1321
      %v1401 = vpack.c.b16 %v1324, %v1323
      %v1402 = vpack.c.b16 %v1326, %v1325
      %v1403 = vpack.c.b16 %v1328, %v1327
      %v1404 = vpack.c.b16 %v1330, %v1329
      %v1405 = vpack.c.b16 %v1332, %v1331
      %v1406 = vpack.c.b16 %v1334, %v1333
      %1479 = vmatpush.bf16.msra.mxu0 %v1342
      %1480 = vmatpush.bf16.msra.mxu0 %v1341
      %1481 = vmatpush.bf16.msra.mxu0 %v1340
      %1482 = vmatpush.bf16.msra.mxu0 %v1339
      %1483 = vmatpush.bf16.msra.mxu0 %v1338
      %1484 = vmatpush.bf16.msra.mxu0 %v1337
      %1485 = vmatpush.bf16.msra.mxu0 %v1336
      %1486 = vmatpush.bf16.msra.mxu0 %v1335
      %1487 = vmatmul.bf16.gmra.mxu0 %v1011
      %v1488 = vpop.f32.mrf.mxu0
      %v1489 = vadd.f32 %v953, %v1488
      %v1490 = vpop.f32.mrf.mxu0
      %v1491 = vadd.f32 %v953, %v1490
      %1492 = vmatmul.bf16.gmra.mxu0 %v1020
      %v1493 = vpop.f32.mrf.mxu0
      %v1494 = vadd.f32 %v953, %v1493
      %v1495 = vpop.f32.mrf.mxu0
      %v1496 = vadd.f32 %v953, %v1495
      %1497 = vdwg.mxu0
      %1498 = vmatpush.bf16.msra.mxu0 %v1350
      %1499 = vmatpush.bf16.msra.mxu0 %v1349
      %1500 = vmatpush.bf16.msra.mxu0 %v1348
      %1501 = vmatpush.bf16.msra.mxu0 %v1347
      %1502 = vmatpush.bf16.msra.mxu0 %v1346
      %1503 = vmatpush.bf16.msra.mxu0 %v1345
      %1504 = vmatpush.bf16.msra.mxu0 %v1344
      %1505 = vmatpush.bf16.msra.mxu0 %v1343
      %1506 = vmatmul.bf16.gmra.mxu0 %v1012
      %v1507 = vpop.f32.mrf.mxu0
      %v1508 = vadd.f32 %v1489, %v1507
      %v1509 = vpop.f32.mrf.mxu0
      %v1510 = vadd.f32 %v1491, %v1509
      %1511 = vmatmul.bf16.gmra.mxu0 %v1021
      %v1512 = vpop.f32.mrf.mxu0
      %v1513 = vadd.f32 %v1494, %v1512
      %v1514 = vpop.f32.mrf.mxu0
      %v1515 = vadd.f32 %v1496, %v1514
      %1516 = vdwg.mxu0
      %1517 = vmatpush.bf16.msra.mxu0 %v1358
      %1518 = vmatpush.bf16.msra.mxu0 %v1357
      %1519 = vmatpush.bf16.msra.mxu0 %v1356
      %1520 = vmatpush.bf16.msra.mxu0 %v1355
      %1521 = vmatpush.bf16.msra.mxu0 %v1354
      %1522 = vmatpush.bf16.msra.mxu0 %v1353
      %1523 = vmatpush.bf16.msra.mxu0 %v1352
      %1524 = vmatpush.bf16.msra.mxu0 %v1351
      %1525 = vmatmul.bf16.gmra.mxu0 %v1013
      %v1526 = vpop.f32.mrf.mxu0
      %v1527 = vadd.f32 %v1508, %v1526
      %v1528 = vpop.f32.mrf.mxu0
      %v1529 = vadd.f32 %v1510, %v1528
      %1530 = vmatmul.bf16.gmra.mxu0 %v1022
      %v1531 = vpop.f32.mrf.mxu0
      %v1532 = vadd.f32 %v1513, %v1531
      %v1533 = vpop.f32.mrf.mxu0
      %v1534 = vadd.f32 %v1515, %v1533
      %1535 = vdwg.mxu0
      %1536 = vmatpush.bf16.msra.mxu0 %v1366
      %1537 = vmatpush.bf16.msra.mxu0 %v1365
      %1538 = vmatpush.bf16.msra.mxu0 %v1364
      %1539 = vmatpush.bf16.msra.mxu0 %v1363
      %1540 = vmatpush.bf16.msra.mxu0 %v1362
      %1541 = vmatpush.bf16.msra.mxu0 %v1361
      %1542 = vmatpush.bf16.msra.mxu0 %v1360
      %1543 = vmatpush.bf16.msra.mxu0 %v1359
      %1544 = vmatmul.bf16.gmra.mxu0 %v1014
      %v1545 = vpop.f32.mrf.mxu0
      %v1546 = vadd.f32 %v1527, %v1545
      %v1547 = vpop.f32.mrf.mxu0
      %v1548 = vadd.f32 %v1529, %v1547
      %1549 = vmatmul.bf16.gmra.mxu0 %v1023
      %v1550 = vpop.f32.mrf.mxu0
      %v1551 = vadd.f32 %v1532, %v1550
      %v1552 = vpop.f32.mrf.mxu0
      %v1553 = vadd.f32 %v1534, %v1552
      %1554 = vdwg.mxu0
      %1555 = vmatpush.bf16.msra.mxu0 %v1374
      %1556 = vmatpush.bf16.msra.mxu0 %v1373
      %1557 = vmatpush.bf16.msra.mxu0 %v1372
      %1558 = vmatpush.bf16.msra.mxu0 %v1371
      %1559 = vmatpush.bf16.msra.mxu0 %v1370
      %1560 = vmatpush.bf16.msra.mxu0 %v1369
      %1561 = vmatpush.bf16.msra.mxu0 %v1368
      %1562 = vmatpush.bf16.msra.mxu0 %v1367
      %1563 = vmatmul.bf16.gmra.mxu0 %v1015
      %v1564 = vpop.f32.mrf.mxu0
      %v1565 = vadd.f32 %v1546, %v1564
      %v1566 = vpop.f32.mrf.mxu0
      %v1567 = vadd.f32 %v1548, %v1566
      %1568 = vmatmul.bf16.gmra.mxu0 %v1024
      %v1569 = vpop.f32.mrf.mxu0
      %v1570 = vadd.f32 %v1551, %v1569
      %v1571 = vpop.f32.mrf.mxu0
      %v1572 = vadd.f32 %v1553, %v1571
      %1573 = vdwg.mxu0
      %1574 = vmatpush.bf16.msra.mxu0 %v1382
      %1575 = vmatpush.bf16.msra.mxu0 %v1381
      %1576 = vmatpush.bf16.msra.mxu0 %v1380
      %1577 = vmatpush.bf16.msra.mxu0 %v1379
      %1578 = vmatpush.bf16.msra.mxu0 %v1378
      %1579 = vmatpush.bf16.msra.mxu0 %v1377
      %1580 = vmatpush.bf16.msra.mxu0 %v1376
      %1581 = vmatpush.bf16.msra.mxu0 %v1375
      %1582 = vmatmul.bf16.gmra.mxu0 %v1016
      %v1583 = vpop.f32.mrf.mxu0
      %v1584 = vadd.f32 %v1565, %v1583
      %v1585 = vpop.f32.mrf.mxu0
      %v1586 = vadd.f32 %v1567, %v1585
      %1587 = vmatmul.bf16.gmra.mxu0 %v1025
      %v1588 = vpop.f32.mrf.mxu0
      %v1589 = vadd.f32 %v1570, %v1588
      %v1590 = vpop.f32.mrf.mxu0
      %v1591 = vadd.f32 %v1572, %v1590
      %1592 = vdwg.mxu0
      %1593 = vmatpush.bf16.msra.mxu0 %v1390
      %1594 = vmatpush.bf16.msra.mxu0 %v1389
      %1595 = vmatpush.bf16.msra.mxu0 %v1388
      %1596 = vmatpush.bf16.msra.mxu0 %v1387
      %1597 = vmatpush.bf16.msra.mxu0 %v1386
      %1598 = vmatpush.bf16.msra.mxu0 %v1385
      %1599 = vmatpush.bf16.msra.mxu0 %v1384
      %1600 = vmatpush.bf16.msra.mxu0 %v1383
      %1601 = vmatmul.bf16.gmra.mxu0 %v1017
      %v1602 = vpop.f32.mrf.mxu0
      %v1603 = vadd.f32 %v1584, %v1602
      %v1604 = vpop.f32.mrf.mxu0
      %v1605 = vadd.f32 %v1586, %v1604
      %1606 = vmatmul.bf16.gmra.mxu0 %v1026
      %v1607 = vpop.f32.mrf.mxu0
      %v1608 = vadd.f32 %v1589, %v1607
      %v1609 = vpop.f32.mrf.mxu0
      %v1610 = vadd.f32 %v1591, %v1609
      %1611 = vdwg.mxu0
      %1612 = vmatpush.bf16.msra.mxu0 %v1398
      %1613 = vmatpush.bf16.msra.mxu0 %v1397
      %1614 = vmatpush.bf16.msra.mxu0 %v1396
      %1615 = vmatpush.bf16.msra.mxu0 %v1395
      %1616 = vmatpush.bf16.msra.mxu0 %v1394
      %1617 = vmatpush.bf16.msra.mxu0 %v1393
      %1618 = vmatpush.bf16.msra.mxu0 %v1392
      %1619 = vmatpush.bf16.msra.mxu0 %v1391
      %1620 = vmatmul.bf16.gmra.mxu0 %v1018
      %v1621 = vpop.f32.mrf.mxu0
      %v1622 = vadd.f32 %v1603, %v1621
      %v1623 = vpop.f32.mrf.mxu0
      %v1624 = vadd.f32 %v1605, %v1623
      %1625 = vmatmul.bf16.gmra.mxu0 %v1027
      %v1626 = vpop.f32.mrf.mxu0
      %v1627 = vadd.f32 %v1608, %v1626
      %v1628 = vpop.f32.mrf.mxu0
      %v1629 = vadd.f32 %v1610, %v1628
      %1630 = vdwg.mxu0
      %1631 = vmatpush.bf16.msra.mxu0 %v1406
      %1632 = vmatpush.bf16.msra.mxu0 %v1405
      %1633 = vmatpush.bf16.msra.mxu0 %v1404
      %1634 = vmatpush.bf16.msra.mxu0 %v1403
      %1635 = vmatpush.bf16.msra.mxu0 %v1402
      %1636 = vmatpush.bf16.msra.mxu0 %v1401
      %1637 = vmatpush.bf16.msra.mxu0 %v1400
      %1638 = vmatpush.bf16.msra.mxu0 %v1399
      %1639 = vmatmul.bf16.gmra.mxu0 %v1019
      %v1640 = vpop.f32.mrf.mxu0
      %v1641 = vadd.f32 %v1622, %v1640
      %v1642 = vpop.f32.mrf.mxu0
      %v1643 = vadd.f32 %v1624, %v1642
      %1644 = vmatmul.bf16.gmra.mxu0 %v1028
      %v1645 = vpop.f32.mrf.mxu0
      %v1646 = vadd.f32 %v1627, %v1645
      %v1647 = vpop.f32.mrf.mxu0
      %v1648 = vadd.f32 %v1629, %v1647
      %1649 = vdwg.mxu0
      %1650 = vst [vmem:[%s479] sm:$0xff] %v1641
      %1651 = vst [vmem:[%s479 + $0x8] sm:$0xff] %v1643
      %1652 = vst [vmem:[%s479 + $0x10] sm:$0xff] %v1646
      %1653 = vst [vmem:[%s479 + $0x18] sm:$0xff] %v1648
      %v1654 = vadd.f32 %v1641, %v1643
      %v1655 = vadd.f32 %v1654, %v1646
      %v1656 = vadd.f32 %v1655, %v1648
      %v1657 = vrot.slane %v1656, 4
      %v1658 = vadd.f32 %v1656, %v1657
      %v1659 = vrot.slane %v1658, 2
      %v1660 = vadd.f32 %v1658, %v1659
      %v1661 = vrot.slane %v1660, 1
      %v1662 = vadd.f32 %v1660, %v1661
      %v1663 = vmul.f32 %v1641, %v1641
      %v1664 = vmul.f32 %v1643, %v1643
      %v1665 = vmul.f32 %v1646, %v1646
      %v1666 = vmul.f32 %v1648, %v1648
      %v1667 = vadd.f32 %v1663, %v1664
      %v1668 = vadd.f32 %v1667, %v1665
      %v1669 = vadd.f32 %v1668, %v1666
      %v1670 = vrot.slane %v1669, 4
      %v1671 = vadd.f32 %v1669, %v1670
      %v1672 = vrot.slane %v1671, 2
      %v1673 = vadd.f32 %v1671, %v1672
      %v1674 = vrot.slane %v1673, 1
      %v1675 = vadd.f32 %v1673, %v1674
      %vm1676 = vcmask 1040384
      %v1677 = vsel %vm1676, %v1662, %v1675
      %1678 = vst [vmem:[%s483] sm:$0x3] %v1677
      %p1679 = scmp.lt.s32.totalorder %s25, 1
      %s1680 = scalar_select %p1679, %s25, 1
      %s1681 = smul.addr %s1680, 4
      %s1682 = smul.addr %s1681, 8
      %s1683 = scalar_lea.vmem %s11, %s1682
      %p1684 = scmp.lt.s32.totalorder %s25, 1
      %s1685 = scalar_select %p1684, %s25, 1
      %s1686 = smul.addr %s1685, 4
      %s1687 = smul.addr %s1686, 8
      %s1688 = scalar_lea.vmem %s12, %s1687
      %p1689 = scmp.lt.s32.totalorder %s25, 1
      %s1690 = scalar_select %p1689, %s25, 1
      %s1691 = smul.addr %s1690, 2
      %s1692 = scalar_lea.vmem %s13, %s1691
      // Predicated region
      $region65: #{_lambda_.9} parent=63 // pred_check
        %p1693 = pneg %p284
      $region66: #{_lambda_.9} parent=63 // pred_check_branch
        %1695 = sbr.rel (%p1693) target = $region68
      $region67: #{_lambda_.9} parent=63 // pred_region
        _
      $region68: #{_lambda_.9} parent=63 // pred_fallthru
        _
      // Predicated region
      $region69: #{_lambda_.9} parent=63 // pred_check
        %p1696 = pneg %p310
      $region70: #{_lambda_.9} parent=63 // pred_check_branch
        %1698 = sbr.rel (%p1696) target = $region72
      $region71: #{_lambda_.9} parent=63 // pred_region
        _
      $region72: #{_lambda_.9} parent=63 // pred_fallthru
        _
      // Predicated region
      $region73: #{_lambda_.9} parent=63 // pred_check
        %p1699 = pneg %p336
      $region74: #{_lambda_.9} parent=63 // pred_check_branch
        %1701 = sbr.rel (%p1699) target = $region76
      $region75: #{_lambda_.9} parent=63 // pred_region
        _
      $region76: #{_lambda_.9} parent=63 // pred_fallthru
        _
    $region64: #{_lambda_.9} parent=5 // pred_fallthru
      _
    %p1702 = scmp.le.s32.totalorder 2, %s20
    // Predicated region
    $region77: #{_lambda_.9} parent=5 // pred_check
      %p1703 = pneg %p1702
    $region78: #{_lambda_.9} parent=5 // pred_check_branch
      %1705 = sbr.rel (%p1703) target = $region80
    $region79: #{_lambda_.9} parent=5 // pred_region
      %s1706 = ssub.s32 %s20, 2
      // Predicated region
      $region81: #{_lambda_.9} parent=79 // pred_check
        %p1707 = pneg %p290
      $region82: #{_lambda_.9} parent=79 // pred_check_branch
        %1709 = sbr.rel (%p1707) target = $region84
      $region83: #{_lambda_.9} parent=79 // pred_region
        %p1710 = scmp.lt.s32.totalorder %s26, 1
        %s1711 = scalar_select %p1710, %s26, 1
        %s1712 = smul.addr %s1711, 4
        %s1713 = smul.addr %s1712, 8
        %s1714 = scalar_lea.vmem %s11, %s1713
      $region84: #{_lambda_.9} parent=79 // pred_fallthru
        _
      // Predicated region
      $region85: #{_lambda_.9} parent=79 // pred_check
        %p1715 = pneg %p316
      $region86: #{_lambda_.9} parent=79 // pred_check_branch
        %1717 = sbr.rel (%p1715) target = $region88
      $region87: #{_lambda_.9} parent=79 // pred_region
        %p1718 = scmp.lt.s32.totalorder %s26, 1
        %s1719 = scalar_select %p1718, %s26, 1
        %s1720 = smul.addr %s1719, 4
        %s1721 = smul.addr %s1720, 8
        %s1722 = scalar_lea.vmem %s12, %s1721
      $region88: #{_lambda_.9} parent=79 // pred_fallthru
        _
      // Predicated region
      $region89: #{_lambda_.9} parent=79 // pred_check
        %p1723 = pneg %p342
      $region90: #{_lambda_.9} parent=79 // pred_check_branch
        %1725 = sbr.rel (%p1723) target = $region92
      $region91: #{_lambda_.9} parent=79 // pred_region
        %p1726 = scmp.lt.s32.totalorder %s26, 1
        %s1727 = scalar_select %p1726, %s26, 1
        %s1728 = smul.addr %s1727, 2
        %s1729 = scalar_lea.vmem %s13, %s1728
      $region92: #{_lambda_.9} parent=79 // pred_fallthru
        _
    $region80: #{_lambda_.9} parent=5 // pred_fallthru
      _
  $region6: #{_lambda_.9} parent=0 // loop_footer
    %s24 = sadd.s32 1, %s20
  $region7: #{_lambda_.9} parent=0 // loop_footer_branch
    %19 = sbr.rel target = $region3
  $region8: #{_lambda_.9} parent=0 // loop_exit
    _

</llo_original>
